<compile_context>
chip_gen: v7x
topology: tpu7x:2x2x1
jax: 0.10.0
libtpu: 0.0.40
codegen_flags: <defaults>
</compile_context>

<pallas_src>
import functools

import numpy as np
import jax
import jax.numpy as jnp
from jax.experimental import pallas as pl
from jax.experimental.pallas import tpu as pltpu


# ----------------------------------------------------------------------------
# In-kernel helpers
# ----------------------------------------------------------------------------
def _gru_gates(gx, gh, h_prev, b_hn, H):
    """Standard GRU cell math for one direction (gate order r, z, n).

    gx already contains b_ih (all gates) and b_hh for r/z (folded at pack time);
    gh contains no bias, so b_hh_n is added here (it sits inside the r-product).
    """
    r = jax.nn.sigmoid(gx[:, 0:H] + gh[:, 0:H])
    z = jax.nn.sigmoid(gx[:, H:2 * H] + gh[:, H:2 * H])
    n = jnp.tanh(gx[:, 2 * H:3 * H] + r * (gh[:, 2 * H:3 * H] + b_hn))
    return (1.0 - z) * n + z * h_prev


def _bidir_scan(gx_ref, whh_bd, b_hn, mask_all, dst_ref, *, H, T, B):
    """Fused fwd+bwd GRU recurrence for one layer.

    gx_ref   : (B, T, 6H) VMEM scratch with x @ W_ih + b (fwd cols 0:3H, bwd 3H:6H)
    whh_bd   : (2H, 6H)  block-diagonal recurrent weight (one matmul per step)
    b_hn     : (1, 2H)   hidden bias of the candidate gate, [fwd | bwd]
    mask_all : (B, T)    1.0 where t < len[b] else 0.0
    dst_ref  : (B, T, 2H) destination ref (fwd cols 0:H, bwd cols H:2H)
    """
    h = jnp.zeros((B, 2 * H), jnp.float32)
    for i in range(T):                      # statically unrolled (T is small)
        tf, tb = i, T - 1 - i               # fwd time index / bwd time index
        m_f = mask_all[:, tf:tf + 1]        # (B, 1)
        m_b = mask_all[:, tb:tb + 1]        # (B, 1)
        gx_f = gx_ref[:, tf, 0:3 * H]       # (B, 3H)
        gx_b = gx_ref[:, tb, 3 * H:6 * H]   # (B, 3H)

        # single recurrent matmul for both directions (block-diagonal weight)
        gh = jnp.dot(h, whh_bd, preferred_element_type=jnp.float32)   # (B, 6H)

        hf_new = _gru_gates(gx_f, gh[:, 0:3 * H], h[:, 0:H], b_hn[:, 0:H], H)
        hb_new = _gru_gates(gx_b, gh[:, 3 * H:6 * H], h[:, H:2 * H],
                            b_hn[:, H:2 * H], H)

        # packed-sequence semantics: hidden only advances while t < len[b]
        hf = m_f * hf_new + (1.0 - m_f) * h[:, 0:H]
        hb = m_b * hb_new + (1.0 - m_b) * h[:, H:2 * H]

        # pad_packed_sequence: outputs past the sequence length are zero
        dst_ref[:, tf, 0:H] = m_f * hf
        dst_ref[:, tb, H:2 * H] = m_b * hb

        h = jnp.concatenate([hf, hb], axis=1)


# ----------------------------------------------------------------------------
# Fused 2-layer bidirectional GRU kernel
# ----------------------------------------------------------------------------
def _bigru2_kernel(x_ref, len_ref,
                   wih1_ref, whh1_ref, bx1_ref, bhn1_ref,
                   wih2_ref, whh2_ref, bx2_ref, bhn2_ref,
                   out_ref, gx_ref, y1_ref, *, hidden, seq_len):
    H, T = hidden, seq_len
    B = x_ref.shape[0]

    # validity mask, computed once: mask[b, t] = 1.0 iff t < len[b]
    t_pos = jax.lax.broadcasted_iota(jnp.int32, (B, T), 1)
    mask_all = (t_pos < len_ref[...]).astype(jnp.float32)          # (B, T)

    # ---------------- layer 1 ----------------
    wih1 = wih1_ref[...]
    bx1 = bx1_ref[...]
    for t in range(T):       # hoisted, h-independent input projection (no serial dep)
        gx_ref[:, t, :] = jnp.dot(x_ref[:, t, :], wih1,
                                  preferred_element_type=jnp.float32) + bx1
    _bidir_scan(gx_ref, whh1_ref[...], bhn1_ref[...], mask_all, y1_ref,
                H=H, T=T, B=B)

    # ---------------- layer 2 (input = layer-1 output, VMEM-resident) --------
    wih2 = wih2_ref[...]
    bx2 = bx2_ref[...]
    for t in range(T):
        gx_ref[:, t, :] = jnp.dot(y1_ref[:, t, :], wih2,
                                  preferred_element_type=jnp.float32) + bx2
    _bidir_scan(gx_ref, whh2_ref[...], bhn2_ref[...], mask_all, out_ref,
                H=H, T=T, B=B)


def bilstm_forward(feats, seq_lengths, packed_params, *, max_len=None):
    """feats: (B, T, embed_dim + mask_dim) f32; seq_lengths: (B,) int.

    `max_len` must be a static Python int (host-side) to mirror
    pad_packed_sequence's trim without a device->host sync under jit.
    """
    B, T, _ = feats.shape
    H = packed_params[0][1].shape[0] // 2          # whh_bd is (2H, 6H)
    lengths_i = jnp.asarray(seq_lengths, jnp.int32).reshape(B, 1)

    kernel = functools.partial(_bigru2_kernel, hidden=H, seq_len=T)
    vmem = lambda: pl.BlockSpec(memory_space=pltpu.MemorySpace.VMEM)

    (w1, r1, bx1, bn1), (w2, r2, bx2, bn2) = packed_params
    out = pl.pallas_call(
        kernel,
        out_shape=jax.ShapeDtypeStruct((B, T, 2 * H), jnp.float32),
        in_specs=[vmem() for _ in range(10)],
        out_specs=vmem(),
        scratch_shapes=[
            pltpu.VMEM((B, T, 6 * H), jnp.float32),   # gx scratch (reused by both layers)
            pltpu.VMEM((B, T, 2 * H), jnp.float32),   # layer-1 output, never leaves VMEM
        ],
    )(feats, lengths_i, w1, r1, bx1, bn1, w2, r2, bx2, bn2)

    if max_len is not None:
        out = out[:, :max_len, :]     # pad_packed_sequence trims to longest sequence
    return out


# ----------------------------------------------------------------------------
# Parameter init (mirrors init_ortho: orthogonal 2-D weights, uniform biases)
# in PyTorch nn.GRU conventions, plus packing into the fused-kernel layout.
# ----------------------------------------------------------------------------
def _orthogonal(key, shape):
    rows, cols = shape
    n = max(rows, cols)
    a = jax.random.normal(key, (n, n), jnp.float32)
    q, r = jnp.linalg.qr(a)
    q = q * jnp.sign(jnp.diag(r))[None, :]
    return q[:rows, :cols].astype(jnp.float32)


def init_params(key, input_dim, hidden, num_layers=2):
    """Raw PyTorch-shaped params: per layer/direction (W_ih(3H,Din), W_hh(3H,H), b_ih(3H,), b_hh(3H,))."""
    params = []
    bound = 1.0 / np.sqrt(hidden)
    for layer in range(num_layers):
        d_in = input_dim if layer == 0 else 2 * hidden
        layer_p = {}
        for direction in ("fwd", "bwd"):
            key, k1, k2, k3, k4 = jax.random.split(key, 5)
            wih = _orthogonal(k1, (3 * hidden, d_in))
            whh = _orthogonal(k2, (3 * hidden, hidden))
            bih = jax.random.uniform(k3, (3 * hidden,), jnp.float32, -bound, bound)
            bhh = jax.random.uniform(k4, (3 * hidden,), jnp.float32, -bound, bound)
            layer_p[direction] = (wih, whh, bih, bhh)
        params.append(layer_p)
    return params


def pack_params(raw_params, hidden):
    """Pack raw params into the fused-kernel layout.

    Per layer returns:
      wih_all : (D_in, 6H)  [fwd(r,z,n) | bwd(r,z,n)]   (transposed for x @ W)
      whh_bd  : (2H, 6H)    block-diagonal recurrent weight
      bx      : (1, 6H)     b_ih with b_hh folded in for the r/z gates
      bhn     : (1, 2H)     b_hh of the candidate gate  [fwd | bwd]
    """
    H = hidden
    packed = []
    for layer_p in raw_params:
        wih_f, whh_f, bih_f, bhh_f = layer_p["fwd"]
        wih_b, whh_b, bih_b, bhh_b = layer_p["bwd"]

        wih_all = jnp.concatenate([wih_f.T, wih_b.T], axis=1)       # (Din, 6H)

        whh_bd = jnp.zeros((2 * H, 6 * H), jnp.float32)
        whh_bd = whh_bd.at[:H, :3 * H].set(whh_f.T)
        whh_bd = whh_bd.at[H:, 3 * H:].set(whh_b.T)

        def fold(bih, bhh):   # r,z biases combined; n keeps only b_ih here
            return jnp.concatenate([bih[:2 * H] + bhh[:2 * H], bih[2 * H:]])

        bx = jnp.concatenate([fold(bih_f, bhh_f), fold(bih_b, bhh_b)]).reshape(1, 6 * H)
        bhn = jnp.concatenate([bhh_f[2 * H:], bhh_b[2 * H:]]).reshape(1, 2 * H)

        packed.append((wih_all, whh_bd, bx, bhn))
    return packed


# ----------------------------------------------------------------------------
# Pure-JAX reference (unfused, PyTorch-convention weights) for correctness.
# ----------------------------------------------------------------------------
def _gru_dir_ref(x, wih, whh, bih, bhh, lengths_f, reverse):
    B, T, _ = x.shape
    H = whh.shape[1]
    h = jnp.zeros((B, H), jnp.float32)
    out = jnp.zeros((B, T, H), jnp.float32)
    order = range(T - 1, -1, -1) if reverse else range(T)
    for t in order:
        gx = x[:, t, :] @ wih.T + bih
        gh = h @ whh.T + bhh
        r = jax.nn.sigmoid(gx[:, :H] + gh[:, :H])
        z = jax.nn.sigmoid(gx[:, H:2 * H] + gh[:, H:2 * H])
        n = jnp.tanh(gx[:, 2 * H:] + r * gh[:, 2 * H:])
        h_cand = (1.0 - z) * n + z * h
        mask = lengths_f > float(t)
        h = jnp.where(mask, h_cand, h)
        out = out.at[:, t, :].set(jnp.where(mask, h, 0.0))
    return out


def bilstm_ref(feats, seq_lengths, raw_params, max_len):
    lengths_f = jnp.asarray(seq_lengths, jnp.float32).reshape(-1, 1)
    x = feats
    for layer_p in raw_params:
        fwd = _gru_dir_ref(x, *layer_p["fwd"], lengths_f, False)
        bwd = _gru_dir_ref(x, *layer_p["bwd"], lengths_f, True)
        x = jnp.concatenate([fwd, bwd], axis=-1)
    return x[:, :max_len, :]


if __name__ == "__main__":
    # config: embed_dim=28, mask_dim=4, l_hidden_size=32 -> GRU input 32, H=16/dir
    embed_dim, mask_dim, l_hidden_size = 28, 4, 32
    B, T = 2, 8
    H = l_hidden_size // 2

    key = jax.random.PRNGKey(0)
    k_feats, k_params = jax.random.split(key)
    feats = jax.random.normal(k_feats, (B, T, embed_dim + mask_dim), jnp.float32)
    # pack_padded_sequence requires lengths sorted in decreasing order
    seq_lengths = [8, 5]
    max_len = int(max(seq_lengths))          # static host-side int (no device sync)
    seq_lengths_dev = jnp.asarray(seq_lengths, jnp.int32)

    raw_params = init_params(k_params, embed_dim + mask_dim, H, num_layers=2)
    packed = pack_params(raw_params, H)

    out = bilstm_forward(feats, seq_lengths_dev, packed, max_len=max_len)
    out = jax.block_until_ready(out)

    ref = bilstm_ref(feats, seq_lengths_dev, raw_params, max_len)
    np.testing.assert_allclose(np.asarray(out), np.asarray(ref), rtol=1e-5, atol=1e-5)
    assert out.shape == (B, max_len, l_hidden_size)

    print("KERNEL_OK")
</pallas_src>

<mosaic_0001>
module attributes {stable_mosaic.version = 11 : i64} {
  func.func @_bigru2_kernel(%arg0: memref<2x8x32xf32, #tpu.memory_space<vmem>>, %arg1: memref<2x1xi32, #tpu.memory_space<vmem>>, %arg2: memref<32x96xf32, #tpu.memory_space<vmem>>, %arg3: memref<32x96xf32, #tpu.memory_space<vmem>>, %arg4: memref<1x96xf32, #tpu.memory_space<vmem>>, %arg5: memref<1x32xf32, #tpu.memory_space<vmem>>, %arg6: memref<32x96xf32, #tpu.memory_space<vmem>>, %arg7: memref<32x96xf32, #tpu.memory_space<vmem>>, %arg8: memref<1x96xf32, #tpu.memory_space<vmem>>, %arg9: memref<1x32xf32, #tpu.memory_space<vmem>>, %arg10: memref<2x8x32xf32, #tpu.memory_space<vmem>>, %arg11: memref<2x8x96xf32, #tpu.memory_space<vmem>>, %arg12: memref<2x8x32xf32, #tpu.memory_space<vmem>>) attributes {dimension_semantics = [], scalar_prefetch = 0 : i64, scratch_operands = 2 : i64, tpu.core_type = #tpu.core_type<tc>} {
    %0 = tpu.iota {dimensions = array<i32: 1>} : vector<2x8xi32>
    %c0 = arith.constant 0 : index
    %c0_0 = arith.constant 0 : index
    %1 = vector.load %arg1[%c0, %c0_0] : memref<2x1xi32, #tpu.memory_space<vmem>>, vector<2x1xi32>
    %2 = vector.broadcast %1 : vector<2x1xi32> to vector<2x8xi32>
    %3 = arith.cmpi slt, %0, %2 : vector<2x8xi32>
    %4 = arith.extui %3 : vector<2x8xi1> to vector<2x8xi32>
    %5 = arith.sitofp %4 : vector<2x8xi32> to vector<2x8xf32>
    %c0_1 = arith.constant 0 : index
    %c0_2 = arith.constant 0 : index
    %6 = vector.load %arg2[%c0_1, %c0_2] : memref<32x96xf32, #tpu.memory_space<vmem>>, vector<32x96xf32>
    %c0_3 = arith.constant 0 : index
    %c0_4 = arith.constant 0 : index
    %7 = vector.load %arg4[%c0_3, %c0_4] : memref<1x96xf32, #tpu.memory_space<vmem>>, vector<1x96xf32>
    %c0_5 = arith.constant 0 : index
    %c0_6 = arith.constant 0 : index
    %c0_7 = arith.constant 0 : index
    %8 = vector.load %arg0[%c0_5, %c0_6, %c0_7] : memref<2x8x32xf32, #tpu.memory_space<vmem>>, vector<2x1x32xf32>
    %9 = vector.shape_cast %8 : vector<2x1x32xf32> to vector<2x32xf32>
    %cst = arith.constant dense<0.000000e+00> : vector<2x96xf32>
    %10 = tpu.matmul %9, %6, %cst {dimension_numbers = #tpu.dot_dimension_numbers<[1], [0], [0], [1], [0, 0, 1, 1], [], []>} : vector<2x32xf32>, vector<32x96xf32>, vector<2x96xf32> -> vector<2x96xf32>
    %11 = vector.broadcast %7 : vector<1x96xf32> to vector<2x96xf32>
    %12 = arith.addf %10, %11 : vector<2x96xf32>
    %c0_8 = arith.constant 0 : index
    %c0_9 = arith.constant 0 : index
    %c0_10 = arith.constant 0 : index
    %13 = vector.load %arg11[%c0_8, %c0_9, %c0_10] : memref<2x8x96xf32, #tpu.memory_space<vmem>>, vector<2x1x96xf32>
    %14 = vector.shape_cast %13 : vector<2x1x96xf32> to vector<2x96xf32>
    %15 = vector.shape_cast %12 : vector<2x96xf32> to vector<2x1x96xf32>
    tpu.vector_store %arg11[%c0_8, %c0_9, %c0_10], %15 {strides = array<i32>} : memref<2x8x96xf32, #tpu.memory_space<vmem>>, vector<2x1x96xf32>,
    %c0_11 = arith.constant 0 : index
    %c1 = arith.constant 1 : index
    %c0_12 = arith.constant 0 : index
    %16 = vector.load %arg0[%c0_11, %c1, %c0_12] : memref<2x8x32xf32, #tpu.memory_space<vmem>>, vector<2x1x32xf32>
    %17 = vector.shape_cast %16 : vector<2x1x32xf32> to vector<2x32xf32>
    %cst_13 = arith.constant dense<0.000000e+00> : vector<2x96xf32>
    %18 = tpu.matmul %17, %6, %cst_13 {dimension_numbers = #tpu.dot_dimension_numbers<[1], [0], [0], [1], [0, 0, 1, 1], [], []>} : vector<2x32xf32>, vector<32x96xf32>, vector<2x96xf32> -> vector<2x96xf32>
    %19 = vector.broadcast %7 : vector<1x96xf32> to vector<2x96xf32>
    %20 = arith.addf %18, %19 : vector<2x96xf32>
    %c0_14 = arith.constant 0 : index
    %c1_15 = arith.constant 1 : index
    %c0_16 = arith.constant 0 : index
    %21 = vector.load %arg11[%c0_14, %c1_15, %c0_16] : memref<2x8x96xf32, #tpu.memory_space<vmem>>, vector<2x1x96xf32>
    %22 = vector.shape_cast %21 : vector<2x1x96xf32> to vector<2x96xf32>
    %23 = vector.shape_cast %20 : vector<2x96xf32> to vector<2x1x96xf32>
    tpu.vector_store %arg11[%c0_14, %c1_15, %c0_16], %23 {strides = array<i32>} : memref<2x8x96xf32, #tpu.memory_space<vmem>>, vector<2x1x96xf32>,
    %c0_17 = arith.constant 0 : index
    %c2 = arith.constant 2 : index
    %c0_18 = arith.constant 0 : index
    %24 = vector.load %arg0[%c0_17, %c2, %c0_18] : memref<2x8x32xf32, #tpu.memory_space<vmem>>, vector<2x1x32xf32>
    %25 = vector.shape_cast %24 : vector<2x1x32xf32> to vector<2x32xf32>
    %cst_19 = arith.constant dense<0.000000e+00> : vector<2x96xf32>
    %26 = tpu.matmul %25, %6, %cst_19 {dimension_numbers = #tpu.dot_dimension_numbers<[1], [0], [0], [1], [0, 0, 1, 1], [], []>} : vector<2x32xf32>, vector<32x96xf32>, vector<2x96xf32> -> vector<2x96xf32>
    %27 = vector.broadcast %7 : vector<1x96xf32> to vector<2x96xf32>
    %28 = arith.addf %26, %27 : vector<2x96xf32>
    %c0_20 = arith.constant 0 : index
    %c2_21 = arith.constant 2 : index
    %c0_22 = arith.constant 0 : index
    %29 = vector.load %arg11[%c0_20, %c2_21, %c0_22] : memref<2x8x96xf32, #tpu.memory_space<vmem>>, vector<2x1x96xf32>
    %30 = vector.shape_cast %29 : vector<2x1x96xf32> to vector<2x96xf32>
    %31 = vector.shape_cast %28 : vector<2x96xf32> to vector<2x1x96xf32>
    tpu.vector_store %arg11[%c0_20, %c2_21, %c0_22], %31 {strides = array<i32>} : memref<2x8x96xf32, #tpu.memory_space<vmem>>, vector<2x1x96xf32>,
    %c0_23 = arith.constant 0 : index
    %c3 = arith.constant 3 : index
    %c0_24 = arith.constant 0 : index
    %32 = vector.load %arg0[%c0_23, %c3, %c0_24] : memref<2x8x32xf32, #tpu.memory_space<vmem>>, vector<2x1x32xf32>
    %33 = vector.shape_cast %32 : vector<2x1x32xf32> to vector<2x32xf32>
    %cst_25 = arith.constant dense<0.000000e+00> : vector<2x96xf32>
    %34 = tpu.matmul %33, %6, %cst_25 {dimension_numbers = #tpu.dot_dimension_numbers<[1], [0], [0], [1], [0, 0, 1, 1], [], []>} : vector<2x32xf32>, vector<32x96xf32>, vector<2x96xf32> -> vector<2x96xf32>
    %35 = vector.broadcast %7 : vector<1x96xf32> to vector<2x96xf32>
    %36 = arith.addf %34, %35 : vector<2x96xf32>
    %c0_26 = arith.constant 0 : index
    %c3_27 = arith.constant 3 : index
    %c0_28 = arith.constant 0 : index
    %37 = vector.load %arg11[%c0_26, %c3_27, %c0_28] : memref<2x8x96xf32, #tpu.memory_space<vmem>>, vector<2x1x96xf32>
    %38 = vector.shape_cast %37 : vector<2x1x96xf32> to vector<2x96xf32>
    %39 = vector.shape_cast %36 : vector<2x96xf32> to vector<2x1x96xf32>
    tpu.vector_store %arg11[%c0_26, %c3_27, %c0_28], %39 {strides = array<i32>} : memref<2x8x96xf32, #tpu.memory_space<vmem>>, vector<2x1x96xf32>,
    %c0_29 = arith.constant 0 : index
    %c4 = arith.constant 4 : index
    %c0_30 = arith.constant 0 : index
    %40 = vector.load %arg0[%c0_29, %c4, %c0_30] : memref<2x8x32xf32, #tpu.memory_space<vmem>>, vector<2x1x32xf32>
    %41 = vector.shape_cast %40 : vector<2x1x32xf32> to vector<2x32xf32>
    %cst_31 = arith.constant dense<0.000000e+00> : vector<2x96xf32>
    %42 = tpu.matmul %41, %6, %cst_31 {dimension_numbers = #tpu.dot_dimension_numbers<[1], [0], [0], [1], [0, 0, 1, 1], [], []>} : vector<2x32xf32>, vector<32x96xf32>, vector<2x96xf32> -> vector<2x96xf32>
    %43 = vector.broadcast %7 : vector<1x96xf32> to vector<2x96xf32>
    %44 = arith.addf %42, %43 : vector<2x96xf32>
    %c0_32 = arith.constant 0 : index
    %c4_33 = arith.constant 4 : index
    %c0_34 = arith.constant 0 : index
    %45 = vector.load %arg11[%c0_32, %c4_33, %c0_34] : memref<2x8x96xf32, #tpu.memory_space<vmem>>, vector<2x1x96xf32>
    %46 = vector.shape_cast %45 : vector<2x1x96xf32> to vector<2x96xf32>
    %47 = vector.shape_cast %44 : vector<2x96xf32> to vector<2x1x96xf32>
    tpu.vector_store %arg11[%c0_32, %c4_33, %c0_34], %47 {strides = array<i32>} : memref<2x8x96xf32, #tpu.memory_space<vmem>>, vector<2x1x96xf32>,
    %c0_35 = arith.constant 0 : index
    %c5 = arith.constant 5 : index
    %c0_36 = arith.constant 0 : index
    %48 = vector.load %arg0[%c0_35, %c5, %c0_36] : memref<2x8x32xf32, #tpu.memory_space<vmem>>, vector<2x1x32xf32>
    %49 = vector.shape_cast %48 : vector<2x1x32xf32> to vector<2x32xf32>
    %cst_37 = arith.constant dense<0.000000e+00> : vector<2x96xf32>
    %50 = tpu.matmul %49, %6, %cst_37 {dimension_numbers = #tpu.dot_dimension_numbers<[1], [0], [0], [1], [0, 0, 1, 1], [], []>} : vector<2x32xf32>, vector<32x96xf32>, vector<2x96xf32> -> vector<2x96xf32>
    %51 = vector.broadcast %7 : vector<1x96xf32> to vector<2x96xf32>
    %52 = arith.addf %50, %51 : vector<2x96xf32>
    %c0_38 = arith.constant 0 : index
    %c5_39 = arith.constant 5 : index
    %c0_40 = arith.constant 0 : index
    %53 = vector.load %arg11[%c0_38, %c5_39, %c0_40] : memref<2x8x96xf32, #tpu.memory_space<vmem>>, vector<2x1x96xf32>
    %54 = vector.shape_cast %53 : vector<2x1x96xf32> to vector<2x96xf32>
    %55 = vector.shape_cast %52 : vector<2x96xf32> to vector<2x1x96xf32>
    tpu.vector_store %arg11[%c0_38, %c5_39, %c0_40], %55 {strides = array<i32>} : memref<2x8x96xf32, #tpu.memory_space<vmem>>, vector<2x1x96xf32>,
    %c0_41 = arith.constant 0 : index
    %c6 = arith.constant 6 : index
    %c0_42 = arith.constant 0 : index
    %56 = vector.load %arg0[%c0_41, %c6, %c0_42] : memref<2x8x32xf32, #tpu.memory_space<vmem>>, vector<2x1x32xf32>
    %57 = vector.shape_cast %56 : vector<2x1x32xf32> to vector<2x32xf32>
    %cst_43 = arith.constant dense<0.000000e+00> : vector<2x96xf32>
    %58 = tpu.matmul %57, %6, %cst_43 {dimension_numbers = #tpu.dot_dimension_numbers<[1], [0], [0], [1], [0, 0, 1, 1], [], []>} : vector<2x32xf32>, vector<32x96xf32>, vector<2x96xf32> -> vector<2x96xf32>
    %59 = vector.broadcast %7 : vector<1x96xf32> to vector<2x96xf32>
    %60 = arith.addf %58, %59 : vector<2x96xf32>
    %c0_44 = arith.constant 0 : index
    %c6_45 = arith.constant 6 : index
    %c0_46 = arith.constant 0 : index
    %61 = vector.load %arg11[%c0_44, %c6_45, %c0_46] : memref<2x8x96xf32, #tpu.memory_space<vmem>>, vector<2x1x96xf32>
    %62 = vector.shape_cast %61 : vector<2x1x96xf32> to vector<2x96xf32>
    %63 = vector.shape_cast %60 : vector<2x96xf32> to vector<2x1x96xf32>
    tpu.vector_store %arg11[%c0_44, %c6_45, %c0_46], %63 {strides = array<i32>} : memref<2x8x96xf32, #tpu.memory_space<vmem>>, vector<2x1x96xf32>,
    %c0_47 = arith.constant 0 : index
    %c7 = arith.constant 7 : index
    %c0_48 = arith.constant 0 : index
    %64 = vector.load %arg0[%c0_47, %c7, %c0_48] : memref<2x8x32xf32, #tpu.memory_space<vmem>>, vector<2x1x32xf32>
    %65 = vector.shape_cast %64 : vector<2x1x32xf32> to vector<2x32xf32>
    %cst_49 = arith.constant dense<0.000000e+00> : vector<2x96xf32>
    %66 = tpu.matmul %65, %6, %cst_49 {dimension_numbers = #tpu.dot_dimension_numbers<[1], [0], [0], [1], [0, 0, 1, 1], [], []>} : vector<2x32xf32>, vector<32x96xf32>, vector<2x96xf32> -> vector<2x96xf32>
    %67 = vector.broadcast %7 : vector<1x96xf32> to vector<2x96xf32>
    %68 = arith.addf %66, %67 : vector<2x96xf32>
    %c0_50 = arith.constant 0 : index
    %c7_51 = arith.constant 7 : index
    %c0_52 = arith.constant 0 : index
    %69 = vector.load %arg11[%c0_50, %c7_51, %c0_52] : memref<2x8x96xf32, #tpu.memory_space<vmem>>, vector<2x1x96xf32>
    %70 = vector.shape_cast %69 : vector<2x1x96xf32> to vector<2x96xf32>
    %71 = vector.shape_cast %68 : vector<2x96xf32> to vector<2x1x96xf32>
    tpu.vector_store %arg11[%c0_50, %c7_51, %c0_52], %71 {strides = array<i32>} : memref<2x8x96xf32, #tpu.memory_space<vmem>>, vector<2x1x96xf32>,
    %c0_53 = arith.constant 0 : index
    %c0_54 = arith.constant 0 : index
    %72 = vector.load %arg3[%c0_53, %c0_54] : memref<32x96xf32, #tpu.memory_space<vmem>>, vector<32x96xf32>
    %c0_55 = arith.constant 0 : index
    %c0_56 = arith.constant 0 : index
    %73 = vector.load %arg5[%c0_55, %c0_56] : memref<1x32xf32, #tpu.memory_space<vmem>>, vector<1x32xf32>
    %cst_57 = arith.constant 0.000000e+00 : f32
    %74 = vector.broadcast %cst_57 : f32 to vector<2x32xf32>
    %75 = vector.extract_strided_slice %5 {offsets = [0, 0], sizes = [2, 1], strides = [1, 1]} : vector<2x8xf32> to vector<2x1xf32>
    %76 = vector.extract_strided_slice %5 {offsets = [0, 7], sizes = [2, 1], strides = [1, 1]} : vector<2x8xf32> to vector<2x1xf32>
    %c0_58 = arith.constant 0 : index
    %c0_59 = arith.constant 0 : index
    %c0_60 = arith.constant 0 : index
    %77 = vector.load %arg11[%c0_58, %c0_59, %c0_60] : memref<2x8x96xf32, #tpu.memory_space<vmem>>, vector<2x1x48xf32>
    %78 = vector.shape_cast %77 : vector<2x1x48xf32> to vector<2x48xf32>
    %c0_61 = arith.constant 0 : index
    %c7_62 = arith.constant 7 : index
    %c48 = arith.constant 48 : index
    %79 = vector.load %arg11[%c0_61, %c7_62, %c48] : memref<2x8x96xf32, #tpu.memory_space<vmem>>, vector<2x1x48xf32>
    %80 = vector.shape_cast %79 : vector<2x1x48xf32> to vector<2x48xf32>
    %cst_63 = arith.constant dense<0.000000e+00> : vector<2x96xf32>
    %81 = tpu.matmul %74, %72, %cst_63 {dimension_numbers = #tpu.dot_dimension_numbers<[1], [0], [0], [1], [0, 0, 1, 1], [], []>} : vector<2x32xf32>, vector<32x96xf32>, vector<2x96xf32> -> vector<2x96xf32>
    %82 = vector.extract_strided_slice %81 {offsets = [0, 0], sizes = [2, 48], strides = [1, 1]} : vector<2x96xf32> to vector<2x48xf32>
    %83 = vector.extract_strided_slice %74 {offsets = [0, 0], sizes = [2, 16], strides = [1, 1]} : vector<2x32xf32> to vector<2x16xf32>
    %84 = vector.extract_strided_slice %73 {offsets = [0, 0], sizes = [1, 16], strides = [1, 1]} : vector<1x32xf32> to vector<1x16xf32>
    %85 = vector.extract_strided_slice %78 {offsets = [0, 0], sizes = [2, 16], strides = [1, 1]} : vector<2x48xf32> to vector<2x16xf32>
    %86 = vector.extract_strided_slice %82 {offsets = [0, 0], sizes = [2, 16], strides = [1, 1]} : vector<2x48xf32> to vector<2x16xf32>
    %87 = arith.addf %85, %86 : vector<2x16xf32>
    %88 = arith.negf %87 : vector<2x16xf32>
    %89 = math.exp %88 : vector<2x16xf32>
    %cst_64 = arith.constant 1.000000e+00 : f32
    %90 = vector.broadcast %cst_64 : f32 to vector<2x16xf32>
    %91 = arith.addf %90, %89 : vector<2x16xf32>
    %92 = arith.divf %90, %91 : vector<2x16xf32>
    %93 = vector.extract_strided_slice %78 {offsets = [0, 16], sizes = [2, 16], strides = [1, 1]} : vector<2x48xf32> to vector<2x16xf32>
    %94 = vector.extract_strided_slice %82 {offsets = [0, 16], sizes = [2, 16], strides = [1, 1]} : vector<2x48xf32> to vector<2x16xf32>
    %95 = arith.addf %93, %94 : vector<2x16xf32>
    %96 = arith.negf %95 : vector<2x16xf32>
    %97 = math.exp %96 : vector<2x16xf32>
    %cst_65 = arith.constant 1.000000e+00 : f32
    %98 = vector.broadcast %cst_65 : f32 to vector<2x16xf32>
    %99 = arith.addf %98, %97 : vector<2x16xf32>
    %100 = arith.divf %98, %99 : vector<2x16xf32>
    %101 = vector.extract_strided_slice %78 {offsets = [0, 32], sizes = [2, 16], strides = [1, 1]} : vector<2x48xf32> to vector<2x16xf32>
    %102 = vector.extract_strided_slice %82 {offsets = [0, 32], sizes = [2, 16], strides = [1, 1]} : vector<2x48xf32> to vector<2x16xf32>
    %103 = vector.broadcast %84 : vector<1x16xf32> to vector<2x16xf32>
    %104 = arith.addf %102, %103 : vector<2x16xf32>
    %105 = arith.mulf %92, %104 : vector<2x16xf32>
    %106 = arith.addf %101, %105 : vector<2x16xf32>
    %107 = math.tanh %106 : vector<2x16xf32>
    %cst_66 = arith.constant 1.000000e+00 : f32
    %108 = vector.broadcast %cst_66 : f32 to vector<2x16xf32>
    %109 = arith.subf %108, %100 : vector<2x16xf32>
    %110 = arith.mulf %109, %107 : vector<2x16xf32>
    %111 = arith.mulf %100, %83 : vector<2x16xf32>
    %112 = arith.addf %110, %111 : vector<2x16xf32>
    %113 = vector.extract_strided_slice %81 {offsets = [0, 48], sizes = [2, 48], strides = [1, 1]} : vector<2x96xf32> to vector<2x48xf32>
    %114 = vector.extract_strided_slice %74 {offsets = [0, 16], sizes = [2, 16], strides = [1, 1]} : vector<2x32xf32> to vector<2x16xf32>
    %115 = vector.extract_strided_slice %73 {offsets = [0, 16], sizes = [1, 16], strides = [1, 1]} : vector<1x32xf32> to vector<1x16xf32>
    %116 = vector.extract_strided_slice %80 {offsets = [0, 0], sizes = [2, 16], strides = [1, 1]} : vector<2x48xf32> to vector<2x16xf32>
    %117 = vector.extract_strided_slice %113 {offsets = [0, 0], sizes = [2, 16], strides = [1, 1]} : vector<2x48xf32> to vector<2x16xf32>
    %118 = arith.addf %116, %117 : vector<2x16xf32>
    %119 = arith.negf %118 : vector<2x16xf32>
    %120 = math.exp %119 : vector<2x16xf32>
    %cst_67 = arith.constant 1.000000e+00 : f32
    %121 = vector.broadcast %cst_67 : f32 to vector<2x16xf32>
    %122 = arith.addf %121, %120 : vector<2x16xf32>
    %123 = arith.divf %121, %122 : vector<2x16xf32>
    %124 = vector.extract_strided_slice %80 {offsets = [0, 16], sizes = [2, 16], strides = [1, 1]} : vector<2x48xf32> to vector<2x16xf32>
    %125 = vector.extract_strided_slice %113 {offsets = [0, 16], sizes = [2, 16], strides = [1, 1]} : vector<2x48xf32> to vector<2x16xf32>
    %126 = arith.addf %124, %125 : vector<2x16xf32>
    %127 = arith.negf %126 : vector<2x16xf32>
    %128 = math.exp %127 : vector<2x16xf32>
    %cst_68 = arith.constant 1.000000e+00 : f32
    %129 = vector.broadcast %cst_68 : f32 to vector<2x16xf32>
    %130 = arith.addf %129, %128 : vector<2x16xf32>
    %131 = arith.divf %129, %130 : vector<2x16xf32>
    %132 = vector.extract_strided_slice %80 {offsets = [0, 32], sizes = [2, 16], strides = [1, 1]} : vector<2x48xf32> to vector<2x16xf32>
    %133 = vector.extract_strided_slice %113 {offsets = [0, 32], sizes = [2, 16], strides = [1, 1]} : vector<2x48xf32> to vector<2x16xf32>
    %134 = vector.broadcast %115 : vector<1x16xf32> to vector<2x16xf32>
    %135 = arith.addf %133, %134 : vector<2x16xf32>
    %136 = arith.mulf %123, %135 : vector<2x16xf32>
    %137 = arith.addf %132, %136 : vector<2x16xf32>
    %138 = math.tanh %137 : vector<2x16xf32>
    %cst_69 = arith.constant 1.000000e+00 : f32
    %139 = vector.broadcast %cst_69 : f32 to vector<2x16xf32>
    %140 = arith.subf %139, %131 : vector<2x16xf32>
    %141 = arith.mulf %140, %138 : vector<2x16xf32>
    %142 = arith.mulf %131, %114 : vector<2x16xf32>
    %143 = arith.addf %141, %142 : vector<2x16xf32>
    %144 = vector.broadcast %75 : vector<2x1xf32> to vector<2x16xf32>
    %145 = arith.mulf %144, %112 : vector<2x16xf32>
    %cst_70 = arith.constant 1.000000e+00 : f32
    %146 = vector.broadcast %cst_70 : f32 to vector<2x1xf32>
    %147 = arith.subf %146, %75 : vector<2x1xf32>
    %148 = vector.extract_strided_slice %74 {offsets = [0, 0], sizes = [2, 16], strides = [1, 1]} : vector<2x32xf32> to vector<2x16xf32>
    %149 = vector.broadcast %147 : vector<2x1xf32> to vector<2x16xf32>
    %150 = arith.mulf %149, %148 : vector<2x16xf32>
    %151 = arith.addf %145, %150 : vector<2x16xf32>
    %152 = vector.broadcast %76 : vector<2x1xf32> to vector<2x16xf32>
    %153 = arith.mulf %152, %143 : vector<2x16xf32>
    %cst_71 = arith.constant 1.000000e+00 : f32
    %154 = vector.broadcast %cst_71 : f32 to vector<2x1xf32>
    %155 = arith.subf %154, %76 : vector<2x1xf32>
    %156 = vector.extract_strided_slice %74 {offsets = [0, 16], sizes = [2, 16], strides = [1, 1]} : vector<2x32xf32> to vector<2x16xf32>
    %157 = vector.broadcast %155 : vector<2x1xf32> to vector<2x16xf32>
    %158 = arith.mulf %157, %156 : vector<2x16xf32>
    %159 = arith.addf %153, %158 : vector<2x16xf32>
    %160 = vector.broadcast %75 : vector<2x1xf32> to vector<2x16xf32>
    %161 = arith.mulf %160, %151 : vector<2x16xf32>
    %c0_72 = arith.constant 0 : index
    %c0_73 = arith.constant 0 : index
    %c0_74 = arith.constant 0 : index
    %162 = vector.load %arg12[%c0_72, %c0_73, %c0_74] : memref<2x8x32xf32, #tpu.memory_space<vmem>>, vector<2x1x16xf32>
    %163 = vector.shape_cast %162 : vector<2x1x16xf32> to vector<2x16xf32>
    %164 = vector.shape_cast %161 : vector<2x16xf32> to vector<2x1x16xf32>
    tpu.vector_store %arg12[%c0_72, %c0_73, %c0_74], %164 {strides = array<i32>} : memref<2x8x32xf32, #tpu.memory_space<vmem>>, vector<2x1x16xf32>,
    %165 = vector.broadcast %76 : vector<2x1xf32> to vector<2x16xf32>
    %166 = arith.mulf %165, %159 : vector<2x16xf32>
    %c0_75 = arith.constant 0 : index
    %c7_76 = arith.constant 7 : index
    %c16 = arith.constant 16 : index
    %167 = vector.load %arg12[%c0_75, %c7_76, %c16] : memref<2x8x32xf32, #tpu.memory_space<vmem>>, vector<2x1x16xf32>
    %168 = vector.shape_cast %167 : vector<2x1x16xf32> to vector<2x16xf32>
    %169 = vector.shape_cast %166 : vector<2x16xf32> to vector<2x1x16xf32>
    tpu.vector_store %arg12[%c0_75, %c7_76, %c16], %169 {strides = array<i32>} : memref<2x8x32xf32, #tpu.memory_space<vmem>>, vector<2x1x16xf32>,
    %170 = tpu.concatenate %151, %159 in 1 : vector<2x16xf32>, vector<2x16xf32> -> vector<2x32xf32>
    %171 = vector.extract_strided_slice %5 {offsets = [0, 1], sizes = [2, 1], strides = [1, 1]} : vector<2x8xf32> to vector<2x1xf32>
    %172 = vector.extract_strided_slice %5 {offsets = [0, 6], sizes = [2, 1], strides = [1, 1]} : vector<2x8xf32> to vector<2x1xf32>
    %c0_77 = arith.constant 0 : index
    %c1_78 = arith.constant 1 : index
    %c0_79 = arith.constant 0 : index
    %173 = vector.load %arg11[%c0_77, %c1_78, %c0_79] : memref<2x8x96xf32, #tpu.memory_space<vmem>>, vector<2x1x48xf32>
    %174 = vector.shape_cast %173 : vector<2x1x48xf32> to vector<2x48xf32>
    %c0_80 = arith.constant 0 : index
    %c6_81 = arith.constant 6 : index
    %c48_82 = arith.constant 48 : index
    %175 = vector.load %arg11[%c0_80, %c6_81, %c48_82] : memref<2x8x96xf32, #tpu.memory_space<vmem>>, vector<2x1x48xf32>
    %176 = vector.shape_cast %175 : vector<2x1x48xf32> to vector<2x48xf32>
    %cst_83 = arith.constant dense<0.000000e+00> : vector<2x96xf32>
    %177 = tpu.matmul %170, %72, %cst_83 {dimension_numbers = #tpu.dot_dimension_numbers<[1], [0], [0], [1], [0, 0, 1, 1], [], []>} : vector<2x32xf32>, vector<32x96xf32>, vector<2x96xf32> -> vector<2x96xf32>
    %178 = vector.extract_strided_slice %177 {offsets = [0, 0], sizes = [2, 48], strides = [1, 1]} : vector<2x96xf32> to vector<2x48xf32>
    %179 = vector.extract_strided_slice %170 {offsets = [0, 0], sizes = [2, 16], strides = [1, 1]} : vector<2x32xf32> to vector<2x16xf32>
    %180 = vector.extract_strided_slice %73 {offsets = [0, 0], sizes = [1, 16], strides = [1, 1]} : vector<1x32xf32> to vector<1x16xf32>
    %181 = vector.extract_strided_slice %174 {offsets = [0, 0], sizes = [2, 16], strides = [1, 1]} : vector<2x48xf32> to vector<2x16xf32>
    %182 = vector.extract_strided_slice %178 {offsets = [0, 0], sizes = [2, 16], strides = [1, 1]} : vector<2x48xf32> to vector<2x16xf32>
    %183 = arith.addf %181, %182 : vector<2x16xf32>
    %184 = arith.negf %183 : vector<2x16xf32>
    %185 = math.exp %184 : vector<2x16xf32>
    %cst_84 = arith.constant 1.000000e+00 : f32
    %186 = vector.broadcast %cst_84 : f32 to vector<2x16xf32>
    %187 = arith.addf %186, %185 : vector<2x16xf32>
    %188 = arith.divf %186, %187 : vector<2x16xf32>
    %189 = vector.extract_strided_slice %174 {offsets = [0, 16], sizes = [2, 16], strides = [1, 1]} : vector<2x48xf32> to vector<2x16xf32>
    %190 = vector.extract_strided_slice %178 {offsets = [0, 16], sizes = [2, 16], strides = [1, 1]} : vector<2x48xf32> to vector<2x16xf32>
    %191 = arith.addf %189, %190 : vector<2x16xf32>
    %192 = arith.negf %191 : vector<2x16xf32>
    %193 = math.exp %192 : vector<2x16xf32>
    %cst_85 = arith.constant 1.000000e+00 : f32
    %194 = vector.broadcast %cst_85 : f32 to vector<2x16xf32>
    %195 = arith.addf %194, %193 : vector<2x16xf32>
    %196 = arith.divf %194, %195 : vector<2x16xf32>
    %197 = vector.extract_strided_slice %174 {offsets = [0, 32], sizes = [2, 16], strides = [1, 1]} : vector<2x48xf32> to vector<2x16xf32>
    %198 = vector.extract_strided_slice %178 {offsets = [0, 32], sizes = [2, 16], strides = [1, 1]} : vector<2x48xf32> to vector<2x16xf32>
    %199 = vector.broadcast %180 : vector<1x16xf32> to vector<2x16xf32>
    %200 = arith.addf %198, %199 : vector<2x16xf32>
    %201 = arith.mulf %188, %200 : vector<2x16xf32>
    %202 = arith.addf %197, %201 : vector<2x16xf32>
    %203 = math.tanh %202 : vector<2x16xf32>
    %cst_86 = arith.constant 1.000000e+00 : f32
    %204 = vector.broadcast %cst_86 : f32 to vector<2x16xf32>
    %205 = arith.subf %204, %196 : vector<2x16xf32>
    %206 = arith.mulf %205, %203 : vector<2x16xf32>
    %207 = arith.mulf %196, %179 : vector<2x16xf32>
    %208 = arith.addf %206, %207 : vector<2x16xf32>
    %209 = vector.extract_strided_slice %177 {offsets = [0, 48], sizes = [2, 48], strides = [1, 1]} : vector<2x96xf32> to vector<2x48xf32>
    %210 = vector.extract_strided_slice %170 {offsets = [0, 16], sizes = [2, 16], strides = [1, 1]} : vector<2x32xf32> to vector<2x16xf32>
    %211 = vector.extract_strided_slice %73 {offsets = [0, 16], sizes = [1, 16], strides = [1, 1]} : vector<1x32xf32> to vector<1x16xf32>
    %212 = vector.extract_strided_slice %176 {offsets = [0, 0], sizes = [2, 16], strides = [1, 1]} : vector<2x48xf32> to vector<2x16xf32>
    %213 = vector.extract_strided_slice %209 {offsets = [0, 0], sizes = [2, 16], strides = [1, 1]} : vector<2x48xf32> to vector<2x16xf32>
    %214 = arith.addf %212, %213 : vector<2x16xf32>
    %215 = arith.negf %214 : vector<2x16xf32>
    %216 = math.exp %215 : vector<2x16xf32>
    %cst_87 = arith.constant 1.000000e+00 : f32
    %217 = vector.broadcast %cst_87 : f32 to vector<2x16xf32>
    %218 = arith.addf %217, %216 : vector<2x16xf32>
    %219 = arith.divf %217, %218 : vector<2x16xf32>
    %220 = vector.extract_strided_slice %176 {offsets = [0, 16], sizes = [2, 16], strides = [1, 1]} : vector<2x48xf32> to vector<2x16xf32>
    %221 = vector.extract_strided_slice %209 {offsets = [0, 16], sizes = [2, 16], strides = [1, 1]} : vector<2x48xf32> to vector<2x16xf32>
    %222 = arith.addf %220, %221 : vector<2x16xf32>
    %223 = arith.negf %222 : vector<2x16xf32>
    %224 = math.exp %223 : vector<2x16xf32>
    %cst_88 = arith.constant 1.000000e+00 : f32
    %225 = vector.broadcast %cst_88 : f32 to vector<2x16xf32>
    %226 = arith.addf %225, %224 : vector<2x16xf32>
    %227 = arith.divf %225, %226 : vector<2x16xf32>
    %228 = vector.extract_strided_slice %176 {offsets = [0, 32], sizes = [2, 16], strides = [1, 1]} : vector<2x48xf32> to vector<2x16xf32>
    %229 = vector.extract_strided_slice %209 {offsets = [0, 32], sizes = [2, 16], strides = [1, 1]} : vector<2x48xf32> to vector<2x16xf32>
    %230 = vector.broadcast %211 : vector<1x16xf32> to vector<2x16xf32>
    %231 = arith.addf %229, %230 : vector<2x16xf32>
    %232 = arith.mulf %219, %231 : vector<2x16xf32>
    %233 = arith.addf %228, %232 : vector<2x16xf32>
    %234 = math.tanh %233 : vector<2x16xf32>
    %cst_89 = arith.constant 1.000000e+00 : f32
    %235 = vector.broadcast %cst_89 : f32 to vector<2x16xf32>
    %236 = arith.subf %235, %227 : vector<2x16xf32>
    %237 = arith.mulf %236, %234 : vector<2x16xf32>
    %238 = arith.mulf %227, %210 : vector<2x16xf32>
    %239 = arith.addf %237, %238 : vector<2x16xf32>
    %240 = vector.broadcast %171 : vector<2x1xf32> to vector<2x16xf32>
    %241 = arith.mulf %240, %208 : vector<2x16xf32>
    %cst_90 = arith.constant 1.000000e+00 : f32
    %242 = vector.broadcast %cst_90 : f32 to vector<2x1xf32>
    %243 = arith.subf %242, %171 : vector<2x1xf32>
    %244 = vector.extract_strided_slice %170 {offsets = [0, 0], sizes = [2, 16], strides = [1, 1]} : vector<2x32xf32> to vector<2x16xf32>
    %245 = vector.broadcast %243 : vector<2x1xf32> to vector<2x16xf32>
    %246 = arith.mulf %245, %244 : vector<2x16xf32>
    %247 = arith.addf %241, %246 : vector<2x16xf32>
    %248 = vector.broadcast %172 : vector<2x1xf32> to vector<2x16xf32>
    %249 = arith.mulf %248, %239 : vector<2x16xf32>
    %cst_91 = arith.constant 1.000000e+00 : f32
    %250 = vector.broadcast %cst_91 : f32 to vector<2x1xf32>
    %251 = arith.subf %250, %172 : vector<2x1xf32>
    %252 = vector.extract_strided_slice %170 {offsets = [0, 16], sizes = [2, 16], strides = [1, 1]} : vector<2x32xf32> to vector<2x16xf32>
    %253 = vector.broadcast %251 : vector<2x1xf32> to vector<2x16xf32>
    %254 = arith.mulf %253, %252 : vector<2x16xf32>
    %255 = arith.addf %249, %254 : vector<2x16xf32>
    %256 = vector.broadcast %171 : vector<2x1xf32> to vector<2x16xf32>
    %257 = arith.mulf %256, %247 : vector<2x16xf32>
    %c0_92 = arith.constant 0 : index
    %c1_93 = arith.constant 1 : index
    %c0_94 = arith.constant 0 : index
    %258 = vector.load %arg12[%c0_92, %c1_93, %c0_94] : memref<2x8x32xf32, #tpu.memory_space<vmem>>, vector<2x1x16xf32>
    %259 = vector.shape_cast %258 : vector<2x1x16xf32> to vector<2x16xf32>
    %260 = vector.shape_cast %257 : vector<2x16xf32> to vector<2x1x16xf32>
    tpu.vector_store %arg12[%c0_92, %c1_93, %c0_94], %260 {strides = array<i32>} : memref<2x8x32xf32, #tpu.memory_space<vmem>>, vector<2x1x16xf32>,
    %261 = vector.broadcast %172 : vector<2x1xf32> to vector<2x16xf32>
    %262 = arith.mulf %261, %255 : vector<2x16xf32>
    %c0_95 = arith.constant 0 : index
    %c6_96 = arith.constant 6 : index
    %c16_97 = arith.constant 16 : index
    %263 = vector.load %arg12[%c0_95, %c6_96, %c16_97] : memref<2x8x32xf32, #tpu.memory_space<vmem>>, vector<2x1x16xf32>
    %264 = vector.shape_cast %263 : vector<2x1x16xf32> to vector<2x16xf32>
    %265 = vector.shape_cast %262 : vector<2x16xf32> to vector<2x1x16xf32>
    tpu.vector_store %arg12[%c0_95, %c6_96, %c16_97], %265 {strides = array<i32>} : memref<2x8x32xf32, #tpu.memory_space<vmem>>, vector<2x1x16xf32>,
    %266 = tpu.concatenate %247, %255 in 1 : vector<2x16xf32>, vector<2x16xf32> -> vector<2x32xf32>
    %267 = vector.extract_strided_slice %5 {offsets = [0, 2], sizes = [2, 1], strides = [1, 1]} : vector<2x8xf32> to vector<2x1xf32>
    %268 = vector.extract_strided_slice %5 {offsets = [0, 5], sizes = [2, 1], strides = [1, 1]} : vector<2x8xf32> to vector<2x1xf32>
    %c0_98 = arith.constant 0 : index
    %c2_99 = arith.constant 2 : index
    %c0_100 = arith.constant 0 : index
    %269 = vector.load %arg11[%c0_98, %c2_99, %c0_100] : memref<2x8x96xf32, #tpu.memory_space<vmem>>, vector<2x1x48xf32>
    %270 = vector.shape_cast %269 : vector<2x1x48xf32> to vector<2x48xf32>
    %c0_101 = arith.constant 0 : index
    %c5_102 = arith.constant 5 : index
    %c48_103 = arith.constant 48 : index
    %271 = vector.load %arg11[%c0_101, %c5_102, %c48_103] : memref<2x8x96xf32, #tpu.memory_space<vmem>>, vector<2x1x48xf32>
    %272 = vector.shape_cast %271 : vector<2x1x48xf32> to vector<2x48xf32>
    %cst_104 = arith.constant dense<0.000000e+00> : vector<2x96xf32>
    %273 = tpu.matmul %266, %72, %cst_104 {dimension_numbers = #tpu.dot_dimension_numbers<[1], [0], [0], [1], [0, 0, 1, 1], [], []>} : vector<2x32xf32>, vector<32x96xf32>, vector<2x96xf32> -> vector<2x96xf32>
    %274 = vector.extract_strided_slice %273 {offsets = [0, 0], sizes = [2, 48], strides = [1, 1]} : vector<2x96xf32> to vector<2x48xf32>
    %275 = vector.extract_strided_slice %266 {offsets = [0, 0], sizes = [2, 16], strides = [1, 1]} : vector<2x32xf32> to vector<2x16xf32>
    %276 = vector.extract_strided_slice %73 {offsets = [0, 0], sizes = [1, 16], strides = [1, 1]} : vector<1x32xf32> to vector<1x16xf32>
    %277 = vector.extract_strided_slice %270 {offsets = [0, 0], sizes = [2, 16], strides = [1, 1]} : vector<2x48xf32> to vector<2x16xf32>
    %278 = vector.extract_strided_slice %274 {offsets = [0, 0], sizes = [2, 16], strides = [1, 1]} : vector<2x48xf32> to vector<2x16xf32>
    %279 = arith.addf %277, %278 : vector<2x16xf32>
    %280 = arith.negf %279 : vector<2x16xf32>
    %281 = math.exp %280 : vector<2x16xf32>
    %cst_105 = arith.constant 1.000000e+00 : f32
    %282 = vector.broadcast %cst_105 : f32 to vector<2x16xf32>
    %283 = arith.addf %282, %281 : vector<2x16xf32>
    %284 = arith.divf %282, %283 : vector<2x16xf32>
    %285 = vector.extract_strided_slice %270 {offsets = [0, 16], sizes = [2, 16], strides = [1, 1]} : vector<2x48xf32> to vector<2x16xf32>
    %286 = vector.extract_strided_slice %274 {offsets = [0, 16], sizes = [2, 16], strides = [1, 1]} : vector<2x48xf32> to vector<2x16xf32>
    %287 = arith.addf %285, %286 : vector<2x16xf32>
    %288 = arith.negf %287 : vector<2x16xf32>
    %289 = math.exp %288 : vector<2x16xf32>
    %cst_106 = arith.constant 1.000000e+00 : f32
    %290 = vector.broadcast %cst_106 : f32 to vector<2x16xf32>
    %291 = arith.addf %290, %289 : vector<2x16xf32>
    %292 = arith.divf %290, %291 : vector<2x16xf32>
    %293 = vector.extract_strided_slice %270 {offsets = [0, 32], sizes = [2, 16], strides = [1, 1]} : vector<2x48xf32> to vector<2x16xf32>
    %294 = vector.extract_strided_slice %274 {offsets = [0, 32], sizes = [2, 16], strides = [1, 1]} : vector<2x48xf32> to vector<2x16xf32>
    %295 = vector.broadcast %276 : vector<1x16xf32> to vector<2x16xf32>
    %296 = arith.addf %294, %295 : vector<2x16xf32>
    %297 = arith.mulf %284, %296 : vector<2x16xf32>
    %298 = arith.addf %293, %297 : vector<2x16xf32>
    %299 = math.tanh %298 : vector<2x16xf32>
    %cst_107 = arith.constant 1.000000e+00 : f32
    %300 = vector.broadcast %cst_107 : f32 to vector<2x16xf32>
    %301 = arith.subf %300, %292 : vector<2x16xf32>
    %302 = arith.mulf %301, %299 : vector<2x16xf32>
    %303 = arith.mulf %292, %275 : vector<2x16xf32>
    %304 = arith.addf %302, %303 : vector<2x16xf32>
    %305 = vector.extract_strided_slice %273 {offsets = [0, 48], sizes = [2, 48], strides = [1, 1]} : vector<2x96xf32> to vector<2x48xf32>
    %306 = vector.extract_strided_slice %266 {offsets = [0, 16], sizes = [2, 16], strides = [1, 1]} : vector<2x32xf32> to vector<2x16xf32>
    %307 = vector.extract_strided_slice %73 {offsets = [0, 16], sizes = [1, 16], strides = [1, 1]} : vector<1x32xf32> to vector<1x16xf32>
    %308 = vector.extract_strided_slice %272 {offsets = [0, 0], sizes = [2, 16], strides = [1, 1]} : vector<2x48xf32> to vector<2x16xf32>
    %309 = vector.extract_strided_slice %305 {offsets = [0, 0], sizes = [2, 16], strides = [1, 1]} : vector<2x48xf32> to vector<2x16xf32>
    %310 = arith.addf %308, %309 : vector<2x16xf32>
    %311 = arith.negf %310 : vector<2x16xf32>
    %312 = math.exp %311 : vector<2x16xf32>
    %cst_108 = arith.constant 1.000000e+00 : f32
    %313 = vector.broadcast %cst_108 : f32 to vector<2x16xf32>
    %314 = arith.addf %313, %312 : vector<2x16xf32>
    %315 = arith.divf %313, %314 : vector<2x16xf32>
    %316 = vector.extract_strided_slice %272 {offsets = [0, 16], sizes = [2, 16], strides = [1, 1]} : vector<2x48xf32> to vector<2x16xf32>
    %317 = vector.extract_strided_slice %305 {offsets = [0, 16], sizes = [2, 16], strides = [1, 1]} : vector<2x48xf32> to vector<2x16xf32>
    %318 = arith.addf %316, %317 : vector<2x16xf32>
    %319 = arith.negf %318 : vector<2x16xf32>
    %320 = math.exp %319 : vector<2x16xf32>
    %cst_109 = arith.constant 1.000000e+00 : f32
    %321 = vector.broadcast %cst_109 : f32 to vector<2x16xf32>
    %322 = arith.addf %321, %320 : vector<2x16xf32>
    %323 = arith.divf %321, %322 : vector<2x16xf32>
    %324 = vector.extract_strided_slice %272 {offsets = [0, 32], sizes = [2, 16], strides = [1, 1]} : vector<2x48xf32> to vector<2x16xf32>
    %325 = vector.extract_strided_slice %305 {offsets = [0, 32], sizes = [2, 16], strides = [1, 1]} : vector<2x48xf32> to vector<2x16xf32>
    %326 = vector.broadcast %307 : vector<1x16xf32> to vector<2x16xf32>
    %327 = arith.addf %325, %326 : vector<2x16xf32>
    %328 = arith.mulf %315, %327 : vector<2x16xf32>
    %329 = arith.addf %324, %328 : vector<2x16xf32>
    %330 = math.tanh %329 : vector<2x16xf32>
    %cst_110 = arith.constant 1.000000e+00 : f32
    %331 = vector.broadcast %cst_110 : f32 to vector<2x16xf32>
    %332 = arith.subf %331, %323 : vector<2x16xf32>
    %333 = arith.mulf %332, %330 : vector<2x16xf32>
    %334 = arith.mulf %323, %306 : vector<2x16xf32>
    %335 = arith.addf %333, %334 : vector<2x16xf32>
    %336 = vector.broadcast %267 : vector<2x1xf32> to vector<2x16xf32>
    %337 = arith.mulf %336, %304 : vector<2x16xf32>
    %cst_111 = arith.constant 1.000000e+00 : f32
    %338 = vector.broadcast %cst_111 : f32 to vector<2x1xf32>
    %339 = arith.subf %338, %267 : vector<2x1xf32>
    %340 = vector.extract_strided_slice %266 {offsets = [0, 0], sizes = [2, 16], strides = [1, 1]} : vector<2x32xf32> to vector<2x16xf32>
    %341 = vector.broadcast %339 : vector<2x1xf32> to vector<2x16xf32>
    %342 = arith.mulf %341, %340 : vector<2x16xf32>
    %343 = arith.addf %337, %342 : vector<2x16xf32>
    %344 = vector.broadcast %268 : vector<2x1xf32> to vector<2x16xf32>
    %345 = arith.mulf %344, %335 : vector<2x16xf32>
    %cst_112 = arith.constant 1.000000e+00 : f32
    %346 = vector.broadcast %cst_112 : f32 to vector<2x1xf32>
    %347 = arith.subf %346, %268 : vector<2x1xf32>
    %348 = vector.extract_strided_slice %266 {offsets = [0, 16], sizes = [2, 16], strides = [1, 1]} : vector<2x32xf32> to vector<2x16xf32>
    %349 = vector.broadcast %347 : vector<2x1xf32> to vector<2x16xf32>
    %350 = arith.mulf %349, %348 : vector<2x16xf32>
    %351 = arith.addf %345, %350 : vector<2x16xf32>
    %352 = vector.broadcast %267 : vector<2x1xf32> to vector<2x16xf32>
    %353 = arith.mulf %352, %343 : vector<2x16xf32>
    %c0_113 = arith.constant 0 : index
    %c2_114 = arith.constant 2 : index
    %c0_115 = arith.constant 0 : index
    %354 = vector.load %arg12[%c0_113, %c2_114, %c0_115] : memref<2x8x32xf32, #tpu.memory_space<vmem>>, vector<2x1x16xf32>
    %355 = vector.shape_cast %354 : vector<2x1x16xf32> to vector<2x16xf32>
    %356 = vector.shape_cast %353 : vector<2x16xf32> to vector<2x1x16xf32>
    tpu.vector_store %arg12[%c0_113, %c2_114, %c0_115], %356 {strides = array<i32>} : memref<2x8x32xf32, #tpu.memory_space<vmem>>, vector<2x1x16xf32>,
    %357 = vector.broadcast %268 : vector<2x1xf32> to vector<2x16xf32>
    %358 = arith.mulf %357, %351 : vector<2x16xf32>
    %c0_116 = arith.constant 0 : index
    %c5_117 = arith.constant 5 : index
    %c16_118 = arith.constant 16 : index
    %359 = vector.load %arg12[%c0_116, %c5_117, %c16_118] : memref<2x8x32xf32, #tpu.memory_space<vmem>>, vector<2x1x16xf32>
    %360 = vector.shape_cast %359 : vector<2x1x16xf32> to vector<2x16xf32>
    %361 = vector.shape_cast %358 : vector<2x16xf32> to vector<2x1x16xf32>
    tpu.vector_store %arg12[%c0_116, %c5_117, %c16_118], %361 {strides = array<i32>} : memref<2x8x32xf32, #tpu.memory_space<vmem>>, vector<2x1x16xf32>,
    %362 = tpu.concatenate %343, %351 in 1 : vector<2x16xf32>, vector<2x16xf32> -> vector<2x32xf32>
    %363 = vector.extract_strided_slice %5 {offsets = [0, 3], sizes = [2, 1], strides = [1, 1]} : vector<2x8xf32> to vector<2x1xf32>
    %364 = vector.extract_strided_slice %5 {offsets = [0, 4], sizes = [2, 1], strides = [1, 1]} : vector<2x8xf32> to vector<2x1xf32>
    %c0_119 = arith.constant 0 : index
    %c3_120 = arith.constant 3 : index
    %c0_121 = arith.constant 0 : index
    %365 = vector.load %arg11[%c0_119, %c3_120, %c0_121] : memref<2x8x96xf32, #tpu.memory_space<vmem>>, vector<2x1x48xf32>
    %366 = vector.shape_cast %365 : vector<2x1x48xf32> to vector<2x48xf32>
    %c0_122 = arith.constant 0 : index
    %c4_123 = arith.constant 4 : index
    %c48_124 = arith.constant 48 : index
    %367 = vector.load %arg11[%c0_122, %c4_123, %c48_124] : memref<2x8x96xf32, #tpu.memory_space<vmem>>, vector<2x1x48xf32>
    %368 = vector.shape_cast %367 : vector<2x1x48xf32> to vector<2x48xf32>
    %cst_125 = arith.constant dense<0.000000e+00> : vector<2x96xf32>
    %369 = tpu.matmul %362, %72, %cst_125 {dimension_numbers = #tpu.dot_dimension_numbers<[1], [0], [0], [1], [0, 0, 1, 1], [], []>} : vector<2x32xf32>, vector<32x96xf32>, vector<2x96xf32> -> vector<2x96xf32>
    %370 = vector.extract_strided_slice %369 {offsets = [0, 0], sizes = [2, 48], strides = [1, 1]} : vector<2x96xf32> to vector<2x48xf32>
    %371 = vector.extract_strided_slice %362 {offsets = [0, 0], sizes = [2, 16], strides = [1, 1]} : vector<2x32xf32> to vector<2x16xf32>
    %372 = vector.extract_strided_slice %73 {offsets = [0, 0], sizes = [1, 16], strides = [1, 1]} : vector<1x32xf32> to vector<1x16xf32>
    %373 = vector.extract_strided_slice %366 {offsets = [0, 0], sizes = [2, 16], strides = [1, 1]} : vector<2x48xf32> to vector<2x16xf32>
    %374 = vector.extract_strided_slice %370 {offsets = [0, 0], sizes = [2, 16], strides = [1, 1]} : vector<2x48xf32> to vector<2x16xf32>
    %375 = arith.addf %373, %374 : vector<2x16xf32>
    %376 = arith.negf %375 : vector<2x16xf32>
    %377 = math.exp %376 : vector<2x16xf32>
    %cst_126 = arith.constant 1.000000e+00 : f32
    %378 = vector.broadcast %cst_126 : f32 to vector<2x16xf32>
    %379 = arith.addf %378, %377 : vector<2x16xf32>
    %380 = arith.divf %378, %379 : vector<2x16xf32>
    %381 = vector.extract_strided_slice %366 {offsets = [0, 16], sizes = [2, 16], strides = [1, 1]} : vector<2x48xf32> to vector<2x16xf32>
    %382 = vector.extract_strided_slice %370 {offsets = [0, 16], sizes = [2, 16], strides = [1, 1]} : vector<2x48xf32> to vector<2x16xf32>
    %383 = arith.addf %381, %382 : vector<2x16xf32>
    %384 = arith.negf %383 : vector<2x16xf32>
    %385 = math.exp %384 : vector<2x16xf32>
    %cst_127 = arith.constant 1.000000e+00 : f32
    %386 = vector.broadcast %cst_127 : f32 to vector<2x16xf32>
    %387 = arith.addf %386, %385 : vector<2x16xf32>
    %388 = arith.divf %386, %387 : vector<2x16xf32>
    %389 = vector.extract_strided_slice %366 {offsets = [0, 32], sizes = [2, 16], strides = [1, 1]} : vector<2x48xf32> to vector<2x16xf32>
    %390 = vector.extract_strided_slice %370 {offsets = [0, 32], sizes = [2, 16], strides = [1, 1]} : vector<2x48xf32> to vector<2x16xf32>
    %391 = vector.broadcast %372 : vector<1x16xf32> to vector<2x16xf32>
    %392 = arith.addf %390, %391 : vector<2x16xf32>
    %393 = arith.mulf %380, %392 : vector<2x16xf32>
    %394 = arith.addf %389, %393 : vector<2x16xf32>
    %395 = math.tanh %394 : vector<2x16xf32>
    %cst_128 = arith.constant 1.000000e+00 : f32
    %396 = vector.broadcast %cst_128 : f32 to vector<2x16xf32>
    %397 = arith.subf %396, %388 : vector<2x16xf32>
    %398 = arith.mulf %397, %395 : vector<2x16xf32>
    %399 = arith.mulf %388, %371 : vector<2x16xf32>
    %400 = arith.addf %398, %399 : vector<2x16xf32>
    %401 = vector.extract_strided_slice %369 {offsets = [0, 48], sizes = [2, 48], strides = [1, 1]} : vector<2x96xf32> to vector<2x48xf32>
    %402 = vector.extract_strided_slice %362 {offsets = [0, 16], sizes = [2, 16], strides = [1, 1]} : vector<2x32xf32> to vector<2x16xf32>
    %403 = vector.extract_strided_slice %73 {offsets = [0, 16], sizes = [1, 16], strides = [1, 1]} : vector<1x32xf32> to vector<1x16xf32>
    %404 = vector.extract_strided_slice %368 {offsets = [0, 0], sizes = [2, 16], strides = [1, 1]} : vector<2x48xf32> to vector<2x16xf32>
    %405 = vector.extract_strided_slice %401 {offsets = [0, 0], sizes = [2, 16], strides = [1, 1]} : vector<2x48xf32> to vector<2x16xf32>
    %406 = arith.addf %404, %405 : vector<2x16xf32>
    %407 = arith.negf %406 : vector<2x16xf32>
    %408 = math.exp %407 : vector<2x16xf32>
    %cst_129 = arith.constant 1.000000e+00 : f32
    %409 = vector.broadcast %cst_129 : f32 to vector<2x16xf32>
    %410 = arith.addf %409, %408 : vector<2x16xf32>
    %411 = arith.divf %409, %410 : vector<2x16xf32>
    %412 = vector.extract_strided_slice %368 {offsets = [0, 16], sizes = [2, 16], strides = [1, 1]} : vector<2x48xf32> to vector<2x16xf32>
    %413 = vector.extract_strided_slice %401 {offsets = [0, 16], sizes = [2, 16], strides = [1, 1]} : vector<2x48xf32> to vector<2x16xf32>
    %414 = arith.addf %412, %413 : vector<2x16xf32>
    %415 = arith.negf %414 : vector<2x16xf32>
    %416 = math.exp %415 : vector<2x16xf32>
    %cst_130 = arith.constant 1.000000e+00 : f32
    %417 = vector.broadcast %cst_130 : f32 to vector<2x16xf32>
    %418 = arith.addf %417, %416 : vector<2x16xf32>
    %419 = arith.divf %417, %418 : vector<2x16xf32>
    %420 = vector.extract_strided_slice %368 {offsets = [0, 32], sizes = [2, 16], strides = [1, 1]} : vector<2x48xf32> to vector<2x16xf32>
    %421 = vector.extract_strided_slice %401 {offsets = [0, 32], sizes = [2, 16], strides = [1, 1]} : vector<2x48xf32> to vector<2x16xf32>
    %422 = vector.broadcast %403 : vector<1x16xf32> to vector<2x16xf32>
    %423 = arith.addf %421, %422 : vector<2x16xf32>
    %424 = arith.mulf %411, %423 : vector<2x16xf32>
    %425 = arith.addf %420, %424 : vector<2x16xf32>
    %426 = math.tanh %425 : vector<2x16xf32>
    %cst_131 = arith.constant 1.000000e+00 : f32
    %427 = vector.broadcast %cst_131 : f32 to vector<2x16xf32>
    %428 = arith.subf %427, %419 : vector<2x16xf32>
    %429 = arith.mulf %428, %426 : vector<2x16xf32>
    %430 = arith.mulf %419, %402 : vector<2x16xf32>
    %431 = arith.addf %429, %430 : vector<2x16xf32>
    %432 = vector.broadcast %363 : vector<2x1xf32> to vector<2x16xf32>
    %433 = arith.mulf %432, %400 : vector<2x16xf32>
    %cst_132 = arith.constant 1.000000e+00 : f32
    %434 = vector.broadcast %cst_132 : f32 to vector<2x1xf32>
    %435 = arith.subf %434, %363 : vector<2x1xf32>
    %436 = vector.extract_strided_slice %362 {offsets = [0, 0], sizes = [2, 16], strides = [1, 1]} : vector<2x32xf32> to vector<2x16xf32>
    %437 = vector.broadcast %435 : vector<2x1xf32> to vector<2x16xf32>
    %438 = arith.mulf %437, %436 : vector<2x16xf32>
    %439 = arith.addf %433, %438 : vector<2x16xf32>
    %440 = vector.broadcast %364 : vector<2x1xf32> to vector<2x16xf32>
    %441 = arith.mulf %440, %431 : vector<2x16xf32>
    %cst_133 = arith.constant 1.000000e+00 : f32
    %442 = vector.broadcast %cst_133 : f32 to vector<2x1xf32>
    %443 = arith.subf %442, %364 : vector<2x1xf32>
    %444 = vector.extract_strided_slice %362 {offsets = [0, 16], sizes = [2, 16], strides = [1, 1]} : vector<2x32xf32> to vector<2x16xf32>
    %445 = vector.broadcast %443 : vector<2x1xf32> to vector<2x16xf32>
    %446 = arith.mulf %445, %444 : vector<2x16xf32>
    %447 = arith.addf %441, %446 : vector<2x16xf32>
    %448 = vector.broadcast %363 : vector<2x1xf32> to vector<2x16xf32>
    %449 = arith.mulf %448, %439 : vector<2x16xf32>
    %c0_134 = arith.constant 0 : index
    %c3_135 = arith.constant 3 : index
    %c0_136 = arith.constant 0 : index
    %450 = vector.load %arg12[%c0_134, %c3_135, %c0_136] : memref<2x8x32xf32, #tpu.memory_space<vmem>>, vector<2x1x16xf32>
    %451 = vector.shape_cast %450 : vector<2x1x16xf32> to vector<2x16xf32>
    %452 = vector.shape_cast %449 : vector<2x16xf32> to vector<2x1x16xf32>
    tpu.vector_store %arg12[%c0_134, %c3_135, %c0_136], %452 {strides = array<i32>} : memref<2x8x32xf32, #tpu.memory_space<vmem>>, vector<2x1x16xf32>,
    %453 = vector.broadcast %364 : vector<2x1xf32> to vector<2x16xf32>
    %454 = arith.mulf %453, %447 : vector<2x16xf32>
    %c0_137 = arith.constant 0 : index
    %c4_138 = arith.constant 4 : index
    %c16_139 = arith.constant 16 : index
    %455 = vector.load %arg12[%c0_137, %c4_138, %c16_139] : memref<2x8x32xf32, #tpu.memory_space<vmem>>, vector<2x1x16xf32>
    %456 = vector.shape_cast %455 : vector<2x1x16xf32> to vector<2x16xf32>
    %457 = vector.shape_cast %454 : vector<2x16xf32> to vector<2x1x16xf32>
    tpu.vector_store %arg12[%c0_137, %c4_138, %c16_139], %457 {strides = array<i32>} : memref<2x8x32xf32, #tpu.memory_space<vmem>>, vector<2x1x16xf32>,
    %458 = tpu.concatenate %439, %447 in 1 : vector<2x16xf32>, vector<2x16xf32> -> vector<2x32xf32>
    %459 = vector.extract_strided_slice %5 {offsets = [0, 4], sizes = [2, 1], strides = [1, 1]} : vector<2x8xf32> to vector<2x1xf32>
    %460 = vector.extract_strided_slice %5 {offsets = [0, 3], sizes = [2, 1], strides = [1, 1]} : vector<2x8xf32> to vector<2x1xf32>
    %c0_140 = arith.constant 0 : index
    %c4_141 = arith.constant 4 : index
    %c0_142 = arith.constant 0 : index
    %461 = vector.load %arg11[%c0_140, %c4_141, %c0_142] : memref<2x8x96xf32, #tpu.memory_space<vmem>>, vector<2x1x48xf32>
    %462 = vector.shape_cast %461 : vector<2x1x48xf32> to vector<2x48xf32>
    %c0_143 = arith.constant 0 : index
    %c3_144 = arith.constant 3 : index
    %c48_145 = arith.constant 48 : index
    %463 = vector.load %arg11[%c0_143, %c3_144, %c48_145] : memref<2x8x96xf32, #tpu.memory_space<vmem>>, vector<2x1x48xf32>
    %464 = vector.shape_cast %463 : vector<2x1x48xf32> to vector<2x48xf32>
    %cst_146 = arith.constant dense<0.000000e+00> : vector<2x96xf32>
    %465 = tpu.matmul %458, %72, %cst_146 {dimension_numbers = #tpu.dot_dimension_numbers<[1], [0], [0], [1], [0, 0, 1, 1], [], []>} : vector<2x32xf32>, vector<32x96xf32>, vector<2x96xf32> -> vector<2x96xf32>
    %466 = vector.extract_strided_slice %465 {offsets = [0, 0], sizes = [2, 48], strides = [1, 1]} : vector<2x96xf32> to vector<2x48xf32>
    %467 = vector.extract_strided_slice %458 {offsets = [0, 0], sizes = [2, 16], strides = [1, 1]} : vector<2x32xf32> to vector<2x16xf32>
    %468 = vector.extract_strided_slice %73 {offsets = [0, 0], sizes = [1, 16], strides = [1, 1]} : vector<1x32xf32> to vector<1x16xf32>
    %469 = vector.extract_strided_slice %462 {offsets = [0, 0], sizes = [2, 16], strides = [1, 1]} : vector<2x48xf32> to vector<2x16xf32>
    %470 = vector.extract_strided_slice %466 {offsets = [0, 0], sizes = [2, 16], strides = [1, 1]} : vector<2x48xf32> to vector<2x16xf32>
    %471 = arith.addf %469, %470 : vector<2x16xf32>
    %472 = arith.negf %471 : vector<2x16xf32>
    %473 = math.exp %472 : vector<2x16xf32>
    %cst_147 = arith.constant 1.000000e+00 : f32
    %474 = vector.broadcast %cst_147 : f32 to vector<2x16xf32>
    %475 = arith.addf %474, %473 : vector<2x16xf32>
    %476 = arith.divf %474, %475 : vector<2x16xf32>
    %477 = vector.extract_strided_slice %462 {offsets = [0, 16], sizes = [2, 16], strides = [1, 1]} : vector<2x48xf32> to vector<2x16xf32>
    %478 = vector.extract_strided_slice %466 {offsets = [0, 16], sizes = [2, 16], strides = [1, 1]} : vector<2x48xf32> to vector<2x16xf32>
    %479 = arith.addf %477, %478 : vector<2x16xf32>
    %480 = arith.negf %479 : vector<2x16xf32>
    %481 = math.exp %480 : vector<2x16xf32>
    %cst_148 = arith.constant 1.000000e+00 : f32
    %482 = vector.broadcast %cst_148 : f32 to vector<2x16xf32>
    %483 = arith.addf %482, %481 : vector<2x16xf32>
    %484 = arith.divf %482, %483 : vector<2x16xf32>
    %485 = vector.extract_strided_slice %462 {offsets = [0, 32], sizes = [2, 16], strides = [1, 1]} : vector<2x48xf32> to vector<2x16xf32>
    %486 = vector.extract_strided_slice %466 {offsets = [0, 32], sizes = [2, 16], strides = [1, 1]} : vector<2x48xf32> to vector<2x16xf32>
    %487 = vector.broadcast %468 : vector<1x16xf32> to vector<2x16xf32>
    %488 = arith.addf %486, %487 : vector<2x16xf32>
    %489 = arith.mulf %476, %488 : vector<2x16xf32>
    %490 = arith.addf %485, %489 : vector<2x16xf32>
    %491 = math.tanh %490 : vector<2x16xf32>
    %cst_149 = arith.constant 1.000000e+00 : f32
    %492 = vector.broadcast %cst_149 : f32 to vector<2x16xf32>
    %493 = arith.subf %492, %484 : vector<2x16xf32>
    %494 = arith.mulf %493, %491 : vector<2x16xf32>
    %495 = arith.mulf %484, %467 : vector<2x16xf32>
    %496 = arith.addf %494, %495 : vector<2x16xf32>
    %497 = vector.extract_strided_slice %465 {offsets = [0, 48], sizes = [2, 48], strides = [1, 1]} : vector<2x96xf32> to vector<2x48xf32>
    %498 = vector.extract_strided_slice %458 {offsets = [0, 16], sizes = [2, 16], strides = [1, 1]} : vector<2x32xf32> to vector<2x16xf32>
    %499 = vector.extract_strided_slice %73 {offsets = [0, 16], sizes = [1, 16], strides = [1, 1]} : vector<1x32xf32> to vector<1x16xf32>
    %500 = vector.extract_strided_slice %464 {offsets = [0, 0], sizes = [2, 16], strides = [1, 1]} : vector<2x48xf32> to vector<2x16xf32>
    %501 = vector.extract_strided_slice %497 {offsets = [0, 0], sizes = [2, 16], strides = [1, 1]} : vector<2x48xf32> to vector<2x16xf32>
    %502 = arith.addf %500, %501 : vector<2x16xf32>
    %503 = arith.negf %502 : vector<2x16xf32>
    %504 = math.exp %503 : vector<2x16xf32>
    %cst_150 = arith.constant 1.000000e+00 : f32
    %505 = vector.broadcast %cst_150 : f32 to vector<2x16xf32>
    %506 = arith.addf %505, %504 : vector<2x16xf32>
    %507 = arith.divf %505, %506 : vector<2x16xf32>
    %508 = vector.extract_strided_slice %464 {offsets = [0, 16], sizes = [2, 16], strides = [1, 1]} : vector<2x48xf32> to vector<2x16xf32>
    %509 = vector.extract_strided_slice %497 {offsets = [0, 16], sizes = [2, 16], strides = [1, 1]} : vector<2x48xf32> to vector<2x16xf32>
    %510 = arith.addf %508, %509 : vector<2x16xf32>
    %511 = arith.negf %510 : vector<2x16xf32>
    %512 = math.exp %511 : vector<2x16xf32>
    %cst_151 = arith.constant 1.000000e+00 : f32
    %513 = vector.broadcast %cst_151 : f32 to vector<2x16xf32>
    %514 = arith.addf %513, %512 : vector<2x16xf32>
    %515 = arith.divf %513, %514 : vector<2x16xf32>
    %516 = vector.extract_strided_slice %464 {offsets = [0, 32], sizes = [2, 16], strides = [1, 1]} : vector<2x48xf32> to vector<2x16xf32>
    %517 = vector.extract_strided_slice %497 {offsets = [0, 32], sizes = [2, 16], strides = [1, 1]} : vector<2x48xf32> to vector<2x16xf32>
    %518 = vector.broadcast %499 : vector<1x16xf32> to vector<2x16xf32>
    %519 = arith.addf %517, %518 : vector<2x16xf32>
    %520 = arith.mulf %507, %519 : vector<2x16xf32>
    %521 = arith.addf %516, %520 : vector<2x16xf32>
    %522 = math.tanh %521 : vector<2x16xf32>
    %cst_152 = arith.constant 1.000000e+00 : f32
    %523 = vector.broadcast %cst_152 : f32 to vector<2x16xf32>
    %524 = arith.subf %523, %515 : vector<2x16xf32>
    %525 = arith.mulf %524, %522 : vector<2x16xf32>
    %526 = arith.mulf %515, %498 : vector<2x16xf32>
    %527 = arith.addf %525, %526 : vector<2x16xf32>
    %528 = vector.broadcast %459 : vector<2x1xf32> to vector<2x16xf32>
    %529 = arith.mulf %528, %496 : vector<2x16xf32>
    %cst_153 = arith.constant 1.000000e+00 : f32
    %530 = vector.broadcast %cst_153 : f32 to vector<2x1xf32>
    %531 = arith.subf %530, %459 : vector<2x1xf32>
    %532 = vector.extract_strided_slice %458 {offsets = [0, 0], sizes = [2, 16], strides = [1, 1]} : vector<2x32xf32> to vector<2x16xf32>
    %533 = vector.broadcast %531 : vector<2x1xf32> to vector<2x16xf32>
    %534 = arith.mulf %533, %532 : vector<2x16xf32>
    %535 = arith.addf %529, %534 : vector<2x16xf32>
    %536 = vector.broadcast %460 : vector<2x1xf32> to vector<2x16xf32>
    %537 = arith.mulf %536, %527 : vector<2x16xf32>
    %cst_154 = arith.constant 1.000000e+00 : f32
    %538 = vector.broadcast %cst_154 : f32 to vector<2x1xf32>
    %539 = arith.subf %538, %460 : vector<2x1xf32>
    %540 = vector.extract_strided_slice %458 {offsets = [0, 16], sizes = [2, 16], strides = [1, 1]} : vector<2x32xf32> to vector<2x16xf32>
    %541 = vector.broadcast %539 : vector<2x1xf32> to vector<2x16xf32>
    %542 = arith.mulf %541, %540 : vector<2x16xf32>
    %543 = arith.addf %537, %542 : vector<2x16xf32>
    %544 = vector.broadcast %459 : vector<2x1xf32> to vector<2x16xf32>
    %545 = arith.mulf %544, %535 : vector<2x16xf32>
    %c0_155 = arith.constant 0 : index
    %c4_156 = arith.constant 4 : index
    %c0_157 = arith.constant 0 : index
    %546 = vector.load %arg12[%c0_155, %c4_156, %c0_157] : memref<2x8x32xf32, #tpu.memory_space<vmem>>, vector<2x1x16xf32>
    %547 = vector.shape_cast %546 : vector<2x1x16xf32> to vector<2x16xf32>
    %548 = vector.shape_cast %545 : vector<2x16xf32> to vector<2x1x16xf32>
    tpu.vector_store %arg12[%c0_155, %c4_156, %c0_157], %548 {strides = array<i32>} : memref<2x8x32xf32, #tpu.memory_space<vmem>>, vector<2x1x16xf32>,
    %549 = vector.broadcast %460 : vector<2x1xf32> to vector<2x16xf32>
    %550 = arith.mulf %549, %543 : vector<2x16xf32>
    %c0_158 = arith.constant 0 : index
    %c3_159 = arith.constant 3 : index
    %c16_160 = arith.constant 16 : index
    %551 = vector.load %arg12[%c0_158, %c3_159, %c16_160] : memref<2x8x32xf32, #tpu.memory_space<vmem>>, vector<2x1x16xf32>
    %552 = vector.shape_cast %551 : vector<2x1x16xf32> to vector<2x16xf32>
    %553 = vector.shape_cast %550 : vector<2x16xf32> to vector<2x1x16xf32>
    tpu.vector_store %arg12[%c0_158, %c3_159, %c16_160], %553 {strides = array<i32>} : memref<2x8x32xf32, #tpu.memory_space<vmem>>, vector<2x1x16xf32>,
    %554 = tpu.concatenate %535, %543 in 1 : vector<2x16xf32>, vector<2x16xf32> -> vector<2x32xf32>
    %555 = vector.extract_strided_slice %5 {offsets = [0, 5], sizes = [2, 1], strides = [1, 1]} : vector<2x8xf32> to vector<2x1xf32>
    %556 = vector.extract_strided_slice %5 {offsets = [0, 2], sizes = [2, 1], strides = [1, 1]} : vector<2x8xf32> to vector<2x1xf32>
    %c0_161 = arith.constant 0 : index
    %c5_162 = arith.constant 5 : index
    %c0_163 = arith.constant 0 : index
    %557 = vector.load %arg11[%c0_161, %c5_162, %c0_163] : memref<2x8x96xf32, #tpu.memory_space<vmem>>, vector<2x1x48xf32>
    %558 = vector.shape_cast %557 : vector<2x1x48xf32> to vector<2x48xf32>
    %c0_164 = arith.constant 0 : index
    %c2_165 = arith.constant 2 : index
    %c48_166 = arith.constant 48 : index
    %559 = vector.load %arg11[%c0_164, %c2_165, %c48_166] : memref<2x8x96xf32, #tpu.memory_space<vmem>>, vector<2x1x48xf32>
    %560 = vector.shape_cast %559 : vector<2x1x48xf32> to vector<2x48xf32>
    %cst_167 = arith.constant dense<0.000000e+00> : vector<2x96xf32>
    %561 = tpu.matmul %554, %72, %cst_167 {dimension_numbers = #tpu.dot_dimension_numbers<[1], [0], [0], [1], [0, 0, 1, 1], [], []>} : vector<2x32xf32>, vector<32x96xf32>, vector<2x96xf32> -> vector<2x96xf32>
    %562 = vector.extract_strided_slice %561 {offsets = [0, 0], sizes = [2, 48], strides = [1, 1]} : vector<2x96xf32> to vector<2x48xf32>
    %563 = vector.extract_strided_slice %554 {offsets = [0, 0], sizes = [2, 16], strides = [1, 1]} : vector<2x32xf32> to vector<2x16xf32>
    %564 = vector.extract_strided_slice %73 {offsets = [0, 0], sizes = [1, 16], strides = [1, 1]} : vector<1x32xf32> to vector<1x16xf32>
    %565 = vector.extract_strided_slice %558 {offsets = [0, 0], sizes = [2, 16], strides = [1, 1]} : vector<2x48xf32> to vector<2x16xf32>
    %566 = vector.extract_strided_slice %562 {offsets = [0, 0], sizes = [2, 16], strides = [1, 1]} : vector<2x48xf32> to vector<2x16xf32>
    %567 = arith.addf %565, %566 : vector<2x16xf32>
    %568 = arith.negf %567 : vector<2x16xf32>
    %569 = math.exp %568 : vector<2x16xf32>
    %cst_168 = arith.constant 1.000000e+00 : f32
    %570 = vector.broadcast %cst_168 : f32 to vector<2x16xf32>
    %571 = arith.addf %570, %569 : vector<2x16xf32>
    %572 = arith.divf %570, %571 : vector<2x16xf32>
    %573 = vector.extract_strided_slice %558 {offsets = [0, 16], sizes = [2, 16], strides = [1, 1]} : vector<2x48xf32> to vector<2x16xf32>
    %574 = vector.extract_strided_slice %562 {offsets = [0, 16], sizes = [2, 16], strides = [1, 1]} : vector<2x48xf32> to vector<2x16xf32>
    %575 = arith.addf %573, %574 : vector<2x16xf32>
    %576 = arith.negf %575 : vector<2x16xf32>
    %577 = math.exp %576 : vector<2x16xf32>
    %cst_169 = arith.constant 1.000000e+00 : f32
    %578 = vector.broadcast %cst_169 : f32 to vector<2x16xf32>
    %579 = arith.addf %578, %577 : vector<2x16xf32>
    %580 = arith.divf %578, %579 : vector<2x16xf32>
    %581 = vector.extract_strided_slice %558 {offsets = [0, 32], sizes = [2, 16], strides = [1, 1]} : vector<2x48xf32> to vector<2x16xf32>
    %582 = vector.extract_strided_slice %562 {offsets = [0, 32], sizes = [2, 16], strides = [1, 1]} : vector<2x48xf32> to vector<2x16xf32>
    %583 = vector.broadcast %564 : vector<1x16xf32> to vector<2x16xf32>
    %584 = arith.addf %582, %583 : vector<2x16xf32>
    %585 = arith.mulf %572, %584 : vector<2x16xf32>
    %586 = arith.addf %581, %585 : vector<2x16xf32>
    %587 = math.tanh %586 : vector<2x16xf32>
    %cst_170 = arith.constant 1.000000e+00 : f32
    %588 = vector.broadcast %cst_170 : f32 to vector<2x16xf32>
    %589 = arith.subf %588, %580 : vector<2x16xf32>
    %590 = arith.mulf %589, %587 : vector<2x16xf32>
    %591 = arith.mulf %580, %563 : vector<2x16xf32>
    %592 = arith.addf %590, %591 : vector<2x16xf32>
    %593 = vector.extract_strided_slice %561 {offsets = [0, 48], sizes = [2, 48], strides = [1, 1]} : vector<2x96xf32> to vector<2x48xf32>
    %594 = vector.extract_strided_slice %554 {offsets = [0, 16], sizes = [2, 16], strides = [1, 1]} : vector<2x32xf32> to vector<2x16xf32>
    %595 = vector.extract_strided_slice %73 {offsets = [0, 16], sizes = [1, 16], strides = [1, 1]} : vector<1x32xf32> to vector<1x16xf32>
    %596 = vector.extract_strided_slice %560 {offsets = [0, 0], sizes = [2, 16], strides = [1, 1]} : vector<2x48xf32> to vector<2x16xf32>
    %597 = vector.extract_strided_slice %593 {offsets = [0, 0], sizes = [2, 16], strides = [1, 1]} : vector<2x48xf32> to vector<2x16xf32>
    %598 = arith.addf %596, %597 : vector<2x16xf32>
    %599 = arith.negf %598 : vector<2x16xf32>
    %600 = math.exp %599 : vector<2x16xf32>
    %cst_171 = arith.constant 1.000000e+00 : f32
    %601 = vector.broadcast %cst_171 : f32 to vector<2x16xf32>
    %602 = arith.addf %601, %600 : vector<2x16xf32>
    %603 = arith.divf %601, %602 : vector<2x16xf32>
    %604 = vector.extract_strided_slice %560 {offsets = [0, 16], sizes = [2, 16], strides = [1, 1]} : vector<2x48xf32> to vector<2x16xf32>
    %605 = vector.extract_strided_slice %593 {offsets = [0, 16], sizes = [2, 16], strides = [1, 1]} : vector<2x48xf32> to vector<2x16xf32>
    %606 = arith.addf %604, %605 : vector<2x16xf32>
    %607 = arith.negf %606 : vector<2x16xf32>
    %608 = math.exp %607 : vector<2x16xf32>
    %cst_172 = arith.constant 1.000000e+00 : f32
    %609 = vector.broadcast %cst_172 : f32 to vector<2x16xf32>
    %610 = arith.addf %609, %608 : vector<2x16xf32>
    %611 = arith.divf %609, %610 : vector<2x16xf32>
    %612 = vector.extract_strided_slice %560 {offsets = [0, 32], sizes = [2, 16], strides = [1, 1]} : vector<2x48xf32> to vector<2x16xf32>
    %613 = vector.extract_strided_slice %593 {offsets = [0, 32], sizes = [2, 16], strides = [1, 1]} : vector<2x48xf32> to vector<2x16xf32>
    %614 = vector.broadcast %595 : vector<1x16xf32> to vector<2x16xf32>
    %615 = arith.addf %613, %614 : vector<2x16xf32>
    %616 = arith.mulf %603, %615 : vector<2x16xf32>
    %617 = arith.addf %612, %616 : vector<2x16xf32>
    %618 = math.tanh %617 : vector<2x16xf32>
    %cst_173 = arith.constant 1.000000e+00 : f32
    %619 = vector.broadcast %cst_173 : f32 to vector<2x16xf32>
    %620 = arith.subf %619, %611 : vector<2x16xf32>
    %621 = arith.mulf %620, %618 : vector<2x16xf32>
    %622 = arith.mulf %611, %594 : vector<2x16xf32>
    %623 = arith.addf %621, %622 : vector<2x16xf32>
    %624 = vector.broadcast %555 : vector<2x1xf32> to vector<2x16xf32>
    %625 = arith.mulf %624, %592 : vector<2x16xf32>
    %cst_174 = arith.constant 1.000000e+00 : f32
    %626 = vector.broadcast %cst_174 : f32 to vector<2x1xf32>
    %627 = arith.subf %626, %555 : vector<2x1xf32>
    %628 = vector.extract_strided_slice %554 {offsets = [0, 0], sizes = [2, 16], strides = [1, 1]} : vector<2x32xf32> to vector<2x16xf32>
    %629 = vector.broadcast %627 : vector<2x1xf32> to vector<2x16xf32>
    %630 = arith.mulf %629, %628 : vector<2x16xf32>
    %631 = arith.addf %625, %630 : vector<2x16xf32>
    %632 = vector.broadcast %556 : vector<2x1xf32> to vector<2x16xf32>
    %633 = arith.mulf %632, %623 : vector<2x16xf32>
    %cst_175 = arith.constant 1.000000e+00 : f32
    %634 = vector.broadcast %cst_175 : f32 to vector<2x1xf32>
    %635 = arith.subf %634, %556 : vector<2x1xf32>
    %636 = vector.extract_strided_slice %554 {offsets = [0, 16], sizes = [2, 16], strides = [1, 1]} : vector<2x32xf32> to vector<2x16xf32>
    %637 = vector.broadcast %635 : vector<2x1xf32> to vector<2x16xf32>
    %638 = arith.mulf %637, %636 : vector<2x16xf32>
    %639 = arith.addf %633, %638 : vector<2x16xf32>
    %640 = vector.broadcast %555 : vector<2x1xf32> to vector<2x16xf32>
    %641 = arith.mulf %640, %631 : vector<2x16xf32>
    %c0_176 = arith.constant 0 : index
    %c5_177 = arith.constant 5 : index
    %c0_178 = arith.constant 0 : index
    %642 = vector.load %arg12[%c0_176, %c5_177, %c0_178] : memref<2x8x32xf32, #tpu.memory_space<vmem>>, vector<2x1x16xf32>
    %643 = vector.shape_cast %642 : vector<2x1x16xf32> to vector<2x16xf32>
    %644 = vector.shape_cast %641 : vector<2x16xf32> to vector<2x1x16xf32>
    tpu.vector_store %arg12[%c0_176, %c5_177, %c0_178], %644 {strides = array<i32>} : memref<2x8x32xf32, #tpu.memory_space<vmem>>, vector<2x1x16xf32>,
    %645 = vector.broadcast %556 : vector<2x1xf32> to vector<2x16xf32>
    %646 = arith.mulf %645, %639 : vector<2x16xf32>
    %c0_179 = arith.constant 0 : index
    %c2_180 = arith.constant 2 : index
    %c16_181 = arith.constant 16 : index
    %647 = vector.load %arg12[%c0_179, %c2_180, %c16_181] : memref<2x8x32xf32, #tpu.memory_space<vmem>>, vector<2x1x16xf32>
    %648 = vector.shape_cast %647 : vector<2x1x16xf32> to vector<2x16xf32>
    %649 = vector.shape_cast %646 : vector<2x16xf32> to vector<2x1x16xf32>
    tpu.vector_store %arg12[%c0_179, %c2_180, %c16_181], %649 {strides = array<i32>} : memref<2x8x32xf32, #tpu.memory_space<vmem>>, vector<2x1x16xf32>,
    %650 = tpu.concatenate %631, %639 in 1 : vector<2x16xf32>, vector<2x16xf32> -> vector<2x32xf32>
    %651 = vector.extract_strided_slice %5 {offsets = [0, 6], sizes = [2, 1], strides = [1, 1]} : vector<2x8xf32> to vector<2x1xf32>
    %652 = vector.extract_strided_slice %5 {offsets = [0, 1], sizes = [2, 1], strides = [1, 1]} : vector<2x8xf32> to vector<2x1xf32>
    %c0_182 = arith.constant 0 : index
    %c6_183 = arith.constant 6 : index
    %c0_184 = arith.constant 0 : index
    %653 = vector.load %arg11[%c0_182, %c6_183, %c0_184] : memref<2x8x96xf32, #tpu.memory_space<vmem>>, vector<2x1x48xf32>
    %654 = vector.shape_cast %653 : vector<2x1x48xf32> to vector<2x48xf32>
    %c0_185 = arith.constant 0 : index
    %c1_186 = arith.constant 1 : index
    %c48_187 = arith.constant 48 : index
    %655 = vector.load %arg11[%c0_185, %c1_186, %c48_187] : memref<2x8x96xf32, #tpu.memory_space<vmem>>, vector<2x1x48xf32>
    %656 = vector.shape_cast %655 : vector<2x1x48xf32> to vector<2x48xf32>
    %cst_188 = arith.constant dense<0.000000e+00> : vector<2x96xf32>
    %657 = tpu.matmul %650, %72, %cst_188 {dimension_numbers = #tpu.dot_dimension_numbers<[1], [0], [0], [1], [0, 0, 1, 1], [], []>} : vector<2x32xf32>, vector<32x96xf32>, vector<2x96xf32> -> vector<2x96xf32>
    %658 = vector.extract_strided_slice %657 {offsets = [0, 0], sizes = [2, 48], strides = [1, 1]} : vector<2x96xf32> to vector<2x48xf32>
    %659 = vector.extract_strided_slice %650 {offsets = [0, 0], sizes = [2, 16], strides = [1, 1]} : vector<2x32xf32> to vector<2x16xf32>
    %660 = vector.extract_strided_slice %73 {offsets = [0, 0], sizes = [1, 16], strides = [1, 1]} : vector<1x32xf32> to vector<1x16xf32>
    %661 = vector.extract_strided_slice %654 {offsets = [0, 0], sizes = [2, 16], strides = [1, 1]} : vector<2x48xf32> to vector<2x16xf32>
    %662 = vector.extract_strided_slice %658 {offsets = [0, 0], sizes = [2, 16], strides = [1, 1]} : vector<2x48xf32> to vector<2x16xf32>
    %663 = arith.addf %661, %662 : vector<2x16xf32>
    %664 = arith.negf %663 : vector<2x16xf32>
    %665 = math.exp %664 : vector<2x16xf32>
    %cst_189 = arith.constant 1.000000e+00 : f32
    %666 = vector.broadcast %cst_189 : f32 to vector<2x16xf32>
    %667 = arith.addf %666, %665 : vector<2x16xf32>
    %668 = arith.divf %666, %667 : vector<2x16xf32>
    %669 = vector.extract_strided_slice %654 {offsets = [0, 16], sizes = [2, 16], strides = [1, 1]} : vector<2x48xf32> to vector<2x16xf32>
    %670 = vector.extract_strided_slice %658 {offsets = [0, 16], sizes = [2, 16], strides = [1, 1]} : vector<2x48xf32> to vector<2x16xf32>
    %671 = arith.addf %669, %670 : vector<2x16xf32>
    %672 = arith.negf %671 : vector<2x16xf32>
    %673 = math.exp %672 : vector<2x16xf32>
    %cst_190 = arith.constant 1.000000e+00 : f32
    %674 = vector.broadcast %cst_190 : f32 to vector<2x16xf32>
    %675 = arith.addf %674, %673 : vector<2x16xf32>
    %676 = arith.divf %674, %675 : vector<2x16xf32>
    %677 = vector.extract_strided_slice %654 {offsets = [0, 32], sizes = [2, 16], strides = [1, 1]} : vector<2x48xf32> to vector<2x16xf32>
    %678 = vector.extract_strided_slice %658 {offsets = [0, 32], sizes = [2, 16], strides = [1, 1]} : vector<2x48xf32> to vector<2x16xf32>
    %679 = vector.broadcast %660 : vector<1x16xf32> to vector<2x16xf32>
    %680 = arith.addf %678, %679 : vector<2x16xf32>
    %681 = arith.mulf %668, %680 : vector<2x16xf32>
    %682 = arith.addf %677, %681 : vector<2x16xf32>
    %683 = math.tanh %682 : vector<2x16xf32>
    %cst_191 = arith.constant 1.000000e+00 : f32
    %684 = vector.broadcast %cst_191 : f32 to vector<2x16xf32>
    %685 = arith.subf %684, %676 : vector<2x16xf32>
    %686 = arith.mulf %685, %683 : vector<2x16xf32>
    %687 = arith.mulf %676, %659 : vector<2x16xf32>
    %688 = arith.addf %686, %687 : vector<2x16xf32>
    %689 = vector.extract_strided_slice %657 {offsets = [0, 48], sizes = [2, 48], strides = [1, 1]} : vector<2x96xf32> to vector<2x48xf32>
    %690 = vector.extract_strided_slice %650 {offsets = [0, 16], sizes = [2, 16], strides = [1, 1]} : vector<2x32xf32> to vector<2x16xf32>
    %691 = vector.extract_strided_slice %73 {offsets = [0, 16], sizes = [1, 16], strides = [1, 1]} : vector<1x32xf32> to vector<1x16xf32>
    %692 = vector.extract_strided_slice %656 {offsets = [0, 0], sizes = [2, 16], strides = [1, 1]} : vector<2x48xf32> to vector<2x16xf32>
    %693 = vector.extract_strided_slice %689 {offsets = [0, 0], sizes = [2, 16], strides = [1, 1]} : vector<2x48xf32> to vector<2x16xf32>
    %694 = arith.addf %692, %693 : vector<2x16xf32>
    %695 = arith.negf %694 : vector<2x16xf32>
    %696 = math.exp %695 : vector<2x16xf32>
    %cst_192 = arith.constant 1.000000e+00 : f32
    %697 = vector.broadcast %cst_192 : f32 to vector<2x16xf32>
    %698 = arith.addf %697, %696 : vector<2x16xf32>
    %699 = arith.divf %697, %698 : vector<2x16xf32>
    %700 = vector.extract_strided_slice %656 {offsets = [0, 16], sizes = [2, 16], strides = [1, 1]} : vector<2x48xf32> to vector<2x16xf32>
    %701 = vector.extract_strided_slice %689 {offsets = [0, 16], sizes = [2, 16], strides = [1, 1]} : vector<2x48xf32> to vector<2x16xf32>
    %702 = arith.addf %700, %701 : vector<2x16xf32>
    %703 = arith.negf %702 : vector<2x16xf32>
    %704 = math.exp %703 : vector<2x16xf32>
    %cst_193 = arith.constant 1.000000e+00 : f32
    %705 = vector.broadcast %cst_193 : f32 to vector<2x16xf32>
    %706 = arith.addf %705, %704 : vector<2x16xf32>
    %707 = arith.divf %705, %706 : vector<2x16xf32>
    %708 = vector.extract_strided_slice %656 {offsets = [0, 32], sizes = [2, 16], strides = [1, 1]} : vector<2x48xf32> to vector<2x16xf32>
    %709 = vector.extract_strided_slice %689 {offsets = [0, 32], sizes = [2, 16], strides = [1, 1]} : vector<2x48xf32> to vector<2x16xf32>
    %710 = vector.broadcast %691 : vector<1x16xf32> to vector<2x16xf32>
    %711 = arith.addf %709, %710 : vector<2x16xf32>
    %712 = arith.mulf %699, %711 : vector<2x16xf32>
    %713 = arith.addf %708, %712 : vector<2x16xf32>
    %714 = math.tanh %713 : vector<2x16xf32>
    %cst_194 = arith.constant 1.000000e+00 : f32
    %715 = vector.broadcast %cst_194 : f32 to vector<2x16xf32>
    %716 = arith.subf %715, %707 : vector<2x16xf32>
    %717 = arith.mulf %716, %714 : vector<2x16xf32>
    %718 = arith.mulf %707, %690 : vector<2x16xf32>
    %719 = arith.addf %717, %718 : vector<2x16xf32>
    %720 = vector.broadcast %651 : vector<2x1xf32> to vector<2x16xf32>
    %721 = arith.mulf %720, %688 : vector<2x16xf32>
    %cst_195 = arith.constant 1.000000e+00 : f32
    %722 = vector.broadcast %cst_195 : f32 to vector<2x1xf32>
    %723 = arith.subf %722, %651 : vector<2x1xf32>
    %724 = vector.extract_strided_slice %650 {offsets = [0, 0], sizes = [2, 16], strides = [1, 1]} : vector<2x32xf32> to vector<2x16xf32>
    %725 = vector.broadcast %723 : vector<2x1xf32> to vector<2x16xf32>
    %726 = arith.mulf %725, %724 : vector<2x16xf32>
    %727 = arith.addf %721, %726 : vector<2x16xf32>
    %728 = vector.broadcast %652 : vector<2x1xf32> to vector<2x16xf32>
    %729 = arith.mulf %728, %719 : vector<2x16xf32>
    %cst_196 = arith.constant 1.000000e+00 : f32
    %730 = vector.broadcast %cst_196 : f32 to vector<2x1xf32>
    %731 = arith.subf %730, %652 : vector<2x1xf32>
    %732 = vector.extract_strided_slice %650 {offsets = [0, 16], sizes = [2, 16], strides = [1, 1]} : vector<2x32xf32> to vector<2x16xf32>
    %733 = vector.broadcast %731 : vector<2x1xf32> to vector<2x16xf32>
    %734 = arith.mulf %733, %732 : vector<2x16xf32>
    %735 = arith.addf %729, %734 : vector<2x16xf32>
    %736 = vector.broadcast %651 : vector<2x1xf32> to vector<2x16xf32>
    %737 = arith.mulf %736, %727 : vector<2x16xf32>
    %c0_197 = arith.constant 0 : index
    %c6_198 = arith.constant 6 : index
    %c0_199 = arith.constant 0 : index
    %738 = vector.load %arg12[%c0_197, %c6_198, %c0_199] : memref<2x8x32xf32, #tpu.memory_space<vmem>>, vector<2x1x16xf32>
    %739 = vector.shape_cast %738 : vector<2x1x16xf32> to vector<2x16xf32>
    %740 = vector.shape_cast %737 : vector<2x16xf32> to vector<2x1x16xf32>
    tpu.vector_store %arg12[%c0_197, %c6_198, %c0_199], %740 {strides = array<i32>} : memref<2x8x32xf32, #tpu.memory_space<vmem>>, vector<2x1x16xf32>,
    %741 = vector.broadcast %652 : vector<2x1xf32> to vector<2x16xf32>
    %742 = arith.mulf %741, %735 : vector<2x16xf32>
    %c0_200 = arith.constant 0 : index
    %c1_201 = arith.constant 1 : index
    %c16_202 = arith.constant 16 : index
    %743 = vector.load %arg12[%c0_200, %c1_201, %c16_202] : memref<2x8x32xf32, #tpu.memory_space<vmem>>, vector<2x1x16xf32>
    %744 = vector.shape_cast %743 : vector<2x1x16xf32> to vector<2x16xf32>
    %745 = vector.shape_cast %742 : vector<2x16xf32> to vector<2x1x16xf32>
    tpu.vector_store %arg12[%c0_200, %c1_201, %c16_202], %745 {strides = array<i32>} : memref<2x8x32xf32, #tpu.memory_space<vmem>>, vector<2x1x16xf32>,
    %746 = tpu.concatenate %727, %735 in 1 : vector<2x16xf32>, vector<2x16xf32> -> vector<2x32xf32>
    %747 = vector.extract_strided_slice %5 {offsets = [0, 7], sizes = [2, 1], strides = [1, 1]} : vector<2x8xf32> to vector<2x1xf32>
    %748 = vector.extract_strided_slice %5 {offsets = [0, 0], sizes = [2, 1], strides = [1, 1]} : vector<2x8xf32> to vector<2x1xf32>
    %c0_203 = arith.constant 0 : index
    %c7_204 = arith.constant 7 : index
    %c0_205 = arith.constant 0 : index
    %749 = vector.load %arg11[%c0_203, %c7_204, %c0_205] : memref<2x8x96xf32, #tpu.memory_space<vmem>>, vector<2x1x48xf32>
    %750 = vector.shape_cast %749 : vector<2x1x48xf32> to vector<2x48xf32>
    %c0_206 = arith.constant 0 : index
    %c0_207 = arith.constant 0 : index
    %c48_208 = arith.constant 48 : index
    %751 = vector.load %arg11[%c0_206, %c0_207, %c48_208] : memref<2x8x96xf32, #tpu.memory_space<vmem>>, vector<2x1x48xf32>
    %752 = vector.shape_cast %751 : vector<2x1x48xf32> to vector<2x48xf32>
    %cst_209 = arith.constant dense<0.000000e+00> : vector<2x96xf32>
    %753 = tpu.matmul %746, %72, %cst_209 {dimension_numbers = #tpu.dot_dimension_numbers<[1], [0], [0], [1], [0, 0, 1, 1], [], []>} : vector<2x32xf32>, vector<32x96xf32>, vector<2x96xf32> -> vector<2x96xf32>
    %754 = vector.extract_strided_slice %753 {offsets = [0, 0], sizes = [2, 48], strides = [1, 1]} : vector<2x96xf32> to vector<2x48xf32>
    %755 = vector.extract_strided_slice %746 {offsets = [0, 0], sizes = [2, 16], strides = [1, 1]} : vector<2x32xf32> to vector<2x16xf32>
    %756 = vector.extract_strided_slice %73 {offsets = [0, 0], sizes = [1, 16], strides = [1, 1]} : vector<1x32xf32> to vector<1x16xf32>
    %757 = vector.extract_strided_slice %750 {offsets = [0, 0], sizes = [2, 16], strides = [1, 1]} : vector<2x48xf32> to vector<2x16xf32>
    %758 = vector.extract_strided_slice %754 {offsets = [0, 0], sizes = [2, 16], strides = [1, 1]} : vector<2x48xf32> to vector<2x16xf32>
    %759 = arith.addf %757, %758 : vector<2x16xf32>
    %760 = arith.negf %759 : vector<2x16xf32>
    %761 = math.exp %760 : vector<2x16xf32>
    %cst_210 = arith.constant 1.000000e+00 : f32
    %762 = vector.broadcast %cst_210 : f32 to vector<2x16xf32>
    %763 = arith.addf %762, %761 : vector<2x16xf32>
    %764 = arith.divf %762, %763 : vector<2x16xf32>
    %765 = vector.extract_strided_slice %750 {offsets = [0, 16], sizes = [2, 16], strides = [1, 1]} : vector<2x48xf32> to vector<2x16xf32>
    %766 = vector.extract_strided_slice %754 {offsets = [0, 16], sizes = [2, 16], strides = [1, 1]} : vector<2x48xf32> to vector<2x16xf32>
    %767 = arith.addf %765, %766 : vector<2x16xf32>
    %768 = arith.negf %767 : vector<2x16xf32>
    %769 = math.exp %768 : vector<2x16xf32>
    %cst_211 = arith.constant 1.000000e+00 : f32
    %770 = vector.broadcast %cst_211 : f32 to vector<2x16xf32>
    %771 = arith.addf %770, %769 : vector<2x16xf32>
    %772 = arith.divf %770, %771 : vector<2x16xf32>
    %773 = vector.extract_strided_slice %750 {offsets = [0, 32], sizes = [2, 16], strides = [1, 1]} : vector<2x48xf32> to vector<2x16xf32>
    %774 = vector.extract_strided_slice %754 {offsets = [0, 32], sizes = [2, 16], strides = [1, 1]} : vector<2x48xf32> to vector<2x16xf32>
    %775 = vector.broadcast %756 : vector<1x16xf32> to vector<2x16xf32>
    %776 = arith.addf %774, %775 : vector<2x16xf32>
    %777 = arith.mulf %764, %776 : vector<2x16xf32>
    %778 = arith.addf %773, %777 : vector<2x16xf32>
    %779 = math.tanh %778 : vector<2x16xf32>
    %cst_212 = arith.constant 1.000000e+00 : f32
    %780 = vector.broadcast %cst_212 : f32 to vector<2x16xf32>
    %781 = arith.subf %780, %772 : vector<2x16xf32>
    %782 = arith.mulf %781, %779 : vector<2x16xf32>
    %783 = arith.mulf %772, %755 : vector<2x16xf32>
    %784 = arith.addf %782, %783 : vector<2x16xf32>
    %785 = vector.extract_strided_slice %753 {offsets = [0, 48], sizes = [2, 48], strides = [1, 1]} : vector<2x96xf32> to vector<2x48xf32>
    %786 = vector.extract_strided_slice %746 {offsets = [0, 16], sizes = [2, 16], strides = [1, 1]} : vector<2x32xf32> to vector<2x16xf32>
    %787 = vector.extract_strided_slice %73 {offsets = [0, 16], sizes = [1, 16], strides = [1, 1]} : vector<1x32xf32> to vector<1x16xf32>
    %788 = vector.extract_strided_slice %752 {offsets = [0, 0], sizes = [2, 16], strides = [1, 1]} : vector<2x48xf32> to vector<2x16xf32>
    %789 = vector.extract_strided_slice %785 {offsets = [0, 0], sizes = [2, 16], strides = [1, 1]} : vector<2x48xf32> to vector<2x16xf32>
    %790 = arith.addf %788, %789 : vector<2x16xf32>
    %791 = arith.negf %790 : vector<2x16xf32>
    %792 = math.exp %791 : vector<2x16xf32>
    %cst_213 = arith.constant 1.000000e+00 : f32
    %793 = vector.broadcast %cst_213 : f32 to vector<2x16xf32>
    %794 = arith.addf %793, %792 : vector<2x16xf32>
    %795 = arith.divf %793, %794 : vector<2x16xf32>
    %796 = vector.extract_strided_slice %752 {offsets = [0, 16], sizes = [2, 16], strides = [1, 1]} : vector<2x48xf32> to vector<2x16xf32>
    %797 = vector.extract_strided_slice %785 {offsets = [0, 16], sizes = [2, 16], strides = [1, 1]} : vector<2x48xf32> to vector<2x16xf32>
    %798 = arith.addf %796, %797 : vector<2x16xf32>
    %799 = arith.negf %798 : vector<2x16xf32>
    %800 = math.exp %799 : vector<2x16xf32>
    %cst_214 = arith.constant 1.000000e+00 : f32
    %801 = vector.broadcast %cst_214 : f32 to vector<2x16xf32>
    %802 = arith.addf %801, %800 : vector<2x16xf32>
    %803 = arith.divf %801, %802 : vector<2x16xf32>
    %804 = vector.extract_strided_slice %752 {offsets = [0, 32], sizes = [2, 16], strides = [1, 1]} : vector<2x48xf32> to vector<2x16xf32>
    %805 = vector.extract_strided_slice %785 {offsets = [0, 32], sizes = [2, 16], strides = [1, 1]} : vector<2x48xf32> to vector<2x16xf32>
    %806 = vector.broadcast %787 : vector<1x16xf32> to vector<2x16xf32>
    %807 = arith.addf %805, %806 : vector<2x16xf32>
    %808 = arith.mulf %795, %807 : vector<2x16xf32>
    %809 = arith.addf %804, %808 : vector<2x16xf32>
    %810 = math.tanh %809 : vector<2x16xf32>
    %cst_215 = arith.constant 1.000000e+00 : f32
    %811 = vector.broadcast %cst_215 : f32 to vector<2x16xf32>
    %812 = arith.subf %811, %803 : vector<2x16xf32>
    %813 = arith.mulf %812, %810 : vector<2x16xf32>
    %814 = arith.mulf %803, %786 : vector<2x16xf32>
    %815 = arith.addf %813, %814 : vector<2x16xf32>
    %816 = vector.broadcast %747 : vector<2x1xf32> to vector<2x16xf32>
    %817 = arith.mulf %816, %784 : vector<2x16xf32>
    %cst_216 = arith.constant 1.000000e+00 : f32
    %818 = vector.broadcast %cst_216 : f32 to vector<2x1xf32>
    %819 = arith.subf %818, %747 : vector<2x1xf32>
    %820 = vector.extract_strided_slice %746 {offsets = [0, 0], sizes = [2, 16], strides = [1, 1]} : vector<2x32xf32> to vector<2x16xf32>
    %821 = vector.broadcast %819 : vector<2x1xf32> to vector<2x16xf32>
    %822 = arith.mulf %821, %820 : vector<2x16xf32>
    %823 = arith.addf %817, %822 : vector<2x16xf32>
    %824 = vector.broadcast %748 : vector<2x1xf32> to vector<2x16xf32>
    %825 = arith.mulf %824, %815 : vector<2x16xf32>
    %cst_217 = arith.constant 1.000000e+00 : f32
    %826 = vector.broadcast %cst_217 : f32 to vector<2x1xf32>
    %827 = arith.subf %826, %748 : vector<2x1xf32>
    %828 = vector.extract_strided_slice %746 {offsets = [0, 16], sizes = [2, 16], strides = [1, 1]} : vector<2x32xf32> to vector<2x16xf32>
    %829 = vector.broadcast %827 : vector<2x1xf32> to vector<2x16xf32>
    %830 = arith.mulf %829, %828 : vector<2x16xf32>
    %831 = arith.addf %825, %830 : vector<2x16xf32>
    %832 = vector.broadcast %747 : vector<2x1xf32> to vector<2x16xf32>
    %833 = arith.mulf %832, %823 : vector<2x16xf32>
    %c0_218 = arith.constant 0 : index
    %c7_219 = arith.constant 7 : index
    %c0_220 = arith.constant 0 : index
    %834 = vector.load %arg12[%c0_218, %c7_219, %c0_220] : memref<2x8x32xf32, #tpu.memory_space<vmem>>, vector<2x1x16xf32>
    %835 = vector.shape_cast %834 : vector<2x1x16xf32> to vector<2x16xf32>
    %836 = vector.shape_cast %833 : vector<2x16xf32> to vector<2x1x16xf32>
    tpu.vector_store %arg12[%c0_218, %c7_219, %c0_220], %836 {strides = array<i32>} : memref<2x8x32xf32, #tpu.memory_space<vmem>>, vector<2x1x16xf32>,
    %837 = vector.broadcast %748 : vector<2x1xf32> to vector<2x16xf32>
    %838 = arith.mulf %837, %831 : vector<2x16xf32>
    %c0_221 = arith.constant 0 : index
    %c0_222 = arith.constant 0 : index
    %c16_223 = arith.constant 16 : index
    %839 = vector.load %arg12[%c0_221, %c0_222, %c16_223] : memref<2x8x32xf32, #tpu.memory_space<vmem>>, vector<2x1x16xf32>
    %840 = vector.shape_cast %839 : vector<2x1x16xf32> to vector<2x16xf32>
    %841 = vector.shape_cast %838 : vector<2x16xf32> to vector<2x1x16xf32>
    tpu.vector_store %arg12[%c0_221, %c0_222, %c16_223], %841 {strides = array<i32>} : memref<2x8x32xf32, #tpu.memory_space<vmem>>, vector<2x1x16xf32>,
    %c0_224 = arith.constant 0 : index
    %c0_225 = arith.constant 0 : index
    %842 = vector.load %arg6[%c0_224, %c0_225] : memref<32x96xf32, #tpu.memory_space<vmem>>, vector<32x96xf32>
    %c0_226 = arith.constant 0 : index
    %c0_227 = arith.constant 0 : index
    %843 = vector.load %arg8[%c0_226, %c0_227] : memref<1x96xf32, #tpu.memory_space<vmem>>, vector<1x96xf32>
    %c0_228 = arith.constant 0 : index
    %c0_229 = arith.constant 0 : index
    %c0_230 = arith.constant 0 : index
    %844 = vector.load %arg12[%c0_228, %c0_229, %c0_230] : memref<2x8x32xf32, #tpu.memory_space<vmem>>, vector<2x1x32xf32>
    %845 = vector.shape_cast %844 : vector<2x1x32xf32> to vector<2x32xf32>
    %cst_231 = arith.constant dense<0.000000e+00> : vector<2x96xf32>
    %846 = tpu.matmul %845, %842, %cst_231 {dimension_numbers = #tpu.dot_dimension_numbers<[1], [0], [0], [1], [0, 0, 1, 1], [], []>} : vector<2x32xf32>, vector<32x96xf32>, vector<2x96xf32> -> vector<2x96xf32>
    %847 = vector.broadcast %843 : vector<1x96xf32> to vector<2x96xf32>
    %848 = arith.addf %846, %847 : vector<2x96xf32>
    %c0_232 = arith.constant 0 : index
    %c0_233 = arith.constant 0 : index
    %c0_234 = arith.constant 0 : index
    %849 = vector.load %arg11[%c0_232, %c0_233, %c0_234] : memref<2x8x96xf32, #tpu.memory_space<vmem>>, vector<2x1x96xf32>
    %850 = vector.shape_cast %849 : vector<2x1x96xf32> to vector<2x96xf32>
    %851 = vector.shape_cast %848 : vector<2x96xf32> to vector<2x1x96xf32>
    tpu.vector_store %arg11[%c0_232, %c0_233, %c0_234], %851 {strides = array<i32>} : memref<2x8x96xf32, #tpu.memory_space<vmem>>, vector<2x1x96xf32>,
    %c0_235 = arith.constant 0 : index
    %c1_236 = arith.constant 1 : index
    %c0_237 = arith.constant 0 : index
    %852 = vector.load %arg12[%c0_235, %c1_236, %c0_237] : memref<2x8x32xf32, #tpu.memory_space<vmem>>, vector<2x1x32xf32>
    %853 = vector.shape_cast %852 : vector<2x1x32xf32> to vector<2x32xf32>
    %cst_238 = arith.constant dense<0.000000e+00> : vector<2x96xf32>
    %854 = tpu.matmul %853, %842, %cst_238 {dimension_numbers = #tpu.dot_dimension_numbers<[1], [0], [0], [1], [0, 0, 1, 1], [], []>} : vector<2x32xf32>, vector<32x96xf32>, vector<2x96xf32> -> vector<2x96xf32>
    %855 = vector.broadcast %843 : vector<1x96xf32> to vector<2x96xf32>
    %856 = arith.addf %854, %855 : vector<2x96xf32>
    %c0_239 = arith.constant 0 : index
    %c1_240 = arith.constant 1 : index
    %c0_241 = arith.constant 0 : index
    %857 = vector.load %arg11[%c0_239, %c1_240, %c0_241] : memref<2x8x96xf32, #tpu.memory_space<vmem>>, vector<2x1x96xf32>
    %858 = vector.shape_cast %857 : vector<2x1x96xf32> to vector<2x96xf32>
    %859 = vector.shape_cast %856 : vector<2x96xf32> to vector<2x1x96xf32>
    tpu.vector_store %arg11[%c0_239, %c1_240, %c0_241], %859 {strides = array<i32>} : memref<2x8x96xf32, #tpu.memory_space<vmem>>, vector<2x1x96xf32>,
    %c0_242 = arith.constant 0 : index
    %c2_243 = arith.constant 2 : index
    %c0_244 = arith.constant 0 : index
    %860 = vector.load %arg12[%c0_242, %c2_243, %c0_244] : memref<2x8x32xf32, #tpu.memory_space<vmem>>, vector<2x1x32xf32>
    %861 = vector.shape_cast %860 : vector<2x1x32xf32> to vector<2x32xf32>
    %cst_245 = arith.constant dense<0.000000e+00> : vector<2x96xf32>
    %862 = tpu.matmul %861, %842, %cst_245 {dimension_numbers = #tpu.dot_dimension_numbers<[1], [0], [0], [1], [0, 0, 1, 1], [], []>} : vector<2x32xf32>, vector<32x96xf32>, vector<2x96xf32> -> vector<2x96xf32>
    %863 = vector.broadcast %843 : vector<1x96xf32> to vector<2x96xf32>
    %864 = arith.addf %862, %863 : vector<2x96xf32>
    %c0_246 = arith.constant 0 : index
    %c2_247 = arith.constant 2 : index
    %c0_248 = arith.constant 0 : index
    %865 = vector.load %arg11[%c0_246, %c2_247, %c0_248] : memref<2x8x96xf32, #tpu.memory_space<vmem>>, vector<2x1x96xf32>
    %866 = vector.shape_cast %865 : vector<2x1x96xf32> to vector<2x96xf32>
    %867 = vector.shape_cast %864 : vector<2x96xf32> to vector<2x1x96xf32>
    tpu.vector_store %arg11[%c0_246, %c2_247, %c0_248], %867 {strides = array<i32>} : memref<2x8x96xf32, #tpu.memory_space<vmem>>, vector<2x1x96xf32>,
    %c0_249 = arith.constant 0 : index
    %c3_250 = arith.constant 3 : index
    %c0_251 = arith.constant 0 : index
    %868 = vector.load %arg12[%c0_249, %c3_250, %c0_251] : memref<2x8x32xf32, #tpu.memory_space<vmem>>, vector<2x1x32xf32>
    %869 = vector.shape_cast %868 : vector<2x1x32xf32> to vector<2x32xf32>
    %cst_252 = arith.constant dense<0.000000e+00> : vector<2x96xf32>
    %870 = tpu.matmul %869, %842, %cst_252 {dimension_numbers = #tpu.dot_dimension_numbers<[1], [0], [0], [1], [0, 0, 1, 1], [], []>} : vector<2x32xf32>, vector<32x96xf32>, vector<2x96xf32> -> vector<2x96xf32>
    %871 = vector.broadcast %843 : vector<1x96xf32> to vector<2x96xf32>
    %872 = arith.addf %870, %871 : vector<2x96xf32>
    %c0_253 = arith.constant 0 : index
    %c3_254 = arith.constant 3 : index
    %c0_255 = arith.constant 0 : index
    %873 = vector.load %arg11[%c0_253, %c3_254, %c0_255] : memref<2x8x96xf32, #tpu.memory_space<vmem>>, vector<2x1x96xf32>
    %874 = vector.shape_cast %873 : vector<2x1x96xf32> to vector<2x96xf32>
    %875 = vector.shape_cast %872 : vector<2x96xf32> to vector<2x1x96xf32>
    tpu.vector_store %arg11[%c0_253, %c3_254, %c0_255], %875 {strides = array<i32>} : memref<2x8x96xf32, #tpu.memory_space<vmem>>, vector<2x1x96xf32>,
    %c0_256 = arith.constant 0 : index
    %c4_257 = arith.constant 4 : index
    %c0_258 = arith.constant 0 : index
    %876 = vector.load %arg12[%c0_256, %c4_257, %c0_258] : memref<2x8x32xf32, #tpu.memory_space<vmem>>, vector<2x1x32xf32>
    %877 = vector.shape_cast %876 : vector<2x1x32xf32> to vector<2x32xf32>
    %cst_259 = arith.constant dense<0.000000e+00> : vector<2x96xf32>
    %878 = tpu.matmul %877, %842, %cst_259 {dimension_numbers = #tpu.dot_dimension_numbers<[1], [0], [0], [1], [0, 0, 1, 1], [], []>} : vector<2x32xf32>, vector<32x96xf32>, vector<2x96xf32> -> vector<2x96xf32>
    %879 = vector.broadcast %843 : vector<1x96xf32> to vector<2x96xf32>
    %880 = arith.addf %878, %879 : vector<2x96xf32>
    %c0_260 = arith.constant 0 : index
    %c4_261 = arith.constant 4 : index
    %c0_262 = arith.constant 0 : index
    %881 = vector.load %arg11[%c0_260, %c4_261, %c0_262] : memref<2x8x96xf32, #tpu.memory_space<vmem>>, vector<2x1x96xf32>
    %882 = vector.shape_cast %881 : vector<2x1x96xf32> to vector<2x96xf32>
    %883 = vector.shape_cast %880 : vector<2x96xf32> to vector<2x1x96xf32>
    tpu.vector_store %arg11[%c0_260, %c4_261, %c0_262], %883 {strides = array<i32>} : memref<2x8x96xf32, #tpu.memory_space<vmem>>, vector<2x1x96xf32>,
    %c0_263 = arith.constant 0 : index
    %c5_264 = arith.constant 5 : index
    %c0_265 = arith.constant 0 : index
    %884 = vector.load %arg12[%c0_263, %c5_264, %c0_265] : memref<2x8x32xf32, #tpu.memory_space<vmem>>, vector<2x1x32xf32>
    %885 = vector.shape_cast %884 : vector<2x1x32xf32> to vector<2x32xf32>
    %cst_266 = arith.constant dense<0.000000e+00> : vector<2x96xf32>
    %886 = tpu.matmul %885, %842, %cst_266 {dimension_numbers = #tpu.dot_dimension_numbers<[1], [0], [0], [1], [0, 0, 1, 1], [], []>} : vector<2x32xf32>, vector<32x96xf32>, vector<2x96xf32> -> vector<2x96xf32>
    %887 = vector.broadcast %843 : vector<1x96xf32> to vector<2x96xf32>
    %888 = arith.addf %886, %887 : vector<2x96xf32>
    %c0_267 = arith.constant 0 : index
    %c5_268 = arith.constant 5 : index
    %c0_269 = arith.constant 0 : index
    %889 = vector.load %arg11[%c0_267, %c5_268, %c0_269] : memref<2x8x96xf32, #tpu.memory_space<vmem>>, vector<2x1x96xf32>
    %890 = vector.shape_cast %889 : vector<2x1x96xf32> to vector<2x96xf32>
    %891 = vector.shape_cast %888 : vector<2x96xf32> to vector<2x1x96xf32>
    tpu.vector_store %arg11[%c0_267, %c5_268, %c0_269], %891 {strides = array<i32>} : memref<2x8x96xf32, #tpu.memory_space<vmem>>, vector<2x1x96xf32>,
    %c0_270 = arith.constant 0 : index
    %c6_271 = arith.constant 6 : index
    %c0_272 = arith.constant 0 : index
    %892 = vector.load %arg12[%c0_270, %c6_271, %c0_272] : memref<2x8x32xf32, #tpu.memory_space<vmem>>, vector<2x1x32xf32>
    %893 = vector.shape_cast %892 : vector<2x1x32xf32> to vector<2x32xf32>
    %cst_273 = arith.constant dense<0.000000e+00> : vector<2x96xf32>
    %894 = tpu.matmul %893, %842, %cst_273 {dimension_numbers = #tpu.dot_dimension_numbers<[1], [0], [0], [1], [0, 0, 1, 1], [], []>} : vector<2x32xf32>, vector<32x96xf32>, vector<2x96xf32> -> vector<2x96xf32>
    %895 = vector.broadcast %843 : vector<1x96xf32> to vector<2x96xf32>
    %896 = arith.addf %894, %895 : vector<2x96xf32>
    %c0_274 = arith.constant 0 : index
    %c6_275 = arith.constant 6 : index
    %c0_276 = arith.constant 0 : index
    %897 = vector.load %arg11[%c0_274, %c6_275, %c0_276] : memref<2x8x96xf32, #tpu.memory_space<vmem>>, vector<2x1x96xf32>
    %898 = vector.shape_cast %897 : vector<2x1x96xf32> to vector<2x96xf32>
    %899 = vector.shape_cast %896 : vector<2x96xf32> to vector<2x1x96xf32>
    tpu.vector_store %arg11[%c0_274, %c6_275, %c0_276], %899 {strides = array<i32>} : memref<2x8x96xf32, #tpu.memory_space<vmem>>, vector<2x1x96xf32>,
    %c0_277 = arith.constant 0 : index
    %c7_278 = arith.constant 7 : index
    %c0_279 = arith.constant 0 : index
    %900 = vector.load %arg12[%c0_277, %c7_278, %c0_279] : memref<2x8x32xf32, #tpu.memory_space<vmem>>, vector<2x1x32xf32>
    %901 = vector.shape_cast %900 : vector<2x1x32xf32> to vector<2x32xf32>
    %cst_280 = arith.constant dense<0.000000e+00> : vector<2x96xf32>
    %902 = tpu.matmul %901, %842, %cst_280 {dimension_numbers = #tpu.dot_dimension_numbers<[1], [0], [0], [1], [0, 0, 1, 1], [], []>} : vector<2x32xf32>, vector<32x96xf32>, vector<2x96xf32> -> vector<2x96xf32>
    %903 = vector.broadcast %843 : vector<1x96xf32> to vector<2x96xf32>
    %904 = arith.addf %902, %903 : vector<2x96xf32>
    %c0_281 = arith.constant 0 : index
    %c7_282 = arith.constant 7 : index
    %c0_283 = arith.constant 0 : index
    %905 = vector.load %arg11[%c0_281, %c7_282, %c0_283] : memref<2x8x96xf32, #tpu.memory_space<vmem>>, vector<2x1x96xf32>
    %906 = vector.shape_cast %905 : vector<2x1x96xf32> to vector<2x96xf32>
    %907 = vector.shape_cast %904 : vector<2x96xf32> to vector<2x1x96xf32>
    tpu.vector_store %arg11[%c0_281, %c7_282, %c0_283], %907 {strides = array<i32>} : memref<2x8x96xf32, #tpu.memory_space<vmem>>, vector<2x1x96xf32>,
    %c0_284 = arith.constant 0 : index
    %c0_285 = arith.constant 0 : index
    %908 = vector.load %arg7[%c0_284, %c0_285] : memref<32x96xf32, #tpu.memory_space<vmem>>, vector<32x96xf32>
    %c0_286 = arith.constant 0 : index
    %c0_287 = arith.constant 0 : index
    %909 = vector.load %arg9[%c0_286, %c0_287] : memref<1x32xf32, #tpu.memory_space<vmem>>, vector<1x32xf32>
    %cst_288 = arith.constant 0.000000e+00 : f32
    %910 = vector.broadcast %cst_288 : f32 to vector<2x32xf32>
    %911 = vector.extract_strided_slice %5 {offsets = [0, 0], sizes = [2, 1], strides = [1, 1]} : vector<2x8xf32> to vector<2x1xf32>
    %912 = vector.extract_strided_slice %5 {offsets = [0, 7], sizes = [2, 1], strides = [1, 1]} : vector<2x8xf32> to vector<2x1xf32>
    %c0_289 = arith.constant 0 : index
    %c0_290 = arith.constant 0 : index
    %c0_291 = arith.constant 0 : index
    %913 = vector.load %arg11[%c0_289, %c0_290, %c0_291] : memref<2x8x96xf32, #tpu.memory_space<vmem>>, vector<2x1x48xf32>
    %914 = vector.shape_cast %913 : vector<2x1x48xf32> to vector<2x48xf32>
    %c0_292 = arith.constant 0 : index
    %c7_293 = arith.constant 7 : index
    %c48_294 = arith.constant 48 : index
    %915 = vector.load %arg11[%c0_292, %c7_293, %c48_294] : memref<2x8x96xf32, #tpu.memory_space<vmem>>, vector<2x1x48xf32>
    %916 = vector.shape_cast %915 : vector<2x1x48xf32> to vector<2x48xf32>
    %cst_295 = arith.constant dense<0.000000e+00> : vector<2x96xf32>
    %917 = tpu.matmul %910, %908, %cst_295 {dimension_numbers = #tpu.dot_dimension_numbers<[1], [0], [0], [1], [0, 0, 1, 1], [], []>} : vector<2x32xf32>, vector<32x96xf32>, vector<2x96xf32> -> vector<2x96xf32>
    %918 = vector.extract_strided_slice %917 {offsets = [0, 0], sizes = [2, 48], strides = [1, 1]} : vector<2x96xf32> to vector<2x48xf32>
    %919 = vector.extract_strided_slice %910 {offsets = [0, 0], sizes = [2, 16], strides = [1, 1]} : vector<2x32xf32> to vector<2x16xf32>
    %920 = vector.extract_strided_slice %909 {offsets = [0, 0], sizes = [1, 16], strides = [1, 1]} : vector<1x32xf32> to vector<1x16xf32>
    %921 = vector.extract_strided_slice %914 {offsets = [0, 0], sizes = [2, 16], strides = [1, 1]} : vector<2x48xf32> to vector<2x16xf32>
    %922 = vector.extract_strided_slice %918 {offsets = [0, 0], sizes = [2, 16], strides = [1, 1]} : vector<2x48xf32> to vector<2x16xf32>
    %923 = arith.addf %921, %922 : vector<2x16xf32>
    %924 = arith.negf %923 : vector<2x16xf32>
    %925 = math.exp %924 : vector<2x16xf32>
    %cst_296 = arith.constant 1.000000e+00 : f32
    %926 = vector.broadcast %cst_296 : f32 to vector<2x16xf32>
    %927 = arith.addf %926, %925 : vector<2x16xf32>
    %928 = arith.divf %926, %927 : vector<2x16xf32>
    %929 = vector.extract_strided_slice %914 {offsets = [0, 16], sizes = [2, 16], strides = [1, 1]} : vector<2x48xf32> to vector<2x16xf32>
    %930 = vector.extract_strided_slice %918 {offsets = [0, 16], sizes = [2, 16], strides = [1, 1]} : vector<2x48xf32> to vector<2x16xf32>
    %931 = arith.addf %929, %930 : vector<2x16xf32>
    %932 = arith.negf %931 : vector<2x16xf32>
    %933 = math.exp %932 : vector<2x16xf32>
    %cst_297 = arith.constant 1.000000e+00 : f32
    %934 = vector.broadcast %cst_297 : f32 to vector<2x16xf32>
    %935 = arith.addf %934, %933 : vector<2x16xf32>
    %936 = arith.divf %934, %935 : vector<2x16xf32>
    %937 = vector.extract_strided_slice %914 {offsets = [0, 32], sizes = [2, 16], strides = [1, 1]} : vector<2x48xf32> to vector<2x16xf32>
    %938 = vector.extract_strided_slice %918 {offsets = [0, 32], sizes = [2, 16], strides = [1, 1]} : vector<2x48xf32> to vector<2x16xf32>
    %939 = vector.broadcast %920 : vector<1x16xf32> to vector<2x16xf32>
    %940 = arith.addf %938, %939 : vector<2x16xf32>
    %941 = arith.mulf %928, %940 : vector<2x16xf32>
    %942 = arith.addf %937, %941 : vector<2x16xf32>
    %943 = math.tanh %942 : vector<2x16xf32>
    %cst_298 = arith.constant 1.000000e+00 : f32
    %944 = vector.broadcast %cst_298 : f32 to vector<2x16xf32>
    %945 = arith.subf %944, %936 : vector<2x16xf32>
    %946 = arith.mulf %945, %943 : vector<2x16xf32>
    %947 = arith.mulf %936, %919 : vector<2x16xf32>
    %948 = arith.addf %946, %947 : vector<2x16xf32>
    %949 = vector.extract_strided_slice %917 {offsets = [0, 48], sizes = [2, 48], strides = [1, 1]} : vector<2x96xf32> to vector<2x48xf32>
    %950 = vector.extract_strided_slice %910 {offsets = [0, 16], sizes = [2, 16], strides = [1, 1]} : vector<2x32xf32> to vector<2x16xf32>
    %951 = vector.extract_strided_slice %909 {offsets = [0, 16], sizes = [1, 16], strides = [1, 1]} : vector<1x32xf32> to vector<1x16xf32>
    %952 = vector.extract_strided_slice %916 {offsets = [0, 0], sizes = [2, 16], strides = [1, 1]} : vector<2x48xf32> to vector<2x16xf32>
    %953 = vector.extract_strided_slice %949 {offsets = [0, 0], sizes = [2, 16], strides = [1, 1]} : vector<2x48xf32> to vector<2x16xf32>
    %954 = arith.addf %952, %953 : vector<2x16xf32>
    %955 = arith.negf %954 : vector<2x16xf32>
    %956 = math.exp %955 : vector<2x16xf32>
    %cst_299 = arith.constant 1.000000e+00 : f32
    %957 = vector.broadcast %cst_299 : f32 to vector<2x16xf32>
    %958 = arith.addf %957, %956 : vector<2x16xf32>
    %959 = arith.divf %957, %958 : vector<2x16xf32>
    %960 = vector.extract_strided_slice %916 {offsets = [0, 16], sizes = [2, 16], strides = [1, 1]} : vector<2x48xf32> to vector<2x16xf32>
    %961 = vector.extract_strided_slice %949 {offsets = [0, 16], sizes = [2, 16], strides = [1, 1]} : vector<2x48xf32> to vector<2x16xf32>
    %962 = arith.addf %960, %961 : vector<2x16xf32>
    %963 = arith.negf %962 : vector<2x16xf32>
    %964 = math.exp %963 : vector<2x16xf32>
    %cst_300 = arith.constant 1.000000e+00 : f32
    %965 = vector.broadcast %cst_300 : f32 to vector<2x16xf32>
    %966 = arith.addf %965, %964 : vector<2x16xf32>
    %967 = arith.divf %965, %966 : vector<2x16xf32>
    %968 = vector.extract_strided_slice %916 {offsets = [0, 32], sizes = [2, 16], strides = [1, 1]} : vector<2x48xf32> to vector<2x16xf32>
    %969 = vector.extract_strided_slice %949 {offsets = [0, 32], sizes = [2, 16], strides = [1, 1]} : vector<2x48xf32> to vector<2x16xf32>
    %970 = vector.broadcast %951 : vector<1x16xf32> to vector<2x16xf32>
    %971 = arith.addf %969, %970 : vector<2x16xf32>
    %972 = arith.mulf %959, %971 : vector<2x16xf32>
    %973 = arith.addf %968, %972 : vector<2x16xf32>
    %974 = math.tanh %973 : vector<2x16xf32>
    %cst_301 = arith.constant 1.000000e+00 : f32
    %975 = vector.broadcast %cst_301 : f32 to vector<2x16xf32>
    %976 = arith.subf %975, %967 : vector<2x16xf32>
    %977 = arith.mulf %976, %974 : vector<2x16xf32>
    %978 = arith.mulf %967, %950 : vector<2x16xf32>
    %979 = arith.addf %977, %978 : vector<2x16xf32>
    %980 = vector.broadcast %911 : vector<2x1xf32> to vector<2x16xf32>
    %981 = arith.mulf %980, %948 : vector<2x16xf32>
    %cst_302 = arith.constant 1.000000e+00 : f32
    %982 = vector.broadcast %cst_302 : f32 to vector<2x1xf32>
    %983 = arith.subf %982, %911 : vector<2x1xf32>
    %984 = vector.extract_strided_slice %910 {offsets = [0, 0], sizes = [2, 16], strides = [1, 1]} : vector<2x32xf32> to vector<2x16xf32>
    %985 = vector.broadcast %983 : vector<2x1xf32> to vector<2x16xf32>
    %986 = arith.mulf %985, %984 : vector<2x16xf32>
    %987 = arith.addf %981, %986 : vector<2x16xf32>
    %988 = vector.broadcast %912 : vector<2x1xf32> to vector<2x16xf32>
    %989 = arith.mulf %988, %979 : vector<2x16xf32>
    %cst_303 = arith.constant 1.000000e+00 : f32
    %990 = vector.broadcast %cst_303 : f32 to vector<2x1xf32>
    %991 = arith.subf %990, %912 : vector<2x1xf32>
    %992 = vector.extract_strided_slice %910 {offsets = [0, 16], sizes = [2, 16], strides = [1, 1]} : vector<2x32xf32> to vector<2x16xf32>
    %993 = vector.broadcast %991 : vector<2x1xf32> to vector<2x16xf32>
    %994 = arith.mulf %993, %992 : vector<2x16xf32>
    %995 = arith.addf %989, %994 : vector<2x16xf32>
    %996 = vector.broadcast %911 : vector<2x1xf32> to vector<2x16xf32>
    %997 = arith.mulf %996, %987 : vector<2x16xf32>
    %c0_304 = arith.constant 0 : index
    %c0_305 = arith.constant 0 : index
    %c0_306 = arith.constant 0 : index
    %998 = vector.load %arg10[%c0_304, %c0_305, %c0_306] : memref<2x8x32xf32, #tpu.memory_space<vmem>>, vector<2x1x16xf32>
    %999 = vector.shape_cast %998 : vector<2x1x16xf32> to vector<2x16xf32>
    %1000 = vector.shape_cast %997 : vector<2x16xf32> to vector<2x1x16xf32>
    tpu.vector_store %arg10[%c0_304, %c0_305, %c0_306], %1000 {strides = array<i32>} : memref<2x8x32xf32, #tpu.memory_space<vmem>>, vector<2x1x16xf32>,
    %1001 = vector.broadcast %912 : vector<2x1xf32> to vector<2x16xf32>
    %1002 = arith.mulf %1001, %995 : vector<2x16xf32>
    %c0_307 = arith.constant 0 : index
    %c7_308 = arith.constant 7 : index
    %c16_309 = arith.constant 16 : index
    %1003 = vector.load %arg10[%c0_307, %c7_308, %c16_309] : memref<2x8x32xf32, #tpu.memory_space<vmem>>, vector<2x1x16xf32>
    %1004 = vector.shape_cast %1003 : vector<2x1x16xf32> to vector<2x16xf32>
    %1005 = vector.shape_cast %1002 : vector<2x16xf32> to vector<2x1x16xf32>
    tpu.vector_store %arg10[%c0_307, %c7_308, %c16_309], %1005 {strides = array<i32>} : memref<2x8x32xf32, #tpu.memory_space<vmem>>, vector<2x1x16xf32>,
    %1006 = tpu.concatenate %987, %995 in 1 : vector<2x16xf32>, vector<2x16xf32> -> vector<2x32xf32>
    %1007 = vector.extract_strided_slice %5 {offsets = [0, 1], sizes = [2, 1], strides = [1, 1]} : vector<2x8xf32> to vector<2x1xf32>
    %1008 = vector.extract_strided_slice %5 {offsets = [0, 6], sizes = [2, 1], strides = [1, 1]} : vector<2x8xf32> to vector<2x1xf32>
    %c0_310 = arith.constant 0 : index
    %c1_311 = arith.constant 1 : index
    %c0_312 = arith.constant 0 : index
    %1009 = vector.load %arg11[%c0_310, %c1_311, %c0_312] : memref<2x8x96xf32, #tpu.memory_space<vmem>>, vector<2x1x48xf32>
    %1010 = vector.shape_cast %1009 : vector<2x1x48xf32> to vector<2x48xf32>
    %c0_313 = arith.constant 0 : index
    %c6_314 = arith.constant 6 : index
    %c48_315 = arith.constant 48 : index
    %1011 = vector.load %arg11[%c0_313, %c6_314, %c48_315] : memref<2x8x96xf32, #tpu.memory_space<vmem>>, vector<2x1x48xf32>
    %1012 = vector.shape_cast %1011 : vector<2x1x48xf32> to vector<2x48xf32>
    %cst_316 = arith.constant dense<0.000000e+00> : vector<2x96xf32>
    %1013 = tpu.matmul %1006, %908, %cst_316 {dimension_numbers = #tpu.dot_dimension_numbers<[1], [0], [0], [1], [0, 0, 1, 1], [], []>} : vector<2x32xf32>, vector<32x96xf32>, vector<2x96xf32> -> vector<2x96xf32>
    %1014 = vector.extract_strided_slice %1013 {offsets = [0, 0], sizes = [2, 48], strides = [1, 1]} : vector<2x96xf32> to vector<2x48xf32>
    %1015 = vector.extract_strided_slice %1006 {offsets = [0, 0], sizes = [2, 16], strides = [1, 1]} : vector<2x32xf32> to vector<2x16xf32>
    %1016 = vector.extract_strided_slice %909 {offsets = [0, 0], sizes = [1, 16], strides = [1, 1]} : vector<1x32xf32> to vector<1x16xf32>
    %1017 = vector.extract_strided_slice %1010 {offsets = [0, 0], sizes = [2, 16], strides = [1, 1]} : vector<2x48xf32> to vector<2x16xf32>
    %1018 = vector.extract_strided_slice %1014 {offsets = [0, 0], sizes = [2, 16], strides = [1, 1]} : vector<2x48xf32> to vector<2x16xf32>
    %1019 = arith.addf %1017, %1018 : vector<2x16xf32>
    %1020 = arith.negf %1019 : vector<2x16xf32>
    %1021 = math.exp %1020 : vector<2x16xf32>
    %cst_317 = arith.constant 1.000000e+00 : f32
    %1022 = vector.broadcast %cst_317 : f32 to vector<2x16xf32>
    %1023 = arith.addf %1022, %1021 : vector<2x16xf32>
    %1024 = arith.divf %1022, %1023 : vector<2x16xf32>
    %1025 = vector.extract_strided_slice %1010 {offsets = [0, 16], sizes = [2, 16], strides = [1, 1]} : vector<2x48xf32> to vector<2x16xf32>
    %1026 = vector.extract_strided_slice %1014 {offsets = [0, 16], sizes = [2, 16], strides = [1, 1]} : vector<2x48xf32> to vector<2x16xf32>
    %1027 = arith.addf %1025, %1026 : vector<2x16xf32>
    %1028 = arith.negf %1027 : vector<2x16xf32>
    %1029 = math.exp %1028 : vector<2x16xf32>
    %cst_318 = arith.constant 1.000000e+00 : f32
    %1030 = vector.broadcast %cst_318 : f32 to vector<2x16xf32>
    %1031 = arith.addf %1030, %1029 : vector<2x16xf32>
    %1032 = arith.divf %1030, %1031 : vector<2x16xf32>
    %1033 = vector.extract_strided_slice %1010 {offsets = [0, 32], sizes = [2, 16], strides = [1, 1]} : vector<2x48xf32> to vector<2x16xf32>
    %1034 = vector.extract_strided_slice %1014 {offsets = [0, 32], sizes = [2, 16], strides = [1, 1]} : vector<2x48xf32> to vector<2x16xf32>
    %1035 = vector.broadcast %1016 : vector<1x16xf32> to vector<2x16xf32>
    %1036 = arith.addf %1034, %1035 : vector<2x16xf32>
    %1037 = arith.mulf %1024, %1036 : vector<2x16xf32>
    %1038 = arith.addf %1033, %1037 : vector<2x16xf32>
    %1039 = math.tanh %1038 : vector<2x16xf32>
    %cst_319 = arith.constant 1.000000e+00 : f32
    %1040 = vector.broadcast %cst_319 : f32 to vector<2x16xf32>
    %1041 = arith.subf %1040, %1032 : vector<2x16xf32>
    %1042 = arith.mulf %1041, %1039 : vector<2x16xf32>
    %1043 = arith.mulf %1032, %1015 : vector<2x16xf32>
    %1044 = arith.addf %1042, %1043 : vector<2x16xf32>
    %1045 = vector.extract_strided_slice %1013 {offsets = [0, 48], sizes = [2, 48], strides = [1, 1]} : vector<2x96xf32> to vector<2x48xf32>
    %1046 = vector.extract_strided_slice %1006 {offsets = [0, 16], sizes = [2, 16], strides = [1, 1]} : vector<2x32xf32> to vector<2x16xf32>
    %1047 = vector.extract_strided_slice %909 {offsets = [0, 16], sizes = [1, 16], strides = [1, 1]} : vector<1x32xf32> to vector<1x16xf32>
    %1048 = vector.extract_strided_slice %1012 {offsets = [0, 0], sizes = [2, 16], strides = [1, 1]} : vector<2x48xf32> to vector<2x16xf32>
    %1049 = vector.extract_strided_slice %1045 {offsets = [0, 0], sizes = [2, 16], strides = [1, 1]} : vector<2x48xf32> to vector<2x16xf32>
    %1050 = arith.addf %1048, %1049 : vector<2x16xf32>
    %1051 = arith.negf %1050 : vector<2x16xf32>
    %1052 = math.exp %1051 : vector<2x16xf32>
    %cst_320 = arith.constant 1.000000e+00 : f32
    %1053 = vector.broadcast %cst_320 : f32 to vector<2x16xf32>
    %1054 = arith.addf %1053, %1052 : vector<2x16xf32>
    %1055 = arith.divf %1053, %1054 : vector<2x16xf32>
    %1056 = vector.extract_strided_slice %1012 {offsets = [0, 16], sizes = [2, 16], strides = [1, 1]} : vector<2x48xf32> to vector<2x16xf32>
    %1057 = vector.extract_strided_slice %1045 {offsets = [0, 16], sizes = [2, 16], strides = [1, 1]} : vector<2x48xf32> to vector<2x16xf32>
    %1058 = arith.addf %1056, %1057 : vector<2x16xf32>
    %1059 = arith.negf %1058 : vector<2x16xf32>
    %1060 = math.exp %1059 : vector<2x16xf32>
    %cst_321 = arith.constant 1.000000e+00 : f32
    %1061 = vector.broadcast %cst_321 : f32 to vector<2x16xf32>
    %1062 = arith.addf %1061, %1060 : vector<2x16xf32>
    %1063 = arith.divf %1061, %1062 : vector<2x16xf32>
    %1064 = vector.extract_strided_slice %1012 {offsets = [0, 32], sizes = [2, 16], strides = [1, 1]} : vector<2x48xf32> to vector<2x16xf32>
    %1065 = vector.extract_strided_slice %1045 {offsets = [0, 32], sizes = [2, 16], strides = [1, 1]} : vector<2x48xf32> to vector<2x16xf32>
    %1066 = vector.broadcast %1047 : vector<1x16xf32> to vector<2x16xf32>
    %1067 = arith.addf %1065, %1066 : vector<2x16xf32>
    %1068 = arith.mulf %1055, %1067 : vector<2x16xf32>
    %1069 = arith.addf %1064, %1068 : vector<2x16xf32>
    %1070 = math.tanh %1069 : vector<2x16xf32>
    %cst_322 = arith.constant 1.000000e+00 : f32
    %1071 = vector.broadcast %cst_322 : f32 to vector<2x16xf32>
    %1072 = arith.subf %1071, %1063 : vector<2x16xf32>
    %1073 = arith.mulf %1072, %1070 : vector<2x16xf32>
    %1074 = arith.mulf %1063, %1046 : vector<2x16xf32>
    %1075 = arith.addf %1073, %1074 : vector<2x16xf32>
    %1076 = vector.broadcast %1007 : vector<2x1xf32> to vector<2x16xf32>
    %1077 = arith.mulf %1076, %1044 : vector<2x16xf32>
    %cst_323 = arith.constant 1.000000e+00 : f32
    %1078 = vector.broadcast %cst_323 : f32 to vector<2x1xf32>
    %1079 = arith.subf %1078, %1007 : vector<2x1xf32>
    %1080 = vector.extract_strided_slice %1006 {offsets = [0, 0], sizes = [2, 16], strides = [1, 1]} : vector<2x32xf32> to vector<2x16xf32>
    %1081 = vector.broadcast %1079 : vector<2x1xf32> to vector<2x16xf32>
    %1082 = arith.mulf %1081, %1080 : vector<2x16xf32>
    %1083 = arith.addf %1077, %1082 : vector<2x16xf32>
    %1084 = vector.broadcast %1008 : vector<2x1xf32> to vector<2x16xf32>
    %1085 = arith.mulf %1084, %1075 : vector<2x16xf32>
    %cst_324 = arith.constant 1.000000e+00 : f32
    %1086 = vector.broadcast %cst_324 : f32 to vector<2x1xf32>
    %1087 = arith.subf %1086, %1008 : vector<2x1xf32>
    %1088 = vector.extract_strided_slice %1006 {offsets = [0, 16], sizes = [2, 16], strides = [1, 1]} : vector<2x32xf32> to vector<2x16xf32>
    %1089 = vector.broadcast %1087 : vector<2x1xf32> to vector<2x16xf32>
    %1090 = arith.mulf %1089, %1088 : vector<2x16xf32>
    %1091 = arith.addf %1085, %1090 : vector<2x16xf32>
    %1092 = vector.broadcast %1007 : vector<2x1xf32> to vector<2x16xf32>
    %1093 = arith.mulf %1092, %1083 : vector<2x16xf32>
    %c0_325 = arith.constant 0 : index
    %c1_326 = arith.constant 1 : index
    %c0_327 = arith.constant 0 : index
    %1094 = vector.load %arg10[%c0_325, %c1_326, %c0_327] : memref<2x8x32xf32, #tpu.memory_space<vmem>>, vector<2x1x16xf32>
    %1095 = vector.shape_cast %1094 : vector<2x1x16xf32> to vector<2x16xf32>
    %1096 = vector.shape_cast %1093 : vector<2x16xf32> to vector<2x1x16xf32>
    tpu.vector_store %arg10[%c0_325, %c1_326, %c0_327], %1096 {strides = array<i32>} : memref<2x8x32xf32, #tpu.memory_space<vmem>>, vector<2x1x16xf32>,
    %1097 = vector.broadcast %1008 : vector<2x1xf32> to vector<2x16xf32>
    %1098 = arith.mulf %1097, %1091 : vector<2x16xf32>
    %c0_328 = arith.constant 0 : index
    %c6_329 = arith.constant 6 : index
    %c16_330 = arith.constant 16 : index
    %1099 = vector.load %arg10[%c0_328, %c6_329, %c16_330] : memref<2x8x32xf32, #tpu.memory_space<vmem>>, vector<2x1x16xf32>
    %1100 = vector.shape_cast %1099 : vector<2x1x16xf32> to vector<2x16xf32>
    %1101 = vector.shape_cast %1098 : vector<2x16xf32> to vector<2x1x16xf32>
    tpu.vector_store %arg10[%c0_328, %c6_329, %c16_330], %1101 {strides = array<i32>} : memref<2x8x32xf32, #tpu.memory_space<vmem>>, vector<2x1x16xf32>,
    %1102 = tpu.concatenate %1083, %1091 in 1 : vector<2x16xf32>, vector<2x16xf32> -> vector<2x32xf32>
    %1103 = vector.extract_strided_slice %5 {offsets = [0, 2], sizes = [2, 1], strides = [1, 1]} : vector<2x8xf32> to vector<2x1xf32>
    %1104 = vector.extract_strided_slice %5 {offsets = [0, 5], sizes = [2, 1], strides = [1, 1]} : vector<2x8xf32> to vector<2x1xf32>
    %c0_331 = arith.constant 0 : index
    %c2_332 = arith.constant 2 : index
    %c0_333 = arith.constant 0 : index
    %1105 = vector.load %arg11[%c0_331, %c2_332, %c0_333] : memref<2x8x96xf32, #tpu.memory_space<vmem>>, vector<2x1x48xf32>
    %1106 = vector.shape_cast %1105 : vector<2x1x48xf32> to vector<2x48xf32>
    %c0_334 = arith.constant 0 : index
    %c5_335 = arith.constant 5 : index
    %c48_336 = arith.constant 48 : index
    %1107 = vector.load %arg11[%c0_334, %c5_335, %c48_336] : memref<2x8x96xf32, #tpu.memory_space<vmem>>, vector<2x1x48xf32>
    %1108 = vector.shape_cast %1107 : vector<2x1x48xf32> to vector<2x48xf32>
    %cst_337 = arith.constant dense<0.000000e+00> : vector<2x96xf32>
    %1109 = tpu.matmul %1102, %908, %cst_337 {dimension_numbers = #tpu.dot_dimension_numbers<[1], [0], [0], [1], [0, 0, 1, 1], [], []>} : vector<2x32xf32>, vector<32x96xf32>, vector<2x96xf32> -> vector<2x96xf32>
    %1110 = vector.extract_strided_slice %1109 {offsets = [0, 0], sizes = [2, 48], strides = [1, 1]} : vector<2x96xf32> to vector<2x48xf32>
    %1111 = vector.extract_strided_slice %1102 {offsets = [0, 0], sizes = [2, 16], strides = [1, 1]} : vector<2x32xf32> to vector<2x16xf32>
    %1112 = vector.extract_strided_slice %909 {offsets = [0, 0], sizes = [1, 16], strides = [1, 1]} : vector<1x32xf32> to vector<1x16xf32>
    %1113 = vector.extract_strided_slice %1106 {offsets = [0, 0], sizes = [2, 16], strides = [1, 1]} : vector<2x48xf32> to vector<2x16xf32>
    %1114 = vector.extract_strided_slice %1110 {offsets = [0, 0], sizes = [2, 16], strides = [1, 1]} : vector<2x48xf32> to vector<2x16xf32>
    %1115 = arith.addf %1113, %1114 : vector<2x16xf32>
    %1116 = arith.negf %1115 : vector<2x16xf32>
    %1117 = math.exp %1116 : vector<2x16xf32>
    %cst_338 = arith.constant 1.000000e+00 : f32
    %1118 = vector.broadcast %cst_338 : f32 to vector<2x16xf32>
    %1119 = arith.addf %1118, %1117 : vector<2x16xf32>
    %1120 = arith.divf %1118, %1119 : vector<2x16xf32>
    %1121 = vector.extract_strided_slice %1106 {offsets = [0, 16], sizes = [2, 16], strides = [1, 1]} : vector<2x48xf32> to vector<2x16xf32>
    %1122 = vector.extract_strided_slice %1110 {offsets = [0, 16], sizes = [2, 16], strides = [1, 1]} : vector<2x48xf32> to vector<2x16xf32>
    %1123 = arith.addf %1121, %1122 : vector<2x16xf32>
    %1124 = arith.negf %1123 : vector<2x16xf32>
    %1125 = math.exp %1124 : vector<2x16xf32>
    %cst_339 = arith.constant 1.000000e+00 : f32
    %1126 = vector.broadcast %cst_339 : f32 to vector<2x16xf32>
    %1127 = arith.addf %1126, %1125 : vector<2x16xf32>
    %1128 = arith.divf %1126, %1127 : vector<2x16xf32>
    %1129 = vector.extract_strided_slice %1106 {offsets = [0, 32], sizes = [2, 16], strides = [1, 1]} : vector<2x48xf32> to vector<2x16xf32>
    %1130 = vector.extract_strided_slice %1110 {offsets = [0, 32], sizes = [2, 16], strides = [1, 1]} : vector<2x48xf32> to vector<2x16xf32>
    %1131 = vector.broadcast %1112 : vector<1x16xf32> to vector<2x16xf32>
    %1132 = arith.addf %1130, %1131 : vector<2x16xf32>
    %1133 = arith.mulf %1120, %1132 : vector<2x16xf32>
    %1134 = arith.addf %1129, %1133 : vector<2x16xf32>
    %1135 = math.tanh %1134 : vector<2x16xf32>
    %cst_340 = arith.constant 1.000000e+00 : f32
    %1136 = vector.broadcast %cst_340 : f32 to vector<2x16xf32>
    %1137 = arith.subf %1136, %1128 : vector<2x16xf32>
    %1138 = arith.mulf %1137, %1135 : vector<2x16xf32>
    %1139 = arith.mulf %1128, %1111 : vector<2x16xf32>
    %1140 = arith.addf %1138, %1139 : vector<2x16xf32>
    %1141 = vector.extract_strided_slice %1109 {offsets = [0, 48], sizes = [2, 48], strides = [1, 1]} : vector<2x96xf32> to vector<2x48xf32>
    %1142 = vector.extract_strided_slice %1102 {offsets = [0, 16], sizes = [2, 16], strides = [1, 1]} : vector<2x32xf32> to vector<2x16xf32>
    %1143 = vector.extract_strided_slice %909 {offsets = [0, 16], sizes = [1, 16], strides = [1, 1]} : vector<1x32xf32> to vector<1x16xf32>
    %1144 = vector.extract_strided_slice %1108 {offsets = [0, 0], sizes = [2, 16], strides = [1, 1]} : vector<2x48xf32> to vector<2x16xf32>
    %1145 = vector.extract_strided_slice %1141 {offsets = [0, 0], sizes = [2, 16], strides = [1, 1]} : vector<2x48xf32> to vector<2x16xf32>
    %1146 = arith.addf %1144, %1145 : vector<2x16xf32>
    %1147 = arith.negf %1146 : vector<2x16xf32>
    %1148 = math.exp %1147 : vector<2x16xf32>
    %cst_341 = arith.constant 1.000000e+00 : f32
    %1149 = vector.broadcast %cst_341 : f32 to vector<2x16xf32>
    %1150 = arith.addf %1149, %1148 : vector<2x16xf32>
    %1151 = arith.divf %1149, %1150 : vector<2x16xf32>
    %1152 = vector.extract_strided_slice %1108 {offsets = [0, 16], sizes = [2, 16], strides = [1, 1]} : vector<2x48xf32> to vector<2x16xf32>
    %1153 = vector.extract_strided_slice %1141 {offsets = [0, 16], sizes = [2, 16], strides = [1, 1]} : vector<2x48xf32> to vector<2x16xf32>
    %1154 = arith.addf %1152, %1153 : vector<2x16xf32>
    %1155 = arith.negf %1154 : vector<2x16xf32>
    %1156 = math.exp %1155 : vector<2x16xf32>
    %cst_342 = arith.constant 1.000000e+00 : f32
    %1157 = vector.broadcast %cst_342 : f32 to vector<2x16xf32>
    %1158 = arith.addf %1157, %1156 : vector<2x16xf32>
    %1159 = arith.divf %1157, %1158 : vector<2x16xf32>
    %1160 = vector.extract_strided_slice %1108 {offsets = [0, 32], sizes = [2, 16], strides = [1, 1]} : vector<2x48xf32> to vector<2x16xf32>
    %1161 = vector.extract_strided_slice %1141 {offsets = [0, 32], sizes = [2, 16], strides = [1, 1]} : vector<2x48xf32> to vector<2x16xf32>
    %1162 = vector.broadcast %1143 : vector<1x16xf32> to vector<2x16xf32>
    %1163 = arith.addf %1161, %1162 : vector<2x16xf32>
    %1164 = arith.mulf %1151, %1163 : vector<2x16xf32>
    %1165 = arith.addf %1160, %1164 : vector<2x16xf32>
    %1166 = math.tanh %1165 : vector<2x16xf32>
    %cst_343 = arith.constant 1.000000e+00 : f32
    %1167 = vector.broadcast %cst_343 : f32 to vector<2x16xf32>
    %1168 = arith.subf %1167, %1159 : vector<2x16xf32>
    %1169 = arith.mulf %1168, %1166 : vector<2x16xf32>
    %1170 = arith.mulf %1159, %1142 : vector<2x16xf32>
    %1171 = arith.addf %1169, %1170 : vector<2x16xf32>
    %1172 = vector.broadcast %1103 : vector<2x1xf32> to vector<2x16xf32>
    %1173 = arith.mulf %1172, %1140 : vector<2x16xf32>
    %cst_344 = arith.constant 1.000000e+00 : f32
    %1174 = vector.broadcast %cst_344 : f32 to vector<2x1xf32>
    %1175 = arith.subf %1174, %1103 : vector<2x1xf32>
    %1176 = vector.extract_strided_slice %1102 {offsets = [0, 0], sizes = [2, 16], strides = [1, 1]} : vector<2x32xf32> to vector<2x16xf32>
    %1177 = vector.broadcast %1175 : vector<2x1xf32> to vector<2x16xf32>
    %1178 = arith.mulf %1177, %1176 : vector<2x16xf32>
    %1179 = arith.addf %1173, %1178 : vector<2x16xf32>
    %1180 = vector.broadcast %1104 : vector<2x1xf32> to vector<2x16xf32>
    %1181 = arith.mulf %1180, %1171 : vector<2x16xf32>
    %cst_345 = arith.constant 1.000000e+00 : f32
    %1182 = vector.broadcast %cst_345 : f32 to vector<2x1xf32>
    %1183 = arith.subf %1182, %1104 : vector<2x1xf32>
    %1184 = vector.extract_strided_slice %1102 {offsets = [0, 16], sizes = [2, 16], strides = [1, 1]} : vector<2x32xf32> to vector<2x16xf32>
    %1185 = vector.broadcast %1183 : vector<2x1xf32> to vector<2x16xf32>
    %1186 = arith.mulf %1185, %1184 : vector<2x16xf32>
    %1187 = arith.addf %1181, %1186 : vector<2x16xf32>
    %1188 = vector.broadcast %1103 : vector<2x1xf32> to vector<2x16xf32>
    %1189 = arith.mulf %1188, %1179 : vector<2x16xf32>
    %c0_346 = arith.constant 0 : index
    %c2_347 = arith.constant 2 : index
    %c0_348 = arith.constant 0 : index
    %1190 = vector.load %arg10[%c0_346, %c2_347, %c0_348] : memref<2x8x32xf32, #tpu.memory_space<vmem>>, vector<2x1x16xf32>
    %1191 = vector.shape_cast %1190 : vector<2x1x16xf32> to vector<2x16xf32>
    %1192 = vector.shape_cast %1189 : vector<2x16xf32> to vector<2x1x16xf32>
    tpu.vector_store %arg10[%c0_346, %c2_347, %c0_348], %1192 {strides = array<i32>} : memref<2x8x32xf32, #tpu.memory_space<vmem>>, vector<2x1x16xf32>,
    %1193 = vector.broadcast %1104 : vector<2x1xf32> to vector<2x16xf32>
    %1194 = arith.mulf %1193, %1187 : vector<2x16xf32>
    %c0_349 = arith.constant 0 : index
    %c5_350 = arith.constant 5 : index
    %c16_351 = arith.constant 16 : index
    %1195 = vector.load %arg10[%c0_349, %c5_350, %c16_351] : memref<2x8x32xf32, #tpu.memory_space<vmem>>, vector<2x1x16xf32>
    %1196 = vector.shape_cast %1195 : vector<2x1x16xf32> to vector<2x16xf32>
    %1197 = vector.shape_cast %1194 : vector<2x16xf32> to vector<2x1x16xf32>
    tpu.vector_store %arg10[%c0_349, %c5_350, %c16_351], %1197 {strides = array<i32>} : memref<2x8x32xf32, #tpu.memory_space<vmem>>, vector<2x1x16xf32>,
    %1198 = tpu.concatenate %1179, %1187 in 1 : vector<2x16xf32>, vector<2x16xf32> -> vector<2x32xf32>
    %1199 = vector.extract_strided_slice %5 {offsets = [0, 3], sizes = [2, 1], strides = [1, 1]} : vector<2x8xf32> to vector<2x1xf32>
    %1200 = vector.extract_strided_slice %5 {offsets = [0, 4], sizes = [2, 1], strides = [1, 1]} : vector<2x8xf32> to vector<2x1xf32>
    %c0_352 = arith.constant 0 : index
    %c3_353 = arith.constant 3 : index
    %c0_354 = arith.constant 0 : index
    %1201 = vector.load %arg11[%c0_352, %c3_353, %c0_354] : memref<2x8x96xf32, #tpu.memory_space<vmem>>, vector<2x1x48xf32>
    %1202 = vector.shape_cast %1201 : vector<2x1x48xf32> to vector<2x48xf32>
    %c0_355 = arith.constant 0 : index
    %c4_356 = arith.constant 4 : index
    %c48_357 = arith.constant 48 : index
    %1203 = vector.load %arg11[%c0_355, %c4_356, %c48_357] : memref<2x8x96xf32, #tpu.memory_space<vmem>>, vector<2x1x48xf32>
    %1204 = vector.shape_cast %1203 : vector<2x1x48xf32> to vector<2x48xf32>
    %cst_358 = arith.constant dense<0.000000e+00> : vector<2x96xf32>
    %1205 = tpu.matmul %1198, %908, %cst_358 {dimension_numbers = #tpu.dot_dimension_numbers<[1], [0], [0], [1], [0, 0, 1, 1], [], []>} : vector<2x32xf32>, vector<32x96xf32>, vector<2x96xf32> -> vector<2x96xf32>
    %1206 = vector.extract_strided_slice %1205 {offsets = [0, 0], sizes = [2, 48], strides = [1, 1]} : vector<2x96xf32> to vector<2x48xf32>
    %1207 = vector.extract_strided_slice %1198 {offsets = [0, 0], sizes = [2, 16], strides = [1, 1]} : vector<2x32xf32> to vector<2x16xf32>
    %1208 = vector.extract_strided_slice %909 {offsets = [0, 0], sizes = [1, 16], strides = [1, 1]} : vector<1x32xf32> to vector<1x16xf32>
    %1209 = vector.extract_strided_slice %1202 {offsets = [0, 0], sizes = [2, 16], strides = [1, 1]} : vector<2x48xf32> to vector<2x16xf32>
    %1210 = vector.extract_strided_slice %1206 {offsets = [0, 0], sizes = [2, 16], strides = [1, 1]} : vector<2x48xf32> to vector<2x16xf32>
    %1211 = arith.addf %1209, %1210 : vector<2x16xf32>
    %1212 = arith.negf %1211 : vector<2x16xf32>
    %1213 = math.exp %1212 : vector<2x16xf32>
    %cst_359 = arith.constant 1.000000e+00 : f32
    %1214 = vector.broadcast %cst_359 : f32 to vector<2x16xf32>
    %1215 = arith.addf %1214, %1213 : vector<2x16xf32>
    %1216 = arith.divf %1214, %1215 : vector<2x16xf32>
    %1217 = vector.extract_strided_slice %1202 {offsets = [0, 16], sizes = [2, 16], strides = [1, 1]} : vector<2x48xf32> to vector<2x16xf32>
    %1218 = vector.extract_strided_slice %1206 {offsets = [0, 16], sizes = [2, 16], strides = [1, 1]} : vector<2x48xf32> to vector<2x16xf32>
    %1219 = arith.addf %1217, %1218 : vector<2x16xf32>
    %1220 = arith.negf %1219 : vector<2x16xf32>
    %1221 = math.exp %1220 : vector<2x16xf32>
    %cst_360 = arith.constant 1.000000e+00 : f32
    %1222 = vector.broadcast %cst_360 : f32 to vector<2x16xf32>
    %1223 = arith.addf %1222, %1221 : vector<2x16xf32>
    %1224 = arith.divf %1222, %1223 : vector<2x16xf32>
    %1225 = vector.extract_strided_slice %1202 {offsets = [0, 32], sizes = [2, 16], strides = [1, 1]} : vector<2x48xf32> to vector<2x16xf32>
    %1226 = vector.extract_strided_slice %1206 {offsets = [0, 32], sizes = [2, 16], strides = [1, 1]} : vector<2x48xf32> to vector<2x16xf32>
    %1227 = vector.broadcast %1208 : vector<1x16xf32> to vector<2x16xf32>
    %1228 = arith.addf %1226, %1227 : vector<2x16xf32>
    %1229 = arith.mulf %1216, %1228 : vector<2x16xf32>
    %1230 = arith.addf %1225, %1229 : vector<2x16xf32>
    %1231 = math.tanh %1230 : vector<2x16xf32>
    %cst_361 = arith.constant 1.000000e+00 : f32
    %1232 = vector.broadcast %cst_361 : f32 to vector<2x16xf32>
    %1233 = arith.subf %1232, %1224 : vector<2x16xf32>
    %1234 = arith.mulf %1233, %1231 : vector<2x16xf32>
    %1235 = arith.mulf %1224, %1207 : vector<2x16xf32>
    %1236 = arith.addf %1234, %1235 : vector<2x16xf32>
    %1237 = vector.extract_strided_slice %1205 {offsets = [0, 48], sizes = [2, 48], strides = [1, 1]} : vector<2x96xf32> to vector<2x48xf32>
    %1238 = vector.extract_strided_slice %1198 {offsets = [0, 16], sizes = [2, 16], strides = [1, 1]} : vector<2x32xf32> to vector<2x16xf32>
    %1239 = vector.extract_strided_slice %909 {offsets = [0, 16], sizes = [1, 16], strides = [1, 1]} : vector<1x32xf32> to vector<1x16xf32>
    %1240 = vector.extract_strided_slice %1204 {offsets = [0, 0], sizes = [2, 16], strides = [1, 1]} : vector<2x48xf32> to vector<2x16xf32>
    %1241 = vector.extract_strided_slice %1237 {offsets = [0, 0], sizes = [2, 16], strides = [1, 1]} : vector<2x48xf32> to vector<2x16xf32>
    %1242 = arith.addf %1240, %1241 : vector<2x16xf32>
    %1243 = arith.negf %1242 : vector<2x16xf32>
    %1244 = math.exp %1243 : vector<2x16xf32>
    %cst_362 = arith.constant 1.000000e+00 : f32
    %1245 = vector.broadcast %cst_362 : f32 to vector<2x16xf32>
    %1246 = arith.addf %1245, %1244 : vector<2x16xf32>
    %1247 = arith.divf %1245, %1246 : vector<2x16xf32>
    %1248 = vector.extract_strided_slice %1204 {offsets = [0, 16], sizes = [2, 16], strides = [1, 1]} : vector<2x48xf32> to vector<2x16xf32>
    %1249 = vector.extract_strided_slice %1237 {offsets = [0, 16], sizes = [2, 16], strides = [1, 1]} : vector<2x48xf32> to vector<2x16xf32>
    %1250 = arith.addf %1248, %1249 : vector<2x16xf32>
    %1251 = arith.negf %1250 : vector<2x16xf32>
    %1252 = math.exp %1251 : vector<2x16xf32>
    %cst_363 = arith.constant 1.000000e+00 : f32
    %1253 = vector.broadcast %cst_363 : f32 to vector<2x16xf32>
    %1254 = arith.addf %1253, %1252 : vector<2x16xf32>
    %1255 = arith.divf %1253, %1254 : vector<2x16xf32>
    %1256 = vector.extract_strided_slice %1204 {offsets = [0, 32], sizes = [2, 16], strides = [1, 1]} : vector<2x48xf32> to vector<2x16xf32>
    %1257 = vector.extract_strided_slice %1237 {offsets = [0, 32], sizes = [2, 16], strides = [1, 1]} : vector<2x48xf32> to vector<2x16xf32>
    %1258 = vector.broadcast %1239 : vector<1x16xf32> to vector<2x16xf32>
    %1259 = arith.addf %1257, %1258 : vector<2x16xf32>
    %1260 = arith.mulf %1247, %1259 : vector<2x16xf32>
    %1261 = arith.addf %1256, %1260 : vector<2x16xf32>
    %1262 = math.tanh %1261 : vector<2x16xf32>
    %cst_364 = arith.constant 1.000000e+00 : f32
    %1263 = vector.broadcast %cst_364 : f32 to vector<2x16xf32>
    %1264 = arith.subf %1263, %1255 : vector<2x16xf32>
    %1265 = arith.mulf %1264, %1262 : vector<2x16xf32>
    %1266 = arith.mulf %1255, %1238 : vector<2x16xf32>
    %1267 = arith.addf %1265, %1266 : vector<2x16xf32>
    %1268 = vector.broadcast %1199 : vector<2x1xf32> to vector<2x16xf32>
    %1269 = arith.mulf %1268, %1236 : vector<2x16xf32>
    %cst_365 = arith.constant 1.000000e+00 : f32
    %1270 = vector.broadcast %cst_365 : f32 to vector<2x1xf32>
    %1271 = arith.subf %1270, %1199 : vector<2x1xf32>
    %1272 = vector.extract_strided_slice %1198 {offsets = [0, 0], sizes = [2, 16], strides = [1, 1]} : vector<2x32xf32> to vector<2x16xf32>
    %1273 = vector.broadcast %1271 : vector<2x1xf32> to vector<2x16xf32>
    %1274 = arith.mulf %1273, %1272 : vector<2x16xf32>
    %1275 = arith.addf %1269, %1274 : vector<2x16xf32>
    %1276 = vector.broadcast %1200 : vector<2x1xf32> to vector<2x16xf32>
    %1277 = arith.mulf %1276, %1267 : vector<2x16xf32>
    %cst_366 = arith.constant 1.000000e+00 : f32
    %1278 = vector.broadcast %cst_366 : f32 to vector<2x1xf32>
    %1279 = arith.subf %1278, %1200 : vector<2x1xf32>
    %1280 = vector.extract_strided_slice %1198 {offsets = [0, 16], sizes = [2, 16], strides = [1, 1]} : vector<2x32xf32> to vector<2x16xf32>
    %1281 = vector.broadcast %1279 : vector<2x1xf32> to vector<2x16xf32>
    %1282 = arith.mulf %1281, %1280 : vector<2x16xf32>
    %1283 = arith.addf %1277, %1282 : vector<2x16xf32>
    %1284 = vector.broadcast %1199 : vector<2x1xf32> to vector<2x16xf32>
    %1285 = arith.mulf %1284, %1275 : vector<2x16xf32>
    %c0_367 = arith.constant 0 : index
    %c3_368 = arith.constant 3 : index
    %c0_369 = arith.constant 0 : index
    %1286 = vector.load %arg10[%c0_367, %c3_368, %c0_369] : memref<2x8x32xf32, #tpu.memory_space<vmem>>, vector<2x1x16xf32>
    %1287 = vector.shape_cast %1286 : vector<2x1x16xf32> to vector<2x16xf32>
    %1288 = vector.shape_cast %1285 : vector<2x16xf32> to vector<2x1x16xf32>
    tpu.vector_store %arg10[%c0_367, %c3_368, %c0_369], %1288 {strides = array<i32>} : memref<2x8x32xf32, #tpu.memory_space<vmem>>, vector<2x1x16xf32>,
    %1289 = vector.broadcast %1200 : vector<2x1xf32> to vector<2x16xf32>
    %1290 = arith.mulf %1289, %1283 : vector<2x16xf32>
    %c0_370 = arith.constant 0 : index
    %c4_371 = arith.constant 4 : index
    %c16_372 = arith.constant 16 : index
    %1291 = vector.load %arg10[%c0_370, %c4_371, %c16_372] : memref<2x8x32xf32, #tpu.memory_space<vmem>>, vector<2x1x16xf32>
    %1292 = vector.shape_cast %1291 : vector<2x1x16xf32> to vector<2x16xf32>
    %1293 = vector.shape_cast %1290 : vector<2x16xf32> to vector<2x1x16xf32>
    tpu.vector_store %arg10[%c0_370, %c4_371, %c16_372], %1293 {strides = array<i32>} : memref<2x8x32xf32, #tpu.memory_space<vmem>>, vector<2x1x16xf32>,
    %1294 = tpu.concatenate %1275, %1283 in 1 : vector<2x16xf32>, vector<2x16xf32> -> vector<2x32xf32>
    %1295 = vector.extract_strided_slice %5 {offsets = [0, 4], sizes = [2, 1], strides = [1, 1]} : vector<2x8xf32> to vector<2x1xf32>
    %1296 = vector.extract_strided_slice %5 {offsets = [0, 3], sizes = [2, 1], strides = [1, 1]} : vector<2x8xf32> to vector<2x1xf32>
    %c0_373 = arith.constant 0 : index
    %c4_374 = arith.constant 4 : index
    %c0_375 = arith.constant 0 : index
    %1297 = vector.load %arg11[%c0_373, %c4_374, %c0_375] : memref<2x8x96xf32, #tpu.memory_space<vmem>>, vector<2x1x48xf32>
    %1298 = vector.shape_cast %1297 : vector<2x1x48xf32> to vector<2x48xf32>
    %c0_376 = arith.constant 0 : index
    %c3_377 = arith.constant 3 : index
    %c48_378 = arith.constant 48 : index
    %1299 = vector.load %arg11[%c0_376, %c3_377, %c48_378] : memref<2x8x96xf32, #tpu.memory_space<vmem>>, vector<2x1x48xf32>
    %1300 = vector.shape_cast %1299 : vector<2x1x48xf32> to vector<2x48xf32>
    %cst_379 = arith.constant dense<0.000000e+00> : vector<2x96xf32>
    %1301 = tpu.matmul %1294, %908, %cst_379 {dimension_numbers = #tpu.dot_dimension_numbers<[1], [0], [0], [1], [0, 0, 1, 1], [], []>} : vector<2x32xf32>, vector<32x96xf32>, vector<2x96xf32> -> vector<2x96xf32>
    %1302 = vector.extract_strided_slice %1301 {offsets = [0, 0], sizes = [2, 48], strides = [1, 1]} : vector<2x96xf32> to vector<2x48xf32>
    %1303 = vector.extract_strided_slice %1294 {offsets = [0, 0], sizes = [2, 16], strides = [1, 1]} : vector<2x32xf32> to vector<2x16xf32>
    %1304 = vector.extract_strided_slice %909 {offsets = [0, 0], sizes = [1, 16], strides = [1, 1]} : vector<1x32xf32> to vector<1x16xf32>
    %1305 = vector.extract_strided_slice %1298 {offsets = [0, 0], sizes = [2, 16], strides = [1, 1]} : vector<2x48xf32> to vector<2x16xf32>
    %1306 = vector.extract_strided_slice %1302 {offsets = [0, 0], sizes = [2, 16], strides = [1, 1]} : vector<2x48xf32> to vector<2x16xf32>
    %1307 = arith.addf %1305, %1306 : vector<2x16xf32>
    %1308 = arith.negf %1307 : vector<2x16xf32>
    %1309 = math.exp %1308 : vector<2x16xf32>
    %cst_380 = arith.constant 1.000000e+00 : f32
    %1310 = vector.broadcast %cst_380 : f32 to vector<2x16xf32>
    %1311 = arith.addf %1310, %1309 : vector<2x16xf32>
    %1312 = arith.divf %1310, %1311 : vector<2x16xf32>
    %1313 = vector.extract_strided_slice %1298 {offsets = [0, 16], sizes = [2, 16], strides = [1, 1]} : vector<2x48xf32> to vector<2x16xf32>
    %1314 = vector.extract_strided_slice %1302 {offsets = [0, 16], sizes = [2, 16], strides = [1, 1]} : vector<2x48xf32> to vector<2x16xf32>
    %1315 = arith.addf %1313, %1314 : vector<2x16xf32>
    %1316 = arith.negf %1315 : vector<2x16xf32>
    %1317 = math.exp %1316 : vector<2x16xf32>
    %cst_381 = arith.constant 1.000000e+00 : f32
    %1318 = vector.broadcast %cst_381 : f32 to vector<2x16xf32>
    %1319 = arith.addf %1318, %1317 : vector<2x16xf32>
    %1320 = arith.divf %1318, %1319 : vector<2x16xf32>
    %1321 = vector.extract_strided_slice %1298 {offsets = [0, 32], sizes = [2, 16], strides = [1, 1]} : vector<2x48xf32> to vector<2x16xf32>
    %1322 = vector.extract_strided_slice %1302 {offsets = [0, 32], sizes = [2, 16], strides = [1, 1]} : vector<2x48xf32> to vector<2x16xf32>
    %1323 = vector.broadcast %1304 : vector<1x16xf32> to vector<2x16xf32>
    %1324 = arith.addf %1322, %1323 : vector<2x16xf32>
    %1325 = arith.mulf %1312, %1324 : vector<2x16xf32>
    %1326 = arith.addf %1321, %1325 : vector<2x16xf32>
    %1327 = math.tanh %1326 : vector<2x16xf32>
    %cst_382 = arith.constant 1.000000e+00 : f32
    %1328 = vector.broadcast %cst_382 : f32 to vector<2x16xf32>
    %1329 = arith.subf %1328, %1320 : vector<2x16xf32>
    %1330 = arith.mulf %1329, %1327 : vector<2x16xf32>
    %1331 = arith.mulf %1320, %1303 : vector<2x16xf32>
    %1332 = arith.addf %1330, %1331 : vector<2x16xf32>
    %1333 = vector.extract_strided_slice %1301 {offsets = [0, 48], sizes = [2, 48], strides = [1, 1]} : vector<2x96xf32> to vector<2x48xf32>
    %1334 = vector.extract_strided_slice %1294 {offsets = [0, 16], sizes = [2, 16], strides = [1, 1]} : vector<2x32xf32> to vector<2x16xf32>
    %1335 = vector.extract_strided_slice %909 {offsets = [0, 16], sizes = [1, 16], strides = [1, 1]} : vector<1x32xf32> to vector<1x16xf32>
    %1336 = vector.extract_strided_slice %1300 {offsets = [0, 0], sizes = [2, 16], strides = [1, 1]} : vector<2x48xf32> to vector<2x16xf32>
    %1337 = vector.extract_strided_slice %1333 {offsets = [0, 0], sizes = [2, 16], strides = [1, 1]} : vector<2x48xf32> to vector<2x16xf32>
    %1338 = arith.addf %1336, %1337 : vector<2x16xf32>
    %1339 = arith.negf %1338 : vector<2x16xf32>
    %1340 = math.exp %1339 : vector<2x16xf32>
    %cst_383 = arith.constant 1.000000e+00 : f32
    %1341 = vector.broadcast %cst_383 : f32 to vector<2x16xf32>
    %1342 = arith.addf %1341, %1340 : vector<2x16xf32>
    %1343 = arith.divf %1341, %1342 : vector<2x16xf32>
    %1344 = vector.extract_strided_slice %1300 {offsets = [0, 16], sizes = [2, 16], strides = [1, 1]} : vector<2x48xf32> to vector<2x16xf32>
    %1345 = vector.extract_strided_slice %1333 {offsets = [0, 16], sizes = [2, 16], strides = [1, 1]} : vector<2x48xf32> to vector<2x16xf32>
    %1346 = arith.addf %1344, %1345 : vector<2x16xf32>
    %1347 = arith.negf %1346 : vector<2x16xf32>
    %1348 = math.exp %1347 : vector<2x16xf32>
    %cst_384 = arith.constant 1.000000e+00 : f32
    %1349 = vector.broadcast %cst_384 : f32 to vector<2x16xf32>
    %1350 = arith.addf %1349, %1348 : vector<2x16xf32>
    %1351 = arith.divf %1349, %1350 : vector<2x16xf32>
    %1352 = vector.extract_strided_slice %1300 {offsets = [0, 32], sizes = [2, 16], strides = [1, 1]} : vector<2x48xf32> to vector<2x16xf32>
    %1353 = vector.extract_strided_slice %1333 {offsets = [0, 32], sizes = [2, 16], strides = [1, 1]} : vector<2x48xf32> to vector<2x16xf32>
    %1354 = vector.broadcast %1335 : vector<1x16xf32> to vector<2x16xf32>
    %1355 = arith.addf %1353, %1354 : vector<2x16xf32>
    %1356 = arith.mulf %1343, %1355 : vector<2x16xf32>
    %1357 = arith.addf %1352, %1356 : vector<2x16xf32>
    %1358 = math.tanh %1357 : vector<2x16xf32>
    %cst_385 = arith.constant 1.000000e+00 : f32
    %1359 = vector.broadcast %cst_385 : f32 to vector<2x16xf32>
    %1360 = arith.subf %1359, %1351 : vector<2x16xf32>
    %1361 = arith.mulf %1360, %1358 : vector<2x16xf32>
    %1362 = arith.mulf %1351, %1334 : vector<2x16xf32>
    %1363 = arith.addf %1361, %1362 : vector<2x16xf32>
    %1364 = vector.broadcast %1295 : vector<2x1xf32> to vector<2x16xf32>
    %1365 = arith.mulf %1364, %1332 : vector<2x16xf32>
    %cst_386 = arith.constant 1.000000e+00 : f32
    %1366 = vector.broadcast %cst_386 : f32 to vector<2x1xf32>
    %1367 = arith.subf %1366, %1295 : vector<2x1xf32>
    %1368 = vector.extract_strided_slice %1294 {offsets = [0, 0], sizes = [2, 16], strides = [1, 1]} : vector<2x32xf32> to vector<2x16xf32>
    %1369 = vector.broadcast %1367 : vector<2x1xf32> to vector<2x16xf32>
    %1370 = arith.mulf %1369, %1368 : vector<2x16xf32>
    %1371 = arith.addf %1365, %1370 : vector<2x16xf32>
    %1372 = vector.broadcast %1296 : vector<2x1xf32> to vector<2x16xf32>
    %1373 = arith.mulf %1372, %1363 : vector<2x16xf32>
    %cst_387 = arith.constant 1.000000e+00 : f32
    %1374 = vector.broadcast %cst_387 : f32 to vector<2x1xf32>
    %1375 = arith.subf %1374, %1296 : vector<2x1xf32>
    %1376 = vector.extract_strided_slice %1294 {offsets = [0, 16], sizes = [2, 16], strides = [1, 1]} : vector<2x32xf32> to vector<2x16xf32>
    %1377 = vector.broadcast %1375 : vector<2x1xf32> to vector<2x16xf32>
    %1378 = arith.mulf %1377, %1376 : vector<2x16xf32>
    %1379 = arith.addf %1373, %1378 : vector<2x16xf32>
    %1380 = vector.broadcast %1295 : vector<2x1xf32> to vector<2x16xf32>
    %1381 = arith.mulf %1380, %1371 : vector<2x16xf32>
    %c0_388 = arith.constant 0 : index
    %c4_389 = arith.constant 4 : index
    %c0_390 = arith.constant 0 : index
    %1382 = vector.load %arg10[%c0_388, %c4_389, %c0_390] : memref<2x8x32xf32, #tpu.memory_space<vmem>>, vector<2x1x16xf32>
    %1383 = vector.shape_cast %1382 : vector<2x1x16xf32> to vector<2x16xf32>
    %1384 = vector.shape_cast %1381 : vector<2x16xf32> to vector<2x1x16xf32>
    tpu.vector_store %arg10[%c0_388, %c4_389, %c0_390], %1384 {strides = array<i32>} : memref<2x8x32xf32, #tpu.memory_space<vmem>>, vector<2x1x16xf32>,
    %1385 = vector.broadcast %1296 : vector<2x1xf32> to vector<2x16xf32>
    %1386 = arith.mulf %1385, %1379 : vector<2x16xf32>
    %c0_391 = arith.constant 0 : index
    %c3_392 = arith.constant 3 : index
    %c16_393 = arith.constant 16 : index
    %1387 = vector.load %arg10[%c0_391, %c3_392, %c16_393] : memref<2x8x32xf32, #tpu.memory_space<vmem>>, vector<2x1x16xf32>
    %1388 = vector.shape_cast %1387 : vector<2x1x16xf32> to vector<2x16xf32>
    %1389 = vector.shape_cast %1386 : vector<2x16xf32> to vector<2x1x16xf32>
    tpu.vector_store %arg10[%c0_391, %c3_392, %c16_393], %1389 {strides = array<i32>} : memref<2x8x32xf32, #tpu.memory_space<vmem>>, vector<2x1x16xf32>,
    %1390 = tpu.concatenate %1371, %1379 in 1 : vector<2x16xf32>, vector<2x16xf32> -> vector<2x32xf32>
    %1391 = vector.extract_strided_slice %5 {offsets = [0, 5], sizes = [2, 1], strides = [1, 1]} : vector<2x8xf32> to vector<2x1xf32>
    %1392 = vector.extract_strided_slice %5 {offsets = [0, 2], sizes = [2, 1], strides = [1, 1]} : vector<2x8xf32> to vector<2x1xf32>
    %c0_394 = arith.constant 0 : index
    %c5_395 = arith.constant 5 : index
    %c0_396 = arith.constant 0 : index
    %1393 = vector.load %arg11[%c0_394, %c5_395, %c0_396] : memref<2x8x96xf32, #tpu.memory_space<vmem>>, vector<2x1x48xf32>
    %1394 = vector.shape_cast %1393 : vector<2x1x48xf32> to vector<2x48xf32>
    %c0_397 = arith.constant 0 : index
    %c2_398 = arith.constant 2 : index
    %c48_399 = arith.constant 48 : index
    %1395 = vector.load %arg11[%c0_397, %c2_398, %c48_399] : memref<2x8x96xf32, #tpu.memory_space<vmem>>, vector<2x1x48xf32>
    %1396 = vector.shape_cast %1395 : vector<2x1x48xf32> to vector<2x48xf32>
    %cst_400 = arith.constant dense<0.000000e+00> : vector<2x96xf32>
    %1397 = tpu.matmul %1390, %908, %cst_400 {dimension_numbers = #tpu.dot_dimension_numbers<[1], [0], [0], [1], [0, 0, 1, 1], [], []>} : vector<2x32xf32>, vector<32x96xf32>, vector<2x96xf32> -> vector<2x96xf32>
    %1398 = vector.extract_strided_slice %1397 {offsets = [0, 0], sizes = [2, 48], strides = [1, 1]} : vector<2x96xf32> to vector<2x48xf32>
    %1399 = vector.extract_strided_slice %1390 {offsets = [0, 0], sizes = [2, 16], strides = [1, 1]} : vector<2x32xf32> to vector<2x16xf32>
    %1400 = vector.extract_strided_slice %909 {offsets = [0, 0], sizes = [1, 16], strides = [1, 1]} : vector<1x32xf32> to vector<1x16xf32>
    %1401 = vector.extract_strided_slice %1394 {offsets = [0, 0], sizes = [2, 16], strides = [1, 1]} : vector<2x48xf32> to vector<2x16xf32>
    %1402 = vector.extract_strided_slice %1398 {offsets = [0, 0], sizes = [2, 16], strides = [1, 1]} : vector<2x48xf32> to vector<2x16xf32>
    %1403 = arith.addf %1401, %1402 : vector<2x16xf32>
    %1404 = arith.negf %1403 : vector<2x16xf32>
    %1405 = math.exp %1404 : vector<2x16xf32>
    %cst_401 = arith.constant 1.000000e+00 : f32
    %1406 = vector.broadcast %cst_401 : f32 to vector<2x16xf32>
    %1407 = arith.addf %1406, %1405 : vector<2x16xf32>
    %1408 = arith.divf %1406, %1407 : vector<2x16xf32>
    %1409 = vector.extract_strided_slice %1394 {offsets = [0, 16], sizes = [2, 16], strides = [1, 1]} : vector<2x48xf32> to vector<2x16xf32>
    %1410 = vector.extract_strided_slice %1398 {offsets = [0, 16], sizes = [2, 16], strides = [1, 1]} : vector<2x48xf32> to vector<2x16xf32>
    %1411 = arith.addf %1409, %1410 : vector<2x16xf32>
    %1412 = arith.negf %1411 : vector<2x16xf32>
    %1413 = math.exp %1412 : vector<2x16xf32>
    %cst_402 = arith.constant 1.000000e+00 : f32
    %1414 = vector.broadcast %cst_402 : f32 to vector<2x16xf32>
    %1415 = arith.addf %1414, %1413 : vector<2x16xf32>
    %1416 = arith.divf %1414, %1415 : vector<2x16xf32>
    %1417 = vector.extract_strided_slice %1394 {offsets = [0, 32], sizes = [2, 16], strides = [1, 1]} : vector<2x48xf32> to vector<2x16xf32>
    %1418 = vector.extract_strided_slice %1398 {offsets = [0, 32], sizes = [2, 16], strides = [1, 1]} : vector<2x48xf32> to vector<2x16xf32>
    %1419 = vector.broadcast %1400 : vector<1x16xf32> to vector<2x16xf32>
    %1420 = arith.addf %1418, %1419 : vector<2x16xf32>
    %1421 = arith.mulf %1408, %1420 : vector<2x16xf32>
    %1422 = arith.addf %1417, %1421 : vector<2x16xf32>
    %1423 = math.tanh %1422 : vector<2x16xf32>
    %cst_403 = arith.constant 1.000000e+00 : f32
    %1424 = vector.broadcast %cst_403 : f32 to vector<2x16xf32>
    %1425 = arith.subf %1424, %1416 : vector<2x16xf32>
    %1426 = arith.mulf %1425, %1423 : vector<2x16xf32>
    %1427 = arith.mulf %1416, %1399 : vector<2x16xf32>
    %1428 = arith.addf %1426, %1427 : vector<2x16xf32>
    %1429 = vector.extract_strided_slice %1397 {offsets = [0, 48], sizes = [2, 48], strides = [1, 1]} : vector<2x96xf32> to vector<2x48xf32>
    %1430 = vector.extract_strided_slice %1390 {offsets = [0, 16], sizes = [2, 16], strides = [1, 1]} : vector<2x32xf32> to vector<2x16xf32>
    %1431 = vector.extract_strided_slice %909 {offsets = [0, 16], sizes = [1, 16], strides = [1, 1]} : vector<1x32xf32> to vector<1x16xf32>
    %1432 = vector.extract_strided_slice %1396 {offsets = [0, 0], sizes = [2, 16], strides = [1, 1]} : vector<2x48xf32> to vector<2x16xf32>
    %1433 = vector.extract_strided_slice %1429 {offsets = [0, 0], sizes = [2, 16], strides = [1, 1]} : vector<2x48xf32> to vector<2x16xf32>
    %1434 = arith.addf %1432, %1433 : vector<2x16xf32>
    %1435 = arith.negf %1434 : vector<2x16xf32>
    %1436 = math.exp %1435 : vector<2x16xf32>
    %cst_404 = arith.constant 1.000000e+00 : f32
    %1437 = vector.broadcast %cst_404 : f32 to vector<2x16xf32>
    %1438 = arith.addf %1437, %1436 : vector<2x16xf32>
    %1439 = arith.divf %1437, %1438 : vector<2x16xf32>
    %1440 = vector.extract_strided_slice %1396 {offsets = [0, 16], sizes = [2, 16], strides = [1, 1]} : vector<2x48xf32> to vector<2x16xf32>
    %1441 = vector.extract_strided_slice %1429 {offsets = [0, 16], sizes = [2, 16], strides = [1, 1]} : vector<2x48xf32> to vector<2x16xf32>
    %1442 = arith.addf %1440, %1441 : vector<2x16xf32>
    %1443 = arith.negf %1442 : vector<2x16xf32>
    %1444 = math.exp %1443 : vector<2x16xf32>
    %cst_405 = arith.constant 1.000000e+00 : f32
    %1445 = vector.broadcast %cst_405 : f32 to vector<2x16xf32>
    %1446 = arith.addf %1445, %1444 : vector<2x16xf32>
    %1447 = arith.divf %1445, %1446 : vector<2x16xf32>
    %1448 = vector.extract_strided_slice %1396 {offsets = [0, 32], sizes = [2, 16], strides = [1, 1]} : vector<2x48xf32> to vector<2x16xf32>
    %1449 = vector.extract_strided_slice %1429 {offsets = [0, 32], sizes = [2, 16], strides = [1, 1]} : vector<2x48xf32> to vector<2x16xf32>
    %1450 = vector.broadcast %1431 : vector<1x16xf32> to vector<2x16xf32>
    %1451 = arith.addf %1449, %1450 : vector<2x16xf32>
    %1452 = arith.mulf %1439, %1451 : vector<2x16xf32>
    %1453 = arith.addf %1448, %1452 : vector<2x16xf32>
    %1454 = math.tanh %1453 : vector<2x16xf32>
    %cst_406 = arith.constant 1.000000e+00 : f32
    %1455 = vector.broadcast %cst_406 : f32 to vector<2x16xf32>
    %1456 = arith.subf %1455, %1447 : vector<2x16xf32>
    %1457 = arith.mulf %1456, %1454 : vector<2x16xf32>
    %1458 = arith.mulf %1447, %1430 : vector<2x16xf32>
    %1459 = arith.addf %1457, %1458 : vector<2x16xf32>
    %1460 = vector.broadcast %1391 : vector<2x1xf32> to vector<2x16xf32>
    %1461 = arith.mulf %1460, %1428 : vector<2x16xf32>
    %cst_407 = arith.constant 1.000000e+00 : f32
    %1462 = vector.broadcast %cst_407 : f32 to vector<2x1xf32>
    %1463 = arith.subf %1462, %1391 : vector<2x1xf32>
    %1464 = vector.extract_strided_slice %1390 {offsets = [0, 0], sizes = [2, 16], strides = [1, 1]} : vector<2x32xf32> to vector<2x16xf32>
    %1465 = vector.broadcast %1463 : vector<2x1xf32> to vector<2x16xf32>
    %1466 = arith.mulf %1465, %1464 : vector<2x16xf32>
    %1467 = arith.addf %1461, %1466 : vector<2x16xf32>
    %1468 = vector.broadcast %1392 : vector<2x1xf32> to vector<2x16xf32>
    %1469 = arith.mulf %1468, %1459 : vector<2x16xf32>
    %cst_408 = arith.constant 1.000000e+00 : f32
    %1470 = vector.broadcast %cst_408 : f32 to vector<2x1xf32>
    %1471 = arith.subf %1470, %1392 : vector<2x1xf32>
    %1472 = vector.extract_strided_slice %1390 {offsets = [0, 16], sizes = [2, 16], strides = [1, 1]} : vector<2x32xf32> to vector<2x16xf32>
    %1473 = vector.broadcast %1471 : vector<2x1xf32> to vector<2x16xf32>
    %1474 = arith.mulf %1473, %1472 : vector<2x16xf32>
    %1475 = arith.addf %1469, %1474 : vector<2x16xf32>
    %1476 = vector.broadcast %1391 : vector<2x1xf32> to vector<2x16xf32>
    %1477 = arith.mulf %1476, %1467 : vector<2x16xf32>
    %c0_409 = arith.constant 0 : index
    %c5_410 = arith.constant 5 : index
    %c0_411 = arith.constant 0 : index
    %1478 = vector.load %arg10[%c0_409, %c5_410, %c0_411] : memref<2x8x32xf32, #tpu.memory_space<vmem>>, vector<2x1x16xf32>
    %1479 = vector.shape_cast %1478 : vector<2x1x16xf32> to vector<2x16xf32>
    %1480 = vector.shape_cast %1477 : vector<2x16xf32> to vector<2x1x16xf32>
    tpu.vector_store %arg10[%c0_409, %c5_410, %c0_411], %1480 {strides = array<i32>} : memref<2x8x32xf32, #tpu.memory_space<vmem>>, vector<2x1x16xf32>,
    %1481 = vector.broadcast %1392 : vector<2x1xf32> to vector<2x16xf32>
    %1482 = arith.mulf %1481, %1475 : vector<2x16xf32>
    %c0_412 = arith.constant 0 : index
    %c2_413 = arith.constant 2 : index
    %c16_414 = arith.constant 16 : index
    %1483 = vector.load %arg10[%c0_412, %c2_413, %c16_414] : memref<2x8x32xf32, #tpu.memory_space<vmem>>, vector<2x1x16xf32>
    %1484 = vector.shape_cast %1483 : vector<2x1x16xf32> to vector<2x16xf32>
    %1485 = vector.shape_cast %1482 : vector<2x16xf32> to vector<2x1x16xf32>
    tpu.vector_store %arg10[%c0_412, %c2_413, %c16_414], %1485 {strides = array<i32>} : memref<2x8x32xf32, #tpu.memory_space<vmem>>, vector<2x1x16xf32>,
    %1486 = tpu.concatenate %1467, %1475 in 1 : vector<2x16xf32>, vector<2x16xf32> -> vector<2x32xf32>
    %1487 = vector.extract_strided_slice %5 {offsets = [0, 6], sizes = [2, 1], strides = [1, 1]} : vector<2x8xf32> to vector<2x1xf32>
    %1488 = vector.extract_strided_slice %5 {offsets = [0, 1], sizes = [2, 1], strides = [1, 1]} : vector<2x8xf32> to vector<2x1xf32>
    %c0_415 = arith.constant 0 : index
    %c6_416 = arith.constant 6 : index
    %c0_417 = arith.constant 0 : index
    %1489 = vector.load %arg11[%c0_415, %c6_416, %c0_417] : memref<2x8x96xf32, #tpu.memory_space<vmem>>, vector<2x1x48xf32>
    %1490 = vector.shape_cast %1489 : vector<2x1x48xf32> to vector<2x48xf32>
    %c0_418 = arith.constant 0 : index
    %c1_419 = arith.constant 1 : index
    %c48_420 = arith.constant 48 : index
    %1491 = vector.load %arg11[%c0_418, %c1_419, %c48_420] : memref<2x8x96xf32, #tpu.memory_space<vmem>>, vector<2x1x48xf32>
    %1492 = vector.shape_cast %1491 : vector<2x1x48xf32> to vector<2x48xf32>
    %cst_421 = arith.constant dense<0.000000e+00> : vector<2x96xf32>
    %1493 = tpu.matmul %1486, %908, %cst_421 {dimension_numbers = #tpu.dot_dimension_numbers<[1], [0], [0], [1], [0, 0, 1, 1], [], []>} : vector<2x32xf32>, vector<32x96xf32>, vector<2x96xf32> -> vector<2x96xf32>
    %1494 = vector.extract_strided_slice %1493 {offsets = [0, 0], sizes = [2, 48], strides = [1, 1]} : vector<2x96xf32> to vector<2x48xf32>
    %1495 = vector.extract_strided_slice %1486 {offsets = [0, 0], sizes = [2, 16], strides = [1, 1]} : vector<2x32xf32> to vector<2x16xf32>
    %1496 = vector.extract_strided_slice %909 {offsets = [0, 0], sizes = [1, 16], strides = [1, 1]} : vector<1x32xf32> to vector<1x16xf32>
    %1497 = vector.extract_strided_slice %1490 {offsets = [0, 0], sizes = [2, 16], strides = [1, 1]} : vector<2x48xf32> to vector<2x16xf32>
    %1498 = vector.extract_strided_slice %1494 {offsets = [0, 0], sizes = [2, 16], strides = [1, 1]} : vector<2x48xf32> to vector<2x16xf32>
    %1499 = arith.addf %1497, %1498 : vector<2x16xf32>
    %1500 = arith.negf %1499 : vector<2x16xf32>
    %1501 = math.exp %1500 : vector<2x16xf32>
    %cst_422 = arith.constant 1.000000e+00 : f32
    %1502 = vector.broadcast %cst_422 : f32 to vector<2x16xf32>
    %1503 = arith.addf %1502, %1501 : vector<2x16xf32>
    %1504 = arith.divf %1502, %1503 : vector<2x16xf32>
    %1505 = vector.extract_strided_slice %1490 {offsets = [0, 16], sizes = [2, 16], strides = [1, 1]} : vector<2x48xf32> to vector<2x16xf32>
    %1506 = vector.extract_strided_slice %1494 {offsets = [0, 16], sizes = [2, 16], strides = [1, 1]} : vector<2x48xf32> to vector<2x16xf32>
    %1507 = arith.addf %1505, %1506 : vector<2x16xf32>
    %1508 = arith.negf %1507 : vector<2x16xf32>
    %1509 = math.exp %1508 : vector<2x16xf32>
    %cst_423 = arith.constant 1.000000e+00 : f32
    %1510 = vector.broadcast %cst_423 : f32 to vector<2x16xf32>
    %1511 = arith.addf %1510, %1509 : vector<2x16xf32>
    %1512 = arith.divf %1510, %1511 : vector<2x16xf32>
    %1513 = vector.extract_strided_slice %1490 {offsets = [0, 32], sizes = [2, 16], strides = [1, 1]} : vector<2x48xf32> to vector<2x16xf32>
    %1514 = vector.extract_strided_slice %1494 {offsets = [0, 32], sizes = [2, 16], strides = [1, 1]} : vector<2x48xf32> to vector<2x16xf32>
    %1515 = vector.broadcast %1496 : vector<1x16xf32> to vector<2x16xf32>
    %1516 = arith.addf %1514, %1515 : vector<2x16xf32>
    %1517 = arith.mulf %1504, %1516 : vector<2x16xf32>
    %1518 = arith.addf %1513, %1517 : vector<2x16xf32>
    %1519 = math.tanh %1518 : vector<2x16xf32>
    %cst_424 = arith.constant 1.000000e+00 : f32
    %1520 = vector.broadcast %cst_424 : f32 to vector<2x16xf32>
    %1521 = arith.subf %1520, %1512 : vector<2x16xf32>
    %1522 = arith.mulf %1521, %1519 : vector<2x16xf32>
    %1523 = arith.mulf %1512, %1495 : vector<2x16xf32>
    %1524 = arith.addf %1522, %1523 : vector<2x16xf32>
    %1525 = vector.extract_strided_slice %1493 {offsets = [0, 48], sizes = [2, 48], strides = [1, 1]} : vector<2x96xf32> to vector<2x48xf32>
    %1526 = vector.extract_strided_slice %1486 {offsets = [0, 16], sizes = [2, 16], strides = [1, 1]} : vector<2x32xf32> to vector<2x16xf32>
    %1527 = vector.extract_strided_slice %909 {offsets = [0, 16], sizes = [1, 16], strides = [1, 1]} : vector<1x32xf32> to vector<1x16xf32>
    %1528 = vector.extract_strided_slice %1492 {offsets = [0, 0], sizes = [2, 16], strides = [1, 1]} : vector<2x48xf32> to vector<2x16xf32>
    %1529 = vector.extract_strided_slice %1525 {offsets = [0, 0], sizes = [2, 16], strides = [1, 1]} : vector<2x48xf32> to vector<2x16xf32>
    %1530 = arith.addf %1528, %1529 : vector<2x16xf32>
    %1531 = arith.negf %1530 : vector<2x16xf32>
    %1532 = math.exp %1531 : vector<2x16xf32>
    %cst_425 = arith.constant 1.000000e+00 : f32
    %1533 = vector.broadcast %cst_425 : f32 to vector<2x16xf32>
    %1534 = arith.addf %1533, %1532 : vector<2x16xf32>
    %1535 = arith.divf %1533, %1534 : vector<2x16xf32>
    %1536 = vector.extract_strided_slice %1492 {offsets = [0, 16], sizes = [2, 16], strides = [1, 1]} : vector<2x48xf32> to vector<2x16xf32>
    %1537 = vector.extract_strided_slice %1525 {offsets = [0, 16], sizes = [2, 16], strides = [1, 1]} : vector<2x48xf32> to vector<2x16xf32>
    %1538 = arith.addf %1536, %1537 : vector<2x16xf32>
    %1539 = arith.negf %1538 : vector<2x16xf32>
    %1540 = math.exp %1539 : vector<2x16xf32>
    %cst_426 = arith.constant 1.000000e+00 : f32
    %1541 = vector.broadcast %cst_426 : f32 to vector<2x16xf32>
    %1542 = arith.addf %1541, %1540 : vector<2x16xf32>
    %1543 = arith.divf %1541, %1542 : vector<2x16xf32>
    %1544 = vector.extract_strided_slice %1492 {offsets = [0, 32], sizes = [2, 16], strides = [1, 1]} : vector<2x48xf32> to vector<2x16xf32>
    %1545 = vector.extract_strided_slice %1525 {offsets = [0, 32], sizes = [2, 16], strides = [1, 1]} : vector<2x48xf32> to vector<2x16xf32>
    %1546 = vector.broadcast %1527 : vector<1x16xf32> to vector<2x16xf32>
    %1547 = arith.addf %1545, %1546 : vector<2x16xf32>
    %1548 = arith.mulf %1535, %1547 : vector<2x16xf32>
    %1549 = arith.addf %1544, %1548 : vector<2x16xf32>
    %1550 = math.tanh %1549 : vector<2x16xf32>
    %cst_427 = arith.constant 1.000000e+00 : f32
    %1551 = vector.broadcast %cst_427 : f32 to vector<2x16xf32>
    %1552 = arith.subf %1551, %1543 : vector<2x16xf32>
    %1553 = arith.mulf %1552, %1550 : vector<2x16xf32>
    %1554 = arith.mulf %1543, %1526 : vector<2x16xf32>
    %1555 = arith.addf %1553, %1554 : vector<2x16xf32>
    %1556 = vector.broadcast %1487 : vector<2x1xf32> to vector<2x16xf32>
    %1557 = arith.mulf %1556, %1524 : vector<2x16xf32>
    %cst_428 = arith.constant 1.000000e+00 : f32
    %1558 = vector.broadcast %cst_428 : f32 to vector<2x1xf32>
    %1559 = arith.subf %1558, %1487 : vector<2x1xf32>
    %1560 = vector.extract_strided_slice %1486 {offsets = [0, 0], sizes = [2, 16], strides = [1, 1]} : vector<2x32xf32> to vector<2x16xf32>
    %1561 = vector.broadcast %1559 : vector<2x1xf32> to vector<2x16xf32>
    %1562 = arith.mulf %1561, %1560 : vector<2x16xf32>
    %1563 = arith.addf %1557, %1562 : vector<2x16xf32>
    %1564 = vector.broadcast %1488 : vector<2x1xf32> to vector<2x16xf32>
    %1565 = arith.mulf %1564, %1555 : vector<2x16xf32>
    %cst_429 = arith.constant 1.000000e+00 : f32
    %1566 = vector.broadcast %cst_429 : f32 to vector<2x1xf32>
    %1567 = arith.subf %1566, %1488 : vector<2x1xf32>
    %1568 = vector.extract_strided_slice %1486 {offsets = [0, 16], sizes = [2, 16], strides = [1, 1]} : vector<2x32xf32> to vector<2x16xf32>
    %1569 = vector.broadcast %1567 : vector<2x1xf32> to vector<2x16xf32>
    %1570 = arith.mulf %1569, %1568 : vector<2x16xf32>
    %1571 = arith.addf %1565, %1570 : vector<2x16xf32>
    %1572 = vector.broadcast %1487 : vector<2x1xf32> to vector<2x16xf32>
    %1573 = arith.mulf %1572, %1563 : vector<2x16xf32>
    %c0_430 = arith.constant 0 : index
    %c6_431 = arith.constant 6 : index
    %c0_432 = arith.constant 0 : index
    %1574 = vector.load %arg10[%c0_430, %c6_431, %c0_432] : memref<2x8x32xf32, #tpu.memory_space<vmem>>, vector<2x1x16xf32>
    %1575 = vector.shape_cast %1574 : vector<2x1x16xf32> to vector<2x16xf32>
    %1576 = vector.shape_cast %1573 : vector<2x16xf32> to vector<2x1x16xf32>
    tpu.vector_store %arg10[%c0_430, %c6_431, %c0_432], %1576 {strides = array<i32>} : memref<2x8x32xf32, #tpu.memory_space<vmem>>, vector<2x1x16xf32>,
    %1577 = vector.broadcast %1488 : vector<2x1xf32> to vector<2x16xf32>
    %1578 = arith.mulf %1577, %1571 : vector<2x16xf32>
    %c0_433 = arith.constant 0 : index
    %c1_434 = arith.constant 1 : index
    %c16_435 = arith.constant 16 : index
    %1579 = vector.load %arg10[%c0_433, %c1_434, %c16_435] : memref<2x8x32xf32, #tpu.memory_space<vmem>>, vector<2x1x16xf32>
    %1580 = vector.shape_cast %1579 : vector<2x1x16xf32> to vector<2x16xf32>
    %1581 = vector.shape_cast %1578 : vector<2x16xf32> to vector<2x1x16xf32>
    tpu.vector_store %arg10[%c0_433, %c1_434, %c16_435], %1581 {strides = array<i32>} : memref<2x8x32xf32, #tpu.memory_space<vmem>>, vector<2x1x16xf32>,
    %1582 = tpu.concatenate %1563, %1571 in 1 : vector<2x16xf32>, vector<2x16xf32> -> vector<2x32xf32>
    %1583 = vector.extract_strided_slice %5 {offsets = [0, 7], sizes = [2, 1], strides = [1, 1]} : vector<2x8xf32> to vector<2x1xf32>
    %1584 = vector.extract_strided_slice %5 {offsets = [0, 0], sizes = [2, 1], strides = [1, 1]} : vector<2x8xf32> to vector<2x1xf32>
    %c0_436 = arith.constant 0 : index
    %c7_437 = arith.constant 7 : index
    %c0_438 = arith.constant 0 : index
    %1585 = vector.load %arg11[%c0_436, %c7_437, %c0_438] : memref<2x8x96xf32, #tpu.memory_space<vmem>>, vector<2x1x48xf32>
    %1586 = vector.shape_cast %1585 : vector<2x1x48xf32> to vector<2x48xf32>
    %c0_439 = arith.constant 0 : index
    %c0_440 = arith.constant 0 : index
    %c48_441 = arith.constant 48 : index
    %1587 = vector.load %arg11[%c0_439, %c0_440, %c48_441] : memref<2x8x96xf32, #tpu.memory_space<vmem>>, vector<2x1x48xf32>
    %1588 = vector.shape_cast %1587 : vector<2x1x48xf32> to vector<2x48xf32>
    %cst_442 = arith.constant dense<0.000000e+00> : vector<2x96xf32>
    %1589 = tpu.matmul %1582, %908, %cst_442 {dimension_numbers = #tpu.dot_dimension_numbers<[1], [0], [0], [1], [0, 0, 1, 1], [], []>} : vector<2x32xf32>, vector<32x96xf32>, vector<2x96xf32> -> vector<2x96xf32>
    %1590 = vector.extract_strided_slice %1589 {offsets = [0, 0], sizes = [2, 48], strides = [1, 1]} : vector<2x96xf32> to vector<2x48xf32>
    %1591 = vector.extract_strided_slice %1582 {offsets = [0, 0], sizes = [2, 16], strides = [1, 1]} : vector<2x32xf32> to vector<2x16xf32>
    %1592 = vector.extract_strided_slice %909 {offsets = [0, 0], sizes = [1, 16], strides = [1, 1]} : vector<1x32xf32> to vector<1x16xf32>
    %1593 = vector.extract_strided_slice %1586 {offsets = [0, 0], sizes = [2, 16], strides = [1, 1]} : vector<2x48xf32> to vector<2x16xf32>
    %1594 = vector.extract_strided_slice %1590 {offsets = [0, 0], sizes = [2, 16], strides = [1, 1]} : vector<2x48xf32> to vector<2x16xf32>
    %1595 = arith.addf %1593, %1594 : vector<2x16xf32>
    %1596 = arith.negf %1595 : vector<2x16xf32>
    %1597 = math.exp %1596 : vector<2x16xf32>
    %cst_443 = arith.constant 1.000000e+00 : f32
    %1598 = vector.broadcast %cst_443 : f32 to vector<2x16xf32>
    %1599 = arith.addf %1598, %1597 : vector<2x16xf32>
    %1600 = arith.divf %1598, %1599 : vector<2x16xf32>
    %1601 = vector.extract_strided_slice %1586 {offsets = [0, 16], sizes = [2, 16], strides = [1, 1]} : vector<2x48xf32> to vector<2x16xf32>
    %1602 = vector.extract_strided_slice %1590 {offsets = [0, 16], sizes = [2, 16], strides = [1, 1]} : vector<2x48xf32> to vector<2x16xf32>
    %1603 = arith.addf %1601, %1602 : vector<2x16xf32>
    %1604 = arith.negf %1603 : vector<2x16xf32>
    %1605 = math.exp %1604 : vector<2x16xf32>
    %cst_444 = arith.constant 1.000000e+00 : f32
    %1606 = vector.broadcast %cst_444 : f32 to vector<2x16xf32>
    %1607 = arith.addf %1606, %1605 : vector<2x16xf32>
    %1608 = arith.divf %1606, %1607 : vector<2x16xf32>
    %1609 = vector.extract_strided_slice %1586 {offsets = [0, 32], sizes = [2, 16], strides = [1, 1]} : vector<2x48xf32> to vector<2x16xf32>
    %1610 = vector.extract_strided_slice %1590 {offsets = [0, 32], sizes = [2, 16], strides = [1, 1]} : vector<2x48xf32> to vector<2x16xf32>
    %1611 = vector.broadcast %1592 : vector<1x16xf32> to vector<2x16xf32>
    %1612 = arith.addf %1610, %1611 : vector<2x16xf32>
    %1613 = arith.mulf %1600, %1612 : vector<2x16xf32>
    %1614 = arith.addf %1609, %1613 : vector<2x16xf32>
    %1615 = math.tanh %1614 : vector<2x16xf32>
    %cst_445 = arith.constant 1.000000e+00 : f32
    %1616 = vector.broadcast %cst_445 : f32 to vector<2x16xf32>
    %1617 = arith.subf %1616, %1608 : vector<2x16xf32>
    %1618 = arith.mulf %1617, %1615 : vector<2x16xf32>
    %1619 = arith.mulf %1608, %1591 : vector<2x16xf32>
    %1620 = arith.addf %1618, %1619 : vector<2x16xf32>
    %1621 = vector.extract_strided_slice %1589 {offsets = [0, 48], sizes = [2, 48], strides = [1, 1]} : vector<2x96xf32> to vector<2x48xf32>
    %1622 = vector.extract_strided_slice %1582 {offsets = [0, 16], sizes = [2, 16], strides = [1, 1]} : vector<2x32xf32> to vector<2x16xf32>
    %1623 = vector.extract_strided_slice %909 {offsets = [0, 16], sizes = [1, 16], strides = [1, 1]} : vector<1x32xf32> to vector<1x16xf32>
    %1624 = vector.extract_strided_slice %1588 {offsets = [0, 0], sizes = [2, 16], strides = [1, 1]} : vector<2x48xf32> to vector<2x16xf32>
    %1625 = vector.extract_strided_slice %1621 {offsets = [0, 0], sizes = [2, 16], strides = [1, 1]} : vector<2x48xf32> to vector<2x16xf32>
    %1626 = arith.addf %1624, %1625 : vector<2x16xf32>
    %1627 = arith.negf %1626 : vector<2x16xf32>
    %1628 = math.exp %1627 : vector<2x16xf32>
    %cst_446 = arith.constant 1.000000e+00 : f32
    %1629 = vector.broadcast %cst_446 : f32 to vector<2x16xf32>
    %1630 = arith.addf %1629, %1628 : vector<2x16xf32>
    %1631 = arith.divf %1629, %1630 : vector<2x16xf32>
    %1632 = vector.extract_strided_slice %1588 {offsets = [0, 16], sizes = [2, 16], strides = [1, 1]} : vector<2x48xf32> to vector<2x16xf32>
    %1633 = vector.extract_strided_slice %1621 {offsets = [0, 16], sizes = [2, 16], strides = [1, 1]} : vector<2x48xf32> to vector<2x16xf32>
    %1634 = arith.addf %1632, %1633 : vector<2x16xf32>
    %1635 = arith.negf %1634 : vector<2x16xf32>
    %1636 = math.exp %1635 : vector<2x16xf32>
    %cst_447 = arith.constant 1.000000e+00 : f32
    %1637 = vector.broadcast %cst_447 : f32 to vector<2x16xf32>
    %1638 = arith.addf %1637, %1636 : vector<2x16xf32>
    %1639 = arith.divf %1637, %1638 : vector<2x16xf32>
    %1640 = vector.extract_strided_slice %1588 {offsets = [0, 32], sizes = [2, 16], strides = [1, 1]} : vector<2x48xf32> to vector<2x16xf32>
    %1641 = vector.extract_strided_slice %1621 {offsets = [0, 32], sizes = [2, 16], strides = [1, 1]} : vector<2x48xf32> to vector<2x16xf32>
    %1642 = vector.broadcast %1623 : vector<1x16xf32> to vector<2x16xf32>
    %1643 = arith.addf %1641, %1642 : vector<2x16xf32>
    %1644 = arith.mulf %1631, %1643 : vector<2x16xf32>
    %1645 = arith.addf %1640, %1644 : vector<2x16xf32>
    %1646 = math.tanh %1645 : vector<2x16xf32>
    %cst_448 = arith.constant 1.000000e+00 : f32
    %1647 = vector.broadcast %cst_448 : f32 to vector<2x16xf32>
    %1648 = arith.subf %1647, %1639 : vector<2x16xf32>
    %1649 = arith.mulf %1648, %1646 : vector<2x16xf32>
    %1650 = arith.mulf %1639, %1622 : vector<2x16xf32>
    %1651 = arith.addf %1649, %1650 : vector<2x16xf32>
    %1652 = vector.broadcast %1583 : vector<2x1xf32> to vector<2x16xf32>
    %1653 = arith.mulf %1652, %1620 : vector<2x16xf32>
    %cst_449 = arith.constant 1.000000e+00 : f32
    %1654 = vector.broadcast %cst_449 : f32 to vector<2x1xf32>
    %1655 = arith.subf %1654, %1583 : vector<2x1xf32>
    %1656 = vector.extract_strided_slice %1582 {offsets = [0, 0], sizes = [2, 16], strides = [1, 1]} : vector<2x32xf32> to vector<2x16xf32>
    %1657 = vector.broadcast %1655 : vector<2x1xf32> to vector<2x16xf32>
    %1658 = arith.mulf %1657, %1656 : vector<2x16xf32>
    %1659 = arith.addf %1653, %1658 : vector<2x16xf32>
    %1660 = vector.broadcast %1584 : vector<2x1xf32> to vector<2x16xf32>
    %1661 = arith.mulf %1660, %1651 : vector<2x16xf32>
    %cst_450 = arith.constant 1.000000e+00 : f32
    %1662 = vector.broadcast %cst_450 : f32 to vector<2x1xf32>
    %1663 = arith.subf %1662, %1584 : vector<2x1xf32>
    %1664 = vector.extract_strided_slice %1582 {offsets = [0, 16], sizes = [2, 16], strides = [1, 1]} : vector<2x32xf32> to vector<2x16xf32>
    %1665 = vector.broadcast %1663 : vector<2x1xf32> to vector<2x16xf32>
    %1666 = arith.mulf %1665, %1664 : vector<2x16xf32>
    %1667 = arith.addf %1661, %1666 : vector<2x16xf32>
    %1668 = vector.broadcast %1583 : vector<2x1xf32> to vector<2x16xf32>
    %1669 = arith.mulf %1668, %1659 : vector<2x16xf32>
    %c0_451 = arith.constant 0 : index
    %c7_452 = arith.constant 7 : index
    %c0_453 = arith.constant 0 : index
    %1670 = vector.load %arg10[%c0_451, %c7_452, %c0_453] : memref<2x8x32xf32, #tpu.memory_space<vmem>>, vector<2x1x16xf32>
    %1671 = vector.shape_cast %1670 : vector<2x1x16xf32> to vector<2x16xf32>
    %1672 = vector.shape_cast %1669 : vector<2x16xf32> to vector<2x1x16xf32>
    tpu.vector_store %arg10[%c0_451, %c7_452, %c0_453], %1672 {strides = array<i32>} : memref<2x8x32xf32, #tpu.memory_space<vmem>>, vector<2x1x16xf32>,
    %1673 = vector.broadcast %1584 : vector<2x1xf32> to vector<2x16xf32>
    %1674 = arith.mulf %1673, %1667 : vector<2x16xf32>
    %c0_454 = arith.constant 0 : index
    %c0_455 = arith.constant 0 : index
    %c16_456 = arith.constant 16 : index
    %1675 = vector.load %arg10[%c0_454, %c0_455, %c16_456] : memref<2x8x32xf32, #tpu.memory_space<vmem>>, vector<2x1x16xf32>
    %1676 = vector.shape_cast %1675 : vector<2x1x16xf32> to vector<2x16xf32>
    %1677 = vector.shape_cast %1674 : vector<2x16xf32> to vector<2x1x16xf32>
    tpu.vector_store %arg10[%c0_454, %c0_455, %c16_456], %1677 {strides = array<i32>} : memref<2x8x32xf32, #tpu.memory_space<vmem>>, vector<2x1x16xf32>,
    return
  }
}

</mosaic_0001>

<llo_original>
// kernel: tpu_custom_call.1
$region0: #{tpu_custom_call.1}
  #allocation0 [shape = 'u32[]', space=smem, size = 0x4, offset = 0x4, fixed_abs, tag = 'smem constant byte address 0x4 - core index']
  #allocation1 [shape = 'u32[144,128]{1,0:T(1,128)}', space=vmem, size = 0x12000, scoped, tag = 'internal scratch']
  #allocation2 [shape = 'f32[2,8,96]{2,1,0:T(8,128)}', space=vmem, size = 0x2000, scoped, tag = 'scratch operand']
  #allocation3 [shape = 'f32[2,8,32]{2,1,0:T(8,128)}', space=vmem, size = 0x2000, scoped, tag = 'scratch operand']
  %s0 = inlined_call_operand.hbm [shape: f32[2,8,32], index: 0, kind: input, shape index: {}]
  %s1 = inlined_call_operand.vmem [shape: s32[2,1], index: 1, kind: input, shape index: {}]
  %s2 = inlined_call_operand.hbm [shape: f32[32,96], index: 2, kind: input, shape index: {}]
  %s3 = inlined_call_operand.hbm [shape: f32[32,96], index: 3, kind: input, shape index: {}]
  %s4 = inlined_call_operand.vmem [shape: f32[1,96], index: 4, kind: input, shape index: {}]
  %s5 = inlined_call_operand.vmem [shape: f32[1,32], index: 5, kind: input, shape index: {}]
  %s6 = inlined_call_operand.hbm [shape: f32[32,96], index: 6, kind: input, shape index: {}]
  %s7 = inlined_call_operand.hbm [shape: f32[32,96], index: 7, kind: input, shape index: {}]
  %s8 = inlined_call_operand.vmem [shape: f32[1,96], index: 8, kind: input, shape index: {}]
  %s9 = inlined_call_operand.vmem [shape: f32[1,32], index: 9, kind: input, shape index: {}]
  %s10 = inlined_call_operand.hbm [shape: f32[2,8,32], index: 10, kind: output, shape index: {}]
  %s11 = sld [smem:[#allocation0]]
  $region70: #{tpu_custom_call.1} parent=0
    _
  %s13 = ssub.s32 1, %s11
  %s14 = scalar_select 0, %s13, %s11
  $region1: #{tpu_custom_call.1} parent=0
    #allocation4 [shape = 'u8[8192]{0}', space=vmem, size = 0x2000, scoped, tag = 'input window, operand 0, single buffered']
    #allocation5 [shape = 's32[1]{0}', space=sflag, size = 0x4, scoped, tag = 'scoped memory for tpu_custom_call.1']
    #allocation6 [shape = 's32[1]{0}', space=sflag, size = 0x4, scoped, tag = 'scoped memory for tpu_custom_call.1']
    #allocation7 [shape = 'u8[16384]{0}', space=vmem, size = 0x4000, scoped, tag = 'input window, operand 2, single buffered']
    #allocation8 [shape = 's32[1]{0}', space=sflag, size = 0x4, scoped, tag = 'scoped memory for tpu_custom_call.1']
    #allocation9 [shape = 'u8[16384]{0}', space=vmem, size = 0x4000, scoped, tag = 'input window, operand 3, single buffered']
    #allocation10 [shape = 'u8[16384]{0}', space=vmem, size = 0x4000, scoped, tag = 'input window, operand 6, single buffered']
    #allocation11 [shape = 's32[1]{0}', space=sflag, size = 0x4, scoped, tag = 'scoped memory for tpu_custom_call.1']
    #allocation12 [shape = 'u8[16384]{0}', space=vmem, size = 0x4000, scoped, tag = 'input window, operand 7, single buffered']
    #allocation13 [shape = 'u8[8192]{0}', space=vmem, size = 0x2000, scoped, tag = 'output window, operand 0, single buffered']
    %15 = vsyncpa [#allocation5], 0
    %16 = vsyncpa [#allocation8], 0
    %17 = vsyncpa [#allocation11], 0
    %18 = vsyncpa [#allocation6], 0
    // Predicated region
    $region2: #{tpu_custom_call.1} parent=1 // pred_check
      _
    $region3: #{tpu_custom_call.1} parent=1 // pred_check_branch
      %20 = sbr.rel (0) target = $region5
    $region4: #{tpu_custom_call.1} parent=1 // pred_region
      %s22 = ssub.s32 256, 256
      %23 = vsyncadd [#allocation5], %s22
      %s24 = sshll.u32 [#allocation4], 4
      %s25 = int_to_ptr.vmem [resolvable:$true] %s24
      %30 = dma.hbm_to_vmem [thread:$0]  %s0, 256, %s25, [#allocation5], 128, 128, 8
    $region5: #{tpu_custom_call.1} parent=1 // pred_fallthru
      _
    // Predicated region
    $region6: #{tpu_custom_call.1} parent=1 // pred_check
      _
    $region7: #{tpu_custom_call.1} parent=1 // pred_check_branch
      %32 = sbr.rel (0) target = $region9
    $region8: #{tpu_custom_call.1} parent=1 // pred_region
      _
    $region9: #{tpu_custom_call.1} parent=1 // pred_fallthru
      _
    // Predicated region
    $region10: #{tpu_custom_call.1} parent=1 // pred_check
      _
    $region11: #{tpu_custom_call.1} parent=1 // pred_check_branch
      %34 = sbr.rel (0) target = $region13
    $region12: #{tpu_custom_call.1} parent=1 // pred_region
      %s36 = ssub.s32 512, 512
      %37 = vsyncadd [#allocation8], %s36
      %s38 = sshll.u32 [#allocation7], 4
      %s39 = int_to_ptr.vmem [resolvable:$true] %s38
      %44 = dma.hbm_to_vmem [thread:$0]  %s2, 512, %s39, [#allocation8], 128, 128, 8
    $region13: #{tpu_custom_call.1} parent=1 // pred_fallthru
      _
    // Predicated region
    $region14: #{tpu_custom_call.1} parent=1 // pred_check
      _
    $region15: #{tpu_custom_call.1} parent=1 // pred_check_branch
      %46 = sbr.rel (0) target = $region17
    $region16: #{tpu_custom_call.1} parent=1 // pred_region
      %s48 = ssub.s32 512, 512
      %49 = vsyncadd [#allocation8], %s48
      %s50 = sshll.u32 [#allocation9], 4
      %s51 = int_to_ptr.vmem [resolvable:$true] %s50
      %56 = dma.hbm_to_vmem [thread:$0]  %s3, 512, %s51, [#allocation8], 128, 128, 8
    $region17: #{tpu_custom_call.1} parent=1 // pred_fallthru
      _
    // Predicated region
    $region18: #{tpu_custom_call.1} parent=1 // pred_check
      _
    $region19: #{tpu_custom_call.1} parent=1 // pred_check_branch
      %58 = sbr.rel (0) target = $region21
    $region20: #{tpu_custom_call.1} parent=1 // pred_region
      _
    $region21: #{tpu_custom_call.1} parent=1 // pred_fallthru
      _
    // Predicated region
    $region22: #{tpu_custom_call.1} parent=1 // pred_check
      _
    $region23: #{tpu_custom_call.1} parent=1 // pred_check_branch
      %60 = sbr.rel (0) target = $region25
    $region24: #{tpu_custom_call.1} parent=1 // pred_region
      _
    $region25: #{tpu_custom_call.1} parent=1 // pred_fallthru
      _
    // Predicated region
    $region26: #{tpu_custom_call.1} parent=1 // pred_check
      _
    $region27: #{tpu_custom_call.1} parent=1 // pred_check_branch
      %62 = sbr.rel (0) target = $region29
    $region28: #{tpu_custom_call.1} parent=1 // pred_region
      %s64 = ssub.s32 512, 512
      %65 = vsyncadd [#allocation11], %s64
      %s66 = sshll.u32 [#allocation10], 4
      %s67 = int_to_ptr.vmem [resolvable:$true] %s66
      %72 = dma.hbm_to_vmem [thread:$0]  %s6, 512, %s67, [#allocation11], 128, 128, 8
    $region29: #{tpu_custom_call.1} parent=1 // pred_fallthru
      _
    // Predicated region
    $region30: #{tpu_custom_call.1} parent=1 // pred_check
      _
    $region31: #{tpu_custom_call.1} parent=1 // pred_check_branch
      %74 = sbr.rel (0) target = $region33
    $region32: #{tpu_custom_call.1} parent=1 // pred_region
      %s76 = ssub.s32 512, 512
      %77 = vsyncadd [#allocation11], %s76
      %s78 = sshll.u32 [#allocation12], 4
      %s79 = int_to_ptr.vmem [resolvable:$true] %s78
      %84 = dma.hbm_to_vmem [thread:$0]  %s7, 512, %s79, [#allocation11], 128, 128, 8
    $region33: #{tpu_custom_call.1} parent=1 // pred_fallthru
      _
    // Predicated region
    $region34: #{tpu_custom_call.1} parent=1 // pred_check
      _
    $region35: #{tpu_custom_call.1} parent=1 // pred_check_branch
      %86 = sbr.rel (0) target = $region37
    $region36: #{tpu_custom_call.1} parent=1 // pred_region
      _
    $region37: #{tpu_custom_call.1} parent=1 // pred_fallthru
      _
    // Predicated region
    $region38: #{tpu_custom_call.1} parent=1 // pred_check
      _
    $region39: #{tpu_custom_call.1} parent=1 // pred_check_branch
      %88 = sbr.rel (0) target = $region41
    $region40: #{tpu_custom_call.1} parent=1 // pred_region
      _
    $region41: #{tpu_custom_call.1} parent=1 // pred_fallthru
      _
    // Predicated region
    $region42: #{tpu_custom_call.1} parent=1 // pred_check
      _
    $region43: #{tpu_custom_call.1} parent=1 // pred_check_branch
      %90 = sbr.rel (0) target = $region45
    $region44: #{tpu_custom_call.1} parent=1 // pred_region
      %91 = dma.done [#allocation5], 256
    $region45: #{tpu_custom_call.1} parent=1 // pred_fallthru
      _
    // Predicated region
    $region46: #{tpu_custom_call.1} parent=1 // pred_check
      _
    $region47: #{tpu_custom_call.1} parent=1 // pred_check_branch
      %93 = sbr.rel (0) target = $region49
    $region48: #{tpu_custom_call.1} parent=1 // pred_region
      %94 = dma.done [#allocation8], 512
    $region49: #{tpu_custom_call.1} parent=1 // pred_fallthru
      _
    // Predicated region
    $region50: #{tpu_custom_call.1} parent=1 // pred_check
      _
    $region51: #{tpu_custom_call.1} parent=1 // pred_check_branch
      %96 = sbr.rel (0) target = $region53
    $region52: #{tpu_custom_call.1} parent=1 // pred_region
      %97 = dma.done [#allocation8], 512
    $region53: #{tpu_custom_call.1} parent=1 // pred_fallthru
      _
    // Predicated region
    $region54: #{tpu_custom_call.1} parent=1 // pred_check
      _
    $region55: #{tpu_custom_call.1} parent=1 // pred_check_branch
      %99 = sbr.rel (0) target = $region57
    $region56: #{tpu_custom_call.1} parent=1 // pred_region
      %100 = dma.done [#allocation11], 512
    $region57: #{tpu_custom_call.1} parent=1 // pred_fallthru
      _
    // Predicated region
    $region58: #{tpu_custom_call.1} parent=1 // pred_check
      _
    $region59: #{tpu_custom_call.1} parent=1 // pred_check_branch
      %102 = sbr.rel (0) target = $region61
    $region60: #{tpu_custom_call.1} parent=1 // pred_region
      %103 = dma.done [#allocation11], 512
    $region61: #{tpu_custom_call.1} parent=1 // pred_fallthru
      _
    %v104 = vlaneseq
    %v105 = vand.u32 %v104, 127
    %v106 = vld [vmem:[%s1] sm:$0x3]
    %107 = vset.pattern.permute.xlu0 0
    %108 = vperm.xlu0 %107, %v106
    %v109 = vpop.permute.xlu0 %108
    %vm110 = vcmp.lt.s32.totalorder %v105, %v109
    %v111 = vsel %vm110, 1, 0
    %v112 = vcvt.s32.f32 %v111
    %v113 = vld [vmem:[#allocation7] sm:$0xff]
    %v114 = vld [vmem:[#allocation7 + $0x8] sm:$0xff]
    %v115 = vld [vmem:[#allocation7 + $0x10] sm:$0xff]
    %v116 = vld [vmem:[#allocation7 + $0x18] sm:$0xff]
    %v117 = vld [vmem:[%s4] sm:$0x1]
    %v118 = vld [vmem:[#allocation4] sm:$0x1]
    %v119 = vld [vmem:[#allocation4 + $0x8] sm:$0x1]
    %v121 = vlaneseq
    %v122 = vshrl.u32 %v121, 7
    %v123 = vsub.s32 0, %v122
    %v124 = vrot.slane %v117, %v123
    %v128 = vrot.slane %v119, 7
    %vm129 = vcmask 1041409
    %v130 = vsel %vm129, %v128, %v118
    %vm131 = vcmask 261120
    %v132 = vsel %vm131, %v130, 0
    %134 = vmatprep.subr.mxu0 0.0
    %135 = vmatpush1.msra.mxu0 %v113
    %136 = vmatprep.subr.mxu0 0.0
    %137 = vmatpush1.msra.mxu0 %v114
    %138 = vmatprep.subr.mxu0 0.0
    %139 = vmatpush1.msra.mxu0 %v115
    %140 = vmatprep.subr.mxu0 0.0
    %141 = vmatpush1.msra.mxu0 %v116
    %142 = vmatprep.subr.mxu0 0.0
    %143 = vmatpush1.msra.mxu0 0.0
    %144 = vmatprep.subr.mxu0 0.0
    %145 = vmatpush1.msra.mxu0 0.0
    %146 = vmatprep.subr.mxu0 0.0
    %147 = vmatpush1.msra.mxu0 0.0
    %148 = vmatprep.subr.mxu0 0.0
    %149 = vmatpush1.msra.mxu0 0.0
    %150 = vmatprep.subr.mxu0 0.0
    %151 = vmatpush1.msra.mxu0 0.0
    %152 = vmatprep.subr.mxu0 0.0
    %153 = vmatpush1.msra.mxu0 0.0
    %154 = vmatprep.subr.mxu0 0.0
    %155 = vmatpush1.msra.mxu0 0.0
    %156 = vmatprep.subr.mxu0 0.0
    %157 = vmatpush1.msra.mxu0 0.0
    %158 = vmatprep.subr.mxu0 0.0
    %159 = vmatpush1.msra.mxu0 0.0
    %160 = vmatprep.subr.mxu0 0.0
    %161 = vmatpush1.msra.mxu0 0.0
    %162 = vmatprep.subr.mxu0 0.0
    %163 = vmatpush1.msra.mxu0 0.0
    %164 = vmatprep.subr.mxu0 0.0
    %165 = vmatpush1.msra.mxu0 0.0
    %166 = vmatprep.subr.mxu0 0.0
    %167 = vmatpush1.msra.mxu0 0.0
    %168 = vmatprep.subr.mxu0 0.0
    %169 = vmatpush1.msra.mxu0 0.0
    %170 = vmatprep.subr.mxu0 0.0
    %171 = vmatpush1.msra.mxu0 0.0
    %172 = vmatprep.subr.mxu0 0.0
    %173 = vmatpush1.msra.mxu0 0.0
    %174 = vmatprep.subr.mxu0 0.0
    %175 = vmatpush1.msra.mxu0 0.0
    %176 = vmatprep.subr.mxu0 0.0
    %177 = vmatpush1.msra.mxu0 0.0
    %178 = vmatprep.subr.mxu0 0.0
    %179 = vmatpush1.msra.mxu0 0.0
    %180 = vmatprep.subr.mxu0 0.0
    %181 = vmatpush1.msra.mxu0 0.0
    %182 = vmatprep.subr.mxu0 0.0
    %183 = vmatpush1.msra.mxu0 0.0
    %184 = vmatprep.subr.mxu0 0.0
    %185 = vmatpush1.msra.mxu0 0.0
    %186 = vmatprep.subr.mxu0 0.0
    %187 = vmatpush1.msra.mxu0 0.0
    %188 = vmatprep.subr.mxu0 0.0
    %189 = vmatpush1.msra.mxu0 0.0
    %190 = vmatprep.subr.mxu0 0.0
    %191 = vmatpush1.msra.mxu0 0.0
    %192 = vmatprep.subr.mxu0 0.0
    %193 = vmatpush1.msra.mxu0 0.0
    %194 = vmatprep.subr.mxu0 0.0
    %195 = vmatpush1.msra.mxu0 0.0
    %196 = vmatprep.subr.mxu0 0.0
    %197 = vmatpush1.msra.mxu0 0.0
    %198 = vmatprep.mubr.f32.mxu0 0.0
    %199 = vmatmul.mubr.f32.gmra.mrb[0].mxu0 %v132
    %v200 = vpop.f32.mrb[0].mxu0
    %v201 = vadd.f32 %v124, %v200
    %v202 = vpop.f32.mrb[0].mxu0
    %203 = vdwg.mxu0
    %v206 = vunpack.c.l.s4 1966171168
    %v207 = vunpack.c.0.s8 %v206
    %v208 = vlaneseq
    %v209 = vshrl.u32 %v208, 7
    %v210 = vsub.s32 %v207, %v209
    %v211 = vrot.slane %v201, %v210
    %v212 = vcombine.high %v211, %v211
    %v214 = vunpack.c.l.s4 1966171168
    %v215 = vunpack.c.0.s8 %v214
    %v216 = vlaneseq
    %v217 = vshrl.u32 %v216, 7
    %v218 = vsub.s32 %v215, %v217
    %v219 = vrot.slane %v211, %v218
    %v221 = vunpack.c.l.s4 1966171168
    %v222 = vunpack.c.0.s8 %v221
    %v223 = vlaneseq
    %v224 = vshrl.u32 %v223, 7
    %v225 = vsub.s32 %v222, %v224
    %v226 = vrot.slane %v212, %v225
    %vm229 = vcmask 778240
    %230 = vst.msk [vmem:[#allocation2] sm:$0x1] %vm229, %v219
    %231 = vst.msk [vmem:[#allocation2 + $0x8] sm:$0x1] %vm229, %v226
    %v232 = vld [vmem:[#allocation4 + $0x1] sm:$0x1]
    %v233 = vld [vmem:[#allocation4 + $0x9] sm:$0x1]
    %v236 = vrot.slane %v233, 7
    %v237 = vsel %vm129, %v236, %v232
    %v238 = vsel %vm131, %v237, 0
    %240 = vmatprep.subr.mxu0 0.0
    %241 = vmatpush1.msra.mxu0 %v113
    %242 = vmatprep.subr.mxu0 0.0
    %243 = vmatpush1.msra.mxu0 %v114
    %244 = vmatprep.subr.mxu0 0.0
    %245 = vmatpush1.msra.mxu0 %v115
    %246 = vmatprep.subr.mxu0 0.0
    %247 = vmatpush1.msra.mxu0 %v116
    %248 = vmatprep.subr.mxu0 0.0
    %249 = vmatpush1.msra.mxu0 0.0
    %250 = vmatprep.subr.mxu0 0.0
    %251 = vmatpush1.msra.mxu0 0.0
    %252 = vmatprep.subr.mxu0 0.0
    %253 = vmatpush1.msra.mxu0 0.0
    %254 = vmatprep.subr.mxu0 0.0
    %255 = vmatpush1.msra.mxu0 0.0
    %256 = vmatprep.subr.mxu0 0.0
    %257 = vmatpush1.msra.mxu0 0.0
    %258 = vmatprep.subr.mxu0 0.0
    %259 = vmatpush1.msra.mxu0 0.0
    %260 = vmatprep.subr.mxu0 0.0
    %261 = vmatpush1.msra.mxu0 0.0
    %262 = vmatprep.subr.mxu0 0.0
    %263 = vmatpush1.msra.mxu0 0.0
    %264 = vmatprep.subr.mxu0 0.0
    %265 = vmatpush1.msra.mxu0 0.0
    %266 = vmatprep.subr.mxu0 0.0
    %267 = vmatpush1.msra.mxu0 0.0
    %268 = vmatprep.subr.mxu0 0.0
    %269 = vmatpush1.msra.mxu0 0.0
    %270 = vmatprep.subr.mxu0 0.0
    %271 = vmatpush1.msra.mxu0 0.0
    %272 = vmatprep.subr.mxu0 0.0
    %273 = vmatpush1.msra.mxu0 0.0
    %274 = vmatprep.subr.mxu0 0.0
    %275 = vmatpush1.msra.mxu0 0.0
    %276 = vmatprep.subr.mxu0 0.0
    %277 = vmatpush1.msra.mxu0 0.0
    %278 = vmatprep.subr.mxu0 0.0
    %279 = vmatpush1.msra.mxu0 0.0
    %280 = vmatprep.subr.mxu0 0.0
    %281 = vmatpush1.msra.mxu0 0.0
    %282 = vmatprep.subr.mxu0 0.0
    %283 = vmatpush1.msra.mxu0 0.0
    %284 = vmatprep.subr.mxu0 0.0
    %285 = vmatpush1.msra.mxu0 0.0
    %286 = vmatprep.subr.mxu0 0.0
    %287 = vmatpush1.msra.mxu0 0.0
    %288 = vmatprep.subr.mxu0 0.0
    %289 = vmatpush1.msra.mxu0 0.0
    %290 = vmatprep.subr.mxu0 0.0
    %291 = vmatpush1.msra.mxu0 0.0
    %292 = vmatprep.subr.mxu0 0.0
    %293 = vmatpush1.msra.mxu0 0.0
    %294 = vmatprep.subr.mxu0 0.0
    %295 = vmatpush1.msra.mxu0 0.0
    %296 = vmatprep.subr.mxu0 0.0
    %297 = vmatpush1.msra.mxu0 0.0
    %298 = vmatprep.subr.mxu0 0.0
    %299 = vmatpush1.msra.mxu0 0.0
    %300 = vmatprep.subr.mxu0 0.0
    %301 = vmatpush1.msra.mxu0 0.0
    %302 = vmatprep.subr.mxu0 0.0
    %303 = vmatpush1.msra.mxu0 0.0
    %304 = vmatprep.mubr.f32.mxu0 0.0
    %305 = vmatmul.mubr.f32.gmra.mrb[0].mxu0 %v238
    %v306 = vpop.f32.mrb[0].mxu0
    %v307 = vadd.f32 %v124, %v306
    %v308 = vpop.f32.mrb[0].mxu0
    %309 = vdwg.mxu0
    %v312 = vunpack.c.l.s4 1966171168
    %v313 = vunpack.c.0.s8 %v312
    %v314 = vlaneseq
    %v315 = vshrl.u32 %v314, 7
    %v316 = vsub.s32 %v313, %v315
    %v317 = vrot.slane %v307, %v316
    %v318 = vcombine.high %v317, %v317
    %v320 = vunpack.c.l.s4 1966171168
    %v321 = vunpack.c.0.s8 %v320
    %v322 = vlaneseq
    %v323 = vshrl.u32 %v322, 7
    %v324 = vsub.s32 %v321, %v323
    %v325 = vrot.slane %v317, %v324
    %v327 = vunpack.c.l.s4 1966171168
    %v328 = vunpack.c.0.s8 %v327
    %v329 = vlaneseq
    %v330 = vshrl.u32 %v329, 7
    %v331 = vsub.s32 %v328, %v330
    %v332 = vrot.slane %v318, %v331
    %335 = vst.msk [vmem:[#allocation2 + $0x1] sm:$0x1] %vm229, %v325
    %336 = vst.msk [vmem:[#allocation2 + $0x9] sm:$0x1] %vm229, %v332
    %v337 = vld [vmem:[#allocation4 + $0x2] sm:$0x1]
    %v338 = vld [vmem:[#allocation4 + $0xa] sm:$0x1]
    %v341 = vrot.slane %v338, 7
    %v342 = vsel %vm129, %v341, %v337
    %v343 = vsel %vm131, %v342, 0
    %345 = vmatprep.subr.mxu0 0.0
    %346 = vmatpush1.msra.mxu0 %v113
    %347 = vmatprep.subr.mxu0 0.0
    %348 = vmatpush1.msra.mxu0 %v114
    %349 = vmatprep.subr.mxu0 0.0
    %350 = vmatpush1.msra.mxu0 %v115
    %351 = vmatprep.subr.mxu0 0.0
    %352 = vmatpush1.msra.mxu0 %v116
    %353 = vmatprep.subr.mxu0 0.0
    %354 = vmatpush1.msra.mxu0 0.0
    %355 = vmatprep.subr.mxu0 0.0
    %356 = vmatpush1.msra.mxu0 0.0
    %357 = vmatprep.subr.mxu0 0.0
    %358 = vmatpush1.msra.mxu0 0.0
    %359 = vmatprep.subr.mxu0 0.0
    %360 = vmatpush1.msra.mxu0 0.0
    %361 = vmatprep.subr.mxu0 0.0
    %362 = vmatpush1.msra.mxu0 0.0
    %363 = vmatprep.subr.mxu0 0.0
    %364 = vmatpush1.msra.mxu0 0.0
    %365 = vmatprep.subr.mxu0 0.0
    %366 = vmatpush1.msra.mxu0 0.0
    %367 = vmatprep.subr.mxu0 0.0
    %368 = vmatpush1.msra.mxu0 0.0
    %369 = vmatprep.subr.mxu0 0.0
    %370 = vmatpush1.msra.mxu0 0.0
    %371 = vmatprep.subr.mxu0 0.0
    %372 = vmatpush1.msra.mxu0 0.0
    %373 = vmatprep.subr.mxu0 0.0
    %374 = vmatpush1.msra.mxu0 0.0
    %375 = vmatprep.subr.mxu0 0.0
    %376 = vmatpush1.msra.mxu0 0.0
    %377 = vmatprep.subr.mxu0 0.0
    %378 = vmatpush1.msra.mxu0 0.0
    %379 = vmatprep.subr.mxu0 0.0
    %380 = vmatpush1.msra.mxu0 0.0
    %381 = vmatprep.subr.mxu0 0.0
    %382 = vmatpush1.msra.mxu0 0.0
    %383 = vmatprep.subr.mxu0 0.0
    %384 = vmatpush1.msra.mxu0 0.0
    %385 = vmatprep.subr.mxu0 0.0
    %386 = vmatpush1.msra.mxu0 0.0
    %387 = vmatprep.subr.mxu0 0.0
    %388 = vmatpush1.msra.mxu0 0.0
    %389 = vmatprep.subr.mxu0 0.0
    %390 = vmatpush1.msra.mxu0 0.0
    %391 = vmatprep.subr.mxu0 0.0
    %392 = vmatpush1.msra.mxu0 0.0
    %393 = vmatprep.subr.mxu0 0.0
    %394 = vmatpush1.msra.mxu0 0.0
    %395 = vmatprep.subr.mxu0 0.0
    %396 = vmatpush1.msra.mxu0 0.0
    %397 = vmatprep.subr.mxu0 0.0
    %398 = vmatpush1.msra.mxu0 0.0
    %399 = vmatprep.subr.mxu0 0.0
    %400 = vmatpush1.msra.mxu0 0.0
    %401 = vmatprep.subr.mxu0 0.0
    %402 = vmatpush1.msra.mxu0 0.0
    %403 = vmatprep.subr.mxu0 0.0
    %404 = vmatpush1.msra.mxu0 0.0
    %405 = vmatprep.subr.mxu0 0.0
    %406 = vmatpush1.msra.mxu0 0.0
    %407 = vmatprep.subr.mxu0 0.0
    %408 = vmatpush1.msra.mxu0 0.0
    %409 = vmatprep.mubr.f32.mxu0 0.0
    %410 = vmatmul.mubr.f32.gmra.mrb[0].mxu0 %v343
    %v411 = vpop.f32.mrb[0].mxu0
    %v412 = vadd.f32 %v124, %v411
    %v413 = vpop.f32.mrb[0].mxu0
    %414 = vdwg.mxu0
    %v417 = vunpack.c.l.s4 1966171168
    %v418 = vunpack.c.0.s8 %v417
    %v419 = vlaneseq
    %v420 = vshrl.u32 %v419, 7
    %v421 = vsub.s32 %v418, %v420
    %v422 = vrot.slane %v412, %v421
    %v423 = vcombine.high %v422, %v422
    %v425 = vunpack.c.l.s4 1966171168
    %v426 = vunpack.c.0.s8 %v425
    %v427 = vlaneseq
    %v428 = vshrl.u32 %v427, 7
    %v429 = vsub.s32 %v426, %v428
    %v430 = vrot.slane %v422, %v429
    %v432 = vunpack.c.l.s4 1966171168
    %v433 = vunpack.c.0.s8 %v432
    %v434 = vlaneseq
    %v435 = vshrl.u32 %v434, 7
    %v436 = vsub.s32 %v433, %v435
    %v437 = vrot.slane %v423, %v436
    %440 = vst.msk [vmem:[#allocation2 + $0x2] sm:$0x1] %vm229, %v430
    %441 = vst.msk [vmem:[#allocation2 + $0xa] sm:$0x1] %vm229, %v437
    %v442 = vld [vmem:[#allocation4 + $0x3] sm:$0x1]
    %v443 = vld [vmem:[#allocation4 + $0xb] sm:$0x1]
    %v446 = vrot.slane %v443, 7
    %v447 = vsel %vm129, %v446, %v442
    %v448 = vsel %vm131, %v447, 0
    %450 = vmatprep.subr.mxu0 0.0
    %451 = vmatpush1.msra.mxu0 %v113
    %452 = vmatprep.subr.mxu0 0.0
    %453 = vmatpush1.msra.mxu0 %v114
    %454 = vmatprep.subr.mxu0 0.0
    %455 = vmatpush1.msra.mxu0 %v115
    %456 = vmatprep.subr.mxu0 0.0
    %457 = vmatpush1.msra.mxu0 %v116
    %458 = vmatprep.subr.mxu0 0.0
    %459 = vmatpush1.msra.mxu0 0.0
    %460 = vmatprep.subr.mxu0 0.0
    %461 = vmatpush1.msra.mxu0 0.0
    %462 = vmatprep.subr.mxu0 0.0
    %463 = vmatpush1.msra.mxu0 0.0
    %464 = vmatprep.subr.mxu0 0.0
    %465 = vmatpush1.msra.mxu0 0.0
    %466 = vmatprep.subr.mxu0 0.0
    %467 = vmatpush1.msra.mxu0 0.0
    %468 = vmatprep.subr.mxu0 0.0
    %469 = vmatpush1.msra.mxu0 0.0
    %470 = vmatprep.subr.mxu0 0.0
    %471 = vmatpush1.msra.mxu0 0.0
    %472 = vmatprep.subr.mxu0 0.0
    %473 = vmatpush1.msra.mxu0 0.0
    %474 = vmatprep.subr.mxu0 0.0
    %475 = vmatpush1.msra.mxu0 0.0
    %476 = vmatprep.subr.mxu0 0.0
    %477 = vmatpush1.msra.mxu0 0.0
    %478 = vmatprep.subr.mxu0 0.0
    %479 = vmatpush1.msra.mxu0 0.0
    %480 = vmatprep.subr.mxu0 0.0
    %481 = vmatpush1.msra.mxu0 0.0
    %482 = vmatprep.subr.mxu0 0.0
    %483 = vmatpush1.msra.mxu0 0.0
    %484 = vmatprep.subr.mxu0 0.0
    %485 = vmatpush1.msra.mxu0 0.0
    %486 = vmatprep.subr.mxu0 0.0
    %487 = vmatpush1.msra.mxu0 0.0
    %488 = vmatprep.subr.mxu0 0.0
    %489 = vmatpush1.msra.mxu0 0.0
    %490 = vmatprep.subr.mxu0 0.0
    %491 = vmatpush1.msra.mxu0 0.0
    %492 = vmatprep.subr.mxu0 0.0
    %493 = vmatpush1.msra.mxu0 0.0
    %494 = vmatprep.subr.mxu0 0.0
    %495 = vmatpush1.msra.mxu0 0.0
    %496 = vmatprep.subr.mxu0 0.0
    %497 = vmatpush1.msra.mxu0 0.0
    %498 = vmatprep.subr.mxu0 0.0
    %499 = vmatpush1.msra.mxu0 0.0
    %500 = vmatprep.subr.mxu0 0.0
    %501 = vmatpush1.msra.mxu0 0.0
    %502 = vmatprep.subr.mxu0 0.0
    %503 = vmatpush1.msra.mxu0 0.0
    %504 = vmatprep.subr.mxu0 0.0
    %505 = vmatpush1.msra.mxu0 0.0
    %506 = vmatprep.subr.mxu0 0.0
    %507 = vmatpush1.msra.mxu0 0.0
    %508 = vmatprep.subr.mxu0 0.0
    %509 = vmatpush1.msra.mxu0 0.0
    %510 = vmatprep.subr.mxu0 0.0
    %511 = vmatpush1.msra.mxu0 0.0
    %512 = vmatprep.subr.mxu0 0.0
    %513 = vmatpush1.msra.mxu0 0.0
    %514 = vmatprep.mubr.f32.mxu0 0.0
    %515 = vmatmul.mubr.f32.gmra.mrb[0].mxu0 %v448
    %v516 = vpop.f32.mrb[0].mxu0
    %v517 = vadd.f32 %v124, %v516
    %v518 = vpop.f32.mrb[0].mxu0
    %519 = vdwg.mxu0
    %v522 = vunpack.c.l.s4 1966171168
    %v523 = vunpack.c.0.s8 %v522
    %v524 = vlaneseq
    %v525 = vshrl.u32 %v524, 7
    %v526 = vsub.s32 %v523, %v525
    %v527 = vrot.slane %v517, %v526
    %v528 = vcombine.high %v527, %v527
    %v530 = vunpack.c.l.s4 1966171168
    %v531 = vunpack.c.0.s8 %v530
    %v532 = vlaneseq
    %v533 = vshrl.u32 %v532, 7
    %v534 = vsub.s32 %v531, %v533
    %v535 = vrot.slane %v527, %v534
    %v537 = vunpack.c.l.s4 1966171168
    %v538 = vunpack.c.0.s8 %v537
    %v539 = vlaneseq
    %v540 = vshrl.u32 %v539, 7
    %v541 = vsub.s32 %v538, %v540
    %v542 = vrot.slane %v528, %v541
    %545 = vst.msk [vmem:[#allocation2 + $0x3] sm:$0x1] %vm229, %v535
    %546 = vst.msk [vmem:[#allocation2 + $0xb] sm:$0x1] %vm229, %v542
    %v547 = vld [vmem:[#allocation4 + $0x4] sm:$0x1]
    %v548 = vld [vmem:[#allocation4 + $0xc] sm:$0x1]
    %v551 = vrot.slane %v548, 7
    %v552 = vsel %vm129, %v551, %v547
    %v553 = vsel %vm131, %v552, 0
    %555 = vmatprep.subr.mxu0 0.0
    %556 = vmatpush1.msra.mxu0 %v113
    %557 = vmatprep.subr.mxu0 0.0
    %558 = vmatpush1.msra.mxu0 %v114
    %559 = vmatprep.subr.mxu0 0.0
    %560 = vmatpush1.msra.mxu0 %v115
    %561 = vmatprep.subr.mxu0 0.0
    %562 = vmatpush1.msra.mxu0 %v116
    %563 = vmatprep.subr.mxu0 0.0
    %564 = vmatpush1.msra.mxu0 0.0
    %565 = vmatprep.subr.mxu0 0.0
    %566 = vmatpush1.msra.mxu0 0.0
    %567 = vmatprep.subr.mxu0 0.0
    %568 = vmatpush1.msra.mxu0 0.0
    %569 = vmatprep.subr.mxu0 0.0
    %570 = vmatpush1.msra.mxu0 0.0
    %571 = vmatprep.subr.mxu0 0.0
    %572 = vmatpush1.msra.mxu0 0.0
    %573 = vmatprep.subr.mxu0 0.0
    %574 = vmatpush1.msra.mxu0 0.0
    %575 = vmatprep.subr.mxu0 0.0
    %576 = vmatpush1.msra.mxu0 0.0
    %577 = vmatprep.subr.mxu0 0.0
    %578 = vmatpush1.msra.mxu0 0.0
    %579 = vmatprep.subr.mxu0 0.0
    %580 = vmatpush1.msra.mxu0 0.0
    %581 = vmatprep.subr.mxu0 0.0
    %582 = vmatpush1.msra.mxu0 0.0
    %583 = vmatprep.subr.mxu0 0.0
    %584 = vmatpush1.msra.mxu0 0.0
    %585 = vmatprep.subr.mxu0 0.0
    %586 = vmatpush1.msra.mxu0 0.0
    %587 = vmatprep.subr.mxu0 0.0
    %588 = vmatpush1.msra.mxu0 0.0
    %589 = vmatprep.subr.mxu0 0.0
    %590 = vmatpush1.msra.mxu0 0.0
    %591 = vmatprep.subr.mxu0 0.0
    %592 = vmatpush1.msra.mxu0 0.0
    %593 = vmatprep.subr.mxu0 0.0
    %594 = vmatpush1.msra.mxu0 0.0
    %595 = vmatprep.subr.mxu0 0.0
    %596 = vmatpush1.msra.mxu0 0.0
    %597 = vmatprep.subr.mxu0 0.0
    %598 = vmatpush1.msra.mxu0 0.0
    %599 = vmatprep.subr.mxu0 0.0
    %600 = vmatpush1.msra.mxu0 0.0
    %601 = vmatprep.subr.mxu0 0.0
    %602 = vmatpush1.msra.mxu0 0.0
    %603 = vmatprep.subr.mxu0 0.0
    %604 = vmatpush1.msra.mxu0 0.0
    %605 = vmatprep.subr.mxu0 0.0
    %606 = vmatpush1.msra.mxu0 0.0
    %607 = vmatprep.subr.mxu0 0.0
    %608 = vmatpush1.msra.mxu0 0.0
    %609 = vmatprep.subr.mxu0 0.0
    %610 = vmatpush1.msra.mxu0 0.0
    %611 = vmatprep.subr.mxu0 0.0
    %612 = vmatpush1.msra.mxu0 0.0
    %613 = vmatprep.subr.mxu0 0.0
    %614 = vmatpush1.msra.mxu0 0.0
    %615 = vmatprep.subr.mxu0 0.0
    %616 = vmatpush1.msra.mxu0 0.0
    %617 = vmatprep.subr.mxu0 0.0
    %618 = vmatpush1.msra.mxu0 0.0
    %619 = vmatprep.mubr.f32.mxu0 0.0
    %620 = vmatmul.mubr.f32.gmra.mrb[0].mxu0 %v553
    %v621 = vpop.f32.mrb[0].mxu0
    %v622 = vadd.f32 %v124, %v621
    %v623 = vpop.f32.mrb[0].mxu0
    %624 = vdwg.mxu0
    %v627 = vunpack.c.l.s4 1966171168
    %v628 = vunpack.c.0.s8 %v627
    %v629 = vlaneseq
    %v630 = vshrl.u32 %v629, 7
    %v631 = vsub.s32 %v628, %v630
    %v632 = vrot.slane %v622, %v631
    %v633 = vcombine.high %v632, %v632
    %v635 = vunpack.c.l.s4 1966171168
    %v636 = vunpack.c.0.s8 %v635
    %v637 = vlaneseq
    %v638 = vshrl.u32 %v637, 7
    %v639 = vsub.s32 %v636, %v638
    %v640 = vrot.slane %v632, %v639
    %v642 = vunpack.c.l.s4 1966171168
    %v643 = vunpack.c.0.s8 %v642
    %v644 = vlaneseq
    %v645 = vshrl.u32 %v644, 7
    %v646 = vsub.s32 %v643, %v645
    %v647 = vrot.slane %v633, %v646
    %650 = vst.msk [vmem:[#allocation2 + $0x4] sm:$0x1] %vm229, %v640
    %651 = vst.msk [vmem:[#allocation2 + $0xc] sm:$0x1] %vm229, %v647
    %v652 = vld [vmem:[#allocation4 + $0x5] sm:$0x1]
    %v653 = vld [vmem:[#allocation4 + $0xd] sm:$0x1]
    %v656 = vrot.slane %v653, 7
    %v657 = vsel %vm129, %v656, %v652
    %v658 = vsel %vm131, %v657, 0
    %660 = vmatprep.subr.mxu0 0.0
    %661 = vmatpush1.msra.mxu0 %v113
    %662 = vmatprep.subr.mxu0 0.0
    %663 = vmatpush1.msra.mxu0 %v114
    %664 = vmatprep.subr.mxu0 0.0
    %665 = vmatpush1.msra.mxu0 %v115
    %666 = vmatprep.subr.mxu0 0.0
    %667 = vmatpush1.msra.mxu0 %v116
    %668 = vmatprep.subr.mxu0 0.0
    %669 = vmatpush1.msra.mxu0 0.0
    %670 = vmatprep.subr.mxu0 0.0
    %671 = vmatpush1.msra.mxu0 0.0
    %672 = vmatprep.subr.mxu0 0.0
    %673 = vmatpush1.msra.mxu0 0.0
    %674 = vmatprep.subr.mxu0 0.0
    %675 = vmatpush1.msra.mxu0 0.0
    %676 = vmatprep.subr.mxu0 0.0
    %677 = vmatpush1.msra.mxu0 0.0
    %678 = vmatprep.subr.mxu0 0.0
    %679 = vmatpush1.msra.mxu0 0.0
    %680 = vmatprep.subr.mxu0 0.0
    %681 = vmatpush1.msra.mxu0 0.0
    %682 = vmatprep.subr.mxu0 0.0
    %683 = vmatpush1.msra.mxu0 0.0
    %684 = vmatprep.subr.mxu0 0.0
    %685 = vmatpush1.msra.mxu0 0.0
    %686 = vmatprep.subr.mxu0 0.0
    %687 = vmatpush1.msra.mxu0 0.0
    %688 = vmatprep.subr.mxu0 0.0
    %689 = vmatpush1.msra.mxu0 0.0
    %690 = vmatprep.subr.mxu0 0.0
    %691 = vmatpush1.msra.mxu0 0.0
    %692 = vmatprep.subr.mxu0 0.0
    %693 = vmatpush1.msra.mxu0 0.0
    %694 = vmatprep.subr.mxu0 0.0
    %695 = vmatpush1.msra.mxu0 0.0
    %696 = vmatprep.subr.mxu0 0.0
    %697 = vmatpush1.msra.mxu0 0.0
    %698 = vmatprep.subr.mxu0 0.0
    %699 = vmatpush1.msra.mxu0 0.0
    %700 = vmatprep.subr.mxu0 0.0
    %701 = vmatpush1.msra.mxu0 0.0
    %702 = vmatprep.subr.mxu0 0.0
    %703 = vmatpush1.msra.mxu0 0.0
    %704 = vmatprep.subr.mxu0 0.0
    %705 = vmatpush1.msra.mxu0 0.0
    %706 = vmatprep.subr.mxu0 0.0
    %707 = vmatpush1.msra.mxu0 0.0
    %708 = vmatprep.subr.mxu0 0.0
    %709 = vmatpush1.msra.mxu0 0.0
    %710 = vmatprep.subr.mxu0 0.0
    %711 = vmatpush1.msra.mxu0 0.0
    %712 = vmatprep.subr.mxu0 0.0
    %713 = vmatpush1.msra.mxu0 0.0
    %714 = vmatprep.subr.mxu0 0.0
    %715 = vmatpush1.msra.mxu0 0.0
    %716 = vmatprep.subr.mxu0 0.0
    %717 = vmatpush1.msra.mxu0 0.0
    %718 = vmatprep.subr.mxu0 0.0
    %719 = vmatpush1.msra.mxu0 0.0
    %720 = vmatprep.subr.mxu0 0.0
    %721 = vmatpush1.msra.mxu0 0.0
    %722 = vmatprep.subr.mxu0 0.0
    %723 = vmatpush1.msra.mxu0 0.0
    %724 = vmatprep.mubr.f32.mxu0 0.0
    %725 = vmatmul.mubr.f32.gmra.mrb[0].mxu0 %v658
    %v726 = vpop.f32.mrb[0].mxu0
    %v727 = vadd.f32 %v124, %v726
    %v728 = vpop.f32.mrb[0].mxu0
    %729 = vdwg.mxu0
    %v732 = vunpack.c.l.s4 1966171168
    %v733 = vunpack.c.0.s8 %v732
    %v734 = vlaneseq
    %v735 = vshrl.u32 %v734, 7
    %v736 = vsub.s32 %v733, %v735
    %v737 = vrot.slane %v727, %v736
    %v738 = vcombine.high %v737, %v737
    %v740 = vunpack.c.l.s4 1966171168
    %v741 = vunpack.c.0.s8 %v740
    %v742 = vlaneseq
    %v743 = vshrl.u32 %v742, 7
    %v744 = vsub.s32 %v741, %v743
    %v745 = vrot.slane %v737, %v744
    %v747 = vunpack.c.l.s4 1966171168
    %v748 = vunpack.c.0.s8 %v747
    %v749 = vlaneseq
    %v750 = vshrl.u32 %v749, 7
    %v751 = vsub.s32 %v748, %v750
    %v752 = vrot.slane %v738, %v751
    %755 = vst.msk [vmem:[#allocation2 + $0x5] sm:$0x1] %vm229, %v745
    %756 = vst.msk [vmem:[#allocation2 + $0xd] sm:$0x1] %vm229, %v752
    %v757 = vld [vmem:[#allocation4 + $0x6] sm:$0x1]
    %v758 = vld [vmem:[#allocation4 + $0xe] sm:$0x1]
    %v761 = vrot.slane %v758, 7
    %v762 = vsel %vm129, %v761, %v757
    %v763 = vsel %vm131, %v762, 0
    %765 = vmatprep.subr.mxu0 0.0
    %766 = vmatpush1.msra.mxu0 %v113
    %767 = vmatprep.subr.mxu0 0.0
    %768 = vmatpush1.msra.mxu0 %v114
    %769 = vmatprep.subr.mxu0 0.0
    %770 = vmatpush1.msra.mxu0 %v115
    %771 = vmatprep.subr.mxu0 0.0
    %772 = vmatpush1.msra.mxu0 %v116
    %773 = vmatprep.subr.mxu0 0.0
    %774 = vmatpush1.msra.mxu0 0.0
    %775 = vmatprep.subr.mxu0 0.0
    %776 = vmatpush1.msra.mxu0 0.0
    %777 = vmatprep.subr.mxu0 0.0
    %778 = vmatpush1.msra.mxu0 0.0
    %779 = vmatprep.subr.mxu0 0.0
    %780 = vmatpush1.msra.mxu0 0.0
    %781 = vmatprep.subr.mxu0 0.0
    %782 = vmatpush1.msra.mxu0 0.0
    %783 = vmatprep.subr.mxu0 0.0
    %784 = vmatpush1.msra.mxu0 0.0
    %785 = vmatprep.subr.mxu0 0.0
    %786 = vmatpush1.msra.mxu0 0.0
    %787 = vmatprep.subr.mxu0 0.0
    %788 = vmatpush1.msra.mxu0 0.0
    %789 = vmatprep.subr.mxu0 0.0
    %790 = vmatpush1.msra.mxu0 0.0
    %791 = vmatprep.subr.mxu0 0.0
    %792 = vmatpush1.msra.mxu0 0.0
    %793 = vmatprep.subr.mxu0 0.0
    %794 = vmatpush1.msra.mxu0 0.0
    %795 = vmatprep.subr.mxu0 0.0
    %796 = vmatpush1.msra.mxu0 0.0
    %797 = vmatprep.subr.mxu0 0.0
    %798 = vmatpush1.msra.mxu0 0.0
    %799 = vmatprep.subr.mxu0 0.0
    %800 = vmatpush1.msra.mxu0 0.0
    %801 = vmatprep.subr.mxu0 0.0
    %802 = vmatpush1.msra.mxu0 0.0
    %803 = vmatprep.subr.mxu0 0.0
    %804 = vmatpush1.msra.mxu0 0.0
    %805 = vmatprep.subr.mxu0 0.0
    %806 = vmatpush1.msra.mxu0 0.0
    %807 = vmatprep.subr.mxu0 0.0
    %808 = vmatpush1.msra.mxu0 0.0
    %809 = vmatprep.subr.mxu0 0.0
    %810 = vmatpush1.msra.mxu0 0.0
    %811 = vmatprep.subr.mxu0 0.0
    %812 = vmatpush1.msra.mxu0 0.0
    %813 = vmatprep.subr.mxu0 0.0
    %814 = vmatpush1.msra.mxu0 0.0
    %815 = vmatprep.subr.mxu0 0.0
    %816 = vmatpush1.msra.mxu0 0.0
    %817 = vmatprep.subr.mxu0 0.0
    %818 = vmatpush1.msra.mxu0 0.0
    %819 = vmatprep.subr.mxu0 0.0
    %820 = vmatpush1.msra.mxu0 0.0
    %821 = vmatprep.subr.mxu0 0.0
    %822 = vmatpush1.msra.mxu0 0.0
    %823 = vmatprep.subr.mxu0 0.0
    %824 = vmatpush1.msra.mxu0 0.0
    %825 = vmatprep.subr.mxu0 0.0
    %826 = vmatpush1.msra.mxu0 0.0
    %827 = vmatprep.subr.mxu0 0.0
    %828 = vmatpush1.msra.mxu0 0.0
    %829 = vmatprep.mubr.f32.mxu0 0.0
    %830 = vmatmul.mubr.f32.gmra.mrb[0].mxu0 %v763
    %v831 = vpop.f32.mrb[0].mxu0
    %v832 = vadd.f32 %v124, %v831
    %v833 = vpop.f32.mrb[0].mxu0
    %834 = vdwg.mxu0
    %v837 = vunpack.c.l.s4 1966171168
    %v838 = vunpack.c.0.s8 %v837
    %v839 = vlaneseq
    %v840 = vshrl.u32 %v839, 7
    %v841 = vsub.s32 %v838, %v840
    %v842 = vrot.slane %v832, %v841
    %v843 = vcombine.high %v842, %v842
    %v845 = vunpack.c.l.s4 1966171168
    %v846 = vunpack.c.0.s8 %v845
    %v847 = vlaneseq
    %v848 = vshrl.u32 %v847, 7
    %v849 = vsub.s32 %v846, %v848
    %v850 = vrot.slane %v842, %v849
    %v852 = vunpack.c.l.s4 1966171168
    %v853 = vunpack.c.0.s8 %v852
    %v854 = vlaneseq
    %v855 = vshrl.u32 %v854, 7
    %v856 = vsub.s32 %v853, %v855
    %v857 = vrot.slane %v843, %v856
    %860 = vst.msk [vmem:[#allocation2 + $0x6] sm:$0x1] %vm229, %v850
    %861 = vst.msk [vmem:[#allocation2 + $0xe] sm:$0x1] %vm229, %v857
    %v862 = vld [vmem:[#allocation4 + $0x7] sm:$0x1]
    %v863 = vld [vmem:[#allocation4 + $0xf] sm:$0x1]
    %v866 = vrot.slane %v863, 7
    %v867 = vsel %vm129, %v866, %v862
    %v868 = vsel %vm131, %v867, 0
    %870 = vmatprep.subr.mxu0 0.0
    %871 = vmatpush1.msra.mxu0 %v113
    %872 = vmatprep.subr.mxu0 0.0
    %873 = vmatpush1.msra.mxu0 %v114
    %874 = vmatprep.subr.mxu0 0.0
    %875 = vmatpush1.msra.mxu0 %v115
    %876 = vmatprep.subr.mxu0 0.0
    %877 = vmatpush1.msra.mxu0 %v116
    %878 = vmatprep.subr.mxu0 0.0
    %879 = vmatpush1.msra.mxu0 0.0
    %880 = vmatprep.subr.mxu0 0.0
    %881 = vmatpush1.msra.mxu0 0.0
    %882 = vmatprep.subr.mxu0 0.0
    %883 = vmatpush1.msra.mxu0 0.0
    %884 = vmatprep.subr.mxu0 0.0
    %885 = vmatpush1.msra.mxu0 0.0
    %886 = vmatprep.subr.mxu0 0.0
    %887 = vmatpush1.msra.mxu0 0.0
    %888 = vmatprep.subr.mxu0 0.0
    %889 = vmatpush1.msra.mxu0 0.0
    %890 = vmatprep.subr.mxu0 0.0
    %891 = vmatpush1.msra.mxu0 0.0
    %892 = vmatprep.subr.mxu0 0.0
    %893 = vmatpush1.msra.mxu0 0.0
    %894 = vmatprep.subr.mxu0 0.0
    %895 = vmatpush1.msra.mxu0 0.0
    %896 = vmatprep.subr.mxu0 0.0
    %897 = vmatpush1.msra.mxu0 0.0
    %898 = vmatprep.subr.mxu0 0.0
    %899 = vmatpush1.msra.mxu0 0.0
    %900 = vmatprep.subr.mxu0 0.0
    %901 = vmatpush1.msra.mxu0 0.0
    %902 = vmatprep.subr.mxu0 0.0
    %903 = vmatpush1.msra.mxu0 0.0
    %904 = vmatprep.subr.mxu0 0.0
    %905 = vmatpush1.msra.mxu0 0.0
    %906 = vmatprep.subr.mxu0 0.0
    %907 = vmatpush1.msra.mxu0 0.0
    %908 = vmatprep.subr.mxu0 0.0
    %909 = vmatpush1.msra.mxu0 0.0
    %910 = vmatprep.subr.mxu0 0.0
    %911 = vmatpush1.msra.mxu0 0.0
    %912 = vmatprep.subr.mxu0 0.0
    %913 = vmatpush1.msra.mxu0 0.0
    %914 = vmatprep.subr.mxu0 0.0
    %915 = vmatpush1.msra.mxu0 0.0
    %916 = vmatprep.subr.mxu0 0.0
    %917 = vmatpush1.msra.mxu0 0.0
    %918 = vmatprep.subr.mxu0 0.0
    %919 = vmatpush1.msra.mxu0 0.0
    %920 = vmatprep.subr.mxu0 0.0
    %921 = vmatpush1.msra.mxu0 0.0
    %922 = vmatprep.subr.mxu0 0.0
    %923 = vmatpush1.msra.mxu0 0.0
    %924 = vmatprep.subr.mxu0 0.0
    %925 = vmatpush1.msra.mxu0 0.0
    %926 = vmatprep.subr.mxu0 0.0
    %927 = vmatpush1.msra.mxu0 0.0
    %928 = vmatprep.subr.mxu0 0.0
    %929 = vmatpush1.msra.mxu0 0.0
    %930 = vmatprep.subr.mxu0 0.0
    %931 = vmatpush1.msra.mxu0 0.0
    %932 = vmatprep.subr.mxu0 0.0
    %933 = vmatpush1.msra.mxu0 0.0
    %934 = vmatprep.mubr.f32.mxu0 0.0
    %935 = vmatmul.mubr.f32.gmra.mrb[0].mxu0 %v868
    %v936 = vpop.f32.mrb[0].mxu0
    %v937 = vadd.f32 %v124, %v936
    %v938 = vpop.f32.mrb[0].mxu0
    %939 = vdwg.mxu0
    %v942 = vunpack.c.l.s4 1966171168
    %v943 = vunpack.c.0.s8 %v942
    %v944 = vlaneseq
    %v945 = vshrl.u32 %v944, 7
    %v946 = vsub.s32 %v943, %v945
    %v947 = vrot.slane %v937, %v946
    %v948 = vcombine.high %v947, %v947
    %v950 = vunpack.c.l.s4 1966171168
    %v951 = vunpack.c.0.s8 %v950
    %v952 = vlaneseq
    %v953 = vshrl.u32 %v952, 7
    %v954 = vsub.s32 %v951, %v953
    %v955 = vrot.slane %v947, %v954
    %v957 = vunpack.c.l.s4 1966171168
    %v958 = vunpack.c.0.s8 %v957
    %v959 = vlaneseq
    %v960 = vshrl.u32 %v959, 7
    %v961 = vsub.s32 %v958, %v960
    %v962 = vrot.slane %v948, %v961
    %965 = vst.msk [vmem:[#allocation2 + $0x7] sm:$0x1] %vm229, %v955
    %966 = vst.msk [vmem:[#allocation2 + $0xf] sm:$0x1] %vm229, %v962
    %v967 = vld [vmem:[#allocation9] sm:$0xff]
    %v968 = vld [vmem:[#allocation9 + $0x8] sm:$0xff]
    %v969 = vld [vmem:[#allocation9 + $0x10] sm:$0xff]
    %v970 = vld [vmem:[#allocation9 + $0x18] sm:$0xff]
    %v971 = vld [vmem:[%s5] sm:$0x1]
    %v972 = vld [vmem:[#allocation2] sm:$0x1]
    %v973 = vld [vmem:[#allocation2 + $0x8] sm:$0x1]
    %v974 = vld [vmem:[#allocation2 + $0x7] sm:$0x1]
    %v975 = vld [vmem:[#allocation2 + $0xf] sm:$0x1]
    %v977 = vsel %vm131, 0.0, 0
    %979 = vmatprep.subr.mxu0 0.0
    %980 = vmatpush1.msra.mxu0 %v967
    %981 = vmatprep.subr.mxu0 0.0
    %982 = vmatpush1.msra.mxu0 %v968
    %983 = vmatprep.subr.mxu0 0.0
    %984 = vmatpush1.msra.mxu0 %v969
    %985 = vmatprep.subr.mxu0 0.0
    %986 = vmatpush1.msra.mxu0 %v970
    %987 = vmatprep.subr.mxu0 0.0
    %988 = vmatpush1.msra.mxu0 0.0
    %989 = vmatprep.subr.mxu0 0.0
    %990 = vmatpush1.msra.mxu0 0.0
    %991 = vmatprep.subr.mxu0 0.0
    %992 = vmatpush1.msra.mxu0 0.0
    %993 = vmatprep.subr.mxu0 0.0
    %994 = vmatpush1.msra.mxu0 0.0
    %995 = vmatprep.subr.mxu0 0.0
    %996 = vmatpush1.msra.mxu0 0.0
    %997 = vmatprep.subr.mxu0 0.0
    %998 = vmatpush1.msra.mxu0 0.0
    %999 = vmatprep.subr.mxu0 0.0
    %1000 = vmatpush1.msra.mxu0 0.0
    %1001 = vmatprep.subr.mxu0 0.0
    %1002 = vmatpush1.msra.mxu0 0.0
    %1003 = vmatprep.subr.mxu0 0.0
    %1004 = vmatpush1.msra.mxu0 0.0
    %1005 = vmatprep.subr.mxu0 0.0
    %1006 = vmatpush1.msra.mxu0 0.0
    %1007 = vmatprep.subr.mxu0 0.0
    %1008 = vmatpush1.msra.mxu0 0.0
    %1009 = vmatprep.subr.mxu0 0.0
    %1010 = vmatpush1.msra.mxu0 0.0
    %1011 = vmatprep.subr.mxu0 0.0
    %1012 = vmatpush1.msra.mxu0 0.0
    %1013 = vmatprep.subr.mxu0 0.0
    %1014 = vmatpush1.msra.mxu0 0.0
    %1015 = vmatprep.subr.mxu0 0.0
    %1016 = vmatpush1.msra.mxu0 0.0
    %1017 = vmatprep.subr.mxu0 0.0
    %1018 = vmatpush1.msra.mxu0 0.0
    %1019 = vmatprep.subr.mxu0 0.0
    %1020 = vmatpush1.msra.mxu0 0.0
    %1021 = vmatprep.subr.mxu0 0.0
    %1022 = vmatpush1.msra.mxu0 0.0
    %1023 = vmatprep.subr.mxu0 0.0
    %1024 = vmatpush1.msra.mxu0 0.0
    %1025 = vmatprep.subr.mxu0 0.0
    %1026 = vmatpush1.msra.mxu0 0.0
    %1027 = vmatprep.subr.mxu0 0.0
    %1028 = vmatpush1.msra.mxu0 0.0
    %1029 = vmatprep.subr.mxu0 0.0
    %1030 = vmatpush1.msra.mxu0 0.0
    %1031 = vmatprep.subr.mxu0 0.0
    %1032 = vmatpush1.msra.mxu0 0.0
    %1033 = vmatprep.subr.mxu0 0.0
    %1034 = vmatpush1.msra.mxu0 0.0
    %1035 = vmatprep.subr.mxu0 0.0
    %1036 = vmatpush1.msra.mxu0 0.0
    %1037 = vmatprep.subr.mxu0 0.0
    %1038 = vmatpush1.msra.mxu0 0.0
    %1039 = vmatprep.subr.mxu0 0.0
    %1040 = vmatpush1.msra.mxu0 0.0
    %1041 = vmatprep.subr.mxu0 0.0
    %1042 = vmatpush1.msra.mxu0 0.0
    %1043 = vmatprep.mubr.f32.mxu0 0.0
    %1044 = vmatmul.mubr.f32.gmra.mrb[0].mxu0 %v977
    %v1045 = vpop.f32.mrb[0].mxu0
    %v1046 = vadd.f32 0.0, %v1045
    %v1047 = vpop.f32.mrb[0].mxu0
    %1048 = vdwg.mxu0
    %v1050 = vrot.slane %v1046, 1
    %v1053 = vadd.f32 %v972, %v1046
    %v1054 = vadd.f32 %v973, %v1050
    %v1055 = vxor.u32 %v1053, 2147483648
    %v1056 = vxor.u32 %v1054, 2147483648
    %v1057 = vmul.f32 %v1055, 1.442695
    %v1058 = vpow.pop %v1057
    %v1059 = vmul.f32 %v1056, 1.442695
    %v1060 = vpow.pop %v1059
    %v1061 = vadd.f32 %v1058, 1.0
    %v1062 = vadd.f32 %v1060, 1.0
    %v1063 = vrcp.pop %v1061
    %v1064 = vmul.f32 1.0, %v1063
    %v1065 = vrcp.pop %v1062
    %v1066 = vmul.f32 1.0, %v1065
    %v1068 = vlaneseq
    %v1069 = vshrl.u32 %v1068, 7
    %v1070 = vsub.s32 0, %v1069
    %v1071 = vrot.slane %v971, %v1070
    %1072 = vrot.lane.b32.xlu0 %v1071, 32
    %v1073 = vpop.permute.xlu0 %1072
    %v1075 = vadd.f32 %v1046, %v1073
    %v1077 = vrot.slane %v1075, 1
    %1078 = vrot.lane.b32.xlu0 %v1075, 96
    %v1079 = vpop.permute.xlu0 %1078
    %1080 = vrot.lane.b32.xlu0 %v1077, 96
    %v1081 = vpop.permute.xlu0 %1080
    %v1084 = vmul.f32 %v1064, %v1079
    %v1085 = vmul.f32 %v1066, %v1081
    %1088 = vrot.lane.b32.xlu0 %v1084, 32
    %v1089 = vpop.permute.xlu0 %1088
    %1090 = vrot.lane.b32.xlu0 %v1085, 32
    %v1091 = vpop.permute.xlu0 %1090
    %v1094 = vadd.f32 %v972, %v1089
    %v1095 = vadd.f32 %v973, %v1091
    %v1096 = vtanh.pop %v1094
    %v1097 = vtanh.pop %v1095
    %v1098 = vsub.f32 1.0, %v1064
    %v1099 = vsub.f32 1.0, %v1066
    %1102 = vrot.lane.b32.xlu0 %v1096, 112
    %v1103 = vpop.permute.xlu0 %1102
    %1104 = vrot.lane.b32.xlu0 %v1097, 112
    %v1105 = vpop.permute.xlu0 %1104
    %v1108 = vmul.f32 %v1098, %v1103
    %v1109 = vmul.f32 %v1099, %v1105
    %v1110 = vmul.f32 %v1064, 0.0
    %v1111 = vmul.f32 %v1066, 0.0
    %v1112 = vadd.f32 %v1108, %v1110
    %v1113 = vadd.f32 %v1109, %v1111
    %v1114 = vadd.f32 %v974, %v1046
    %v1115 = vadd.f32 %v975, %v1050
    %v1116 = vxor.u32 %v1114, 2147483648
    %v1117 = vxor.u32 %v1115, 2147483648
    %v1118 = vmul.f32 %v1116, 1.442695
    %v1119 = vpow.pop %v1118
    %v1120 = vmul.f32 %v1117, 1.442695
    %v1121 = vpow.pop %v1120
    %v1122 = vadd.f32 %v1119, 1.0
    %v1123 = vadd.f32 %v1121, 1.0
    %v1124 = vrcp.pop %v1122
    %v1125 = vmul.f32 1.0, %v1124
    %v1126 = vrcp.pop %v1123
    %v1127 = vmul.f32 1.0, %v1126
    %1128 = vrot.lane.b32.xlu0 %v1071, 64
    %v1129 = vpop.permute.xlu0 %1128
    %v1131 = vadd.f32 %v1046, %v1129
    %v1133 = vrot.slane %v1131, 1
    %1134 = vrot.lane.b32.xlu0 %v1131, 96
    %v1135 = vpop.permute.xlu0 %1134
    %1136 = vrot.lane.b32.xlu0 %v1133, 96
    %v1137 = vpop.permute.xlu0 %1136
    %v1140 = vmul.f32 %v1125, %v1135
    %v1141 = vmul.f32 %v1127, %v1137
    %1144 = vrot.lane.b32.xlu0 %v1140, 32
    %v1145 = vpop.permute.xlu0 %1144
    %1146 = vrot.lane.b32.xlu0 %v1141, 32
    %v1147 = vpop.permute.xlu0 %1146
    %v1150 = vadd.f32 %v974, %v1145
    %v1151 = vadd.f32 %v975, %v1147
    %v1152 = vtanh.pop %v1150
    %v1153 = vtanh.pop %v1151
    %v1154 = vsub.f32 1.0, %v1125
    %v1155 = vsub.f32 1.0, %v1127
    %1158 = vrot.lane.b32.xlu0 %v1152, 112
    %v1159 = vpop.permute.xlu0 %1158
    %1160 = vrot.lane.b32.xlu0 %v1153, 112
    %v1161 = vpop.permute.xlu0 %1160
    %v1164 = vmul.f32 %v1154, %v1159
    %v1165 = vmul.f32 %v1155, %v1161
    %v1166 = vmul.f32 %v1125, 0.0
    %v1167 = vmul.f32 %v1127, 0.0
    %v1168 = vadd.f32 %v1164, %v1166
    %v1169 = vadd.f32 %v1165, %v1167
    %1171 = vset.pattern.permute.xlu0 0
    %1172 = vperm.xlu0 %1171, %v112
    %v1173 = vpop.permute.xlu0 %1172
    %v1177 = vrot.slane %v1113, 7
    %v1178 = vsel %vm129, %v1177, %v1112
    %1179 = vrot.lane.b32.xlu0 %v1178, 112
    %v1180 = vpop.permute.xlu0 %1179
    %v1182 = vmul.f32 %v1173, %v1180
    %v1183 = vsub.f32 1.0, %v112
    %1185 = vset.pattern.permute.xlu0 0
    %1186 = vperm.xlu0 %1185, %v1183
    %v1187 = vpop.permute.xlu0 %1186
    %v1189 = vmul.f32 %v1187, 0.0
    %v1190 = vadd.f32 %v1182, %v1189
    %1191 = vset.pattern.permute.xlu0 7
    %1192 = vperm.xlu0 %1191, %v112
    %v1193 = vpop.permute.xlu0 %1192
    %v1197 = vrot.slane %v1169, 7
    %v1198 = vsel %vm129, %v1197, %v1168
    %1199 = vrot.lane.b32.xlu0 %v1198, 64
    %v1200 = vpop.permute.xlu0 %1199
    %v1202 = vmul.f32 %v1193, %v1200
    %1203 = vset.pattern.permute.xlu0 7
    %1204 = vperm.xlu0 %1203, %v1183
    %v1205 = vpop.permute.xlu0 %1204
    %v1207 = vmul.f32 %v1205, 0.0
    %v1208 = vadd.f32 %v1202, %v1207
    %v1209 = vmul.f32 %v1173, %v1190
    %v1212 = vunpack.c.l.s4 1966171168
    %v1213 = vunpack.c.0.s8 %v1212
    %v1214 = vlaneseq
    %v1215 = vshrl.u32 %v1214, 7
    %v1216 = vsub.s32 %v1213, %v1215
    %v1217 = vrot.slane %v1209, %v1216
    %v1218 = vcombine.high %v1217, %v1217
    %v1220 = vunpack.c.l.s4 1966171168
    %v1221 = vunpack.c.0.s8 %v1220
    %v1222 = vlaneseq
    %v1223 = vshrl.u32 %v1222, 7
    %v1224 = vsub.s32 %v1221, %v1223
    %v1225 = vrot.slane %v1217, %v1224
    %v1227 = vunpack.c.l.s4 1966171168
    %v1228 = vunpack.c.0.s8 %v1227
    %v1229 = vlaneseq
    %v1230 = vshrl.u32 %v1229, 7
    %v1231 = vsub.s32 %v1228, %v1230
    %v1232 = vrot.slane %v1218, %v1231
    %vm1235 = vcmask 122880
    %1236 = vst.msk [vmem:[#allocation3] sm:$0x1] %vm1235, %v1225
    %1237 = vst.msk [vmem:[#allocation3 + $0x8] sm:$0x1] %vm1235, %v1232
    %v1238 = vmul.f32 %v1193, %v1208
    %v1241 = vunpack.c.l.s4 1966171168
    %v1242 = vunpack.c.0.s8 %v1241
    %v1243 = vlaneseq
    %v1244 = vshrl.u32 %v1243, 7
    %v1245 = vsub.s32 %v1242, %v1244
    %v1246 = vrot.slane %v1238, %v1245
    %v1247 = vcombine.high %v1246, %v1246
    %v1249 = vunpack.c.l.s4 1966171168
    %v1250 = vunpack.c.0.s8 %v1249
    %v1251 = vlaneseq
    %v1252 = vshrl.u32 %v1251, 7
    %v1253 = vsub.s32 %v1250, %v1252
    %v1254 = vrot.slane %v1246, %v1253
    %v1256 = vunpack.c.l.s4 1966171168
    %v1257 = vunpack.c.0.s8 %v1256
    %v1258 = vlaneseq
    %v1259 = vshrl.u32 %v1258, 7
    %v1260 = vsub.s32 %v1257, %v1259
    %v1261 = vrot.slane %v1247, %v1260
    %v1262 = vlaneseq
    %v1263 = vshrl.u32 %v1262, 7
    %v1264 = vsub.s32 0, %v1263
    %v1265 = vrot.slane %v1254, %v1264
    %v1266 = vlaneseq
    %v1267 = vshrl.u32 %v1266, 7
    %v1268 = vsub.s32 0, %v1267
    %v1269 = vrot.slane %v1261, %v1268
    %1270 = vrot.lane.b32.xlu0 %v1265, 16
    %v1271 = vpop.permute.xlu0 %1270
    %1272 = vrot.lane.b32.xlu0 %v1269, 16
    %v1273 = vpop.permute.xlu0 %1272
    %vm1276 = vcmask 254080
    %1277 = vst.msk [vmem:[#allocation3 + $0x7] sm:$0x1] %vm1276, %v1271
    %1278 = vst.msk [vmem:[#allocation3 + $0xf] sm:$0x1] %vm1276, %v1273
    %1280 = vrot.lane.b32.xlu0 %v1208, 16
    %v1281 = vpop.permute.xlu0 %1280
    %vm1283 = vcmask 130048
    %v1284 = vsel %vm1283, %v1190, %v1281
    %v1285 = vld [vmem:[#allocation2 + $0x1] sm:$0x1]
    %v1286 = vld [vmem:[#allocation2 + $0x9] sm:$0x1]
    %v1287 = vld [vmem:[#allocation2 + $0x6] sm:$0x1]
    %v1288 = vld [vmem:[#allocation2 + $0xe] sm:$0x1]
    %v1290 = vsel %vm131, %v1284, 0
    %1292 = vmatprep.subr.mxu0 0.0
    %1293 = vmatpush1.msra.mxu0 %v967
    %1294 = vmatprep.subr.mxu0 0.0
    %1295 = vmatpush1.msra.mxu0 %v968
    %1296 = vmatprep.subr.mxu0 0.0
    %1297 = vmatpush1.msra.mxu0 %v969
    %1298 = vmatprep.subr.mxu0 0.0
    %1299 = vmatpush1.msra.mxu0 %v970
    %1300 = vmatprep.subr.mxu0 0.0
    %1301 = vmatpush1.msra.mxu0 0.0
    %1302 = vmatprep.subr.mxu0 0.0
    %1303 = vmatpush1.msra.mxu0 0.0
    %1304 = vmatprep.subr.mxu0 0.0
    %1305 = vmatpush1.msra.mxu0 0.0
    %1306 = vmatprep.subr.mxu0 0.0
    %1307 = vmatpush1.msra.mxu0 0.0
    %1308 = vmatprep.subr.mxu0 0.0
    %1309 = vmatpush1.msra.mxu0 0.0
    %1310 = vmatprep.subr.mxu0 0.0
    %1311 = vmatpush1.msra.mxu0 0.0
    %1312 = vmatprep.subr.mxu0 0.0
    %1313 = vmatpush1.msra.mxu0 0.0
    %1314 = vmatprep.subr.mxu0 0.0
    %1315 = vmatpush1.msra.mxu0 0.0
    %1316 = vmatprep.subr.mxu0 0.0
    %1317 = vmatpush1.msra.mxu0 0.0
    %1318 = vmatprep.subr.mxu0 0.0
    %1319 = vmatpush1.msra.mxu0 0.0
    %1320 = vmatprep.subr.mxu0 0.0
    %1321 = vmatpush1.msra.mxu0 0.0
    %1322 = vmatprep.subr.mxu0 0.0
    %1323 = vmatpush1.msra.mxu0 0.0
    %1324 = vmatprep.subr.mxu0 0.0
    %1325 = vmatpush1.msra.mxu0 0.0
    %1326 = vmatprep.subr.mxu0 0.0
    %1327 = vmatpush1.msra.mxu0 0.0
    %1328 = vmatprep.subr.mxu0 0.0
    %1329 = vmatpush1.msra.mxu0 0.0
    %1330 = vmatprep.subr.mxu0 0.0
    %1331 = vmatpush1.msra.mxu0 0.0
    %1332 = vmatprep.subr.mxu0 0.0
    %1333 = vmatpush1.msra.mxu0 0.0
    %1334 = vmatprep.subr.mxu0 0.0
    %1335 = vmatpush1.msra.mxu0 0.0
    %1336 = vmatprep.subr.mxu0 0.0
    %1337 = vmatpush1.msra.mxu0 0.0
    %1338 = vmatprep.subr.mxu0 0.0
    %1339 = vmatpush1.msra.mxu0 0.0
    %1340 = vmatprep.subr.mxu0 0.0
    %1341 = vmatpush1.msra.mxu0 0.0
    %1342 = vmatprep.subr.mxu0 0.0
    %1343 = vmatpush1.msra.mxu0 0.0
    %1344 = vmatprep.subr.mxu0 0.0
    %1345 = vmatpush1.msra.mxu0 0.0
    %1346 = vmatprep.subr.mxu0 0.0
    %1347 = vmatpush1.msra.mxu0 0.0
    %1348 = vmatprep.subr.mxu0 0.0
    %1349 = vmatpush1.msra.mxu0 0.0
    %1350 = vmatprep.subr.mxu0 0.0
    %1351 = vmatpush1.msra.mxu0 0.0
    %1352 = vmatprep.subr.mxu0 0.0
    %1353 = vmatpush1.msra.mxu0 0.0
    %1354 = vmatprep.subr.mxu0 0.0
    %1355 = vmatpush1.msra.mxu0 0.0
    %1356 = vmatprep.mubr.f32.mxu0 0.0
    %1357 = vmatmul.mubr.f32.gmra.mrb[0].mxu0 %v1290
    %v1358 = vpop.f32.mrb[0].mxu0
    %v1359 = vadd.f32 0.0, %v1358
    %v1360 = vpop.f32.mrb[0].mxu0
    %1361 = vdwg.mxu0
    %v1363 = vrot.slane %v1359, 1
    %v1366 = vadd.f32 %v1285, %v1359
    %v1367 = vadd.f32 %v1286, %v1363
    %v1368 = vxor.u32 %v1366, 2147483648
    %v1369 = vxor.u32 %v1367, 2147483648
    %v1370 = vmul.f32 %v1368, 1.442695
    %v1371 = vpow.pop %v1370
    %v1372 = vmul.f32 %v1369, 1.442695
    %v1373 = vpow.pop %v1372
    %v1374 = vadd.f32 %v1371, 1.0
    %v1375 = vadd.f32 %v1373, 1.0
    %v1376 = vrcp.pop %v1374
    %v1377 = vmul.f32 1.0, %v1376
    %v1378 = vrcp.pop %v1375
    %v1379 = vmul.f32 1.0, %v1378
    %v1380 = vadd.f32 %v1359, %v1073
    %v1382 = vrot.slane %v1380, 1
    %1383 = vrot.lane.b32.xlu0 %v1380, 96
    %v1384 = vpop.permute.xlu0 %1383
    %1385 = vrot.lane.b32.xlu0 %v1382, 96
    %v1386 = vpop.permute.xlu0 %1385
    %v1389 = vmul.f32 %v1377, %v1384
    %v1390 = vmul.f32 %v1379, %v1386
    %1393 = vrot.lane.b32.xlu0 %v1389, 32
    %v1394 = vpop.permute.xlu0 %1393
    %1395 = vrot.lane.b32.xlu0 %v1390, 32
    %v1396 = vpop.permute.xlu0 %1395
    %v1399 = vadd.f32 %v1285, %v1394
    %v1400 = vadd.f32 %v1286, %v1396
    %v1401 = vtanh.pop %v1399
    %v1402 = vtanh.pop %v1400
    %v1403 = vsub.f32 1.0, %v1377
    %v1404 = vsub.f32 1.0, %v1379
    %1407 = vrot.lane.b32.xlu0 %v1401, 112
    %v1408 = vpop.permute.xlu0 %1407
    %1409 = vrot.lane.b32.xlu0 %v1402, 112
    %v1410 = vpop.permute.xlu0 %1409
    %v1413 = vmul.f32 %v1403, %v1408
    %v1414 = vmul.f32 %v1404, %v1410
    %v1415 = vrot.slane %v1284, 1
    %1416 = vrot.lane.b32.xlu0 %v1284, 16
    %v1417 = vpop.permute.xlu0 %1416
    %1418 = vrot.lane.b32.xlu0 %v1415, 16
    %v1419 = vpop.permute.xlu0 %1418
    %v1422 = vmul.f32 %v1377, %v1417
    %v1423 = vmul.f32 %v1379, %v1419
    %v1424 = vadd.f32 %v1413, %v1422
    %v1425 = vadd.f32 %v1414, %v1423
    %v1426 = vadd.f32 %v1287, %v1359
    %v1427 = vadd.f32 %v1288, %v1363
    %v1428 = vxor.u32 %v1426, 2147483648
    %v1429 = vxor.u32 %v1427, 2147483648
    %v1430 = vmul.f32 %v1428, 1.442695
    %v1431 = vpow.pop %v1430
    %v1432 = vmul.f32 %v1429, 1.442695
    %v1433 = vpow.pop %v1432
    %v1434 = vadd.f32 %v1431, 1.0
    %v1435 = vadd.f32 %v1433, 1.0
    %v1436 = vrcp.pop %v1434
    %v1437 = vmul.f32 1.0, %v1436
    %v1438 = vrcp.pop %v1435
    %v1439 = vmul.f32 1.0, %v1438
    %v1440 = vadd.f32 %v1359, %v1129
    %v1442 = vrot.slane %v1440, 1
    %1443 = vrot.lane.b32.xlu0 %v1440, 96
    %v1444 = vpop.permute.xlu0 %1443
    %1445 = vrot.lane.b32.xlu0 %v1442, 96
    %v1446 = vpop.permute.xlu0 %1445
    %v1449 = vmul.f32 %v1437, %v1444
    %v1450 = vmul.f32 %v1439, %v1446
    %1453 = vrot.lane.b32.xlu0 %v1449, 32
    %v1454 = vpop.permute.xlu0 %1453
    %1455 = vrot.lane.b32.xlu0 %v1450, 32
    %v1456 = vpop.permute.xlu0 %1455
    %v1459 = vadd.f32 %v1287, %v1454
    %v1460 = vadd.f32 %v1288, %v1456
    %v1461 = vtanh.pop %v1459
    %v1462 = vtanh.pop %v1460
    %v1463 = vsub.f32 1.0, %v1437
    %v1464 = vsub.f32 1.0, %v1439
    %1467 = vrot.lane.b32.xlu0 %v1461, 112
    %v1468 = vpop.permute.xlu0 %1467
    %1469 = vrot.lane.b32.xlu0 %v1462, 112
    %v1470 = vpop.permute.xlu0 %1469
    %v1473 = vmul.f32 %v1463, %v1468
    %v1474 = vmul.f32 %v1464, %v1470
    %1475 = vrot.lane.b32.xlu0 %v1284, 48
    %v1476 = vpop.permute.xlu0 %1475
    %1477 = vrot.lane.b32.xlu0 %v1415, 48
    %v1478 = vpop.permute.xlu0 %1477
    %v1481 = vmul.f32 %v1437, %v1476
    %v1482 = vmul.f32 %v1439, %v1478
    %v1483 = vadd.f32 %v1473, %v1481
    %v1484 = vadd.f32 %v1474, %v1482
    %1485 = vset.pattern.permute.xlu0 1
    %1486 = vperm.xlu0 %1485, %v112
    %v1487 = vpop.permute.xlu0 %1486
    %v1491 = vrot.slane %v1425, 7
    %v1492 = vsel %vm129, %v1491, %v1424
    %1493 = vrot.lane.b32.xlu0 %v1492, 112
    %v1494 = vpop.permute.xlu0 %1493
    %v1496 = vmul.f32 %v1487, %v1494
    %1497 = vset.pattern.permute.xlu0 1
    %1498 = vperm.xlu0 %1497, %v1183
    %v1499 = vpop.permute.xlu0 %1498
    %v1501 = vmul.f32 %v1499, %v1284
    %v1502 = vadd.f32 %v1496, %v1501
    %1503 = vset.pattern.permute.xlu0 6
    %1504 = vperm.xlu0 %1503, %v112
    %v1505 = vpop.permute.xlu0 %1504
    %v1509 = vrot.slane %v1484, 7
    %v1510 = vsel %vm129, %v1509, %v1483
    %1511 = vrot.lane.b32.xlu0 %v1510, 64
    %v1512 = vpop.permute.xlu0 %1511
    %v1514 = vmul.f32 %v1505, %v1512
    %1515 = vset.pattern.permute.xlu0 6
    %1516 = vperm.xlu0 %1515, %v1183
    %v1517 = vpop.permute.xlu0 %1516
    %v1519 = vmul.f32 %v1517, %v1284
    %1521 = vrot.lane.b32.xlu0 %v1519, 112
    %v1522 = vpop.permute.xlu0 %1521
    %v1524 = vadd.f32 %v1514, %v1522
    %v1525 = vmul.f32 %v1487, %v1502
    %v1528 = vunpack.c.l.s4 1966171168
    %v1529 = vunpack.c.0.s8 %v1528
    %v1530 = vlaneseq
    %v1531 = vshrl.u32 %v1530, 7
    %v1532 = vsub.s32 %v1529, %v1531
    %v1533 = vrot.slane %v1525, %v1532
    %v1534 = vcombine.high %v1533, %v1533
    %v1536 = vunpack.c.l.s4 1966171168
    %v1537 = vunpack.c.0.s8 %v1536
    %v1538 = vlaneseq
    %v1539 = vshrl.u32 %v1538, 7
    %v1540 = vsub.s32 %v1537, %v1539
    %v1541 = vrot.slane %v1533, %v1540
    %v1543 = vunpack.c.l.s4 1966171168
    %v1544 = vunpack.c.0.s8 %v1543
    %v1545 = vlaneseq
    %v1546 = vshrl.u32 %v1545, 7
    %v1547 = vsub.s32 %v1544, %v1546
    %v1548 = vrot.slane %v1534, %v1547
    %1551 = vst.msk [vmem:[#allocation3 + $0x1] sm:$0x1] %vm1235, %v1541
    %1552 = vst.msk [vmem:[#allocation3 + $0x9] sm:$0x1] %vm1235, %v1548
    %v1553 = vmul.f32 %v1505, %v1524
    %v1556 = vunpack.c.l.s4 1966171168
    %v1557 = vunpack.c.0.s8 %v1556
    %v1558 = vlaneseq
    %v1559 = vshrl.u32 %v1558, 7
    %v1560 = vsub.s32 %v1557, %v1559
    %v1561 = vrot.slane %v1553, %v1560
    %v1562 = vcombine.high %v1561, %v1561
    %v1564 = vunpack.c.l.s4 1966171168
    %v1565 = vunpack.c.0.s8 %v1564
    %v1566 = vlaneseq
    %v1567 = vshrl.u32 %v1566, 7
    %v1568 = vsub.s32 %v1565, %v1567
    %v1569 = vrot.slane %v1561, %v1568
    %v1571 = vunpack.c.l.s4 1966171168
    %v1572 = vunpack.c.0.s8 %v1571
    %v1573 = vlaneseq
    %v1574 = vshrl.u32 %v1573, 7
    %v1575 = vsub.s32 %v1572, %v1574
    %v1576 = vrot.slane %v1562, %v1575
    %v1577 = vlaneseq
    %v1578 = vshrl.u32 %v1577, 7
    %v1579 = vsub.s32 0, %v1578
    %v1580 = vrot.slane %v1569, %v1579
    %v1581 = vlaneseq
    %v1582 = vshrl.u32 %v1581, 7
    %v1583 = vsub.s32 0, %v1582
    %v1584 = vrot.slane %v1576, %v1583
    %1585 = vrot.lane.b32.xlu0 %v1580, 16
    %v1586 = vpop.permute.xlu0 %1585
    %1587 = vrot.lane.b32.xlu0 %v1584, 16
    %v1588 = vpop.permute.xlu0 %1587
    %1591 = vst.msk [vmem:[#allocation3 + $0x6] sm:$0x1] %vm1276, %v1586
    %1592 = vst.msk [vmem:[#allocation3 + $0xe] sm:$0x1] %vm1276, %v1588
    %1594 = vrot.lane.b32.xlu0 %v1524, 16
    %v1595 = vpop.permute.xlu0 %1594
    %v1597 = vsel %vm1283, %v1502, %v1595
    %v1598 = vld [vmem:[#allocation2 + $0x2] sm:$0x1]
    %v1599 = vld [vmem:[#allocation2 + $0xa] sm:$0x1]
    %v1600 = vld [vmem:[#allocation2 + $0x5] sm:$0x1]
    %v1601 = vld [vmem:[#allocation2 + $0xd] sm:$0x1]
    %v1603 = vsel %vm131, %v1597, 0
    %1605 = vmatprep.subr.mxu0 0.0
    %1606 = vmatpush1.msra.mxu0 %v967
    %1607 = vmatprep.subr.mxu0 0.0
    %1608 = vmatpush1.msra.mxu0 %v968
    %1609 = vmatprep.subr.mxu0 0.0
    %1610 = vmatpush1.msra.mxu0 %v969
    %1611 = vmatprep.subr.mxu0 0.0
    %1612 = vmatpush1.msra.mxu0 %v970
    %1613 = vmatprep.subr.mxu0 0.0
    %1614 = vmatpush1.msra.mxu0 0.0
    %1615 = vmatprep.subr.mxu0 0.0
    %1616 = vmatpush1.msra.mxu0 0.0
    %1617 = vmatprep.subr.mxu0 0.0
    %1618 = vmatpush1.msra.mxu0 0.0
    %1619 = vmatprep.subr.mxu0 0.0
    %1620 = vmatpush1.msra.mxu0 0.0
    %1621 = vmatprep.subr.mxu0 0.0
    %1622 = vmatpush1.msra.mxu0 0.0
    %1623 = vmatprep.subr.mxu0 0.0
    %1624 = vmatpush1.msra.mxu0 0.0
    %1625 = vmatprep.subr.mxu0 0.0
    %1626 = vmatpush1.msra.mxu0 0.0
    %1627 = vmatprep.subr.mxu0 0.0
    %1628 = vmatpush1.msra.mxu0 0.0
    %1629 = vmatprep.subr.mxu0 0.0
    %1630 = vmatpush1.msra.mxu0 0.0
    %1631 = vmatprep.subr.mxu0 0.0
    %1632 = vmatpush1.msra.mxu0 0.0
    %1633 = vmatprep.subr.mxu0 0.0
    %1634 = vmatpush1.msra.mxu0 0.0
    %1635 = vmatprep.subr.mxu0 0.0
    %1636 = vmatpush1.msra.mxu0 0.0
    %1637 = vmatprep.subr.mxu0 0.0
    %1638 = vmatpush1.msra.mxu0 0.0
    %1639 = vmatprep.subr.mxu0 0.0
    %1640 = vmatpush1.msra.mxu0 0.0
    %1641 = vmatprep.subr.mxu0 0.0
    %1642 = vmatpush1.msra.mxu0 0.0
    %1643 = vmatprep.subr.mxu0 0.0
    %1644 = vmatpush1.msra.mxu0 0.0
    %1645 = vmatprep.subr.mxu0 0.0
    %1646 = vmatpush1.msra.mxu0 0.0
    %1647 = vmatprep.subr.mxu0 0.0
    %1648 = vmatpush1.msra.mxu0 0.0
    %1649 = vmatprep.subr.mxu0 0.0
    %1650 = vmatpush1.msra.mxu0 0.0
    %1651 = vmatprep.subr.mxu0 0.0
    %1652 = vmatpush1.msra.mxu0 0.0
    %1653 = vmatprep.subr.mxu0 0.0
    %1654 = vmatpush1.msra.mxu0 0.0
    %1655 = vmatprep.subr.mxu0 0.0
    %1656 = vmatpush1.msra.mxu0 0.0
    %1657 = vmatprep.subr.mxu0 0.0
    %1658 = vmatpush1.msra.mxu0 0.0
    %1659 = vmatprep.subr.mxu0 0.0
    %1660 = vmatpush1.msra.mxu0 0.0
    %1661 = vmatprep.subr.mxu0 0.0
    %1662 = vmatpush1.msra.mxu0 0.0
    %1663 = vmatprep.subr.mxu0 0.0
    %1664 = vmatpush1.msra.mxu0 0.0
    %1665 = vmatprep.subr.mxu0 0.0
    %1666 = vmatpush1.msra.mxu0 0.0
    %1667 = vmatprep.subr.mxu0 0.0
    %1668 = vmatpush1.msra.mxu0 0.0
    %1669 = vmatprep.mubr.f32.mxu0 0.0
    %1670 = vmatmul.mubr.f32.gmra.mrb[0].mxu0 %v1603
    %v1671 = vpop.f32.mrb[0].mxu0
    %v1672 = vadd.f32 0.0, %v1671
    %v1673 = vpop.f32.mrb[0].mxu0
    %1674 = vdwg.mxu0
    %v1676 = vrot.slane %v1672, 1
    %v1679 = vadd.f32 %v1598, %v1672
    %v1680 = vadd.f32 %v1599, %v1676
    %v1681 = vxor.u32 %v1679, 2147483648
    %v1682 = vxor.u32 %v1680, 2147483648
    %v1683 = vmul.f32 %v1681, 1.442695
    %v1684 = vpow.pop %v1683
    %v1685 = vmul.f32 %v1682, 1.442695
    %v1686 = vpow.pop %v1685
    %v1687 = vadd.f32 %v1684, 1.0
    %v1688 = vadd.f32 %v1686, 1.0
    %v1689 = vrcp.pop %v1687
    %v1690 = vmul.f32 1.0, %v1689
    %v1691 = vrcp.pop %v1688
    %v1692 = vmul.f32 1.0, %v1691
    %v1693 = vadd.f32 %v1672, %v1073
    %v1695 = vrot.slane %v1693, 1
    %1696 = vrot.lane.b32.xlu0 %v1693, 96
    %v1697 = vpop.permute.xlu0 %1696
    %1698 = vrot.lane.b32.xlu0 %v1695, 96
    %v1699 = vpop.permute.xlu0 %1698
    %v1702 = vmul.f32 %v1690, %v1697
    %v1703 = vmul.f32 %v1692, %v1699
    %1706 = vrot.lane.b32.xlu0 %v1702, 32
    %v1707 = vpop.permute.xlu0 %1706
    %1708 = vrot.lane.b32.xlu0 %v1703, 32
    %v1709 = vpop.permute.xlu0 %1708
    %v1712 = vadd.f32 %v1598, %v1707
    %v1713 = vadd.f32 %v1599, %v1709
    %v1714 = vtanh.pop %v1712
    %v1715 = vtanh.pop %v1713
    %v1716 = vsub.f32 1.0, %v1690
    %v1717 = vsub.f32 1.0, %v1692
    %1720 = vrot.lane.b32.xlu0 %v1714, 112
    %v1721 = vpop.permute.xlu0 %1720
    %1722 = vrot.lane.b32.xlu0 %v1715, 112
    %v1723 = vpop.permute.xlu0 %1722
    %v1726 = vmul.f32 %v1716, %v1721
    %v1727 = vmul.f32 %v1717, %v1723
    %v1728 = vrot.slane %v1597, 1
    %1729 = vrot.lane.b32.xlu0 %v1597, 16
    %v1730 = vpop.permute.xlu0 %1729
    %1731 = vrot.lane.b32.xlu0 %v1728, 16
    %v1732 = vpop.permute.xlu0 %1731
    %v1735 = vmul.f32 %v1690, %v1730
    %v1736 = vmul.f32 %v1692, %v1732
    %v1737 = vadd.f32 %v1726, %v1735
    %v1738 = vadd.f32 %v1727, %v1736
    %v1739 = vadd.f32 %v1600, %v1672
    %v1740 = vadd.f32 %v1601, %v1676
    %v1741 = vxor.u32 %v1739, 2147483648
    %v1742 = vxor.u32 %v1740, 2147483648
    %v1743 = vmul.f32 %v1741, 1.442695
    %v1744 = vpow.pop %v1743
    %v1745 = vmul.f32 %v1742, 1.442695
    %v1746 = vpow.pop %v1745
    %v1747 = vadd.f32 %v1744, 1.0
    %v1748 = vadd.f32 %v1746, 1.0
    %v1749 = vrcp.pop %v1747
    %v1750 = vmul.f32 1.0, %v1749
    %v1751 = vrcp.pop %v1748
    %v1752 = vmul.f32 1.0, %v1751
    %v1753 = vadd.f32 %v1672, %v1129
    %v1755 = vrot.slane %v1753, 1
    %1756 = vrot.lane.b32.xlu0 %v1753, 96
    %v1757 = vpop.permute.xlu0 %1756
    %1758 = vrot.lane.b32.xlu0 %v1755, 96
    %v1759 = vpop.permute.xlu0 %1758
    %v1762 = vmul.f32 %v1750, %v1757
    %v1763 = vmul.f32 %v1752, %v1759
    %1766 = vrot.lane.b32.xlu0 %v1762, 32
    %v1767 = vpop.permute.xlu0 %1766
    %1768 = vrot.lane.b32.xlu0 %v1763, 32
    %v1769 = vpop.permute.xlu0 %1768
    %v1772 = vadd.f32 %v1600, %v1767
    %v1773 = vadd.f32 %v1601, %v1769
    %v1774 = vtanh.pop %v1772
    %v1775 = vtanh.pop %v1773
    %v1776 = vsub.f32 1.0, %v1750
    %v1777 = vsub.f32 1.0, %v1752
    %1780 = vrot.lane.b32.xlu0 %v1774, 112
    %v1781 = vpop.permute.xlu0 %1780
    %1782 = vrot.lane.b32.xlu0 %v1775, 112
    %v1783 = vpop.permute.xlu0 %1782
    %v1786 = vmul.f32 %v1776, %v1781
    %v1787 = vmul.f32 %v1777, %v1783
    %1788 = vrot.lane.b32.xlu0 %v1597, 48
    %v1789 = vpop.permute.xlu0 %1788
    %1790 = vrot.lane.b32.xlu0 %v1728, 48
    %v1791 = vpop.permute.xlu0 %1790
    %v1794 = vmul.f32 %v1750, %v1789
    %v1795 = vmul.f32 %v1752, %v1791
    %v1796 = vadd.f32 %v1786, %v1794
    %v1797 = vadd.f32 %v1787, %v1795
    %1798 = vset.pattern.permute.xlu0 2
    %1799 = vperm.xlu0 %1798, %v112
    %v1800 = vpop.permute.xlu0 %1799
    %v1804 = vrot.slane %v1738, 7
    %v1805 = vsel %vm129, %v1804, %v1737
    %1806 = vrot.lane.b32.xlu0 %v1805, 112
    %v1807 = vpop.permute.xlu0 %1806
    %v1809 = vmul.f32 %v1800, %v1807
    %1810 = vset.pattern.permute.xlu0 2
    %1811 = vperm.xlu0 %1810, %v1183
    %v1812 = vpop.permute.xlu0 %1811
    %v1814 = vmul.f32 %v1812, %v1597
    %v1815 = vadd.f32 %v1809, %v1814
    %1816 = vset.pattern.permute.xlu0 5
    %1817 = vperm.xlu0 %1816, %v112
    %v1818 = vpop.permute.xlu0 %1817
    %v1822 = vrot.slane %v1797, 7
    %v1823 = vsel %vm129, %v1822, %v1796
    %1824 = vrot.lane.b32.xlu0 %v1823, 64
    %v1825 = vpop.permute.xlu0 %1824
    %v1827 = vmul.f32 %v1818, %v1825
    %1828 = vset.pattern.permute.xlu0 5
    %1829 = vperm.xlu0 %1828, %v1183
    %v1830 = vpop.permute.xlu0 %1829
    %v1832 = vmul.f32 %v1830, %v1597
    %1834 = vrot.lane.b32.xlu0 %v1832, 112
    %v1835 = vpop.permute.xlu0 %1834
    %v1837 = vadd.f32 %v1827, %v1835
    %v1838 = vmul.f32 %v1800, %v1815
    %v1841 = vunpack.c.l.s4 1966171168
    %v1842 = vunpack.c.0.s8 %v1841
    %v1843 = vlaneseq
    %v1844 = vshrl.u32 %v1843, 7
    %v1845 = vsub.s32 %v1842, %v1844
    %v1846 = vrot.slane %v1838, %v1845
    %v1847 = vcombine.high %v1846, %v1846
    %v1849 = vunpack.c.l.s4 1966171168
    %v1850 = vunpack.c.0.s8 %v1849
    %v1851 = vlaneseq
    %v1852 = vshrl.u32 %v1851, 7
    %v1853 = vsub.s32 %v1850, %v1852
    %v1854 = vrot.slane %v1846, %v1853
    %v1856 = vunpack.c.l.s4 1966171168
    %v1857 = vunpack.c.0.s8 %v1856
    %v1858 = vlaneseq
    %v1859 = vshrl.u32 %v1858, 7
    %v1860 = vsub.s32 %v1857, %v1859
    %v1861 = vrot.slane %v1847, %v1860
    %1864 = vst.msk [vmem:[#allocation3 + $0x2] sm:$0x1] %vm1235, %v1854
    %1865 = vst.msk [vmem:[#allocation3 + $0xa] sm:$0x1] %vm1235, %v1861
    %v1866 = vmul.f32 %v1818, %v1837
    %v1869 = vunpack.c.l.s4 1966171168
    %v1870 = vunpack.c.0.s8 %v1869
    %v1871 = vlaneseq
    %v1872 = vshrl.u32 %v1871, 7
    %v1873 = vsub.s32 %v1870, %v1872
    %v1874 = vrot.slane %v1866, %v1873
    %v1875 = vcombine.high %v1874, %v1874
    %v1877 = vunpack.c.l.s4 1966171168
    %v1878 = vunpack.c.0.s8 %v1877
    %v1879 = vlaneseq
    %v1880 = vshrl.u32 %v1879, 7
    %v1881 = vsub.s32 %v1878, %v1880
    %v1882 = vrot.slane %v1874, %v1881
    %v1884 = vunpack.c.l.s4 1966171168
    %v1885 = vunpack.c.0.s8 %v1884
    %v1886 = vlaneseq
    %v1887 = vshrl.u32 %v1886, 7
    %v1888 = vsub.s32 %v1885, %v1887
    %v1889 = vrot.slane %v1875, %v1888
    %v1890 = vlaneseq
    %v1891 = vshrl.u32 %v1890, 7
    %v1892 = vsub.s32 0, %v1891
    %v1893 = vrot.slane %v1882, %v1892
    %v1894 = vlaneseq
    %v1895 = vshrl.u32 %v1894, 7
    %v1896 = vsub.s32 0, %v1895
    %v1897 = vrot.slane %v1889, %v1896
    %1898 = vrot.lane.b32.xlu0 %v1893, 16
    %v1899 = vpop.permute.xlu0 %1898
    %1900 = vrot.lane.b32.xlu0 %v1897, 16
    %v1901 = vpop.permute.xlu0 %1900
    %1904 = vst.msk [vmem:[#allocation3 + $0x5] sm:$0x1] %vm1276, %v1899
    %1905 = vst.msk [vmem:[#allocation3 + $0xd] sm:$0x1] %vm1276, %v1901
    %1907 = vrot.lane.b32.xlu0 %v1837, 16
    %v1908 = vpop.permute.xlu0 %1907
    %v1910 = vsel %vm1283, %v1815, %v1908
    %v1911 = vld [vmem:[#allocation2 + $0x3] sm:$0x1]
    %v1912 = vld [vmem:[#allocation2 + $0xb] sm:$0x1]
    %v1913 = vld [vmem:[#allocation2 + $0x4] sm:$0x1]
    %v1914 = vld [vmem:[#allocation2 + $0xc] sm:$0x1]
    %v1916 = vsel %vm131, %v1910, 0
    %1918 = vmatprep.subr.mxu0 0.0
    %1919 = vmatpush1.msra.mxu0 %v967
    %1920 = vmatprep.subr.mxu0 0.0
    %1921 = vmatpush1.msra.mxu0 %v968
    %1922 = vmatprep.subr.mxu0 0.0
    %1923 = vmatpush1.msra.mxu0 %v969
    %1924 = vmatprep.subr.mxu0 0.0
    %1925 = vmatpush1.msra.mxu0 %v970
    %1926 = vmatprep.subr.mxu0 0.0
    %1927 = vmatpush1.msra.mxu0 0.0
    %1928 = vmatprep.subr.mxu0 0.0
    %1929 = vmatpush1.msra.mxu0 0.0
    %1930 = vmatprep.subr.mxu0 0.0
    %1931 = vmatpush1.msra.mxu0 0.0
    %1932 = vmatprep.subr.mxu0 0.0
    %1933 = vmatpush1.msra.mxu0 0.0
    %1934 = vmatprep.subr.mxu0 0.0
    %1935 = vmatpush1.msra.mxu0 0.0
    %1936 = vmatprep.subr.mxu0 0.0
    %1937 = vmatpush1.msra.mxu0 0.0
    %1938 = vmatprep.subr.mxu0 0.0
    %1939 = vmatpush1.msra.mxu0 0.0
    %1940 = vmatprep.subr.mxu0 0.0
    %1941 = vmatpush1.msra.mxu0 0.0
    %1942 = vmatprep.subr.mxu0 0.0
    %1943 = vmatpush1.msra.mxu0 0.0
    %1944 = vmatprep.subr.mxu0 0.0
    %1945 = vmatpush1.msra.mxu0 0.0
    %1946 = vmatprep.subr.mxu0 0.0
    %1947 = vmatpush1.msra.mxu0 0.0
    %1948 = vmatprep.subr.mxu0 0.0
    %1949 = vmatpush1.msra.mxu0 0.0
    %1950 = vmatprep.subr.mxu0 0.0
    %1951 = vmatpush1.msra.mxu0 0.0
    %1952 = vmatprep.subr.mxu0 0.0
    %1953 = vmatpush1.msra.mxu0 0.0
    %1954 = vmatprep.subr.mxu0 0.0
    %1955 = vmatpush1.msra.mxu0 0.0
    %1956 = vmatprep.subr.mxu0 0.0
    %1957 = vmatpush1.msra.mxu0 0.0
    %1958 = vmatprep.subr.mxu0 0.0
    %1959 = vmatpush1.msra.mxu0 0.0
    %1960 = vmatprep.subr.mxu0 0.0
    %1961 = vmatpush1.msra.mxu0 0.0
    %1962 = vmatprep.subr.mxu0 0.0
    %1963 = vmatpush1.msra.mxu0 0.0
    %1964 = vmatprep.subr.mxu0 0.0
    %1965 = vmatpush1.msra.mxu0 0.0
    %1966 = vmatprep.subr.mxu0 0.0
    %1967 = vmatpush1.msra.mxu0 0.0
    %1968 = vmatprep.subr.mxu0 0.0
    %1969 = vmatpush1.msra.mxu0 0.0
    %1970 = vmatprep.subr.mxu0 0.0
    %1971 = vmatpush1.msra.mxu0 0.0
    %1972 = vmatprep.subr.mxu0 0.0
    %1973 = vmatpush1.msra.mxu0 0.0
    %1974 = vmatprep.subr.mxu0 0.0
    %1975 = vmatpush1.msra.mxu0 0.0
    %1976 = vmatprep.subr.mxu0 0.0
    %1977 = vmatpush1.msra.mxu0 0.0
    %1978 = vmatprep.subr.mxu0 0.0
    %1979 = vmatpush1.msra.mxu0 0.0
    %1980 = vmatprep.subr.mxu0 0.0
    %1981 = vmatpush1.msra.mxu0 0.0
    %1982 = vmatprep.mubr.f32.mxu0 0.0
    %1983 = vmatmul.mubr.f32.gmra.mrb[0].mxu0 %v1916
    %v1984 = vpop.f32.mrb[0].mxu0
    %v1985 = vadd.f32 0.0, %v1984
    %v1986 = vpop.f32.mrb[0].mxu0
    %1987 = vdwg.mxu0
    %v1989 = vrot.slane %v1985, 1
    %v1992 = vadd.f32 %v1911, %v1985
    %v1993 = vadd.f32 %v1912, %v1989
    %v1994 = vxor.u32 %v1992, 2147483648
    %v1995 = vxor.u32 %v1993, 2147483648
    %v1996 = vmul.f32 %v1994, 1.442695
    %v1997 = vpow.pop %v1996
    %v1998 = vmul.f32 %v1995, 1.442695
    %v1999 = vpow.pop %v1998
    %v2000 = vadd.f32 %v1997, 1.0
    %v2001 = vadd.f32 %v1999, 1.0
    %v2002 = vrcp.pop %v2000
    %v2003 = vmul.f32 1.0, %v2002
    %v2004 = vrcp.pop %v2001
    %v2005 = vmul.f32 1.0, %v2004
    %v2006 = vadd.f32 %v1985, %v1073
    %v2008 = vrot.slane %v2006, 1
    %2009 = vrot.lane.b32.xlu0 %v2006, 96
    %v2010 = vpop.permute.xlu0 %2009
    %2011 = vrot.lane.b32.xlu0 %v2008, 96
    %v2012 = vpop.permute.xlu0 %2011
    %v2015 = vmul.f32 %v2003, %v2010
    %v2016 = vmul.f32 %v2005, %v2012
    %2019 = vrot.lane.b32.xlu0 %v2015, 32
    %v2020 = vpop.permute.xlu0 %2019
    %2021 = vrot.lane.b32.xlu0 %v2016, 32
    %v2022 = vpop.permute.xlu0 %2021
    %v2025 = vadd.f32 %v1911, %v2020
    %v2026 = vadd.f32 %v1912, %v2022
    %v2027 = vtanh.pop %v2025
    %v2028 = vtanh.pop %v2026
    %v2029 = vsub.f32 1.0, %v2003
    %v2030 = vsub.f32 1.0, %v2005
    %2033 = vrot.lane.b32.xlu0 %v2027, 112
    %v2034 = vpop.permute.xlu0 %2033
    %2035 = vrot.lane.b32.xlu0 %v2028, 112
    %v2036 = vpop.permute.xlu0 %2035
    %v2039 = vmul.f32 %v2029, %v2034
    %v2040 = vmul.f32 %v2030, %v2036
    %v2041 = vrot.slane %v1910, 1
    %2042 = vrot.lane.b32.xlu0 %v1910, 16
    %v2043 = vpop.permute.xlu0 %2042
    %2044 = vrot.lane.b32.xlu0 %v2041, 16
    %v2045 = vpop.permute.xlu0 %2044
    %v2048 = vmul.f32 %v2003, %v2043
    %v2049 = vmul.f32 %v2005, %v2045
    %v2050 = vadd.f32 %v2039, %v2048
    %v2051 = vadd.f32 %v2040, %v2049
    %v2052 = vadd.f32 %v1913, %v1985
    %v2053 = vadd.f32 %v1914, %v1989
    %v2054 = vxor.u32 %v2052, 2147483648
    %v2055 = vxor.u32 %v2053, 2147483648
    %v2056 = vmul.f32 %v2054, 1.442695
    %v2057 = vpow.pop %v2056
    %v2058 = vmul.f32 %v2055, 1.442695
    %v2059 = vpow.pop %v2058
    %v2060 = vadd.f32 %v2057, 1.0
    %v2061 = vadd.f32 %v2059, 1.0
    %v2062 = vrcp.pop %v2060
    %v2063 = vmul.f32 1.0, %v2062
    %v2064 = vrcp.pop %v2061
    %v2065 = vmul.f32 1.0, %v2064
    %v2066 = vadd.f32 %v1985, %v1129
    %v2068 = vrot.slane %v2066, 1
    %2069 = vrot.lane.b32.xlu0 %v2066, 96
    %v2070 = vpop.permute.xlu0 %2069
    %2071 = vrot.lane.b32.xlu0 %v2068, 96
    %v2072 = vpop.permute.xlu0 %2071
    %v2075 = vmul.f32 %v2063, %v2070
    %v2076 = vmul.f32 %v2065, %v2072
    %2079 = vrot.lane.b32.xlu0 %v2075, 32
    %v2080 = vpop.permute.xlu0 %2079
    %2081 = vrot.lane.b32.xlu0 %v2076, 32
    %v2082 = vpop.permute.xlu0 %2081
    %v2085 = vadd.f32 %v1913, %v2080
    %v2086 = vadd.f32 %v1914, %v2082
    %v2087 = vtanh.pop %v2085
    %v2088 = vtanh.pop %v2086
    %v2089 = vsub.f32 1.0, %v2063
    %v2090 = vsub.f32 1.0, %v2065
    %2093 = vrot.lane.b32.xlu0 %v2087, 112
    %v2094 = vpop.permute.xlu0 %2093
    %2095 = vrot.lane.b32.xlu0 %v2088, 112
    %v2096 = vpop.permute.xlu0 %2095
    %v2099 = vmul.f32 %v2089, %v2094
    %v2100 = vmul.f32 %v2090, %v2096
    %2101 = vrot.lane.b32.xlu0 %v1910, 48
    %v2102 = vpop.permute.xlu0 %2101
    %2103 = vrot.lane.b32.xlu0 %v2041, 48
    %v2104 = vpop.permute.xlu0 %2103
    %v2107 = vmul.f32 %v2063, %v2102
    %v2108 = vmul.f32 %v2065, %v2104
    %v2109 = vadd.f32 %v2099, %v2107
    %v2110 = vadd.f32 %v2100, %v2108
    %2111 = vset.pattern.permute.xlu0 3
    %2112 = vperm.xlu0 %2111, %v112
    %v2113 = vpop.permute.xlu0 %2112
    %v2117 = vrot.slane %v2051, 7
    %v2118 = vsel %vm129, %v2117, %v2050
    %2119 = vrot.lane.b32.xlu0 %v2118, 112
    %v2120 = vpop.permute.xlu0 %2119
    %v2122 = vmul.f32 %v2113, %v2120
    %2123 = vset.pattern.permute.xlu0 3
    %2124 = vperm.xlu0 %2123, %v1183
    %v2125 = vpop.permute.xlu0 %2124
    %v2127 = vmul.f32 %v2125, %v1910
    %v2128 = vadd.f32 %v2122, %v2127
    %2129 = vset.pattern.permute.xlu0 4
    %2130 = vperm.xlu0 %2129, %v112
    %v2131 = vpop.permute.xlu0 %2130
    %v2135 = vrot.slane %v2110, 7
    %v2136 = vsel %vm129, %v2135, %v2109
    %2137 = vrot.lane.b32.xlu0 %v2136, 64
    %v2138 = vpop.permute.xlu0 %2137
    %v2140 = vmul.f32 %v2131, %v2138
    %2141 = vset.pattern.permute.xlu0 4
    %2142 = vperm.xlu0 %2141, %v1183
    %v2143 = vpop.permute.xlu0 %2142
    %v2145 = vmul.f32 %v2143, %v1910
    %2147 = vrot.lane.b32.xlu0 %v2145, 112
    %v2148 = vpop.permute.xlu0 %2147
    %v2150 = vadd.f32 %v2140, %v2148
    %v2151 = vmul.f32 %v2113, %v2128
    %v2154 = vunpack.c.l.s4 1966171168
    %v2155 = vunpack.c.0.s8 %v2154
    %v2156 = vlaneseq
    %v2157 = vshrl.u32 %v2156, 7
    %v2158 = vsub.s32 %v2155, %v2157
    %v2159 = vrot.slane %v2151, %v2158
    %v2160 = vcombine.high %v2159, %v2159
    %v2162 = vunpack.c.l.s4 1966171168
    %v2163 = vunpack.c.0.s8 %v2162
    %v2164 = vlaneseq
    %v2165 = vshrl.u32 %v2164, 7
    %v2166 = vsub.s32 %v2163, %v2165
    %v2167 = vrot.slane %v2159, %v2166
    %v2169 = vunpack.c.l.s4 1966171168
    %v2170 = vunpack.c.0.s8 %v2169
    %v2171 = vlaneseq
    %v2172 = vshrl.u32 %v2171, 7
    %v2173 = vsub.s32 %v2170, %v2172
    %v2174 = vrot.slane %v2160, %v2173
    %2177 = vst.msk [vmem:[#allocation3 + $0x3] sm:$0x1] %vm1235, %v2167
    %2178 = vst.msk [vmem:[#allocation3 + $0xb] sm:$0x1] %vm1235, %v2174
    %v2179 = vmul.f32 %v2131, %v2150
    %v2182 = vunpack.c.l.s4 1966171168
    %v2183 = vunpack.c.0.s8 %v2182
    %v2184 = vlaneseq
    %v2185 = vshrl.u32 %v2184, 7
    %v2186 = vsub.s32 %v2183, %v2185
    %v2187 = vrot.slane %v2179, %v2186
    %v2188 = vcombine.high %v2187, %v2187
    %v2190 = vunpack.c.l.s4 1966171168
    %v2191 = vunpack.c.0.s8 %v2190
    %v2192 = vlaneseq
    %v2193 = vshrl.u32 %v2192, 7
    %v2194 = vsub.s32 %v2191, %v2193
    %v2195 = vrot.slane %v2187, %v2194
    %v2197 = vunpack.c.l.s4 1966171168
    %v2198 = vunpack.c.0.s8 %v2197
    %v2199 = vlaneseq
    %v2200 = vshrl.u32 %v2199, 7
    %v2201 = vsub.s32 %v2198, %v2200
    %v2202 = vrot.slane %v2188, %v2201
    %v2203 = vlaneseq
    %v2204 = vshrl.u32 %v2203, 7
    %v2205 = vsub.s32 0, %v2204
    %v2206 = vrot.slane %v2195, %v2205
    %v2207 = vlaneseq
    %v2208 = vshrl.u32 %v2207, 7
    %v2209 = vsub.s32 0, %v2208
    %v2210 = vrot.slane %v2202, %v2209
    %2211 = vrot.lane.b32.xlu0 %v2206, 16
    %v2212 = vpop.permute.xlu0 %2211
    %2213 = vrot.lane.b32.xlu0 %v2210, 16
    %v2214 = vpop.permute.xlu0 %2213
    %2217 = vst.msk [vmem:[#allocation3 + $0x4] sm:$0x1] %vm1276, %v2212
    %2218 = vst.msk [vmem:[#allocation3 + $0xc] sm:$0x1] %vm1276, %v2214
    %2220 = vrot.lane.b32.xlu0 %v2150, 16
    %v2221 = vpop.permute.xlu0 %2220
    %v2223 = vsel %vm1283, %v2128, %v2221
    %v2224 = vld [vmem:[#allocation2 + $0x4] sm:$0x1]
    %v2225 = vld [vmem:[#allocation2 + $0xc] sm:$0x1]
    %v2226 = vld [vmem:[#allocation2 + $0x3] sm:$0x1]
    %v2227 = vld [vmem:[#allocation2 + $0xb] sm:$0x1]
    %v2229 = vsel %vm131, %v2223, 0
    %2231 = vmatprep.subr.mxu0 0.0
    %2232 = vmatpush1.msra.mxu0 %v967
    %2233 = vmatprep.subr.mxu0 0.0
    %2234 = vmatpush1.msra.mxu0 %v968
    %2235 = vmatprep.subr.mxu0 0.0
    %2236 = vmatpush1.msra.mxu0 %v969
    %2237 = vmatprep.subr.mxu0 0.0
    %2238 = vmatpush1.msra.mxu0 %v970
    %2239 = vmatprep.subr.mxu0 0.0
    %2240 = vmatpush1.msra.mxu0 0.0
    %2241 = vmatprep.subr.mxu0 0.0
    %2242 = vmatpush1.msra.mxu0 0.0
    %2243 = vmatprep.subr.mxu0 0.0
    %2244 = vmatpush1.msra.mxu0 0.0
    %2245 = vmatprep.subr.mxu0 0.0
    %2246 = vmatpush1.msra.mxu0 0.0
    %2247 = vmatprep.subr.mxu0 0.0
    %2248 = vmatpush1.msra.mxu0 0.0
    %2249 = vmatprep.subr.mxu0 0.0
    %2250 = vmatpush1.msra.mxu0 0.0
    %2251 = vmatprep.subr.mxu0 0.0
    %2252 = vmatpush1.msra.mxu0 0.0
    %2253 = vmatprep.subr.mxu0 0.0
    %2254 = vmatpush1.msra.mxu0 0.0
    %2255 = vmatprep.subr.mxu0 0.0
    %2256 = vmatpush1.msra.mxu0 0.0
    %2257 = vmatprep.subr.mxu0 0.0
    %2258 = vmatpush1.msra.mxu0 0.0
    %2259 = vmatprep.subr.mxu0 0.0
    %2260 = vmatpush1.msra.mxu0 0.0
    %2261 = vmatprep.subr.mxu0 0.0
    %2262 = vmatpush1.msra.mxu0 0.0
    %2263 = vmatprep.subr.mxu0 0.0
    %2264 = vmatpush1.msra.mxu0 0.0
    %2265 = vmatprep.subr.mxu0 0.0
    %2266 = vmatpush1.msra.mxu0 0.0
    %2267 = vmatprep.subr.mxu0 0.0
    %2268 = vmatpush1.msra.mxu0 0.0
    %2269 = vmatprep.subr.mxu0 0.0
    %2270 = vmatpush1.msra.mxu0 0.0
    %2271 = vmatprep.subr.mxu0 0.0
    %2272 = vmatpush1.msra.mxu0 0.0
    %2273 = vmatprep.subr.mxu0 0.0
    %2274 = vmatpush1.msra.mxu0 0.0
    %2275 = vmatprep.subr.mxu0 0.0
    %2276 = vmatpush1.msra.mxu0 0.0
    %2277 = vmatprep.subr.mxu0 0.0
    %2278 = vmatpush1.msra.mxu0 0.0
    %2279 = vmatprep.subr.mxu0 0.0
    %2280 = vmatpush1.msra.mxu0 0.0
    %2281 = vmatprep.subr.mxu0 0.0
    %2282 = vmatpush1.msra.mxu0 0.0
    %2283 = vmatprep.subr.mxu0 0.0
    %2284 = vmatpush1.msra.mxu0 0.0
    %2285 = vmatprep.subr.mxu0 0.0
    %2286 = vmatpush1.msra.mxu0 0.0
    %2287 = vmatprep.subr.mxu0 0.0
    %2288 = vmatpush1.msra.mxu0 0.0
    %2289 = vmatprep.subr.mxu0 0.0
    %2290 = vmatpush1.msra.mxu0 0.0
    %2291 = vmatprep.subr.mxu0 0.0
    %2292 = vmatpush1.msra.mxu0 0.0
    %2293 = vmatprep.subr.mxu0 0.0
    %2294 = vmatpush1.msra.mxu0 0.0
    %2295 = vmatprep.mubr.f32.mxu0 0.0
    %2296 = vmatmul.mubr.f32.gmra.mrb[0].mxu0 %v2229
    %v2297 = vpop.f32.mrb[0].mxu0
    %v2298 = vadd.f32 0.0, %v2297
    %v2299 = vpop.f32.mrb[0].mxu0
    %2300 = vdwg.mxu0
    %v2302 = vrot.slane %v2298, 1
    %v2305 = vadd.f32 %v2224, %v2298
    %v2306 = vadd.f32 %v2225, %v2302
    %v2307 = vxor.u32 %v2305, 2147483648
    %v2308 = vxor.u32 %v2306, 2147483648
    %v2309 = vmul.f32 %v2307, 1.442695
    %v2310 = vpow.pop %v2309
    %v2311 = vmul.f32 %v2308, 1.442695
    %v2312 = vpow.pop %v2311
    %v2313 = vadd.f32 %v2310, 1.0
    %v2314 = vadd.f32 %v2312, 1.0
    %v2315 = vrcp.pop %v2313
    %v2316 = vmul.f32 1.0, %v2315
    %v2317 = vrcp.pop %v2314
    %v2318 = vmul.f32 1.0, %v2317
    %v2319 = vadd.f32 %v2298, %v1073
    %v2321 = vrot.slane %v2319, 1
    %2322 = vrot.lane.b32.xlu0 %v2319, 96
    %v2323 = vpop.permute.xlu0 %2322
    %2324 = vrot.lane.b32.xlu0 %v2321, 96
    %v2325 = vpop.permute.xlu0 %2324
    %v2328 = vmul.f32 %v2316, %v2323
    %v2329 = vmul.f32 %v2318, %v2325
    %2332 = vrot.lane.b32.xlu0 %v2328, 32
    %v2333 = vpop.permute.xlu0 %2332
    %2334 = vrot.lane.b32.xlu0 %v2329, 32
    %v2335 = vpop.permute.xlu0 %2334
    %v2338 = vadd.f32 %v2224, %v2333
    %v2339 = vadd.f32 %v2225, %v2335
    %v2340 = vtanh.pop %v2338
    %v2341 = vtanh.pop %v2339
    %v2342 = vsub.f32 1.0, %v2316
    %v2343 = vsub.f32 1.0, %v2318
    %2346 = vrot.lane.b32.xlu0 %v2340, 112
    %v2347 = vpop.permute.xlu0 %2346
    %2348 = vrot.lane.b32.xlu0 %v2341, 112
    %v2349 = vpop.permute.xlu0 %2348
    %v2352 = vmul.f32 %v2342, %v2347
    %v2353 = vmul.f32 %v2343, %v2349
    %v2354 = vrot.slane %v2223, 1
    %2355 = vrot.lane.b32.xlu0 %v2223, 16
    %v2356 = vpop.permute.xlu0 %2355
    %2357 = vrot.lane.b32.xlu0 %v2354, 16
    %v2358 = vpop.permute.xlu0 %2357
    %v2361 = vmul.f32 %v2316, %v2356
    %v2362 = vmul.f32 %v2318, %v2358
    %v2363 = vadd.f32 %v2352, %v2361
    %v2364 = vadd.f32 %v2353, %v2362
    %v2365 = vadd.f32 %v2226, %v2298
    %v2366 = vadd.f32 %v2227, %v2302
    %v2367 = vxor.u32 %v2365, 2147483648
    %v2368 = vxor.u32 %v2366, 2147483648
    %v2369 = vmul.f32 %v2367, 1.442695
    %v2370 = vpow.pop %v2369
    %v2371 = vmul.f32 %v2368, 1.442695
    %v2372 = vpow.pop %v2371
    %v2373 = vadd.f32 %v2370, 1.0
    %v2374 = vadd.f32 %v2372, 1.0
    %v2375 = vrcp.pop %v2373
    %v2376 = vmul.f32 1.0, %v2375
    %v2377 = vrcp.pop %v2374
    %v2378 = vmul.f32 1.0, %v2377
    %v2379 = vadd.f32 %v2298, %v1129
    %v2381 = vrot.slane %v2379, 1
    %2382 = vrot.lane.b32.xlu0 %v2379, 96
    %v2383 = vpop.permute.xlu0 %2382
    %2384 = vrot.lane.b32.xlu0 %v2381, 96
    %v2385 = vpop.permute.xlu0 %2384
    %v2388 = vmul.f32 %v2376, %v2383
    %v2389 = vmul.f32 %v2378, %v2385
    %2392 = vrot.lane.b32.xlu0 %v2388, 32
    %v2393 = vpop.permute.xlu0 %2392
    %2394 = vrot.lane.b32.xlu0 %v2389, 32
    %v2395 = vpop.permute.xlu0 %2394
    %v2398 = vadd.f32 %v2226, %v2393
    %v2399 = vadd.f32 %v2227, %v2395
    %v2400 = vtanh.pop %v2398
    %v2401 = vtanh.pop %v2399
    %v2402 = vsub.f32 1.0, %v2376
    %v2403 = vsub.f32 1.0, %v2378
    %2406 = vrot.lane.b32.xlu0 %v2400, 112
    %v2407 = vpop.permute.xlu0 %2406
    %2408 = vrot.lane.b32.xlu0 %v2401, 112
    %v2409 = vpop.permute.xlu0 %2408
    %v2412 = vmul.f32 %v2402, %v2407
    %v2413 = vmul.f32 %v2403, %v2409
    %2414 = vrot.lane.b32.xlu0 %v2223, 48
    %v2415 = vpop.permute.xlu0 %2414
    %2416 = vrot.lane.b32.xlu0 %v2354, 48
    %v2417 = vpop.permute.xlu0 %2416
    %v2420 = vmul.f32 %v2376, %v2415
    %v2421 = vmul.f32 %v2378, %v2417
    %v2422 = vadd.f32 %v2412, %v2420
    %v2423 = vadd.f32 %v2413, %v2421
    %v2426 = vrot.slane %v2364, 7
    %v2427 = vsel %vm129, %v2426, %v2363
    %2428 = vrot.lane.b32.xlu0 %v2427, 112
    %v2429 = vpop.permute.xlu0 %2428
    %v2431 = vmul.f32 %v2131, %v2429
    %v2432 = vmul.f32 %v2143, %v2223
    %v2433 = vadd.f32 %v2431, %v2432
    %v2436 = vrot.slane %v2423, 7
    %v2437 = vsel %vm129, %v2436, %v2422
    %2438 = vrot.lane.b32.xlu0 %v2437, 64
    %v2439 = vpop.permute.xlu0 %2438
    %v2441 = vmul.f32 %v2113, %v2439
    %v2442 = vmul.f32 %v2125, %v2223
    %2444 = vrot.lane.b32.xlu0 %v2442, 112
    %v2445 = vpop.permute.xlu0 %2444
    %v2447 = vadd.f32 %v2441, %v2445
    %v2448 = vmul.f32 %v2131, %v2433
    %v2451 = vunpack.c.l.s4 1966171168
    %v2452 = vunpack.c.0.s8 %v2451
    %v2453 = vlaneseq
    %v2454 = vshrl.u32 %v2453, 7
    %v2455 = vsub.s32 %v2452, %v2454
    %v2456 = vrot.slane %v2448, %v2455
    %v2457 = vcombine.high %v2456, %v2456
    %v2459 = vunpack.c.l.s4 1966171168
    %v2460 = vunpack.c.0.s8 %v2459
    %v2461 = vlaneseq
    %v2462 = vshrl.u32 %v2461, 7
    %v2463 = vsub.s32 %v2460, %v2462
    %v2464 = vrot.slane %v2456, %v2463
    %v2466 = vunpack.c.l.s4 1966171168
    %v2467 = vunpack.c.0.s8 %v2466
    %v2468 = vlaneseq
    %v2469 = vshrl.u32 %v2468, 7
    %v2470 = vsub.s32 %v2467, %v2469
    %v2471 = vrot.slane %v2457, %v2470
    %2474 = vst.msk [vmem:[#allocation3 + $0x4] sm:$0x1] %vm1235, %v2464
    %2475 = vst.msk [vmem:[#allocation3 + $0xc] sm:$0x1] %vm1235, %v2471
    %v2476 = vmul.f32 %v2113, %v2447
    %v2479 = vunpack.c.l.s4 1966171168
    %v2480 = vunpack.c.0.s8 %v2479
    %v2481 = vlaneseq
    %v2482 = vshrl.u32 %v2481, 7
    %v2483 = vsub.s32 %v2480, %v2482
    %v2484 = vrot.slane %v2476, %v2483
    %v2485 = vcombine.high %v2484, %v2484
    %v2487 = vunpack.c.l.s4 1966171168
    %v2488 = vunpack.c.0.s8 %v2487
    %v2489 = vlaneseq
    %v2490 = vshrl.u32 %v2489, 7
    %v2491 = vsub.s32 %v2488, %v2490
    %v2492 = vrot.slane %v2484, %v2491
    %v2494 = vunpack.c.l.s4 1966171168
    %v2495 = vunpack.c.0.s8 %v2494
    %v2496 = vlaneseq
    %v2497 = vshrl.u32 %v2496, 7
    %v2498 = vsub.s32 %v2495, %v2497
    %v2499 = vrot.slane %v2485, %v2498
    %v2500 = vlaneseq
    %v2501 = vshrl.u32 %v2500, 7
    %v2502 = vsub.s32 0, %v2501
    %v2503 = vrot.slane %v2492, %v2502
    %v2504 = vlaneseq
    %v2505 = vshrl.u32 %v2504, 7
    %v2506 = vsub.s32 0, %v2505
    %v2507 = vrot.slane %v2499, %v2506
    %2508 = vrot.lane.b32.xlu0 %v2503, 16
    %v2509 = vpop.permute.xlu0 %2508
    %2510 = vrot.lane.b32.xlu0 %v2507, 16
    %v2511 = vpop.permute.xlu0 %2510
    %2514 = vst.msk [vmem:[#allocation3 + $0x3] sm:$0x1] %vm1276, %v2509
    %2515 = vst.msk [vmem:[#allocation3 + $0xb] sm:$0x1] %vm1276, %v2511
    %2517 = vrot.lane.b32.xlu0 %v2447, 16
    %v2518 = vpop.permute.xlu0 %2517
    %v2520 = vsel %vm1283, %v2433, %v2518
    %v2521 = vld [vmem:[#allocation2 + $0x5] sm:$0x1]
    %v2522 = vld [vmem:[#allocation2 + $0xd] sm:$0x1]
    %v2523 = vld [vmem:[#allocation2 + $0x2] sm:$0x1]
    %v2524 = vld [vmem:[#allocation2 + $0xa] sm:$0x1]
    %v2526 = vsel %vm131, %v2520, 0
    %2528 = vmatprep.subr.mxu0 0.0
    %2529 = vmatpush1.msra.mxu0 %v967
    %2530 = vmatprep.subr.mxu0 0.0
    %2531 = vmatpush1.msra.mxu0 %v968
    %2532 = vmatprep.subr.mxu0 0.0
    %2533 = vmatpush1.msra.mxu0 %v969
    %2534 = vmatprep.subr.mxu0 0.0
    %2535 = vmatpush1.msra.mxu0 %v970
    %2536 = vmatprep.subr.mxu0 0.0
    %2537 = vmatpush1.msra.mxu0 0.0
    %2538 = vmatprep.subr.mxu0 0.0
    %2539 = vmatpush1.msra.mxu0 0.0
    %2540 = vmatprep.subr.mxu0 0.0
    %2541 = vmatpush1.msra.mxu0 0.0
    %2542 = vmatprep.subr.mxu0 0.0
    %2543 = vmatpush1.msra.mxu0 0.0
    %2544 = vmatprep.subr.mxu0 0.0
    %2545 = vmatpush1.msra.mxu0 0.0
    %2546 = vmatprep.subr.mxu0 0.0
    %2547 = vmatpush1.msra.mxu0 0.0
    %2548 = vmatprep.subr.mxu0 0.0
    %2549 = vmatpush1.msra.mxu0 0.0
    %2550 = vmatprep.subr.mxu0 0.0
    %2551 = vmatpush1.msra.mxu0 0.0
    %2552 = vmatprep.subr.mxu0 0.0
    %2553 = vmatpush1.msra.mxu0 0.0
    %2554 = vmatprep.subr.mxu0 0.0
    %2555 = vmatpush1.msra.mxu0 0.0
    %2556 = vmatprep.subr.mxu0 0.0
    %2557 = vmatpush1.msra.mxu0 0.0
    %2558 = vmatprep.subr.mxu0 0.0
    %2559 = vmatpush1.msra.mxu0 0.0
    %2560 = vmatprep.subr.mxu0 0.0
    %2561 = vmatpush1.msra.mxu0 0.0
    %2562 = vmatprep.subr.mxu0 0.0
    %2563 = vmatpush1.msra.mxu0 0.0
    %2564 = vmatprep.subr.mxu0 0.0
    %2565 = vmatpush1.msra.mxu0 0.0
    %2566 = vmatprep.subr.mxu0 0.0
    %2567 = vmatpush1.msra.mxu0 0.0
    %2568 = vmatprep.subr.mxu0 0.0
    %2569 = vmatpush1.msra.mxu0 0.0
    %2570 = vmatprep.subr.mxu0 0.0
    %2571 = vmatpush1.msra.mxu0 0.0
    %2572 = vmatprep.subr.mxu0 0.0
    %2573 = vmatpush1.msra.mxu0 0.0
    %2574 = vmatprep.subr.mxu0 0.0
    %2575 = vmatpush1.msra.mxu0 0.0
    %2576 = vmatprep.subr.mxu0 0.0
    %2577 = vmatpush1.msra.mxu0 0.0
    %2578 = vmatprep.subr.mxu0 0.0
    %2579 = vmatpush1.msra.mxu0 0.0
    %2580 = vmatprep.subr.mxu0 0.0
    %2581 = vmatpush1.msra.mxu0 0.0
    %2582 = vmatprep.subr.mxu0 0.0
    %2583 = vmatpush1.msra.mxu0 0.0
    %2584 = vmatprep.subr.mxu0 0.0
    %2585 = vmatpush1.msra.mxu0 0.0
    %2586 = vmatprep.subr.mxu0 0.0
    %2587 = vmatpush1.msra.mxu0 0.0
    %2588 = vmatprep.subr.mxu0 0.0
    %2589 = vmatpush1.msra.mxu0 0.0
    %2590 = vmatprep.subr.mxu0 0.0
    %2591 = vmatpush1.msra.mxu0 0.0
    %2592 = vmatprep.mubr.f32.mxu0 0.0
    %2593 = vmatmul.mubr.f32.gmra.mrb[0].mxu0 %v2526
    %v2594 = vpop.f32.mrb[0].mxu0
    %v2595 = vadd.f32 0.0, %v2594
    %v2596 = vpop.f32.mrb[0].mxu0
    %2597 = vdwg.mxu0
    %v2599 = vrot.slane %v2595, 1
    %v2602 = vadd.f32 %v2521, %v2595
    %v2603 = vadd.f32 %v2522, %v2599
    %v2604 = vxor.u32 %v2602, 2147483648
    %v2605 = vxor.u32 %v2603, 2147483648
    %v2606 = vmul.f32 %v2604, 1.442695
    %v2607 = vpow.pop %v2606
    %v2608 = vmul.f32 %v2605, 1.442695
    %v2609 = vpow.pop %v2608
    %v2610 = vadd.f32 %v2607, 1.0
    %v2611 = vadd.f32 %v2609, 1.0
    %v2612 = vrcp.pop %v2610
    %v2613 = vmul.f32 1.0, %v2612
    %v2614 = vrcp.pop %v2611
    %v2615 = vmul.f32 1.0, %v2614
    %v2616 = vadd.f32 %v2595, %v1073
    %v2618 = vrot.slane %v2616, 1
    %2619 = vrot.lane.b32.xlu0 %v2616, 96
    %v2620 = vpop.permute.xlu0 %2619
    %2621 = vrot.lane.b32.xlu0 %v2618, 96
    %v2622 = vpop.permute.xlu0 %2621
    %v2625 = vmul.f32 %v2613, %v2620
    %v2626 = vmul.f32 %v2615, %v2622
    %2629 = vrot.lane.b32.xlu0 %v2625, 32
    %v2630 = vpop.permute.xlu0 %2629
    %2631 = vrot.lane.b32.xlu0 %v2626, 32
    %v2632 = vpop.permute.xlu0 %2631
    %v2635 = vadd.f32 %v2521, %v2630
    %v2636 = vadd.f32 %v2522, %v2632
    %v2637 = vtanh.pop %v2635
    %v2638 = vtanh.pop %v2636
    %v2639 = vsub.f32 1.0, %v2613
    %v2640 = vsub.f32 1.0, %v2615
    %2643 = vrot.lane.b32.xlu0 %v2637, 112
    %v2644 = vpop.permute.xlu0 %2643
    %2645 = vrot.lane.b32.xlu0 %v2638, 112
    %v2646 = vpop.permute.xlu0 %2645
    %v2649 = vmul.f32 %v2639, %v2644
    %v2650 = vmul.f32 %v2640, %v2646
    %v2651 = vrot.slane %v2520, 1
    %2652 = vrot.lane.b32.xlu0 %v2520, 16
    %v2653 = vpop.permute.xlu0 %2652
    %2654 = vrot.lane.b32.xlu0 %v2651, 16
    %v2655 = vpop.permute.xlu0 %2654
    %v2658 = vmul.f32 %v2613, %v2653
    %v2659 = vmul.f32 %v2615, %v2655
    %v2660 = vadd.f32 %v2649, %v2658
    %v2661 = vadd.f32 %v2650, %v2659
    %v2662 = vadd.f32 %v2523, %v2595
    %v2663 = vadd.f32 %v2524, %v2599
    %v2664 = vxor.u32 %v2662, 2147483648
    %v2665 = vxor.u32 %v2663, 2147483648
    %v2666 = vmul.f32 %v2664, 1.442695
    %v2667 = vpow.pop %v2666
    %v2668 = vmul.f32 %v2665, 1.442695
    %v2669 = vpow.pop %v2668
    %v2670 = vadd.f32 %v2667, 1.0
    %v2671 = vadd.f32 %v2669, 1.0
    %v2672 = vrcp.pop %v2670
    %v2673 = vmul.f32 1.0, %v2672
    %v2674 = vrcp.pop %v2671
    %v2675 = vmul.f32 1.0, %v2674
    %v2676 = vadd.f32 %v2595, %v1129
    %v2678 = vrot.slane %v2676, 1
    %2679 = vrot.lane.b32.xlu0 %v2676, 96
    %v2680 = vpop.permute.xlu0 %2679
    %2681 = vrot.lane.b32.xlu0 %v2678, 96
    %v2682 = vpop.permute.xlu0 %2681
    %v2685 = vmul.f32 %v2673, %v2680
    %v2686 = vmul.f32 %v2675, %v2682
    %2689 = vrot.lane.b32.xlu0 %v2685, 32
    %v2690 = vpop.permute.xlu0 %2689
    %2691 = vrot.lane.b32.xlu0 %v2686, 32
    %v2692 = vpop.permute.xlu0 %2691
    %v2695 = vadd.f32 %v2523, %v2690
    %v2696 = vadd.f32 %v2524, %v2692
    %v2697 = vtanh.pop %v2695
    %v2698 = vtanh.pop %v2696
    %v2699 = vsub.f32 1.0, %v2673
    %v2700 = vsub.f32 1.0, %v2675
    %2703 = vrot.lane.b32.xlu0 %v2697, 112
    %v2704 = vpop.permute.xlu0 %2703
    %2705 = vrot.lane.b32.xlu0 %v2698, 112
    %v2706 = vpop.permute.xlu0 %2705
    %v2709 = vmul.f32 %v2699, %v2704
    %v2710 = vmul.f32 %v2700, %v2706
    %2711 = vrot.lane.b32.xlu0 %v2520, 48
    %v2712 = vpop.permute.xlu0 %2711
    %2713 = vrot.lane.b32.xlu0 %v2651, 48
    %v2714 = vpop.permute.xlu0 %2713
    %v2717 = vmul.f32 %v2673, %v2712
    %v2718 = vmul.f32 %v2675, %v2714
    %v2719 = vadd.f32 %v2709, %v2717
    %v2720 = vadd.f32 %v2710, %v2718
    %v2723 = vrot.slane %v2661, 7
    %v2724 = vsel %vm129, %v2723, %v2660
    %2725 = vrot.lane.b32.xlu0 %v2724, 112
    %v2726 = vpop.permute.xlu0 %2725
    %v2728 = vmul.f32 %v1818, %v2726
    %v2729 = vmul.f32 %v1830, %v2520
    %v2730 = vadd.f32 %v2728, %v2729
    %v2733 = vrot.slane %v2720, 7
    %v2734 = vsel %vm129, %v2733, %v2719
    %2735 = vrot.lane.b32.xlu0 %v2734, 64
    %v2736 = vpop.permute.xlu0 %2735
    %v2738 = vmul.f32 %v1800, %v2736
    %v2739 = vmul.f32 %v1812, %v2520
    %2741 = vrot.lane.b32.xlu0 %v2739, 112
    %v2742 = vpop.permute.xlu0 %2741
    %v2744 = vadd.f32 %v2738, %v2742
    %v2745 = vmul.f32 %v1818, %v2730
    %v2748 = vunpack.c.l.s4 1966171168
    %v2749 = vunpack.c.0.s8 %v2748
    %v2750 = vlaneseq
    %v2751 = vshrl.u32 %v2750, 7
    %v2752 = vsub.s32 %v2749, %v2751
    %v2753 = vrot.slane %v2745, %v2752
    %v2754 = vcombine.high %v2753, %v2753
    %v2756 = vunpack.c.l.s4 1966171168
    %v2757 = vunpack.c.0.s8 %v2756
    %v2758 = vlaneseq
    %v2759 = vshrl.u32 %v2758, 7
    %v2760 = vsub.s32 %v2757, %v2759
    %v2761 = vrot.slane %v2753, %v2760
    %v2763 = vunpack.c.l.s4 1966171168
    %v2764 = vunpack.c.0.s8 %v2763
    %v2765 = vlaneseq
    %v2766 = vshrl.u32 %v2765, 7
    %v2767 = vsub.s32 %v2764, %v2766
    %v2768 = vrot.slane %v2754, %v2767
    %2771 = vst.msk [vmem:[#allocation3 + $0x5] sm:$0x1] %vm1235, %v2761
    %2772 = vst.msk [vmem:[#allocation3 + $0xd] sm:$0x1] %vm1235, %v2768
    %v2773 = vmul.f32 %v1800, %v2744
    %v2776 = vunpack.c.l.s4 1966171168
    %v2777 = vunpack.c.0.s8 %v2776
    %v2778 = vlaneseq
    %v2779 = vshrl.u32 %v2778, 7
    %v2780 = vsub.s32 %v2777, %v2779
    %v2781 = vrot.slane %v2773, %v2780
    %v2782 = vcombine.high %v2781, %v2781
    %v2784 = vunpack.c.l.s4 1966171168
    %v2785 = vunpack.c.0.s8 %v2784
    %v2786 = vlaneseq
    %v2787 = vshrl.u32 %v2786, 7
    %v2788 = vsub.s32 %v2785, %v2787
    %v2789 = vrot.slane %v2781, %v2788
    %v2791 = vunpack.c.l.s4 1966171168
    %v2792 = vunpack.c.0.s8 %v2791
    %v2793 = vlaneseq
    %v2794 = vshrl.u32 %v2793, 7
    %v2795 = vsub.s32 %v2792, %v2794
    %v2796 = vrot.slane %v2782, %v2795
    %v2797 = vlaneseq
    %v2798 = vshrl.u32 %v2797, 7
    %v2799 = vsub.s32 0, %v2798
    %v2800 = vrot.slane %v2789, %v2799
    %v2801 = vlaneseq
    %v2802 = vshrl.u32 %v2801, 7
    %v2803 = vsub.s32 0, %v2802
    %v2804 = vrot.slane %v2796, %v2803
    %2805 = vrot.lane.b32.xlu0 %v2800, 16
    %v2806 = vpop.permute.xlu0 %2805
    %2807 = vrot.lane.b32.xlu0 %v2804, 16
    %v2808 = vpop.permute.xlu0 %2807
    %2811 = vst.msk [vmem:[#allocation3 + $0x2] sm:$0x1] %vm1276, %v2806
    %2812 = vst.msk [vmem:[#allocation3 + $0xa] sm:$0x1] %vm1276, %v2808
    %2814 = vrot.lane.b32.xlu0 %v2744, 16
    %v2815 = vpop.permute.xlu0 %2814
    %v2817 = vsel %vm1283, %v2730, %v2815
    %v2818 = vld [vmem:[#allocation2 + $0x6] sm:$0x1]
    %v2819 = vld [vmem:[#allocation2 + $0xe] sm:$0x1]
    %v2820 = vld [vmem:[#allocation2 + $0x1] sm:$0x1]
    %v2821 = vld [vmem:[#allocation2 + $0x9] sm:$0x1]
    %v2823 = vsel %vm131, %v2817, 0
    %2825 = vmatprep.subr.mxu0 0.0
    %2826 = vmatpush1.msra.mxu0 %v967
    %2827 = vmatprep.subr.mxu0 0.0
    %2828 = vmatpush1.msra.mxu0 %v968
    %2829 = vmatprep.subr.mxu0 0.0
    %2830 = vmatpush1.msra.mxu0 %v969
    %2831 = vmatprep.subr.mxu0 0.0
    %2832 = vmatpush1.msra.mxu0 %v970
    %2833 = vmatprep.subr.mxu0 0.0
    %2834 = vmatpush1.msra.mxu0 0.0
    %2835 = vmatprep.subr.mxu0 0.0
    %2836 = vmatpush1.msra.mxu0 0.0
    %2837 = vmatprep.subr.mxu0 0.0
    %2838 = vmatpush1.msra.mxu0 0.0
    %2839 = vmatprep.subr.mxu0 0.0
    %2840 = vmatpush1.msra.mxu0 0.0
    %2841 = vmatprep.subr.mxu0 0.0
    %2842 = vmatpush1.msra.mxu0 0.0
    %2843 = vmatprep.subr.mxu0 0.0
    %2844 = vmatpush1.msra.mxu0 0.0
    %2845 = vmatprep.subr.mxu0 0.0
    %2846 = vmatpush1.msra.mxu0 0.0
    %2847 = vmatprep.subr.mxu0 0.0
    %2848 = vmatpush1.msra.mxu0 0.0
    %2849 = vmatprep.subr.mxu0 0.0
    %2850 = vmatpush1.msra.mxu0 0.0
    %2851 = vmatprep.subr.mxu0 0.0
    %2852 = vmatpush1.msra.mxu0 0.0
    %2853 = vmatprep.subr.mxu0 0.0
    %2854 = vmatpush1.msra.mxu0 0.0
    %2855 = vmatprep.subr.mxu0 0.0
    %2856 = vmatpush1.msra.mxu0 0.0
    %2857 = vmatprep.subr.mxu0 0.0
    %2858 = vmatpush1.msra.mxu0 0.0
    %2859 = vmatprep.subr.mxu0 0.0
    %2860 = vmatpush1.msra.mxu0 0.0
    %2861 = vmatprep.subr.mxu0 0.0
    %2862 = vmatpush1.msra.mxu0 0.0
    %2863 = vmatprep.subr.mxu0 0.0
    %2864 = vmatpush1.msra.mxu0 0.0
    %2865 = vmatprep.subr.mxu0 0.0
    %2866 = vmatpush1.msra.mxu0 0.0
    %2867 = vmatprep.subr.mxu0 0.0
    %2868 = vmatpush1.msra.mxu0 0.0
    %2869 = vmatprep.subr.mxu0 0.0
    %2870 = vmatpush1.msra.mxu0 0.0
    %2871 = vmatprep.subr.mxu0 0.0
    %2872 = vmatpush1.msra.mxu0 0.0
    %2873 = vmatprep.subr.mxu0 0.0
    %2874 = vmatpush1.msra.mxu0 0.0
    %2875 = vmatprep.subr.mxu0 0.0
    %2876 = vmatpush1.msra.mxu0 0.0
    %2877 = vmatprep.subr.mxu0 0.0
    %2878 = vmatpush1.msra.mxu0 0.0
    %2879 = vmatprep.subr.mxu0 0.0
    %2880 = vmatpush1.msra.mxu0 0.0
    %2881 = vmatprep.subr.mxu0 0.0
    %2882 = vmatpush1.msra.mxu0 0.0
    %2883 = vmatprep.subr.mxu0 0.0
    %2884 = vmatpush1.msra.mxu0 0.0
    %2885 = vmatprep.subr.mxu0 0.0
    %2886 = vmatpush1.msra.mxu0 0.0
    %2887 = vmatprep.subr.mxu0 0.0
    %2888 = vmatpush1.msra.mxu0 0.0
    %2889 = vmatprep.mubr.f32.mxu0 0.0
    %2890 = vmatmul.mubr.f32.gmra.mrb[0].mxu0 %v2823
    %v2891 = vpop.f32.mrb[0].mxu0
    %v2892 = vadd.f32 0.0, %v2891
    %v2893 = vpop.f32.mrb[0].mxu0
    %2894 = vdwg.mxu0
    %v2896 = vrot.slane %v2892, 1
    %v2899 = vadd.f32 %v2818, %v2892
    %v2900 = vadd.f32 %v2819, %v2896
    %v2901 = vxor.u32 %v2899, 2147483648
    %v2902 = vxor.u32 %v2900, 2147483648
    %v2903 = vmul.f32 %v2901, 1.442695
    %v2904 = vpow.pop %v2903
    %v2905 = vmul.f32 %v2902, 1.442695
    %v2906 = vpow.pop %v2905
    %v2907 = vadd.f32 %v2904, 1.0
    %v2908 = vadd.f32 %v2906, 1.0
    %v2909 = vrcp.pop %v2907
    %v2910 = vmul.f32 1.0, %v2909
    %v2911 = vrcp.pop %v2908
    %v2912 = vmul.f32 1.0, %v2911
    %v2913 = vadd.f32 %v2892, %v1073
    %v2915 = vrot.slane %v2913, 1
    %2916 = vrot.lane.b32.xlu0 %v2913, 96
    %v2917 = vpop.permute.xlu0 %2916
    %2918 = vrot.lane.b32.xlu0 %v2915, 96
    %v2919 = vpop.permute.xlu0 %2918
    %v2922 = vmul.f32 %v2910, %v2917
    %v2923 = vmul.f32 %v2912, %v2919
    %2926 = vrot.lane.b32.xlu0 %v2922, 32
    %v2927 = vpop.permute.xlu0 %2926
    %2928 = vrot.lane.b32.xlu0 %v2923, 32
    %v2929 = vpop.permute.xlu0 %2928
    %v2932 = vadd.f32 %v2818, %v2927
    %v2933 = vadd.f32 %v2819, %v2929
    %v2934 = vtanh.pop %v2932
    %v2935 = vtanh.pop %v2933
    %v2936 = vsub.f32 1.0, %v2910
    %v2937 = vsub.f32 1.0, %v2912
    %2940 = vrot.lane.b32.xlu0 %v2934, 112
    %v2941 = vpop.permute.xlu0 %2940
    %2942 = vrot.lane.b32.xlu0 %v2935, 112
    %v2943 = vpop.permute.xlu0 %2942
    %v2946 = vmul.f32 %v2936, %v2941
    %v2947 = vmul.f32 %v2937, %v2943
    %v2948 = vrot.slane %v2817, 1
    %2949 = vrot.lane.b32.xlu0 %v2817, 16
    %v2950 = vpop.permute.xlu0 %2949
    %2951 = vrot.lane.b32.xlu0 %v2948, 16
    %v2952 = vpop.permute.xlu0 %2951
    %v2955 = vmul.f32 %v2910, %v2950
    %v2956 = vmul.f32 %v2912, %v2952
    %v2957 = vadd.f32 %v2946, %v2955
    %v2958 = vadd.f32 %v2947, %v2956
    %v2959 = vadd.f32 %v2820, %v2892
    %v2960 = vadd.f32 %v2821, %v2896
    %v2961 = vxor.u32 %v2959, 2147483648
    %v2962 = vxor.u32 %v2960, 2147483648
    %v2963 = vmul.f32 %v2961, 1.442695
    %v2964 = vpow.pop %v2963
    %v2965 = vmul.f32 %v2962, 1.442695
    %v2966 = vpow.pop %v2965
    %v2967 = vadd.f32 %v2964, 1.0
    %v2968 = vadd.f32 %v2966, 1.0
    %v2969 = vrcp.pop %v2967
    %v2970 = vmul.f32 1.0, %v2969
    %v2971 = vrcp.pop %v2968
    %v2972 = vmul.f32 1.0, %v2971
    %v2973 = vadd.f32 %v2892, %v1129
    %v2975 = vrot.slane %v2973, 1
    %2976 = vrot.lane.b32.xlu0 %v2973, 96
    %v2977 = vpop.permute.xlu0 %2976
    %2978 = vrot.lane.b32.xlu0 %v2975, 96
    %v2979 = vpop.permute.xlu0 %2978
    %v2982 = vmul.f32 %v2970, %v2977
    %v2983 = vmul.f32 %v2972, %v2979
    %2986 = vrot.lane.b32.xlu0 %v2982, 32
    %v2987 = vpop.permute.xlu0 %2986
    %2988 = vrot.lane.b32.xlu0 %v2983, 32
    %v2989 = vpop.permute.xlu0 %2988
    %v2992 = vadd.f32 %v2820, %v2987
    %v2993 = vadd.f32 %v2821, %v2989
    %v2994 = vtanh.pop %v2992
    %v2995 = vtanh.pop %v2993
    %v2996 = vsub.f32 1.0, %v2970
    %v2997 = vsub.f32 1.0, %v2972
    %3000 = vrot.lane.b32.xlu0 %v2994, 112
    %v3001 = vpop.permute.xlu0 %3000
    %3002 = vrot.lane.b32.xlu0 %v2995, 112
    %v3003 = vpop.permute.xlu0 %3002
    %v3006 = vmul.f32 %v2996, %v3001
    %v3007 = vmul.f32 %v2997, %v3003
    %3008 = vrot.lane.b32.xlu0 %v2817, 48
    %v3009 = vpop.permute.xlu0 %3008
    %3010 = vrot.lane.b32.xlu0 %v2948, 48
    %v3011 = vpop.permute.xlu0 %3010
    %v3014 = vmul.f32 %v2970, %v3009
    %v3015 = vmul.f32 %v2972, %v3011
    %v3016 = vadd.f32 %v3006, %v3014
    %v3017 = vadd.f32 %v3007, %v3015
    %v3020 = vrot.slane %v2958, 7
    %v3021 = vsel %vm129, %v3020, %v2957
    %3022 = vrot.lane.b32.xlu0 %v3021, 112
    %v3023 = vpop.permute.xlu0 %3022
    %v3025 = vmul.f32 %v1505, %v3023
    %v3026 = vmul.f32 %v1517, %v2817
    %v3027 = vadd.f32 %v3025, %v3026
    %v3030 = vrot.slane %v3017, 7
    %v3031 = vsel %vm129, %v3030, %v3016
    %3032 = vrot.lane.b32.xlu0 %v3031, 64
    %v3033 = vpop.permute.xlu0 %3032
    %v3035 = vmul.f32 %v1487, %v3033
    %v3036 = vmul.f32 %v1499, %v2817
    %3038 = vrot.lane.b32.xlu0 %v3036, 112
    %v3039 = vpop.permute.xlu0 %3038
    %v3041 = vadd.f32 %v3035, %v3039
    %v3042 = vmul.f32 %v1505, %v3027
    %v3045 = vunpack.c.l.s4 1966171168
    %v3046 = vunpack.c.0.s8 %v3045
    %v3047 = vlaneseq
    %v3048 = vshrl.u32 %v3047, 7
    %v3049 = vsub.s32 %v3046, %v3048
    %v3050 = vrot.slane %v3042, %v3049
    %v3051 = vcombine.high %v3050, %v3050
    %v3053 = vunpack.c.l.s4 1966171168
    %v3054 = vunpack.c.0.s8 %v3053
    %v3055 = vlaneseq
    %v3056 = vshrl.u32 %v3055, 7
    %v3057 = vsub.s32 %v3054, %v3056
    %v3058 = vrot.slane %v3050, %v3057
    %v3060 = vunpack.c.l.s4 1966171168
    %v3061 = vunpack.c.0.s8 %v3060
    %v3062 = vlaneseq
    %v3063 = vshrl.u32 %v3062, 7
    %v3064 = vsub.s32 %v3061, %v3063
    %v3065 = vrot.slane %v3051, %v3064
    %3068 = vst.msk [vmem:[#allocation3 + $0x6] sm:$0x1] %vm1235, %v3058
    %3069 = vst.msk [vmem:[#allocation3 + $0xe] sm:$0x1] %vm1235, %v3065
    %v3070 = vmul.f32 %v1487, %v3041
    %v3073 = vunpack.c.l.s4 1966171168
    %v3074 = vunpack.c.0.s8 %v3073
    %v3075 = vlaneseq
    %v3076 = vshrl.u32 %v3075, 7
    %v3077 = vsub.s32 %v3074, %v3076
    %v3078 = vrot.slane %v3070, %v3077
    %v3079 = vcombine.high %v3078, %v3078
    %v3081 = vunpack.c.l.s4 1966171168
    %v3082 = vunpack.c.0.s8 %v3081
    %v3083 = vlaneseq
    %v3084 = vshrl.u32 %v3083, 7
    %v3085 = vsub.s32 %v3082, %v3084
    %v3086 = vrot.slane %v3078, %v3085
    %v3088 = vunpack.c.l.s4 1966171168
    %v3089 = vunpack.c.0.s8 %v3088
    %v3090 = vlaneseq
    %v3091 = vshrl.u32 %v3090, 7
    %v3092 = vsub.s32 %v3089, %v3091
    %v3093 = vrot.slane %v3079, %v3092
    %v3094 = vlaneseq
    %v3095 = vshrl.u32 %v3094, 7
    %v3096 = vsub.s32 0, %v3095
    %v3097 = vrot.slane %v3086, %v3096
    %v3098 = vlaneseq
    %v3099 = vshrl.u32 %v3098, 7
    %v3100 = vsub.s32 0, %v3099
    %v3101 = vrot.slane %v3093, %v3100
    %3102 = vrot.lane.b32.xlu0 %v3097, 16
    %v3103 = vpop.permute.xlu0 %3102
    %3104 = vrot.lane.b32.xlu0 %v3101, 16
    %v3105 = vpop.permute.xlu0 %3104
    %3108 = vst.msk [vmem:[#allocation3 + $0x1] sm:$0x1] %vm1276, %v3103
    %3109 = vst.msk [vmem:[#allocation3 + $0x9] sm:$0x1] %vm1276, %v3105
    %3111 = vrot.lane.b32.xlu0 %v3041, 16
    %v3112 = vpop.permute.xlu0 %3111
    %v3114 = vsel %vm1283, %v3027, %v3112
    %v3115 = vld [vmem:[#allocation2 + $0x7] sm:$0x1]
    %v3116 = vld [vmem:[#allocation2 + $0xf] sm:$0x1]
    %v3117 = vld [vmem:[#allocation2] sm:$0x1]
    %v3118 = vld [vmem:[#allocation2 + $0x8] sm:$0x1]
    %v3120 = vsel %vm131, %v3114, 0
    %3122 = vmatprep.subr.mxu0 0.0
    %3123 = vmatpush1.msra.mxu0 %v967
    %3124 = vmatprep.subr.mxu0 0.0
    %3125 = vmatpush1.msra.mxu0 %v968
    %3126 = vmatprep.subr.mxu0 0.0
    %3127 = vmatpush1.msra.mxu0 %v969
    %3128 = vmatprep.subr.mxu0 0.0
    %3129 = vmatpush1.msra.mxu0 %v970
    %3130 = vmatprep.subr.mxu0 0.0
    %3131 = vmatpush1.msra.mxu0 0.0
    %3132 = vmatprep.subr.mxu0 0.0
    %3133 = vmatpush1.msra.mxu0 0.0
    %3134 = vmatprep.subr.mxu0 0.0
    %3135 = vmatpush1.msra.mxu0 0.0
    %3136 = vmatprep.subr.mxu0 0.0
    %3137 = vmatpush1.msra.mxu0 0.0
    %3138 = vmatprep.subr.mxu0 0.0
    %3139 = vmatpush1.msra.mxu0 0.0
    %3140 = vmatprep.subr.mxu0 0.0
    %3141 = vmatpush1.msra.mxu0 0.0
    %3142 = vmatprep.subr.mxu0 0.0
    %3143 = vmatpush1.msra.mxu0 0.0
    %3144 = vmatprep.subr.mxu0 0.0
    %3145 = vmatpush1.msra.mxu0 0.0
    %3146 = vmatprep.subr.mxu0 0.0
    %3147 = vmatpush1.msra.mxu0 0.0
    %3148 = vmatprep.subr.mxu0 0.0
    %3149 = vmatpush1.msra.mxu0 0.0
    %3150 = vmatprep.subr.mxu0 0.0
    %3151 = vmatpush1.msra.mxu0 0.0
    %3152 = vmatprep.subr.mxu0 0.0
    %3153 = vmatpush1.msra.mxu0 0.0
    %3154 = vmatprep.subr.mxu0 0.0
    %3155 = vmatpush1.msra.mxu0 0.0
    %3156 = vmatprep.subr.mxu0 0.0
    %3157 = vmatpush1.msra.mxu0 0.0
    %3158 = vmatprep.subr.mxu0 0.0
    %3159 = vmatpush1.msra.mxu0 0.0
    %3160 = vmatprep.subr.mxu0 0.0
    %3161 = vmatpush1.msra.mxu0 0.0
    %3162 = vmatprep.subr.mxu0 0.0
    %3163 = vmatpush1.msra.mxu0 0.0
    %3164 = vmatprep.subr.mxu0 0.0
    %3165 = vmatpush1.msra.mxu0 0.0
    %3166 = vmatprep.subr.mxu0 0.0
    %3167 = vmatpush1.msra.mxu0 0.0
    %3168 = vmatprep.subr.mxu0 0.0
    %3169 = vmatpush1.msra.mxu0 0.0
    %3170 = vmatprep.subr.mxu0 0.0
    %3171 = vmatpush1.msra.mxu0 0.0
    %3172 = vmatprep.subr.mxu0 0.0
    %3173 = vmatpush1.msra.mxu0 0.0
    %3174 = vmatprep.subr.mxu0 0.0
    %3175 = vmatpush1.msra.mxu0 0.0
    %3176 = vmatprep.subr.mxu0 0.0
    %3177 = vmatpush1.msra.mxu0 0.0
    %3178 = vmatprep.subr.mxu0 0.0
    %3179 = vmatpush1.msra.mxu0 0.0
    %3180 = vmatprep.subr.mxu0 0.0
    %3181 = vmatpush1.msra.mxu0 0.0
    %3182 = vmatprep.subr.mxu0 0.0
    %3183 = vmatpush1.msra.mxu0 0.0
    %3184 = vmatprep.subr.mxu0 0.0
    %3185 = vmatpush1.msra.mxu0 0.0
    %3186 = vmatprep.mubr.f32.mxu0 0.0
    %3187 = vmatmul.mubr.f32.gmra.mrb[0].mxu0 %v3120
    %v3188 = vpop.f32.mrb[0].mxu0
    %v3189 = vadd.f32 0.0, %v3188
    %v3190 = vpop.f32.mrb[0].mxu0
    %3191 = vdwg.mxu0
    %v3193 = vrot.slane %v3189, 1
    %v3196 = vadd.f32 %v3115, %v3189
    %v3197 = vadd.f32 %v3116, %v3193
    %v3198 = vxor.u32 %v3196, 2147483648
    %v3199 = vxor.u32 %v3197, 2147483648
    %v3200 = vmul.f32 %v3198, 1.442695
    %v3201 = vpow.pop %v3200
    %v3202 = vmul.f32 %v3199, 1.442695
    %v3203 = vpow.pop %v3202
    %v3204 = vadd.f32 %v3201, 1.0
    %v3205 = vadd.f32 %v3203, 1.0
    %v3206 = vrcp.pop %v3204
    %v3207 = vmul.f32 1.0, %v3206
    %v3208 = vrcp.pop %v3205
    %v3209 = vmul.f32 1.0, %v3208
    %v3210 = vadd.f32 %v3189, %v1073
    %v3212 = vrot.slane %v3210, 1
    %3213 = vrot.lane.b32.xlu0 %v3210, 96
    %v3214 = vpop.permute.xlu0 %3213
    %3215 = vrot.lane.b32.xlu0 %v3212, 96
    %v3216 = vpop.permute.xlu0 %3215
    %v3219 = vmul.f32 %v3207, %v3214
    %v3220 = vmul.f32 %v3209, %v3216
    %3223 = vrot.lane.b32.xlu0 %v3219, 32
    %v3224 = vpop.permute.xlu0 %3223
    %3225 = vrot.lane.b32.xlu0 %v3220, 32
    %v3226 = vpop.permute.xlu0 %3225
    %v3229 = vadd.f32 %v3115, %v3224
    %v3230 = vadd.f32 %v3116, %v3226
    %v3231 = vtanh.pop %v3229
    %v3232 = vtanh.pop %v3230
    %v3233 = vsub.f32 1.0, %v3207
    %v3234 = vsub.f32 1.0, %v3209
    %3237 = vrot.lane.b32.xlu0 %v3231, 112
    %v3238 = vpop.permute.xlu0 %3237
    %3239 = vrot.lane.b32.xlu0 %v3232, 112
    %v3240 = vpop.permute.xlu0 %3239
    %v3243 = vmul.f32 %v3233, %v3238
    %v3244 = vmul.f32 %v3234, %v3240
    %v3245 = vrot.slane %v3114, 1
    %3246 = vrot.lane.b32.xlu0 %v3114, 16
    %v3247 = vpop.permute.xlu0 %3246
    %3248 = vrot.lane.b32.xlu0 %v3245, 16
    %v3249 = vpop.permute.xlu0 %3248
    %v3252 = vmul.f32 %v3207, %v3247
    %v3253 = vmul.f32 %v3209, %v3249
    %v3254 = vadd.f32 %v3243, %v3252
    %v3255 = vadd.f32 %v3244, %v3253
    %v3256 = vadd.f32 %v3117, %v3189
    %v3257 = vadd.f32 %v3118, %v3193
    %v3258 = vxor.u32 %v3256, 2147483648
    %v3259 = vxor.u32 %v3257, 2147483648
    %v3260 = vmul.f32 %v3258, 1.442695
    %v3261 = vpow.pop %v3260
    %v3262 = vmul.f32 %v3259, 1.442695
    %v3263 = vpow.pop %v3262
    %v3264 = vadd.f32 %v3261, 1.0
    %v3265 = vadd.f32 %v3263, 1.0
    %v3266 = vrcp.pop %v3264
    %v3267 = vmul.f32 1.0, %v3266
    %v3268 = vrcp.pop %v3265
    %v3269 = vmul.f32 1.0, %v3268
    %v3270 = vadd.f32 %v3189, %v1129
    %v3272 = vrot.slane %v3270, 1
    %3273 = vrot.lane.b32.xlu0 %v3270, 96
    %v3274 = vpop.permute.xlu0 %3273
    %3275 = vrot.lane.b32.xlu0 %v3272, 96
    %v3276 = vpop.permute.xlu0 %3275
    %v3279 = vmul.f32 %v3267, %v3274
    %v3280 = vmul.f32 %v3269, %v3276
    %3283 = vrot.lane.b32.xlu0 %v3279, 32
    %v3284 = vpop.permute.xlu0 %3283
    %3285 = vrot.lane.b32.xlu0 %v3280, 32
    %v3286 = vpop.permute.xlu0 %3285
    %v3289 = vadd.f32 %v3117, %v3284
    %v3290 = vadd.f32 %v3118, %v3286
    %v3291 = vtanh.pop %v3289
    %v3292 = vtanh.pop %v3290
    %v3293 = vsub.f32 1.0, %v3267
    %v3294 = vsub.f32 1.0, %v3269
    %3297 = vrot.lane.b32.xlu0 %v3291, 112
    %v3298 = vpop.permute.xlu0 %3297
    %3299 = vrot.lane.b32.xlu0 %v3292, 112
    %v3300 = vpop.permute.xlu0 %3299
    %v3303 = vmul.f32 %v3293, %v3298
    %v3304 = vmul.f32 %v3294, %v3300
    %3305 = vrot.lane.b32.xlu0 %v3114, 48
    %v3306 = vpop.permute.xlu0 %3305
    %3307 = vrot.lane.b32.xlu0 %v3245, 48
    %v3308 = vpop.permute.xlu0 %3307
    %v3311 = vmul.f32 %v3267, %v3306
    %v3312 = vmul.f32 %v3269, %v3308
    %v3313 = vadd.f32 %v3303, %v3311
    %v3314 = vadd.f32 %v3304, %v3312
    %v3317 = vrot.slane %v3255, 7
    %v3318 = vsel %vm129, %v3317, %v3254
    %3319 = vrot.lane.b32.xlu0 %v3318, 112
    %v3320 = vpop.permute.xlu0 %3319
    %v3322 = vmul.f32 %v1193, %v3320
    %v3323 = vmul.f32 %v1205, %v3114
    %v3324 = vadd.f32 %v3322, %v3323
    %v3327 = vrot.slane %v3314, 7
    %v3328 = vsel %vm129, %v3327, %v3313
    %3329 = vrot.lane.b32.xlu0 %v3328, 64
    %v3330 = vpop.permute.xlu0 %3329
    %v3332 = vmul.f32 %v1173, %v3330
    %v3333 = vmul.f32 %v1187, %v3114
    %3335 = vrot.lane.b32.xlu0 %v3333, 112
    %v3336 = vpop.permute.xlu0 %3335
    %v3338 = vadd.f32 %v3332, %v3336
    %v3339 = vmul.f32 %v1193, %v3324
    %v3342 = vunpack.c.l.s4 1966171168
    %v3343 = vunpack.c.0.s8 %v3342
    %v3344 = vlaneseq
    %v3345 = vshrl.u32 %v3344, 7
    %v3346 = vsub.s32 %v3343, %v3345
    %v3347 = vrot.slane %v3339, %v3346
    %v3348 = vcombine.high %v3347, %v3347
    %v3350 = vunpack.c.l.s4 1966171168
    %v3351 = vunpack.c.0.s8 %v3350
    %v3352 = vlaneseq
    %v3353 = vshrl.u32 %v3352, 7
    %v3354 = vsub.s32 %v3351, %v3353
    %v3355 = vrot.slane %v3347, %v3354
    %v3357 = vunpack.c.l.s4 1966171168
    %v3358 = vunpack.c.0.s8 %v3357
    %v3359 = vlaneseq
    %v3360 = vshrl.u32 %v3359, 7
    %v3361 = vsub.s32 %v3358, %v3360
    %v3362 = vrot.slane %v3348, %v3361
    %3365 = vst.msk [vmem:[#allocation3 + $0x7] sm:$0x1] %vm1235, %v3355
    %3366 = vst.msk [vmem:[#allocation3 + $0xf] sm:$0x1] %vm1235, %v3362
    %v3367 = vmul.f32 %v1173, %v3338
    %v3370 = vunpack.c.l.s4 1966171168
    %v3371 = vunpack.c.0.s8 %v3370
    %v3372 = vlaneseq
    %v3373 = vshrl.u32 %v3372, 7
    %v3374 = vsub.s32 %v3371, %v3373
    %v3375 = vrot.slane %v3367, %v3374
    %v3376 = vcombine.high %v3375, %v3375
    %v3378 = vunpack.c.l.s4 1966171168
    %v3379 = vunpack.c.0.s8 %v3378
    %v3380 = vlaneseq
    %v3381 = vshrl.u32 %v3380, 7
    %v3382 = vsub.s32 %v3379, %v3381
    %v3383 = vrot.slane %v3375, %v3382
    %v3385 = vunpack.c.l.s4 1966171168
    %v3386 = vunpack.c.0.s8 %v3385
    %v3387 = vlaneseq
    %v3388 = vshrl.u32 %v3387, 7
    %v3389 = vsub.s32 %v3386, %v3388
    %v3390 = vrot.slane %v3376, %v3389
    %v3391 = vlaneseq
    %v3392 = vshrl.u32 %v3391, 7
    %v3393 = vsub.s32 0, %v3392
    %v3394 = vrot.slane %v3383, %v3393
    %v3395 = vlaneseq
    %v3396 = vshrl.u32 %v3395, 7
    %v3397 = vsub.s32 0, %v3396
    %v3398 = vrot.slane %v3390, %v3397
    %3399 = vrot.lane.b32.xlu0 %v3394, 16
    %v3400 = vpop.permute.xlu0 %3399
    %3401 = vrot.lane.b32.xlu0 %v3398, 16
    %v3402 = vpop.permute.xlu0 %3401
    %3405 = vst.msk [vmem:[#allocation3] sm:$0x1] %vm1276, %v3400
    %3406 = vst.msk [vmem:[#allocation3 + $0x8] sm:$0x1] %vm1276, %v3402
    %v3407 = vld [vmem:[#allocation10] sm:$0xff]
    %v3408 = vld [vmem:[#allocation10 + $0x8] sm:$0xff]
    %v3409 = vld [vmem:[#allocation10 + $0x10] sm:$0xff]
    %v3410 = vld [vmem:[#allocation10 + $0x18] sm:$0xff]
    %v3411 = vld [vmem:[%s8] sm:$0x1]
    %v3412 = vld [vmem:[#allocation3] sm:$0x1]
    %v3413 = vld [vmem:[#allocation3 + $0x8] sm:$0x1]
    %v3415 = vlaneseq
    %v3416 = vshrl.u32 %v3415, 7
    %v3417 = vsub.s32 0, %v3416
    %v3418 = vrot.slane %v3411, %v3417
    %v3422 = vrot.slane %v3413, 7
    %v3423 = vsel %vm129, %v3422, %v3412
    %v3424 = vsel %vm131, %v3423, 0
    %3426 = vmatprep.subr.mxu0 0.0
    %3427 = vmatpush1.msra.mxu0 %v3407
    %3428 = vmatprep.subr.mxu0 0.0
    %3429 = vmatpush1.msra.mxu0 %v3408
    %3430 = vmatprep.subr.mxu0 0.0
    %3431 = vmatpush1.msra.mxu0 %v3409
    %3432 = vmatprep.subr.mxu0 0.0
    %3433 = vmatpush1.msra.mxu0 %v3410
    %3434 = vmatprep.subr.mxu0 0.0
    %3435 = vmatpush1.msra.mxu0 0.0
    %3436 = vmatprep.subr.mxu0 0.0
    %3437 = vmatpush1.msra.mxu0 0.0
    %3438 = vmatprep.subr.mxu0 0.0
    %3439 = vmatpush1.msra.mxu0 0.0
    %3440 = vmatprep.subr.mxu0 0.0
    %3441 = vmatpush1.msra.mxu0 0.0
    %3442 = vmatprep.subr.mxu0 0.0
    %3443 = vmatpush1.msra.mxu0 0.0
    %3444 = vmatprep.subr.mxu0 0.0
    %3445 = vmatpush1.msra.mxu0 0.0
    %3446 = vmatprep.subr.mxu0 0.0
    %3447 = vmatpush1.msra.mxu0 0.0
    %3448 = vmatprep.subr.mxu0 0.0
    %3449 = vmatpush1.msra.mxu0 0.0
    %3450 = vmatprep.subr.mxu0 0.0
    %3451 = vmatpush1.msra.mxu0 0.0
    %3452 = vmatprep.subr.mxu0 0.0
    %3453 = vmatpush1.msra.mxu0 0.0
    %3454 = vmatprep.subr.mxu0 0.0
    %3455 = vmatpush1.msra.mxu0 0.0
    %3456 = vmatprep.subr.mxu0 0.0
    %3457 = vmatpush1.msra.mxu0 0.0
    %3458 = vmatprep.subr.mxu0 0.0
    %3459 = vmatpush1.msra.mxu0 0.0
    %3460 = vmatprep.subr.mxu0 0.0
    %3461 = vmatpush1.msra.mxu0 0.0
    %3462 = vmatprep.subr.mxu0 0.0
    %3463 = vmatpush1.msra.mxu0 0.0
    %3464 = vmatprep.subr.mxu0 0.0
    %3465 = vmatpush1.msra.mxu0 0.0
    %3466 = vmatprep.subr.mxu0 0.0
    %3467 = vmatpush1.msra.mxu0 0.0
    %3468 = vmatprep.subr.mxu0 0.0
    %3469 = vmatpush1.msra.mxu0 0.0
    %3470 = vmatprep.subr.mxu0 0.0
    %3471 = vmatpush1.msra.mxu0 0.0
    %3472 = vmatprep.subr.mxu0 0.0
    %3473 = vmatpush1.msra.mxu0 0.0
    %3474 = vmatprep.subr.mxu0 0.0
    %3475 = vmatpush1.msra.mxu0 0.0
    %3476 = vmatprep.subr.mxu0 0.0
    %3477 = vmatpush1.msra.mxu0 0.0
    %3478 = vmatprep.subr.mxu0 0.0
    %3479 = vmatpush1.msra.mxu0 0.0
    %3480 = vmatprep.subr.mxu0 0.0
    %3481 = vmatpush1.msra.mxu0 0.0
    %3482 = vmatprep.subr.mxu0 0.0
    %3483 = vmatpush1.msra.mxu0 0.0
    %3484 = vmatprep.subr.mxu0 0.0
    %3485 = vmatpush1.msra.mxu0 0.0
    %3486 = vmatprep.subr.mxu0 0.0
    %3487 = vmatpush1.msra.mxu0 0.0
    %3488 = vmatprep.subr.mxu0 0.0
    %3489 = vmatpush1.msra.mxu0 0.0
    %3490 = vmatprep.mubr.f32.mxu0 0.0
    %3491 = vmatmul.mubr.f32.gmra.mrb[0].mxu0 %v3424
    %v3492 = vpop.f32.mrb[0].mxu0
    %v3493 = vadd.f32 %v3418, %v3492
    %v3494 = vpop.f32.mrb[0].mxu0
    %3495 = vdwg.mxu0
    %v3498 = vunpack.c.l.s4 1966171168
    %v3499 = vunpack.c.0.s8 %v3498
    %v3500 = vlaneseq
    %v3501 = vshrl.u32 %v3500, 7
    %v3502 = vsub.s32 %v3499, %v3501
    %v3503 = vrot.slane %v3493, %v3502
    %v3504 = vcombine.high %v3503, %v3503
    %v3506 = vunpack.c.l.s4 1966171168
    %v3507 = vunpack.c.0.s8 %v3506
    %v3508 = vlaneseq
    %v3509 = vshrl.u32 %v3508, 7
    %v3510 = vsub.s32 %v3507, %v3509
    %v3511 = vrot.slane %v3503, %v3510
    %v3513 = vunpack.c.l.s4 1966171168
    %v3514 = vunpack.c.0.s8 %v3513
    %v3515 = vlaneseq
    %v3516 = vshrl.u32 %v3515, 7
    %v3517 = vsub.s32 %v3514, %v3516
    %v3518 = vrot.slane %v3504, %v3517
    %3521 = vst.msk [vmem:[#allocation2] sm:$0x1] %vm229, %v3511
    %3522 = vst.msk [vmem:[#allocation2 + $0x8] sm:$0x1] %vm229, %v3518
    %v3523 = vld [vmem:[#allocation3 + $0x1] sm:$0x1]
    %v3524 = vld [vmem:[#allocation3 + $0x9] sm:$0x1]
    %v3527 = vrot.slane %v3524, 7
    %v3528 = vsel %vm129, %v3527, %v3523
    %v3529 = vsel %vm131, %v3528, 0
    %3531 = vmatprep.subr.mxu0 0.0
    %3532 = vmatpush1.msra.mxu0 %v3407
    %3533 = vmatprep.subr.mxu0 0.0
    %3534 = vmatpush1.msra.mxu0 %v3408
    %3535 = vmatprep.subr.mxu0 0.0
    %3536 = vmatpush1.msra.mxu0 %v3409
    %3537 = vmatprep.subr.mxu0 0.0
    %3538 = vmatpush1.msra.mxu0 %v3410
    %3539 = vmatprep.subr.mxu0 0.0
    %3540 = vmatpush1.msra.mxu0 0.0
    %3541 = vmatprep.subr.mxu0 0.0
    %3542 = vmatpush1.msra.mxu0 0.0
    %3543 = vmatprep.subr.mxu0 0.0
    %3544 = vmatpush1.msra.mxu0 0.0
    %3545 = vmatprep.subr.mxu0 0.0
    %3546 = vmatpush1.msra.mxu0 0.0
    %3547 = vmatprep.subr.mxu0 0.0
    %3548 = vmatpush1.msra.mxu0 0.0
    %3549 = vmatprep.subr.mxu0 0.0
    %3550 = vmatpush1.msra.mxu0 0.0
    %3551 = vmatprep.subr.mxu0 0.0
    %3552 = vmatpush1.msra.mxu0 0.0
    %3553 = vmatprep.subr.mxu0 0.0
    %3554 = vmatpush1.msra.mxu0 0.0
    %3555 = vmatprep.subr.mxu0 0.0
    %3556 = vmatpush1.msra.mxu0 0.0
    %3557 = vmatprep.subr.mxu0 0.0
    %3558 = vmatpush1.msra.mxu0 0.0
    %3559 = vmatprep.subr.mxu0 0.0
    %3560 = vmatpush1.msra.mxu0 0.0
    %3561 = vmatprep.subr.mxu0 0.0
    %3562 = vmatpush1.msra.mxu0 0.0
    %3563 = vmatprep.subr.mxu0 0.0
    %3564 = vmatpush1.msra.mxu0 0.0
    %3565 = vmatprep.subr.mxu0 0.0
    %3566 = vmatpush1.msra.mxu0 0.0
    %3567 = vmatprep.subr.mxu0 0.0
    %3568 = vmatpush1.msra.mxu0 0.0
    %3569 = vmatprep.subr.mxu0 0.0
    %3570 = vmatpush1.msra.mxu0 0.0
    %3571 = vmatprep.subr.mxu0 0.0
    %3572 = vmatpush1.msra.mxu0 0.0
    %3573 = vmatprep.subr.mxu0 0.0
    %3574 = vmatpush1.msra.mxu0 0.0
    %3575 = vmatprep.subr.mxu0 0.0
    %3576 = vmatpush1.msra.mxu0 0.0
    %3577 = vmatprep.subr.mxu0 0.0
    %3578 = vmatpush1.msra.mxu0 0.0
    %3579 = vmatprep.subr.mxu0 0.0
    %3580 = vmatpush1.msra.mxu0 0.0
    %3581 = vmatprep.subr.mxu0 0.0
    %3582 = vmatpush1.msra.mxu0 0.0
    %3583 = vmatprep.subr.mxu0 0.0
    %3584 = vmatpush1.msra.mxu0 0.0
    %3585 = vmatprep.subr.mxu0 0.0
    %3586 = vmatpush1.msra.mxu0 0.0
    %3587 = vmatprep.subr.mxu0 0.0
    %3588 = vmatpush1.msra.mxu0 0.0
    %3589 = vmatprep.subr.mxu0 0.0
    %3590 = vmatpush1.msra.mxu0 0.0
    %3591 = vmatprep.subr.mxu0 0.0
    %3592 = vmatpush1.msra.mxu0 0.0
    %3593 = vmatprep.subr.mxu0 0.0
    %3594 = vmatpush1.msra.mxu0 0.0
    %3595 = vmatprep.mubr.f32.mxu0 0.0
    %3596 = vmatmul.mubr.f32.gmra.mrb[0].mxu0 %v3529
    %v3597 = vpop.f32.mrb[0].mxu0
    %v3598 = vadd.f32 %v3418, %v3597
    %v3599 = vpop.f32.mrb[0].mxu0
    %3600 = vdwg.mxu0
    %v3603 = vunpack.c.l.s4 1966171168
    %v3604 = vunpack.c.0.s8 %v3603
    %v3605 = vlaneseq
    %v3606 = vshrl.u32 %v3605, 7
    %v3607 = vsub.s32 %v3604, %v3606
    %v3608 = vrot.slane %v3598, %v3607
    %v3609 = vcombine.high %v3608, %v3608
    %v3611 = vunpack.c.l.s4 1966171168
    %v3612 = vunpack.c.0.s8 %v3611
    %v3613 = vlaneseq
    %v3614 = vshrl.u32 %v3613, 7
    %v3615 = vsub.s32 %v3612, %v3614
    %v3616 = vrot.slane %v3608, %v3615
    %v3618 = vunpack.c.l.s4 1966171168
    %v3619 = vunpack.c.0.s8 %v3618
    %v3620 = vlaneseq
    %v3621 = vshrl.u32 %v3620, 7
    %v3622 = vsub.s32 %v3619, %v3621
    %v3623 = vrot.slane %v3609, %v3622
    %3626 = vst.msk [vmem:[#allocation2 + $0x1] sm:$0x1] %vm229, %v3616
    %3627 = vst.msk [vmem:[#allocation2 + $0x9] sm:$0x1] %vm229, %v3623
    %v3628 = vld [vmem:[#allocation3 + $0x2] sm:$0x1]
    %v3629 = vld [vmem:[#allocation3 + $0xa] sm:$0x1]
    %v3632 = vrot.slane %v3629, 7
    %v3633 = vsel %vm129, %v3632, %v3628
    %v3634 = vsel %vm131, %v3633, 0
    %3636 = vmatprep.subr.mxu0 0.0
    %3637 = vmatpush1.msra.mxu0 %v3407
    %3638 = vmatprep.subr.mxu0 0.0
    %3639 = vmatpush1.msra.mxu0 %v3408
    %3640 = vmatprep.subr.mxu0 0.0
    %3641 = vmatpush1.msra.mxu0 %v3409
    %3642 = vmatprep.subr.mxu0 0.0
    %3643 = vmatpush1.msra.mxu0 %v3410
    %3644 = vmatprep.subr.mxu0 0.0
    %3645 = vmatpush1.msra.mxu0 0.0
    %3646 = vmatprep.subr.mxu0 0.0
    %3647 = vmatpush1.msra.mxu0 0.0
    %3648 = vmatprep.subr.mxu0 0.0
    %3649 = vmatpush1.msra.mxu0 0.0
    %3650 = vmatprep.subr.mxu0 0.0
    %3651 = vmatpush1.msra.mxu0 0.0
    %3652 = vmatprep.subr.mxu0 0.0
    %3653 = vmatpush1.msra.mxu0 0.0
    %3654 = vmatprep.subr.mxu0 0.0
    %3655 = vmatpush1.msra.mxu0 0.0
    %3656 = vmatprep.subr.mxu0 0.0
    %3657 = vmatpush1.msra.mxu0 0.0
    %3658 = vmatprep.subr.mxu0 0.0
    %3659 = vmatpush1.msra.mxu0 0.0
    %3660 = vmatprep.subr.mxu0 0.0
    %3661 = vmatpush1.msra.mxu0 0.0
    %3662 = vmatprep.subr.mxu0 0.0
    %3663 = vmatpush1.msra.mxu0 0.0
    %3664 = vmatprep.subr.mxu0 0.0
    %3665 = vmatpush1.msra.mxu0 0.0
    %3666 = vmatprep.subr.mxu0 0.0
    %3667 = vmatpush1.msra.mxu0 0.0
    %3668 = vmatprep.subr.mxu0 0.0
    %3669 = vmatpush1.msra.mxu0 0.0
    %3670 = vmatprep.subr.mxu0 0.0
    %3671 = vmatpush1.msra.mxu0 0.0
    %3672 = vmatprep.subr.mxu0 0.0
    %3673 = vmatpush1.msra.mxu0 0.0
    %3674 = vmatprep.subr.mxu0 0.0
    %3675 = vmatpush1.msra.mxu0 0.0
    %3676 = vmatprep.subr.mxu0 0.0
    %3677 = vmatpush1.msra.mxu0 0.0
    %3678 = vmatprep.subr.mxu0 0.0
    %3679 = vmatpush1.msra.mxu0 0.0
    %3680 = vmatprep.subr.mxu0 0.0
    %3681 = vmatpush1.msra.mxu0 0.0
    %3682 = vmatprep.subr.mxu0 0.0
    %3683 = vmatpush1.msra.mxu0 0.0
    %3684 = vmatprep.subr.mxu0 0.0
    %3685 = vmatpush1.msra.mxu0 0.0
    %3686 = vmatprep.subr.mxu0 0.0
    %3687 = vmatpush1.msra.mxu0 0.0
    %3688 = vmatprep.subr.mxu0 0.0
    %3689 = vmatpush1.msra.mxu0 0.0
    %3690 = vmatprep.subr.mxu0 0.0
    %3691 = vmatpush1.msra.mxu0 0.0
    %3692 = vmatprep.subr.mxu0 0.0
    %3693 = vmatpush1.msra.mxu0 0.0
    %3694 = vmatprep.subr.mxu0 0.0
    %3695 = vmatpush1.msra.mxu0 0.0
    %3696 = vmatprep.subr.mxu0 0.0
    %3697 = vmatpush1.msra.mxu0 0.0
    %3698 = vmatprep.subr.mxu0 0.0
    %3699 = vmatpush1.msra.mxu0 0.0
    %3700 = vmatprep.mubr.f32.mxu0 0.0
    %3701 = vmatmul.mubr.f32.gmra.mrb[0].mxu0 %v3634
    %v3702 = vpop.f32.mrb[0].mxu0
    %v3703 = vadd.f32 %v3418, %v3702
    %v3704 = vpop.f32.mrb[0].mxu0
    %3705 = vdwg.mxu0
    %v3708 = vunpack.c.l.s4 1966171168
    %v3709 = vunpack.c.0.s8 %v3708
    %v3710 = vlaneseq
    %v3711 = vshrl.u32 %v3710, 7
    %v3712 = vsub.s32 %v3709, %v3711
    %v3713 = vrot.slane %v3703, %v3712
    %v3714 = vcombine.high %v3713, %v3713
    %v3716 = vunpack.c.l.s4 1966171168
    %v3717 = vunpack.c.0.s8 %v3716
    %v3718 = vlaneseq
    %v3719 = vshrl.u32 %v3718, 7
    %v3720 = vsub.s32 %v3717, %v3719
    %v3721 = vrot.slane %v3713, %v3720
    %v3723 = vunpack.c.l.s4 1966171168
    %v3724 = vunpack.c.0.s8 %v3723
    %v3725 = vlaneseq
    %v3726 = vshrl.u32 %v3725, 7
    %v3727 = vsub.s32 %v3724, %v3726
    %v3728 = vrot.slane %v3714, %v3727
    %3731 = vst.msk [vmem:[#allocation2 + $0x2] sm:$0x1] %vm229, %v3721
    %3732 = vst.msk [vmem:[#allocation2 + $0xa] sm:$0x1] %vm229, %v3728
    %v3733 = vld [vmem:[#allocation3 + $0x3] sm:$0x1]
    %v3734 = vld [vmem:[#allocation3 + $0xb] sm:$0x1]
    %v3737 = vrot.slane %v3734, 7
    %v3738 = vsel %vm129, %v3737, %v3733
    %v3739 = vsel %vm131, %v3738, 0
    %3741 = vmatprep.subr.mxu0 0.0
    %3742 = vmatpush1.msra.mxu0 %v3407
    %3743 = vmatprep.subr.mxu0 0.0
    %3744 = vmatpush1.msra.mxu0 %v3408
    %3745 = vmatprep.subr.mxu0 0.0
    %3746 = vmatpush1.msra.mxu0 %v3409
    %3747 = vmatprep.subr.mxu0 0.0
    %3748 = vmatpush1.msra.mxu0 %v3410
    %3749 = vmatprep.subr.mxu0 0.0
    %3750 = vmatpush1.msra.mxu0 0.0
    %3751 = vmatprep.subr.mxu0 0.0
    %3752 = vmatpush1.msra.mxu0 0.0
    %3753 = vmatprep.subr.mxu0 0.0
    %3754 = vmatpush1.msra.mxu0 0.0
    %3755 = vmatprep.subr.mxu0 0.0
    %3756 = vmatpush1.msra.mxu0 0.0
    %3757 = vmatprep.subr.mxu0 0.0
    %3758 = vmatpush1.msra.mxu0 0.0
    %3759 = vmatprep.subr.mxu0 0.0
    %3760 = vmatpush1.msra.mxu0 0.0
    %3761 = vmatprep.subr.mxu0 0.0
    %3762 = vmatpush1.msra.mxu0 0.0
    %3763 = vmatprep.subr.mxu0 0.0
    %3764 = vmatpush1.msra.mxu0 0.0
    %3765 = vmatprep.subr.mxu0 0.0
    %3766 = vmatpush1.msra.mxu0 0.0
    %3767 = vmatprep.subr.mxu0 0.0
    %3768 = vmatpush1.msra.mxu0 0.0
    %3769 = vmatprep.subr.mxu0 0.0
    %3770 = vmatpush1.msra.mxu0 0.0
    %3771 = vmatprep.subr.mxu0 0.0
    %3772 = vmatpush1.msra.mxu0 0.0
    %3773 = vmatprep.subr.mxu0 0.0
    %3774 = vmatpush1.msra.mxu0 0.0
    %3775 = vmatprep.subr.mxu0 0.0
    %3776 = vmatpush1.msra.mxu0 0.0
    %3777 = vmatprep.subr.mxu0 0.0
    %3778 = vmatpush1.msra.mxu0 0.0
    %3779 = vmatprep.subr.mxu0 0.0
    %3780 = vmatpush1.msra.mxu0 0.0
    %3781 = vmatprep.subr.mxu0 0.0
    %3782 = vmatpush1.msra.mxu0 0.0
    %3783 = vmatprep.subr.mxu0 0.0
    %3784 = vmatpush1.msra.mxu0 0.0
    %3785 = vmatprep.subr.mxu0 0.0
    %3786 = vmatpush1.msra.mxu0 0.0
    %3787 = vmatprep.subr.mxu0 0.0
    %3788 = vmatpush1.msra.mxu0 0.0
    %3789 = vmatprep.subr.mxu0 0.0
    %3790 = vmatpush1.msra.mxu0 0.0
    %3791 = vmatprep.subr.mxu0 0.0
    %3792 = vmatpush1.msra.mxu0 0.0
    %3793 = vmatprep.subr.mxu0 0.0
    %3794 = vmatpush1.msra.mxu0 0.0
    %3795 = vmatprep.subr.mxu0 0.0
    %3796 = vmatpush1.msra.mxu0 0.0
    %3797 = vmatprep.subr.mxu0 0.0
    %3798 = vmatpush1.msra.mxu0 0.0
    %3799 = vmatprep.subr.mxu0 0.0
    %3800 = vmatpush1.msra.mxu0 0.0
    %3801 = vmatprep.subr.mxu0 0.0
    %3802 = vmatpush1.msra.mxu0 0.0
    %3803 = vmatprep.subr.mxu0 0.0
    %3804 = vmatpush1.msra.mxu0 0.0
    %3805 = vmatprep.mubr.f32.mxu0 0.0
    %3806 = vmatmul.mubr.f32.gmra.mrb[0].mxu0 %v3739
    %v3807 = vpop.f32.mrb[0].mxu0
    %v3808 = vadd.f32 %v3418, %v3807
    %v3809 = vpop.f32.mrb[0].mxu0
    %3810 = vdwg.mxu0
    %v3813 = vunpack.c.l.s4 1966171168
    %v3814 = vunpack.c.0.s8 %v3813
    %v3815 = vlaneseq
    %v3816 = vshrl.u32 %v3815, 7
    %v3817 = vsub.s32 %v3814, %v3816
    %v3818 = vrot.slane %v3808, %v3817
    %v3819 = vcombine.high %v3818, %v3818
    %v3821 = vunpack.c.l.s4 1966171168
    %v3822 = vunpack.c.0.s8 %v3821
    %v3823 = vlaneseq
    %v3824 = vshrl.u32 %v3823, 7
    %v3825 = vsub.s32 %v3822, %v3824
    %v3826 = vrot.slane %v3818, %v3825
    %v3828 = vunpack.c.l.s4 1966171168
    %v3829 = vunpack.c.0.s8 %v3828
    %v3830 = vlaneseq
    %v3831 = vshrl.u32 %v3830, 7
    %v3832 = vsub.s32 %v3829, %v3831
    %v3833 = vrot.slane %v3819, %v3832
    %3836 = vst.msk [vmem:[#allocation2 + $0x3] sm:$0x1] %vm229, %v3826
    %3837 = vst.msk [vmem:[#allocation2 + $0xb] sm:$0x1] %vm229, %v3833
    %v3838 = vld [vmem:[#allocation3 + $0x4] sm:$0x1]
    %v3839 = vld [vmem:[#allocation3 + $0xc] sm:$0x1]
    %v3842 = vrot.slane %v3839, 7
    %v3843 = vsel %vm129, %v3842, %v3838
    %v3844 = vsel %vm131, %v3843, 0
    %3846 = vmatprep.subr.mxu0 0.0
    %3847 = vmatpush1.msra.mxu0 %v3407
    %3848 = vmatprep.subr.mxu0 0.0
    %3849 = vmatpush1.msra.mxu0 %v3408
    %3850 = vmatprep.subr.mxu0 0.0
    %3851 = vmatpush1.msra.mxu0 %v3409
    %3852 = vmatprep.subr.mxu0 0.0
    %3853 = vmatpush1.msra.mxu0 %v3410
    %3854 = vmatprep.subr.mxu0 0.0
    %3855 = vmatpush1.msra.mxu0 0.0
    %3856 = vmatprep.subr.mxu0 0.0
    %3857 = vmatpush1.msra.mxu0 0.0
    %3858 = vmatprep.subr.mxu0 0.0
    %3859 = vmatpush1.msra.mxu0 0.0
    %3860 = vmatprep.subr.mxu0 0.0
    %3861 = vmatpush1.msra.mxu0 0.0
    %3862 = vmatprep.subr.mxu0 0.0
    %3863 = vmatpush1.msra.mxu0 0.0
    %3864 = vmatprep.subr.mxu0 0.0
    %3865 = vmatpush1.msra.mxu0 0.0
    %3866 = vmatprep.subr.mxu0 0.0
    %3867 = vmatpush1.msra.mxu0 0.0
    %3868 = vmatprep.subr.mxu0 0.0
    %3869 = vmatpush1.msra.mxu0 0.0
    %3870 = vmatprep.subr.mxu0 0.0
    %3871 = vmatpush1.msra.mxu0 0.0
    %3872 = vmatprep.subr.mxu0 0.0
    %3873 = vmatpush1.msra.mxu0 0.0
    %3874 = vmatprep.subr.mxu0 0.0
    %3875 = vmatpush1.msra.mxu0 0.0
    %3876 = vmatprep.subr.mxu0 0.0
    %3877 = vmatpush1.msra.mxu0 0.0
    %3878 = vmatprep.subr.mxu0 0.0
    %3879 = vmatpush1.msra.mxu0 0.0
    %3880 = vmatprep.subr.mxu0 0.0
    %3881 = vmatpush1.msra.mxu0 0.0
    %3882 = vmatprep.subr.mxu0 0.0
    %3883 = vmatpush1.msra.mxu0 0.0
    %3884 = vmatprep.subr.mxu0 0.0
    %3885 = vmatpush1.msra.mxu0 0.0
    %3886 = vmatprep.subr.mxu0 0.0
    %3887 = vmatpush1.msra.mxu0 0.0
    %3888 = vmatprep.subr.mxu0 0.0
    %3889 = vmatpush1.msra.mxu0 0.0
    %3890 = vmatprep.subr.mxu0 0.0
    %3891 = vmatpush1.msra.mxu0 0.0
    %3892 = vmatprep.subr.mxu0 0.0
    %3893 = vmatpush1.msra.mxu0 0.0
    %3894 = vmatprep.subr.mxu0 0.0
    %3895 = vmatpush1.msra.mxu0 0.0
    %3896 = vmatprep.subr.mxu0 0.0
    %3897 = vmatpush1.msra.mxu0 0.0
    %3898 = vmatprep.subr.mxu0 0.0
    %3899 = vmatpush1.msra.mxu0 0.0
    %3900 = vmatprep.subr.mxu0 0.0
    %3901 = vmatpush1.msra.mxu0 0.0
    %3902 = vmatprep.subr.mxu0 0.0
    %3903 = vmatpush1.msra.mxu0 0.0
    %3904 = vmatprep.subr.mxu0 0.0
    %3905 = vmatpush1.msra.mxu0 0.0
    %3906 = vmatprep.subr.mxu0 0.0
    %3907 = vmatpush1.msra.mxu0 0.0
    %3908 = vmatprep.subr.mxu0 0.0
    %3909 = vmatpush1.msra.mxu0 0.0
    %3910 = vmatprep.mubr.f32.mxu0 0.0
    %3911 = vmatmul.mubr.f32.gmra.mrb[0].mxu0 %v3844
    %v3912 = vpop.f32.mrb[0].mxu0
    %v3913 = vadd.f32 %v3418, %v3912
    %v3914 = vpop.f32.mrb[0].mxu0
    %3915 = vdwg.mxu0
    %v3918 = vunpack.c.l.s4 1966171168
    %v3919 = vunpack.c.0.s8 %v3918
    %v3920 = vlaneseq
    %v3921 = vshrl.u32 %v3920, 7
    %v3922 = vsub.s32 %v3919, %v3921
    %v3923 = vrot.slane %v3913, %v3922
    %v3924 = vcombine.high %v3923, %v3923
    %v3926 = vunpack.c.l.s4 1966171168
    %v3927 = vunpack.c.0.s8 %v3926
    %v3928 = vlaneseq
    %v3929 = vshrl.u32 %v3928, 7
    %v3930 = vsub.s32 %v3927, %v3929
    %v3931 = vrot.slane %v3923, %v3930
    %v3933 = vunpack.c.l.s4 1966171168
    %v3934 = vunpack.c.0.s8 %v3933
    %v3935 = vlaneseq
    %v3936 = vshrl.u32 %v3935, 7
    %v3937 = vsub.s32 %v3934, %v3936
    %v3938 = vrot.slane %v3924, %v3937
    %3941 = vst.msk [vmem:[#allocation2 + $0x4] sm:$0x1] %vm229, %v3931
    %3942 = vst.msk [vmem:[#allocation2 + $0xc] sm:$0x1] %vm229, %v3938
    %v3943 = vld [vmem:[#allocation3 + $0x5] sm:$0x1]
    %v3944 = vld [vmem:[#allocation3 + $0xd] sm:$0x1]
    %v3947 = vrot.slane %v3944, 7
    %v3948 = vsel %vm129, %v3947, %v3943
    %v3949 = vsel %vm131, %v3948, 0
    %3951 = vmatprep.subr.mxu0 0.0
    %3952 = vmatpush1.msra.mxu0 %v3407
    %3953 = vmatprep.subr.mxu0 0.0
    %3954 = vmatpush1.msra.mxu0 %v3408
    %3955 = vmatprep.subr.mxu0 0.0
    %3956 = vmatpush1.msra.mxu0 %v3409
    %3957 = vmatprep.subr.mxu0 0.0
    %3958 = vmatpush1.msra.mxu0 %v3410
    %3959 = vmatprep.subr.mxu0 0.0
    %3960 = vmatpush1.msra.mxu0 0.0
    %3961 = vmatprep.subr.mxu0 0.0
    %3962 = vmatpush1.msra.mxu0 0.0
    %3963 = vmatprep.subr.mxu0 0.0
    %3964 = vmatpush1.msra.mxu0 0.0
    %3965 = vmatprep.subr.mxu0 0.0
    %3966 = vmatpush1.msra.mxu0 0.0
    %3967 = vmatprep.subr.mxu0 0.0
    %3968 = vmatpush1.msra.mxu0 0.0
    %3969 = vmatprep.subr.mxu0 0.0
    %3970 = vmatpush1.msra.mxu0 0.0
    %3971 = vmatprep.subr.mxu0 0.0
    %3972 = vmatpush1.msra.mxu0 0.0
    %3973 = vmatprep.subr.mxu0 0.0
    %3974 = vmatpush1.msra.mxu0 0.0
    %3975 = vmatprep.subr.mxu0 0.0
    %3976 = vmatpush1.msra.mxu0 0.0
    %3977 = vmatprep.subr.mxu0 0.0
    %3978 = vmatpush1.msra.mxu0 0.0
    %3979 = vmatprep.subr.mxu0 0.0
    %3980 = vmatpush1.msra.mxu0 0.0
    %3981 = vmatprep.subr.mxu0 0.0
    %3982 = vmatpush1.msra.mxu0 0.0
    %3983 = vmatprep.subr.mxu0 0.0
    %3984 = vmatpush1.msra.mxu0 0.0
    %3985 = vmatprep.subr.mxu0 0.0
    %3986 = vmatpush1.msra.mxu0 0.0
    %3987 = vmatprep.subr.mxu0 0.0
    %3988 = vmatpush1.msra.mxu0 0.0
    %3989 = vmatprep.subr.mxu0 0.0
    %3990 = vmatpush1.msra.mxu0 0.0
    %3991 = vmatprep.subr.mxu0 0.0
    %3992 = vmatpush1.msra.mxu0 0.0
    %3993 = vmatprep.subr.mxu0 0.0
    %3994 = vmatpush1.msra.mxu0 0.0
    %3995 = vmatprep.subr.mxu0 0.0
    %3996 = vmatpush1.msra.mxu0 0.0
    %3997 = vmatprep.subr.mxu0 0.0
    %3998 = vmatpush1.msra.mxu0 0.0
    %3999 = vmatprep.subr.mxu0 0.0
    %4000 = vmatpush1.msra.mxu0 0.0
    %4001 = vmatprep.subr.mxu0 0.0
    %4002 = vmatpush1.msra.mxu0 0.0
    %4003 = vmatprep.subr.mxu0 0.0
    %4004 = vmatpush1.msra.mxu0 0.0
    %4005 = vmatprep.subr.mxu0 0.0
    %4006 = vmatpush1.msra.mxu0 0.0
    %4007 = vmatprep.subr.mxu0 0.0
    %4008 = vmatpush1.msra.mxu0 0.0
    %4009 = vmatprep.subr.mxu0 0.0
    %4010 = vmatpush1.msra.mxu0 0.0
    %4011 = vmatprep.subr.mxu0 0.0
    %4012 = vmatpush1.msra.mxu0 0.0
    %4013 = vmatprep.subr.mxu0 0.0
    %4014 = vmatpush1.msra.mxu0 0.0
    %4015 = vmatprep.mubr.f32.mxu0 0.0
    %4016 = vmatmul.mubr.f32.gmra.mrb[0].mxu0 %v3949
    %v4017 = vpop.f32.mrb[0].mxu0
    %v4018 = vadd.f32 %v3418, %v4017
    %v4019 = vpop.f32.mrb[0].mxu0
    %4020 = vdwg.mxu0
    %v4023 = vunpack.c.l.s4 1966171168
    %v4024 = vunpack.c.0.s8 %v4023
    %v4025 = vlaneseq
    %v4026 = vshrl.u32 %v4025, 7
    %v4027 = vsub.s32 %v4024, %v4026
    %v4028 = vrot.slane %v4018, %v4027
    %v4029 = vcombine.high %v4028, %v4028
    %v4031 = vunpack.c.l.s4 1966171168
    %v4032 = vunpack.c.0.s8 %v4031
    %v4033 = vlaneseq
    %v4034 = vshrl.u32 %v4033, 7
    %v4035 = vsub.s32 %v4032, %v4034
    %v4036 = vrot.slane %v4028, %v4035
    %v4038 = vunpack.c.l.s4 1966171168
    %v4039 = vunpack.c.0.s8 %v4038
    %v4040 = vlaneseq
    %v4041 = vshrl.u32 %v4040, 7
    %v4042 = vsub.s32 %v4039, %v4041
    %v4043 = vrot.slane %v4029, %v4042
    %4046 = vst.msk [vmem:[#allocation2 + $0x5] sm:$0x1] %vm229, %v4036
    %4047 = vst.msk [vmem:[#allocation2 + $0xd] sm:$0x1] %vm229, %v4043
    %v4048 = vld [vmem:[#allocation3 + $0x6] sm:$0x1]
    %v4049 = vld [vmem:[#allocation3 + $0xe] sm:$0x1]
    %v4052 = vrot.slane %v4049, 7
    %v4053 = vsel %vm129, %v4052, %v4048
    %v4054 = vsel %vm131, %v4053, 0
    %4056 = vmatprep.subr.mxu0 0.0
    %4057 = vmatpush1.msra.mxu0 %v3407
    %4058 = vmatprep.subr.mxu0 0.0
    %4059 = vmatpush1.msra.mxu0 %v3408
    %4060 = vmatprep.subr.mxu0 0.0
    %4061 = vmatpush1.msra.mxu0 %v3409
    %4062 = vmatprep.subr.mxu0 0.0
    %4063 = vmatpush1.msra.mxu0 %v3410
    %4064 = vmatprep.subr.mxu0 0.0
    %4065 = vmatpush1.msra.mxu0 0.0
    %4066 = vmatprep.subr.mxu0 0.0
    %4067 = vmatpush1.msra.mxu0 0.0
    %4068 = vmatprep.subr.mxu0 0.0
    %4069 = vmatpush1.msra.mxu0 0.0
    %4070 = vmatprep.subr.mxu0 0.0
    %4071 = vmatpush1.msra.mxu0 0.0
    %4072 = vmatprep.subr.mxu0 0.0
    %4073 = vmatpush1.msra.mxu0 0.0
    %4074 = vmatprep.subr.mxu0 0.0
    %4075 = vmatpush1.msra.mxu0 0.0
    %4076 = vmatprep.subr.mxu0 0.0
    %4077 = vmatpush1.msra.mxu0 0.0
    %4078 = vmatprep.subr.mxu0 0.0
    %4079 = vmatpush1.msra.mxu0 0.0
    %4080 = vmatprep.subr.mxu0 0.0
    %4081 = vmatpush1.msra.mxu0 0.0
    %4082 = vmatprep.subr.mxu0 0.0
    %4083 = vmatpush1.msra.mxu0 0.0
    %4084 = vmatprep.subr.mxu0 0.0
    %4085 = vmatpush1.msra.mxu0 0.0
    %4086 = vmatprep.subr.mxu0 0.0
    %4087 = vmatpush1.msra.mxu0 0.0
    %4088 = vmatprep.subr.mxu0 0.0
    %4089 = vmatpush1.msra.mxu0 0.0
    %4090 = vmatprep.subr.mxu0 0.0
    %4091 = vmatpush1.msra.mxu0 0.0
    %4092 = vmatprep.subr.mxu0 0.0
    %4093 = vmatpush1.msra.mxu0 0.0
    %4094 = vmatprep.subr.mxu0 0.0
    %4095 = vmatpush1.msra.mxu0 0.0
    %4096 = vmatprep.subr.mxu0 0.0
    %4097 = vmatpush1.msra.mxu0 0.0
    %4098 = vmatprep.subr.mxu0 0.0
    %4099 = vmatpush1.msra.mxu0 0.0
    %4100 = vmatprep.subr.mxu0 0.0
    %4101 = vmatpush1.msra.mxu0 0.0
    %4102 = vmatprep.subr.mxu0 0.0
    %4103 = vmatpush1.msra.mxu0 0.0
    %4104 = vmatprep.subr.mxu0 0.0
    %4105 = vmatpush1.msra.mxu0 0.0
    %4106 = vmatprep.subr.mxu0 0.0
    %4107 = vmatpush1.msra.mxu0 0.0
    %4108 = vmatprep.subr.mxu0 0.0
    %4109 = vmatpush1.msra.mxu0 0.0
    %4110 = vmatprep.subr.mxu0 0.0
    %4111 = vmatpush1.msra.mxu0 0.0
    %4112 = vmatprep.subr.mxu0 0.0
    %4113 = vmatpush1.msra.mxu0 0.0
    %4114 = vmatprep.subr.mxu0 0.0
    %4115 = vmatpush1.msra.mxu0 0.0
    %4116 = vmatprep.subr.mxu0 0.0
    %4117 = vmatpush1.msra.mxu0 0.0
    %4118 = vmatprep.subr.mxu0 0.0
    %4119 = vmatpush1.msra.mxu0 0.0
    %4120 = vmatprep.mubr.f32.mxu0 0.0
    %4121 = vmatmul.mubr.f32.gmra.mrb[0].mxu0 %v4054
    %v4122 = vpop.f32.mrb[0].mxu0
    %v4123 = vadd.f32 %v3418, %v4122
    %v4124 = vpop.f32.mrb[0].mxu0
    %4125 = vdwg.mxu0
    %v4128 = vunpack.c.l.s4 1966171168
    %v4129 = vunpack.c.0.s8 %v4128
    %v4130 = vlaneseq
    %v4131 = vshrl.u32 %v4130, 7
    %v4132 = vsub.s32 %v4129, %v4131
    %v4133 = vrot.slane %v4123, %v4132
    %v4134 = vcombine.high %v4133, %v4133
    %v4136 = vunpack.c.l.s4 1966171168
    %v4137 = vunpack.c.0.s8 %v4136
    %v4138 = vlaneseq
    %v4139 = vshrl.u32 %v4138, 7
    %v4140 = vsub.s32 %v4137, %v4139
    %v4141 = vrot.slane %v4133, %v4140
    %v4143 = vunpack.c.l.s4 1966171168
    %v4144 = vunpack.c.0.s8 %v4143
    %v4145 = vlaneseq
    %v4146 = vshrl.u32 %v4145, 7
    %v4147 = vsub.s32 %v4144, %v4146
    %v4148 = vrot.slane %v4134, %v4147
    %4151 = vst.msk [vmem:[#allocation2 + $0x6] sm:$0x1] %vm229, %v4141
    %4152 = vst.msk [vmem:[#allocation2 + $0xe] sm:$0x1] %vm229, %v4148
    %v4153 = vld [vmem:[#allocation3 + $0x7] sm:$0x1]
    %v4154 = vld [vmem:[#allocation3 + $0xf] sm:$0x1]
    %v4157 = vrot.slane %v4154, 7
    %v4158 = vsel %vm129, %v4157, %v4153
    %v4159 = vsel %vm131, %v4158, 0
    %4161 = vmatprep.subr.mxu0 0.0
    %4162 = vmatpush1.msra.mxu0 %v3407
    %4163 = vmatprep.subr.mxu0 0.0
    %4164 = vmatpush1.msra.mxu0 %v3408
    %4165 = vmatprep.subr.mxu0 0.0
    %4166 = vmatpush1.msra.mxu0 %v3409
    %4167 = vmatprep.subr.mxu0 0.0
    %4168 = vmatpush1.msra.mxu0 %v3410
    %4169 = vmatprep.subr.mxu0 0.0
    %4170 = vmatpush1.msra.mxu0 0.0
    %4171 = vmatprep.subr.mxu0 0.0
    %4172 = vmatpush1.msra.mxu0 0.0
    %4173 = vmatprep.subr.mxu0 0.0
    %4174 = vmatpush1.msra.mxu0 0.0
    %4175 = vmatprep.subr.mxu0 0.0
    %4176 = vmatpush1.msra.mxu0 0.0
    %4177 = vmatprep.subr.mxu0 0.0
    %4178 = vmatpush1.msra.mxu0 0.0
    %4179 = vmatprep.subr.mxu0 0.0
    %4180 = vmatpush1.msra.mxu0 0.0
    %4181 = vmatprep.subr.mxu0 0.0
    %4182 = vmatpush1.msra.mxu0 0.0
    %4183 = vmatprep.subr.mxu0 0.0
    %4184 = vmatpush1.msra.mxu0 0.0
    %4185 = vmatprep.subr.mxu0 0.0
    %4186 = vmatpush1.msra.mxu0 0.0
    %4187 = vmatprep.subr.mxu0 0.0
    %4188 = vmatpush1.msra.mxu0 0.0
    %4189 = vmatprep.subr.mxu0 0.0
    %4190 = vmatpush1.msra.mxu0 0.0
    %4191 = vmatprep.subr.mxu0 0.0
    %4192 = vmatpush1.msra.mxu0 0.0
    %4193 = vmatprep.subr.mxu0 0.0
    %4194 = vmatpush1.msra.mxu0 0.0
    %4195 = vmatprep.subr.mxu0 0.0
    %4196 = vmatpush1.msra.mxu0 0.0
    %4197 = vmatprep.subr.mxu0 0.0
    %4198 = vmatpush1.msra.mxu0 0.0
    %4199 = vmatprep.subr.mxu0 0.0
    %4200 = vmatpush1.msra.mxu0 0.0
    %4201 = vmatprep.subr.mxu0 0.0
    %4202 = vmatpush1.msra.mxu0 0.0
    %4203 = vmatprep.subr.mxu0 0.0
    %4204 = vmatpush1.msra.mxu0 0.0
    %4205 = vmatprep.subr.mxu0 0.0
    %4206 = vmatpush1.msra.mxu0 0.0
    %4207 = vmatprep.subr.mxu0 0.0
    %4208 = vmatpush1.msra.mxu0 0.0
    %4209 = vmatprep.subr.mxu0 0.0
    %4210 = vmatpush1.msra.mxu0 0.0
    %4211 = vmatprep.subr.mxu0 0.0
    %4212 = vmatpush1.msra.mxu0 0.0
    %4213 = vmatprep.subr.mxu0 0.0
    %4214 = vmatpush1.msra.mxu0 0.0
    %4215 = vmatprep.subr.mxu0 0.0
    %4216 = vmatpush1.msra.mxu0 0.0
    %4217 = vmatprep.subr.mxu0 0.0
    %4218 = vmatpush1.msra.mxu0 0.0
    %4219 = vmatprep.subr.mxu0 0.0
    %4220 = vmatpush1.msra.mxu0 0.0
    %4221 = vmatprep.subr.mxu0 0.0
    %4222 = vmatpush1.msra.mxu0 0.0
    %4223 = vmatprep.subr.mxu0 0.0
    %4224 = vmatpush1.msra.mxu0 0.0
    %4225 = vmatprep.mubr.f32.mxu0 0.0
    %4226 = vmatmul.mubr.f32.gmra.mrb[0].mxu0 %v4159
    %v4227 = vpop.f32.mrb[0].mxu0
    %v4228 = vadd.f32 %v3418, %v4227
    %v4229 = vpop.f32.mrb[0].mxu0
    %4230 = vdwg.mxu0
    %v4233 = vunpack.c.l.s4 1966171168
    %v4234 = vunpack.c.0.s8 %v4233
    %v4235 = vlaneseq
    %v4236 = vshrl.u32 %v4235, 7
    %v4237 = vsub.s32 %v4234, %v4236
    %v4238 = vrot.slane %v4228, %v4237
    %v4239 = vcombine.high %v4238, %v4238
    %v4241 = vunpack.c.l.s4 1966171168
    %v4242 = vunpack.c.0.s8 %v4241
    %v4243 = vlaneseq
    %v4244 = vshrl.u32 %v4243, 7
    %v4245 = vsub.s32 %v4242, %v4244
    %v4246 = vrot.slane %v4238, %v4245
    %v4248 = vunpack.c.l.s4 1966171168
    %v4249 = vunpack.c.0.s8 %v4248
    %v4250 = vlaneseq
    %v4251 = vshrl.u32 %v4250, 7
    %v4252 = vsub.s32 %v4249, %v4251
    %v4253 = vrot.slane %v4239, %v4252
    %4256 = vst.msk [vmem:[#allocation2 + $0x7] sm:$0x1] %vm229, %v4246
    %4257 = vst.msk [vmem:[#allocation2 + $0xf] sm:$0x1] %vm229, %v4253
    %v4258 = vld [vmem:[#allocation12] sm:$0xff]
    %v4259 = vld [vmem:[#allocation12 + $0x8] sm:$0xff]
    %v4260 = vld [vmem:[#allocation12 + $0x10] sm:$0xff]
    %v4261 = vld [vmem:[#allocation12 + $0x18] sm:$0xff]
    %v4262 = vld [vmem:[%s9] sm:$0x1]
    %v4263 = vld [vmem:[#allocation2] sm:$0x1]
    %v4264 = vld [vmem:[#allocation2 + $0x8] sm:$0x1]
    %v4265 = vld [vmem:[#allocation2 + $0x7] sm:$0x1]
    %v4266 = vld [vmem:[#allocation2 + $0xf] sm:$0x1]
    %4267 = vmatprep.subr.mxu0 0.0
    %4268 = vmatpush1.msra.mxu0 %v4258
    %4269 = vmatprep.subr.mxu0 0.0
    %4270 = vmatpush1.msra.mxu0 %v4259
    %4271 = vmatprep.subr.mxu0 0.0
    %4272 = vmatpush1.msra.mxu0 %v4260
    %4273 = vmatprep.subr.mxu0 0.0
    %4274 = vmatpush1.msra.mxu0 %v4261
    %4275 = vmatprep.subr.mxu0 0.0
    %4276 = vmatpush1.msra.mxu0 0.0
    %4277 = vmatprep.subr.mxu0 0.0
    %4278 = vmatpush1.msra.mxu0 0.0
    %4279 = vmatprep.subr.mxu0 0.0
    %4280 = vmatpush1.msra.mxu0 0.0
    %4281 = vmatprep.subr.mxu0 0.0
    %4282 = vmatpush1.msra.mxu0 0.0
    %4283 = vmatprep.subr.mxu0 0.0
    %4284 = vmatpush1.msra.mxu0 0.0
    %4285 = vmatprep.subr.mxu0 0.0
    %4286 = vmatpush1.msra.mxu0 0.0
    %4287 = vmatprep.subr.mxu0 0.0
    %4288 = vmatpush1.msra.mxu0 0.0
    %4289 = vmatprep.subr.mxu0 0.0
    %4290 = vmatpush1.msra.mxu0 0.0
    %4291 = vmatprep.subr.mxu0 0.0
    %4292 = vmatpush1.msra.mxu0 0.0
    %4293 = vmatprep.subr.mxu0 0.0
    %4294 = vmatpush1.msra.mxu0 0.0
    %4295 = vmatprep.subr.mxu0 0.0
    %4296 = vmatpush1.msra.mxu0 0.0
    %4297 = vmatprep.subr.mxu0 0.0
    %4298 = vmatpush1.msra.mxu0 0.0
    %4299 = vmatprep.subr.mxu0 0.0
    %4300 = vmatpush1.msra.mxu0 0.0
    %4301 = vmatprep.subr.mxu0 0.0
    %4302 = vmatpush1.msra.mxu0 0.0
    %4303 = vmatprep.subr.mxu0 0.0
    %4304 = vmatpush1.msra.mxu0 0.0
    %4305 = vmatprep.subr.mxu0 0.0
    %4306 = vmatpush1.msra.mxu0 0.0
    %4307 = vmatprep.subr.mxu0 0.0
    %4308 = vmatpush1.msra.mxu0 0.0
    %4309 = vmatprep.subr.mxu0 0.0
    %4310 = vmatpush1.msra.mxu0 0.0
    %4311 = vmatprep.subr.mxu0 0.0
    %4312 = vmatpush1.msra.mxu0 0.0
    %4313 = vmatprep.subr.mxu0 0.0
    %4314 = vmatpush1.msra.mxu0 0.0
    %4315 = vmatprep.subr.mxu0 0.0
    %4316 = vmatpush1.msra.mxu0 0.0
    %4317 = vmatprep.subr.mxu0 0.0
    %4318 = vmatpush1.msra.mxu0 0.0
    %4319 = vmatprep.subr.mxu0 0.0
    %4320 = vmatpush1.msra.mxu0 0.0
    %4321 = vmatprep.subr.mxu0 0.0
    %4322 = vmatpush1.msra.mxu0 0.0
    %4323 = vmatprep.subr.mxu0 0.0
    %4324 = vmatpush1.msra.mxu0 0.0
    %4325 = vmatprep.subr.mxu0 0.0
    %4326 = vmatpush1.msra.mxu0 0.0
    %4327 = vmatprep.subr.mxu0 0.0
    %4328 = vmatpush1.msra.mxu0 0.0
    %4329 = vmatprep.subr.mxu0 0.0
    %4330 = vmatpush1.msra.mxu0 0.0
    %4331 = vmatprep.mubr.f32.mxu0 0.0
    %4332 = vmatmul.mubr.f32.gmra.mrb[0].mxu0 %v977
    %v4333 = vpop.f32.mrb[0].mxu0
    %v4334 = vadd.f32 0.0, %v4333
    %v4335 = vpop.f32.mrb[0].mxu0
    %4336 = vdwg.mxu0
    %v4338 = vrot.slane %v4334, 1
    %v4341 = vadd.f32 %v4263, %v4334
    %v4342 = vadd.f32 %v4264, %v4338
    %v4343 = vxor.u32 %v4341, 2147483648
    %v4344 = vxor.u32 %v4342, 2147483648
    %v4345 = vmul.f32 %v4343, 1.442695
    %v4346 = vpow.pop %v4345
    %v4347 = vmul.f32 %v4344, 1.442695
    %v4348 = vpow.pop %v4347
    %v4349 = vadd.f32 %v4346, 1.0
    %v4350 = vadd.f32 %v4348, 1.0
    %v4351 = vrcp.pop %v4349
    %v4352 = vmul.f32 1.0, %v4351
    %v4353 = vrcp.pop %v4350
    %v4354 = vmul.f32 1.0, %v4353
    %v4356 = vlaneseq
    %v4357 = vshrl.u32 %v4356, 7
    %v4358 = vsub.s32 0, %v4357
    %v4359 = vrot.slane %v4262, %v4358
    %4360 = vrot.lane.b32.xlu0 %v4359, 32
    %v4361 = vpop.permute.xlu0 %4360
    %v4363 = vadd.f32 %v4334, %v4361
    %v4365 = vrot.slane %v4363, 1
    %4366 = vrot.lane.b32.xlu0 %v4363, 96
    %v4367 = vpop.permute.xlu0 %4366
    %4368 = vrot.lane.b32.xlu0 %v4365, 96
    %v4369 = vpop.permute.xlu0 %4368
    %v4372 = vmul.f32 %v4352, %v4367
    %v4373 = vmul.f32 %v4354, %v4369
    %4376 = vrot.lane.b32.xlu0 %v4372, 32
    %v4377 = vpop.permute.xlu0 %4376
    %4378 = vrot.lane.b32.xlu0 %v4373, 32
    %v4379 = vpop.permute.xlu0 %4378
    %v4382 = vadd.f32 %v4263, %v4377
    %v4383 = vadd.f32 %v4264, %v4379
    %v4384 = vtanh.pop %v4382
    %v4385 = vtanh.pop %v4383
    %v4386 = vsub.f32 1.0, %v4352
    %v4387 = vsub.f32 1.0, %v4354
    %4390 = vrot.lane.b32.xlu0 %v4384, 112
    %v4391 = vpop.permute.xlu0 %4390
    %4392 = vrot.lane.b32.xlu0 %v4385, 112
    %v4393 = vpop.permute.xlu0 %4392
    %v4396 = vmul.f32 %v4386, %v4391
    %v4397 = vmul.f32 %v4387, %v4393
    %v4398 = vmul.f32 %v4352, 0.0
    %v4399 = vmul.f32 %v4354, 0.0
    %v4400 = vadd.f32 %v4396, %v4398
    %v4401 = vadd.f32 %v4397, %v4399
    %v4402 = vadd.f32 %v4265, %v4334
    %v4403 = vadd.f32 %v4266, %v4338
    %v4404 = vxor.u32 %v4402, 2147483648
    %v4405 = vxor.u32 %v4403, 2147483648
    %v4406 = vmul.f32 %v4404, 1.442695
    %v4407 = vpow.pop %v4406
    %v4408 = vmul.f32 %v4405, 1.442695
    %v4409 = vpow.pop %v4408
    %v4410 = vadd.f32 %v4407, 1.0
    %v4411 = vadd.f32 %v4409, 1.0
    %v4412 = vrcp.pop %v4410
    %v4413 = vmul.f32 1.0, %v4412
    %v4414 = vrcp.pop %v4411
    %v4415 = vmul.f32 1.0, %v4414
    %4416 = vrot.lane.b32.xlu0 %v4359, 64
    %v4417 = vpop.permute.xlu0 %4416
    %v4419 = vadd.f32 %v4334, %v4417
    %v4421 = vrot.slane %v4419, 1
    %4422 = vrot.lane.b32.xlu0 %v4419, 96
    %v4423 = vpop.permute.xlu0 %4422
    %4424 = vrot.lane.b32.xlu0 %v4421, 96
    %v4425 = vpop.permute.xlu0 %4424
    %v4428 = vmul.f32 %v4413, %v4423
    %v4429 = vmul.f32 %v4415, %v4425
    %4432 = vrot.lane.b32.xlu0 %v4428, 32
    %v4433 = vpop.permute.xlu0 %4432
    %4434 = vrot.lane.b32.xlu0 %v4429, 32
    %v4435 = vpop.permute.xlu0 %4434
    %v4438 = vadd.f32 %v4265, %v4433
    %v4439 = vadd.f32 %v4266, %v4435
    %v4440 = vtanh.pop %v4438
    %v4441 = vtanh.pop %v4439
    %v4442 = vsub.f32 1.0, %v4413
    %v4443 = vsub.f32 1.0, %v4415
    %4446 = vrot.lane.b32.xlu0 %v4440, 112
    %v4447 = vpop.permute.xlu0 %4446
    %4448 = vrot.lane.b32.xlu0 %v4441, 112
    %v4449 = vpop.permute.xlu0 %4448
    %v4452 = vmul.f32 %v4442, %v4447
    %v4453 = vmul.f32 %v4443, %v4449
    %v4454 = vmul.f32 %v4413, 0.0
    %v4455 = vmul.f32 %v4415, 0.0
    %v4456 = vadd.f32 %v4452, %v4454
    %v4457 = vadd.f32 %v4453, %v4455
    %v4460 = vrot.slane %v4401, 7
    %v4461 = vsel %vm129, %v4460, %v4400
    %4462 = vrot.lane.b32.xlu0 %v4461, 112
    %v4463 = vpop.permute.xlu0 %4462
    %v4465 = vmul.f32 %v1173, %v4463
    %v4466 = vadd.f32 %v4465, %v1189
    %v4469 = vrot.slane %v4457, 7
    %v4470 = vsel %vm129, %v4469, %v4456
    %4471 = vrot.lane.b32.xlu0 %v4470, 64
    %v4472 = vpop.permute.xlu0 %4471
    %v4474 = vmul.f32 %v1193, %v4472
    %v4475 = vadd.f32 %v4474, %v1207
    %v4476 = vmul.f32 %v1173, %v4466
    %v4479 = vunpack.c.l.s4 1966171168
    %v4480 = vunpack.c.0.s8 %v4479
    %v4481 = vlaneseq
    %v4482 = vshrl.u32 %v4481, 7
    %v4483 = vsub.s32 %v4480, %v4482
    %v4484 = vrot.slane %v4476, %v4483
    %v4485 = vcombine.high %v4484, %v4484
    %v4487 = vunpack.c.l.s4 1966171168
    %v4488 = vunpack.c.0.s8 %v4487
    %v4489 = vlaneseq
    %v4490 = vshrl.u32 %v4489, 7
    %v4491 = vsub.s32 %v4488, %v4490
    %v4492 = vrot.slane %v4484, %v4491
    %v4494 = vunpack.c.l.s4 1966171168
    %v4495 = vunpack.c.0.s8 %v4494
    %v4496 = vlaneseq
    %v4497 = vshrl.u32 %v4496, 7
    %v4498 = vsub.s32 %v4495, %v4497
    %v4499 = vrot.slane %v4485, %v4498
    %4502 = vst.msk [vmem:[#allocation13] sm:$0x1] %vm1235, %v4492
    %4503 = vst.msk [vmem:[#allocation13 + $0x8] sm:$0x1] %vm1235, %v4499
    %v4504 = vmul.f32 %v1193, %v4475
    %v4507 = vunpack.c.l.s4 1966171168
    %v4508 = vunpack.c.0.s8 %v4507
    %v4509 = vlaneseq
    %v4510 = vshrl.u32 %v4509, 7
    %v4511 = vsub.s32 %v4508, %v4510
    %v4512 = vrot.slane %v4504, %v4511
    %v4513 = vcombine.high %v4512, %v4512
    %v4515 = vunpack.c.l.s4 1966171168
    %v4516 = vunpack.c.0.s8 %v4515
    %v4517 = vlaneseq
    %v4518 = vshrl.u32 %v4517, 7
    %v4519 = vsub.s32 %v4516, %v4518
    %v4520 = vrot.slane %v4512, %v4519
    %v4522 = vunpack.c.l.s4 1966171168
    %v4523 = vunpack.c.0.s8 %v4522
    %v4524 = vlaneseq
    %v4525 = vshrl.u32 %v4524, 7
    %v4526 = vsub.s32 %v4523, %v4525
    %v4527 = vrot.slane %v4513, %v4526
    %v4528 = vlaneseq
    %v4529 = vshrl.u32 %v4528, 7
    %v4530 = vsub.s32 0, %v4529
    %v4531 = vrot.slane %v4520, %v4530
    %v4532 = vlaneseq
    %v4533 = vshrl.u32 %v4532, 7
    %v4534 = vsub.s32 0, %v4533
    %v4535 = vrot.slane %v4527, %v4534
    %4536 = vrot.lane.b32.xlu0 %v4531, 16
    %v4537 = vpop.permute.xlu0 %4536
    %4538 = vrot.lane.b32.xlu0 %v4535, 16
    %v4539 = vpop.permute.xlu0 %4538
    %4542 = vst.msk [vmem:[#allocation13 + $0x7] sm:$0x1] %vm1276, %v4537
    %4543 = vst.msk [vmem:[#allocation13 + $0xf] sm:$0x1] %vm1276, %v4539
    %4545 = vrot.lane.b32.xlu0 %v4475, 16
    %v4546 = vpop.permute.xlu0 %4545
    %v4548 = vsel %vm1283, %v4466, %v4546
    %v4549 = vld [vmem:[#allocation2 + $0x1] sm:$0x1]
    %v4550 = vld [vmem:[#allocation2 + $0x9] sm:$0x1]
    %v4551 = vld [vmem:[#allocation2 + $0x6] sm:$0x1]
    %v4552 = vld [vmem:[#allocation2 + $0xe] sm:$0x1]
    %v4554 = vsel %vm131, %v4548, 0
    %4556 = vmatprep.subr.mxu0 0.0
    %4557 = vmatpush1.msra.mxu0 %v4258
    %4558 = vmatprep.subr.mxu0 0.0
    %4559 = vmatpush1.msra.mxu0 %v4259
    %4560 = vmatprep.subr.mxu0 0.0
    %4561 = vmatpush1.msra.mxu0 %v4260
    %4562 = vmatprep.subr.mxu0 0.0
    %4563 = vmatpush1.msra.mxu0 %v4261
    %4564 = vmatprep.subr.mxu0 0.0
    %4565 = vmatpush1.msra.mxu0 0.0
    %4566 = vmatprep.subr.mxu0 0.0
    %4567 = vmatpush1.msra.mxu0 0.0
    %4568 = vmatprep.subr.mxu0 0.0
    %4569 = vmatpush1.msra.mxu0 0.0
    %4570 = vmatprep.subr.mxu0 0.0
    %4571 = vmatpush1.msra.mxu0 0.0
    %4572 = vmatprep.subr.mxu0 0.0
    %4573 = vmatpush1.msra.mxu0 0.0
    %4574 = vmatprep.subr.mxu0 0.0
    %4575 = vmatpush1.msra.mxu0 0.0
    %4576 = vmatprep.subr.mxu0 0.0
    %4577 = vmatpush1.msra.mxu0 0.0
    %4578 = vmatprep.subr.mxu0 0.0
    %4579 = vmatpush1.msra.mxu0 0.0
    %4580 = vmatprep.subr.mxu0 0.0
    %4581 = vmatpush1.msra.mxu0 0.0
    %4582 = vmatprep.subr.mxu0 0.0
    %4583 = vmatpush1.msra.mxu0 0.0
    %4584 = vmatprep.subr.mxu0 0.0
    %4585 = vmatpush1.msra.mxu0 0.0
    %4586 = vmatprep.subr.mxu0 0.0
    %4587 = vmatpush1.msra.mxu0 0.0
    %4588 = vmatprep.subr.mxu0 0.0
    %4589 = vmatpush1.msra.mxu0 0.0
    %4590 = vmatprep.subr.mxu0 0.0
    %4591 = vmatpush1.msra.mxu0 0.0
    %4592 = vmatprep.subr.mxu0 0.0
    %4593 = vmatpush1.msra.mxu0 0.0
    %4594 = vmatprep.subr.mxu0 0.0
    %4595 = vmatpush1.msra.mxu0 0.0
    %4596 = vmatprep.subr.mxu0 0.0
    %4597 = vmatpush1.msra.mxu0 0.0
    %4598 = vmatprep.subr.mxu0 0.0
    %4599 = vmatpush1.msra.mxu0 0.0
    %4600 = vmatprep.subr.mxu0 0.0
    %4601 = vmatpush1.msra.mxu0 0.0
    %4602 = vmatprep.subr.mxu0 0.0
    %4603 = vmatpush1.msra.mxu0 0.0
    %4604 = vmatprep.subr.mxu0 0.0
    %4605 = vmatpush1.msra.mxu0 0.0
    %4606 = vmatprep.subr.mxu0 0.0
    %4607 = vmatpush1.msra.mxu0 0.0
    %4608 = vmatprep.subr.mxu0 0.0
    %4609 = vmatpush1.msra.mxu0 0.0
    %4610 = vmatprep.subr.mxu0 0.0
    %4611 = vmatpush1.msra.mxu0 0.0
    %4612 = vmatprep.subr.mxu0 0.0
    %4613 = vmatpush1.msra.mxu0 0.0
    %4614 = vmatprep.subr.mxu0 0.0
    %4615 = vmatpush1.msra.mxu0 0.0
    %4616 = vmatprep.subr.mxu0 0.0
    %4617 = vmatpush1.msra.mxu0 0.0
    %4618 = vmatprep.subr.mxu0 0.0
    %4619 = vmatpush1.msra.mxu0 0.0
    %4620 = vmatprep.mubr.f32.mxu0 0.0
    %4621 = vmatmul.mubr.f32.gmra.mrb[0].mxu0 %v4554
    %v4622 = vpop.f32.mrb[0].mxu0
    %v4623 = vadd.f32 0.0, %v4622
    %v4624 = vpop.f32.mrb[0].mxu0
    %4625 = vdwg.mxu0
    %v4627 = vrot.slane %v4623, 1
    %v4630 = vadd.f32 %v4549, %v4623
    %v4631 = vadd.f32 %v4550, %v4627
    %v4632 = vxor.u32 %v4630, 2147483648
    %v4633 = vxor.u32 %v4631, 2147483648
    %v4634 = vmul.f32 %v4632, 1.442695
    %v4635 = vpow.pop %v4634
    %v4636 = vmul.f32 %v4633, 1.442695
    %v4637 = vpow.pop %v4636
    %v4638 = vadd.f32 %v4635, 1.0
    %v4639 = vadd.f32 %v4637, 1.0
    %v4640 = vrcp.pop %v4638
    %v4641 = vmul.f32 1.0, %v4640
    %v4642 = vrcp.pop %v4639
    %v4643 = vmul.f32 1.0, %v4642
    %v4644 = vadd.f32 %v4623, %v4361
    %v4646 = vrot.slane %v4644, 1
    %4647 = vrot.lane.b32.xlu0 %v4644, 96
    %v4648 = vpop.permute.xlu0 %4647
    %4649 = vrot.lane.b32.xlu0 %v4646, 96
    %v4650 = vpop.permute.xlu0 %4649
    %v4653 = vmul.f32 %v4641, %v4648
    %v4654 = vmul.f32 %v4643, %v4650
    %4657 = vrot.lane.b32.xlu0 %v4653, 32
    %v4658 = vpop.permute.xlu0 %4657
    %4659 = vrot.lane.b32.xlu0 %v4654, 32
    %v4660 = vpop.permute.xlu0 %4659
    %v4663 = vadd.f32 %v4549, %v4658
    %v4664 = vadd.f32 %v4550, %v4660
    %v4665 = vtanh.pop %v4663
    %v4666 = vtanh.pop %v4664
    %v4667 = vsub.f32 1.0, %v4641
    %v4668 = vsub.f32 1.0, %v4643
    %4671 = vrot.lane.b32.xlu0 %v4665, 112
    %v4672 = vpop.permute.xlu0 %4671
    %4673 = vrot.lane.b32.xlu0 %v4666, 112
    %v4674 = vpop.permute.xlu0 %4673
    %v4677 = vmul.f32 %v4667, %v4672
    %v4678 = vmul.f32 %v4668, %v4674
    %v4679 = vrot.slane %v4548, 1
    %4680 = vrot.lane.b32.xlu0 %v4548, 16
    %v4681 = vpop.permute.xlu0 %4680
    %4682 = vrot.lane.b32.xlu0 %v4679, 16
    %v4683 = vpop.permute.xlu0 %4682
    %v4686 = vmul.f32 %v4641, %v4681
    %v4687 = vmul.f32 %v4643, %v4683
    %v4688 = vadd.f32 %v4677, %v4686
    %v4689 = vadd.f32 %v4678, %v4687
    %v4690 = vadd.f32 %v4551, %v4623
    %v4691 = vadd.f32 %v4552, %v4627
    %v4692 = vxor.u32 %v4690, 2147483648
    %v4693 = vxor.u32 %v4691, 2147483648
    %v4694 = vmul.f32 %v4692, 1.442695
    %v4695 = vpow.pop %v4694
    %v4696 = vmul.f32 %v4693, 1.442695
    %v4697 = vpow.pop %v4696
    %v4698 = vadd.f32 %v4695, 1.0
    %v4699 = vadd.f32 %v4697, 1.0
    %v4700 = vrcp.pop %v4698
    %v4701 = vmul.f32 1.0, %v4700
    %v4702 = vrcp.pop %v4699
    %v4703 = vmul.f32 1.0, %v4702
    %v4704 = vadd.f32 %v4623, %v4417
    %v4706 = vrot.slane %v4704, 1
    %4707 = vrot.lane.b32.xlu0 %v4704, 96
    %v4708 = vpop.permute.xlu0 %4707
    %4709 = vrot.lane.b32.xlu0 %v4706, 96
    %v4710 = vpop.permute.xlu0 %4709
    %v4713 = vmul.f32 %v4701, %v4708
    %v4714 = vmul.f32 %v4703, %v4710
    %4717 = vrot.lane.b32.xlu0 %v4713, 32
    %v4718 = vpop.permute.xlu0 %4717
    %4719 = vrot.lane.b32.xlu0 %v4714, 32
    %v4720 = vpop.permute.xlu0 %4719
    %v4723 = vadd.f32 %v4551, %v4718
    %v4724 = vadd.f32 %v4552, %v4720
    %v4725 = vtanh.pop %v4723
    %v4726 = vtanh.pop %v4724
    %v4727 = vsub.f32 1.0, %v4701
    %v4728 = vsub.f32 1.0, %v4703
    %4731 = vrot.lane.b32.xlu0 %v4725, 112
    %v4732 = vpop.permute.xlu0 %4731
    %4733 = vrot.lane.b32.xlu0 %v4726, 112
    %v4734 = vpop.permute.xlu0 %4733
    %v4737 = vmul.f32 %v4727, %v4732
    %v4738 = vmul.f32 %v4728, %v4734
    %4739 = vrot.lane.b32.xlu0 %v4548, 48
    %v4740 = vpop.permute.xlu0 %4739
    %4741 = vrot.lane.b32.xlu0 %v4679, 48
    %v4742 = vpop.permute.xlu0 %4741
    %v4745 = vmul.f32 %v4701, %v4740
    %v4746 = vmul.f32 %v4703, %v4742
    %v4747 = vadd.f32 %v4737, %v4745
    %v4748 = vadd.f32 %v4738, %v4746
    %v4751 = vrot.slane %v4689, 7
    %v4752 = vsel %vm129, %v4751, %v4688
    %4753 = vrot.lane.b32.xlu0 %v4752, 112
    %v4754 = vpop.permute.xlu0 %4753
    %v4756 = vmul.f32 %v1487, %v4754
    %v4757 = vmul.f32 %v1499, %v4548
    %v4758 = vadd.f32 %v4756, %v4757
    %v4761 = vrot.slane %v4748, 7
    %v4762 = vsel %vm129, %v4761, %v4747
    %4763 = vrot.lane.b32.xlu0 %v4762, 64
    %v4764 = vpop.permute.xlu0 %4763
    %v4766 = vmul.f32 %v1505, %v4764
    %v4767 = vmul.f32 %v1517, %v4548
    %4769 = vrot.lane.b32.xlu0 %v4767, 112
    %v4770 = vpop.permute.xlu0 %4769
    %v4772 = vadd.f32 %v4766, %v4770
    %v4773 = vmul.f32 %v1487, %v4758
    %v4776 = vunpack.c.l.s4 1966171168
    %v4777 = vunpack.c.0.s8 %v4776
    %v4778 = vlaneseq
    %v4779 = vshrl.u32 %v4778, 7
    %v4780 = vsub.s32 %v4777, %v4779
    %v4781 = vrot.slane %v4773, %v4780
    %v4782 = vcombine.high %v4781, %v4781
    %v4784 = vunpack.c.l.s4 1966171168
    %v4785 = vunpack.c.0.s8 %v4784
    %v4786 = vlaneseq
    %v4787 = vshrl.u32 %v4786, 7
    %v4788 = vsub.s32 %v4785, %v4787
    %v4789 = vrot.slane %v4781, %v4788
    %v4791 = vunpack.c.l.s4 1966171168
    %v4792 = vunpack.c.0.s8 %v4791
    %v4793 = vlaneseq
    %v4794 = vshrl.u32 %v4793, 7
    %v4795 = vsub.s32 %v4792, %v4794
    %v4796 = vrot.slane %v4782, %v4795
    %4799 = vst.msk [vmem:[#allocation13 + $0x1] sm:$0x1] %vm1235, %v4789
    %4800 = vst.msk [vmem:[#allocation13 + $0x9] sm:$0x1] %vm1235, %v4796
    %v4801 = vmul.f32 %v1505, %v4772
    %v4804 = vunpack.c.l.s4 1966171168
    %v4805 = vunpack.c.0.s8 %v4804
    %v4806 = vlaneseq
    %v4807 = vshrl.u32 %v4806, 7
    %v4808 = vsub.s32 %v4805, %v4807
    %v4809 = vrot.slane %v4801, %v4808
    %v4810 = vcombine.high %v4809, %v4809
    %v4812 = vunpack.c.l.s4 1966171168
    %v4813 = vunpack.c.0.s8 %v4812
    %v4814 = vlaneseq
    %v4815 = vshrl.u32 %v4814, 7
    %v4816 = vsub.s32 %v4813, %v4815
    %v4817 = vrot.slane %v4809, %v4816
    %v4819 = vunpack.c.l.s4 1966171168
    %v4820 = vunpack.c.0.s8 %v4819
    %v4821 = vlaneseq
    %v4822 = vshrl.u32 %v4821, 7
    %v4823 = vsub.s32 %v4820, %v4822
    %v4824 = vrot.slane %v4810, %v4823
    %v4825 = vlaneseq
    %v4826 = vshrl.u32 %v4825, 7
    %v4827 = vsub.s32 0, %v4826
    %v4828 = vrot.slane %v4817, %v4827
    %v4829 = vlaneseq
    %v4830 = vshrl.u32 %v4829, 7
    %v4831 = vsub.s32 0, %v4830
    %v4832 = vrot.slane %v4824, %v4831
    %4833 = vrot.lane.b32.xlu0 %v4828, 16
    %v4834 = vpop.permute.xlu0 %4833
    %4835 = vrot.lane.b32.xlu0 %v4832, 16
    %v4836 = vpop.permute.xlu0 %4835
    %4839 = vst.msk [vmem:[#allocation13 + $0x6] sm:$0x1] %vm1276, %v4834
    %4840 = vst.msk [vmem:[#allocation13 + $0xe] sm:$0x1] %vm1276, %v4836
    %4842 = vrot.lane.b32.xlu0 %v4772, 16
    %v4843 = vpop.permute.xlu0 %4842
    %v4845 = vsel %vm1283, %v4758, %v4843
    %v4846 = vld [vmem:[#allocation2 + $0x2] sm:$0x1]
    %v4847 = vld [vmem:[#allocation2 + $0xa] sm:$0x1]
    %v4848 = vld [vmem:[#allocation2 + $0x5] sm:$0x1]
    %v4849 = vld [vmem:[#allocation2 + $0xd] sm:$0x1]
    %v4851 = vsel %vm131, %v4845, 0
    %4853 = vmatprep.subr.mxu0 0.0
    %4854 = vmatpush1.msra.mxu0 %v4258
    %4855 = vmatprep.subr.mxu0 0.0
    %4856 = vmatpush1.msra.mxu0 %v4259
    %4857 = vmatprep.subr.mxu0 0.0
    %4858 = vmatpush1.msra.mxu0 %v4260
    %4859 = vmatprep.subr.mxu0 0.0
    %4860 = vmatpush1.msra.mxu0 %v4261
    %4861 = vmatprep.subr.mxu0 0.0
    %4862 = vmatpush1.msra.mxu0 0.0
    %4863 = vmatprep.subr.mxu0 0.0
    %4864 = vmatpush1.msra.mxu0 0.0
    %4865 = vmatprep.subr.mxu0 0.0
    %4866 = vmatpush1.msra.mxu0 0.0
    %4867 = vmatprep.subr.mxu0 0.0
    %4868 = vmatpush1.msra.mxu0 0.0
    %4869 = vmatprep.subr.mxu0 0.0
    %4870 = vmatpush1.msra.mxu0 0.0
    %4871 = vmatprep.subr.mxu0 0.0
    %4872 = vmatpush1.msra.mxu0 0.0
    %4873 = vmatprep.subr.mxu0 0.0
    %4874 = vmatpush1.msra.mxu0 0.0
    %4875 = vmatprep.subr.mxu0 0.0
    %4876 = vmatpush1.msra.mxu0 0.0
    %4877 = vmatprep.subr.mxu0 0.0
    %4878 = vmatpush1.msra.mxu0 0.0
    %4879 = vmatprep.subr.mxu0 0.0
    %4880 = vmatpush1.msra.mxu0 0.0
    %4881 = vmatprep.subr.mxu0 0.0
    %4882 = vmatpush1.msra.mxu0 0.0
    %4883 = vmatprep.subr.mxu0 0.0
    %4884 = vmatpush1.msra.mxu0 0.0
    %4885 = vmatprep.subr.mxu0 0.0
    %4886 = vmatpush1.msra.mxu0 0.0
    %4887 = vmatprep.subr.mxu0 0.0
    %4888 = vmatpush1.msra.mxu0 0.0
    %4889 = vmatprep.subr.mxu0 0.0
    %4890 = vmatpush1.msra.mxu0 0.0
    %4891 = vmatprep.subr.mxu0 0.0
    %4892 = vmatpush1.msra.mxu0 0.0
    %4893 = vmatprep.subr.mxu0 0.0
    %4894 = vmatpush1.msra.mxu0 0.0
    %4895 = vmatprep.subr.mxu0 0.0
    %4896 = vmatpush1.msra.mxu0 0.0
    %4897 = vmatprep.subr.mxu0 0.0
    %4898 = vmatpush1.msra.mxu0 0.0
    %4899 = vmatprep.subr.mxu0 0.0
    %4900 = vmatpush1.msra.mxu0 0.0
    %4901 = vmatprep.subr.mxu0 0.0
    %4902 = vmatpush1.msra.mxu0 0.0
    %4903 = vmatprep.subr.mxu0 0.0
    %4904 = vmatpush1.msra.mxu0 0.0
    %4905 = vmatprep.subr.mxu0 0.0
    %4906 = vmatpush1.msra.mxu0 0.0
    %4907 = vmatprep.subr.mxu0 0.0
    %4908 = vmatpush1.msra.mxu0 0.0
    %4909 = vmatprep.subr.mxu0 0.0
    %4910 = vmatpush1.msra.mxu0 0.0
    %4911 = vmatprep.subr.mxu0 0.0
    %4912 = vmatpush1.msra.mxu0 0.0
    %4913 = vmatprep.subr.mxu0 0.0
    %4914 = vmatpush1.msra.mxu0 0.0
    %4915 = vmatprep.subr.mxu0 0.0
    %4916 = vmatpush1.msra.mxu0 0.0
    %4917 = vmatprep.mubr.f32.mxu0 0.0
    %4918 = vmatmul.mubr.f32.gmra.mrb[0].mxu0 %v4851
    %v4919 = vpop.f32.mrb[0].mxu0
    %v4920 = vadd.f32 0.0, %v4919
    %v4921 = vpop.f32.mrb[0].mxu0
    %4922 = vdwg.mxu0
    %v4924 = vrot.slane %v4920, 1
    %v4927 = vadd.f32 %v4846, %v4920
    %v4928 = vadd.f32 %v4847, %v4924
    %v4929 = vxor.u32 %v4927, 2147483648
    %v4930 = vxor.u32 %v4928, 2147483648
    %v4931 = vmul.f32 %v4929, 1.442695
    %v4932 = vpow.pop %v4931
    %v4933 = vmul.f32 %v4930, 1.442695
    %v4934 = vpow.pop %v4933
    %v4935 = vadd.f32 %v4932, 1.0
    %v4936 = vadd.f32 %v4934, 1.0
    %v4937 = vrcp.pop %v4935
    %v4938 = vmul.f32 1.0, %v4937
    %v4939 = vrcp.pop %v4936
    %v4940 = vmul.f32 1.0, %v4939
    %v4941 = vadd.f32 %v4920, %v4361
    %v4943 = vrot.slane %v4941, 1
    %4944 = vrot.lane.b32.xlu0 %v4941, 96
    %v4945 = vpop.permute.xlu0 %4944
    %4946 = vrot.lane.b32.xlu0 %v4943, 96
    %v4947 = vpop.permute.xlu0 %4946
    %v4950 = vmul.f32 %v4938, %v4945
    %v4951 = vmul.f32 %v4940, %v4947
    %4954 = vrot.lane.b32.xlu0 %v4950, 32
    %v4955 = vpop.permute.xlu0 %4954
    %4956 = vrot.lane.b32.xlu0 %v4951, 32
    %v4957 = vpop.permute.xlu0 %4956
    %v4960 = vadd.f32 %v4846, %v4955
    %v4961 = vadd.f32 %v4847, %v4957
    %v4962 = vtanh.pop %v4960
    %v4963 = vtanh.pop %v4961
    %v4964 = vsub.f32 1.0, %v4938
    %v4965 = vsub.f32 1.0, %v4940
    %4968 = vrot.lane.b32.xlu0 %v4962, 112
    %v4969 = vpop.permute.xlu0 %4968
    %4970 = vrot.lane.b32.xlu0 %v4963, 112
    %v4971 = vpop.permute.xlu0 %4970
    %v4974 = vmul.f32 %v4964, %v4969
    %v4975 = vmul.f32 %v4965, %v4971
    %v4976 = vrot.slane %v4845, 1
    %4977 = vrot.lane.b32.xlu0 %v4845, 16
    %v4978 = vpop.permute.xlu0 %4977
    %4979 = vrot.lane.b32.xlu0 %v4976, 16
    %v4980 = vpop.permute.xlu0 %4979
    %v4983 = vmul.f32 %v4938, %v4978
    %v4984 = vmul.f32 %v4940, %v4980
    %v4985 = vadd.f32 %v4974, %v4983
    %v4986 = vadd.f32 %v4975, %v4984
    %v4987 = vadd.f32 %v4848, %v4920
    %v4988 = vadd.f32 %v4849, %v4924
    %v4989 = vxor.u32 %v4987, 2147483648
    %v4990 = vxor.u32 %v4988, 2147483648
    %v4991 = vmul.f32 %v4989, 1.442695
    %v4992 = vpow.pop %v4991
    %v4993 = vmul.f32 %v4990, 1.442695
    %v4994 = vpow.pop %v4993
    %v4995 = vadd.f32 %v4992, 1.0
    %v4996 = vadd.f32 %v4994, 1.0
    %v4997 = vrcp.pop %v4995
    %v4998 = vmul.f32 1.0, %v4997
    %v4999 = vrcp.pop %v4996
    %v5000 = vmul.f32 1.0, %v4999
    %v5001 = vadd.f32 %v4920, %v4417
    %v5003 = vrot.slane %v5001, 1
    %5004 = vrot.lane.b32.xlu0 %v5001, 96
    %v5005 = vpop.permute.xlu0 %5004
    %5006 = vrot.lane.b32.xlu0 %v5003, 96
    %v5007 = vpop.permute.xlu0 %5006
    %v5010 = vmul.f32 %v4998, %v5005
    %v5011 = vmul.f32 %v5000, %v5007
    %5014 = vrot.lane.b32.xlu0 %v5010, 32
    %v5015 = vpop.permute.xlu0 %5014
    %5016 = vrot.lane.b32.xlu0 %v5011, 32
    %v5017 = vpop.permute.xlu0 %5016
    %v5020 = vadd.f32 %v4848, %v5015
    %v5021 = vadd.f32 %v4849, %v5017
    %v5022 = vtanh.pop %v5020
    %v5023 = vtanh.pop %v5021
    %v5024 = vsub.f32 1.0, %v4998
    %v5025 = vsub.f32 1.0, %v5000
    %5028 = vrot.lane.b32.xlu0 %v5022, 112
    %v5029 = vpop.permute.xlu0 %5028
    %5030 = vrot.lane.b32.xlu0 %v5023, 112
    %v5031 = vpop.permute.xlu0 %5030
    %v5034 = vmul.f32 %v5024, %v5029
    %v5035 = vmul.f32 %v5025, %v5031
    %5036 = vrot.lane.b32.xlu0 %v4845, 48
    %v5037 = vpop.permute.xlu0 %5036
    %5038 = vrot.lane.b32.xlu0 %v4976, 48
    %v5039 = vpop.permute.xlu0 %5038
    %v5042 = vmul.f32 %v4998, %v5037
    %v5043 = vmul.f32 %v5000, %v5039
    %v5044 = vadd.f32 %v5034, %v5042
    %v5045 = vadd.f32 %v5035, %v5043
    %v5048 = vrot.slane %v4986, 7
    %v5049 = vsel %vm129, %v5048, %v4985
    %5050 = vrot.lane.b32.xlu0 %v5049, 112
    %v5051 = vpop.permute.xlu0 %5050
    %v5053 = vmul.f32 %v1800, %v5051
    %v5054 = vmul.f32 %v1812, %v4845
    %v5055 = vadd.f32 %v5053, %v5054
    %v5058 = vrot.slane %v5045, 7
    %v5059 = vsel %vm129, %v5058, %v5044
    %5060 = vrot.lane.b32.xlu0 %v5059, 64
    %v5061 = vpop.permute.xlu0 %5060
    %v5063 = vmul.f32 %v1818, %v5061
    %v5064 = vmul.f32 %v1830, %v4845
    %5066 = vrot.lane.b32.xlu0 %v5064, 112
    %v5067 = vpop.permute.xlu0 %5066
    %v5069 = vadd.f32 %v5063, %v5067
    %v5070 = vmul.f32 %v1800, %v5055
    %v5073 = vunpack.c.l.s4 1966171168
    %v5074 = vunpack.c.0.s8 %v5073
    %v5075 = vlaneseq
    %v5076 = vshrl.u32 %v5075, 7
    %v5077 = vsub.s32 %v5074, %v5076
    %v5078 = vrot.slane %v5070, %v5077
    %v5079 = vcombine.high %v5078, %v5078
    %v5081 = vunpack.c.l.s4 1966171168
    %v5082 = vunpack.c.0.s8 %v5081
    %v5083 = vlaneseq
    %v5084 = vshrl.u32 %v5083, 7
    %v5085 = vsub.s32 %v5082, %v5084
    %v5086 = vrot.slane %v5078, %v5085
    %v5088 = vunpack.c.l.s4 1966171168
    %v5089 = vunpack.c.0.s8 %v5088
    %v5090 = vlaneseq
    %v5091 = vshrl.u32 %v5090, 7
    %v5092 = vsub.s32 %v5089, %v5091
    %v5093 = vrot.slane %v5079, %v5092
    %5096 = vst.msk [vmem:[#allocation13 + $0x2] sm:$0x1] %vm1235, %v5086
    %5097 = vst.msk [vmem:[#allocation13 + $0xa] sm:$0x1] %vm1235, %v5093
    %v5098 = vmul.f32 %v1818, %v5069
    %v5101 = vunpack.c.l.s4 1966171168
    %v5102 = vunpack.c.0.s8 %v5101
    %v5103 = vlaneseq
    %v5104 = vshrl.u32 %v5103, 7
    %v5105 = vsub.s32 %v5102, %v5104
    %v5106 = vrot.slane %v5098, %v5105
    %v5107 = vcombine.high %v5106, %v5106
    %v5109 = vunpack.c.l.s4 1966171168
    %v5110 = vunpack.c.0.s8 %v5109
    %v5111 = vlaneseq
    %v5112 = vshrl.u32 %v5111, 7
    %v5113 = vsub.s32 %v5110, %v5112
    %v5114 = vrot.slane %v5106, %v5113
    %v5116 = vunpack.c.l.s4 1966171168
    %v5117 = vunpack.c.0.s8 %v5116
    %v5118 = vlaneseq
    %v5119 = vshrl.u32 %v5118, 7
    %v5120 = vsub.s32 %v5117, %v5119
    %v5121 = vrot.slane %v5107, %v5120
    %v5122 = vlaneseq
    %v5123 = vshrl.u32 %v5122, 7
    %v5124 = vsub.s32 0, %v5123
    %v5125 = vrot.slane %v5114, %v5124
    %v5126 = vlaneseq
    %v5127 = vshrl.u32 %v5126, 7
    %v5128 = vsub.s32 0, %v5127
    %v5129 = vrot.slane %v5121, %v5128
    %5130 = vrot.lane.b32.xlu0 %v5125, 16
    %v5131 = vpop.permute.xlu0 %5130
    %5132 = vrot.lane.b32.xlu0 %v5129, 16
    %v5133 = vpop.permute.xlu0 %5132
    %5136 = vst.msk [vmem:[#allocation13 + $0x5] sm:$0x1] %vm1276, %v5131
    %5137 = vst.msk [vmem:[#allocation13 + $0xd] sm:$0x1] %vm1276, %v5133
    %5139 = vrot.lane.b32.xlu0 %v5069, 16
    %v5140 = vpop.permute.xlu0 %5139
    %v5142 = vsel %vm1283, %v5055, %v5140
    %v5143 = vld [vmem:[#allocation2 + $0x3] sm:$0x1]
    %v5144 = vld [vmem:[#allocation2 + $0xb] sm:$0x1]
    %v5145 = vld [vmem:[#allocation2 + $0x4] sm:$0x1]
    %v5146 = vld [vmem:[#allocation2 + $0xc] sm:$0x1]
    %v5148 = vsel %vm131, %v5142, 0
    %5150 = vmatprep.subr.mxu0 0.0
    %5151 = vmatpush1.msra.mxu0 %v4258
    %5152 = vmatprep.subr.mxu0 0.0
    %5153 = vmatpush1.msra.mxu0 %v4259
    %5154 = vmatprep.subr.mxu0 0.0
    %5155 = vmatpush1.msra.mxu0 %v4260
    %5156 = vmatprep.subr.mxu0 0.0
    %5157 = vmatpush1.msra.mxu0 %v4261
    %5158 = vmatprep.subr.mxu0 0.0
    %5159 = vmatpush1.msra.mxu0 0.0
    %5160 = vmatprep.subr.mxu0 0.0
    %5161 = vmatpush1.msra.mxu0 0.0
    %5162 = vmatprep.subr.mxu0 0.0
    %5163 = vmatpush1.msra.mxu0 0.0
    %5164 = vmatprep.subr.mxu0 0.0
    %5165 = vmatpush1.msra.mxu0 0.0
    %5166 = vmatprep.subr.mxu0 0.0
    %5167 = vmatpush1.msra.mxu0 0.0
    %5168 = vmatprep.subr.mxu0 0.0
    %5169 = vmatpush1.msra.mxu0 0.0
    %5170 = vmatprep.subr.mxu0 0.0
    %5171 = vmatpush1.msra.mxu0 0.0
    %5172 = vmatprep.subr.mxu0 0.0
    %5173 = vmatpush1.msra.mxu0 0.0
    %5174 = vmatprep.subr.mxu0 0.0
    %5175 = vmatpush1.msra.mxu0 0.0
    %5176 = vmatprep.subr.mxu0 0.0
    %5177 = vmatpush1.msra.mxu0 0.0
    %5178 = vmatprep.subr.mxu0 0.0
    %5179 = vmatpush1.msra.mxu0 0.0
    %5180 = vmatprep.subr.mxu0 0.0
    %5181 = vmatpush1.msra.mxu0 0.0
    %5182 = vmatprep.subr.mxu0 0.0
    %5183 = vmatpush1.msra.mxu0 0.0
    %5184 = vmatprep.subr.mxu0 0.0
    %5185 = vmatpush1.msra.mxu0 0.0
    %5186 = vmatprep.subr.mxu0 0.0
    %5187 = vmatpush1.msra.mxu0 0.0
    %5188 = vmatprep.subr.mxu0 0.0
    %5189 = vmatpush1.msra.mxu0 0.0
    %5190 = vmatprep.subr.mxu0 0.0
    %5191 = vmatpush1.msra.mxu0 0.0
    %5192 = vmatprep.subr.mxu0 0.0
    %5193 = vmatpush1.msra.mxu0 0.0
    %5194 = vmatprep.subr.mxu0 0.0
    %5195 = vmatpush1.msra.mxu0 0.0
    %5196 = vmatprep.subr.mxu0 0.0
    %5197 = vmatpush1.msra.mxu0 0.0
    %5198 = vmatprep.subr.mxu0 0.0
    %5199 = vmatpush1.msra.mxu0 0.0
    %5200 = vmatprep.subr.mxu0 0.0
    %5201 = vmatpush1.msra.mxu0 0.0
    %5202 = vmatprep.subr.mxu0 0.0
    %5203 = vmatpush1.msra.mxu0 0.0
    %5204 = vmatprep.subr.mxu0 0.0
    %5205 = vmatpush1.msra.mxu0 0.0
    %5206 = vmatprep.subr.mxu0 0.0
    %5207 = vmatpush1.msra.mxu0 0.0
    %5208 = vmatprep.subr.mxu0 0.0
    %5209 = vmatpush1.msra.mxu0 0.0
    %5210 = vmatprep.subr.mxu0 0.0
    %5211 = vmatpush1.msra.mxu0 0.0
    %5212 = vmatprep.subr.mxu0 0.0
    %5213 = vmatpush1.msra.mxu0 0.0
    %5214 = vmatprep.mubr.f32.mxu0 0.0
    %5215 = vmatmul.mubr.f32.gmra.mrb[0].mxu0 %v5148
    %v5216 = vpop.f32.mrb[0].mxu0
    %v5217 = vadd.f32 0.0, %v5216
    %v5218 = vpop.f32.mrb[0].mxu0
    %5219 = vdwg.mxu0
    %v5221 = vrot.slane %v5217, 1
    %v5224 = vadd.f32 %v5143, %v5217
    %v5225 = vadd.f32 %v5144, %v5221
    %v5226 = vxor.u32 %v5224, 2147483648
    %v5227 = vxor.u32 %v5225, 2147483648
    %v5228 = vmul.f32 %v5226, 1.442695
    %v5229 = vpow.pop %v5228
    %v5230 = vmul.f32 %v5227, 1.442695
    %v5231 = vpow.pop %v5230
    %v5232 = vadd.f32 %v5229, 1.0
    %v5233 = vadd.f32 %v5231, 1.0
    %v5234 = vrcp.pop %v5232
    %v5235 = vmul.f32 1.0, %v5234
    %v5236 = vrcp.pop %v5233
    %v5237 = vmul.f32 1.0, %v5236
    %v5238 = vadd.f32 %v5217, %v4361
    %v5240 = vrot.slane %v5238, 1
    %5241 = vrot.lane.b32.xlu0 %v5238, 96
    %v5242 = vpop.permute.xlu0 %5241
    %5243 = vrot.lane.b32.xlu0 %v5240, 96
    %v5244 = vpop.permute.xlu0 %5243
    %v5247 = vmul.f32 %v5235, %v5242
    %v5248 = vmul.f32 %v5237, %v5244
    %5251 = vrot.lane.b32.xlu0 %v5247, 32
    %v5252 = vpop.permute.xlu0 %5251
    %5253 = vrot.lane.b32.xlu0 %v5248, 32
    %v5254 = vpop.permute.xlu0 %5253
    %v5257 = vadd.f32 %v5143, %v5252
    %v5258 = vadd.f32 %v5144, %v5254
    %v5259 = vtanh.pop %v5257
    %v5260 = vtanh.pop %v5258
    %v5261 = vsub.f32 1.0, %v5235
    %v5262 = vsub.f32 1.0, %v5237
    %5265 = vrot.lane.b32.xlu0 %v5259, 112
    %v5266 = vpop.permute.xlu0 %5265
    %5267 = vrot.lane.b32.xlu0 %v5260, 112
    %v5268 = vpop.permute.xlu0 %5267
    %v5271 = vmul.f32 %v5261, %v5266
    %v5272 = vmul.f32 %v5262, %v5268
    %v5273 = vrot.slane %v5142, 1
    %5274 = vrot.lane.b32.xlu0 %v5142, 16
    %v5275 = vpop.permute.xlu0 %5274
    %5276 = vrot.lane.b32.xlu0 %v5273, 16
    %v5277 = vpop.permute.xlu0 %5276
    %v5280 = vmul.f32 %v5235, %v5275
    %v5281 = vmul.f32 %v5237, %v5277
    %v5282 = vadd.f32 %v5271, %v5280
    %v5283 = vadd.f32 %v5272, %v5281
    %v5284 = vadd.f32 %v5145, %v5217
    %v5285 = vadd.f32 %v5146, %v5221
    %v5286 = vxor.u32 %v5284, 2147483648
    %v5287 = vxor.u32 %v5285, 2147483648
    %v5288 = vmul.f32 %v5286, 1.442695
    %v5289 = vpow.pop %v5288
    %v5290 = vmul.f32 %v5287, 1.442695
    %v5291 = vpow.pop %v5290
    %v5292 = vadd.f32 %v5289, 1.0
    %v5293 = vadd.f32 %v5291, 1.0
    %v5294 = vrcp.pop %v5292
    %v5295 = vmul.f32 1.0, %v5294
    %v5296 = vrcp.pop %v5293
    %v5297 = vmul.f32 1.0, %v5296
    %v5298 = vadd.f32 %v5217, %v4417
    %v5300 = vrot.slane %v5298, 1
    %5301 = vrot.lane.b32.xlu0 %v5298, 96
    %v5302 = vpop.permute.xlu0 %5301
    %5303 = vrot.lane.b32.xlu0 %v5300, 96
    %v5304 = vpop.permute.xlu0 %5303
    %v5307 = vmul.f32 %v5295, %v5302
    %v5308 = vmul.f32 %v5297, %v5304
    %5311 = vrot.lane.b32.xlu0 %v5307, 32
    %v5312 = vpop.permute.xlu0 %5311
    %5313 = vrot.lane.b32.xlu0 %v5308, 32
    %v5314 = vpop.permute.xlu0 %5313
    %v5317 = vadd.f32 %v5145, %v5312
    %v5318 = vadd.f32 %v5146, %v5314
    %v5319 = vtanh.pop %v5317
    %v5320 = vtanh.pop %v5318
    %v5321 = vsub.f32 1.0, %v5295
    %v5322 = vsub.f32 1.0, %v5297
    %5325 = vrot.lane.b32.xlu0 %v5319, 112
    %v5326 = vpop.permute.xlu0 %5325
    %5327 = vrot.lane.b32.xlu0 %v5320, 112
    %v5328 = vpop.permute.xlu0 %5327
    %v5331 = vmul.f32 %v5321, %v5326
    %v5332 = vmul.f32 %v5322, %v5328
    %5333 = vrot.lane.b32.xlu0 %v5142, 48
    %v5334 = vpop.permute.xlu0 %5333
    %5335 = vrot.lane.b32.xlu0 %v5273, 48
    %v5336 = vpop.permute.xlu0 %5335
    %v5339 = vmul.f32 %v5295, %v5334
    %v5340 = vmul.f32 %v5297, %v5336
    %v5341 = vadd.f32 %v5331, %v5339
    %v5342 = vadd.f32 %v5332, %v5340
    %v5345 = vrot.slane %v5283, 7
    %v5346 = vsel %vm129, %v5345, %v5282
    %5347 = vrot.lane.b32.xlu0 %v5346, 112
    %v5348 = vpop.permute.xlu0 %5347
    %v5350 = vmul.f32 %v2113, %v5348
    %v5351 = vmul.f32 %v2125, %v5142
    %v5352 = vadd.f32 %v5350, %v5351
    %v5355 = vrot.slane %v5342, 7
    %v5356 = vsel %vm129, %v5355, %v5341
    %5357 = vrot.lane.b32.xlu0 %v5356, 64
    %v5358 = vpop.permute.xlu0 %5357
    %v5360 = vmul.f32 %v2131, %v5358
    %v5361 = vmul.f32 %v2143, %v5142
    %5363 = vrot.lane.b32.xlu0 %v5361, 112
    %v5364 = vpop.permute.xlu0 %5363
    %v5366 = vadd.f32 %v5360, %v5364
    %v5367 = vmul.f32 %v2113, %v5352
    %v5370 = vunpack.c.l.s4 1966171168
    %v5371 = vunpack.c.0.s8 %v5370
    %v5372 = vlaneseq
    %v5373 = vshrl.u32 %v5372, 7
    %v5374 = vsub.s32 %v5371, %v5373
    %v5375 = vrot.slane %v5367, %v5374
    %v5376 = vcombine.high %v5375, %v5375
    %v5378 = vunpack.c.l.s4 1966171168
    %v5379 = vunpack.c.0.s8 %v5378
    %v5380 = vlaneseq
    %v5381 = vshrl.u32 %v5380, 7
    %v5382 = vsub.s32 %v5379, %v5381
    %v5383 = vrot.slane %v5375, %v5382
    %v5385 = vunpack.c.l.s4 1966171168
    %v5386 = vunpack.c.0.s8 %v5385
    %v5387 = vlaneseq
    %v5388 = vshrl.u32 %v5387, 7
    %v5389 = vsub.s32 %v5386, %v5388
    %v5390 = vrot.slane %v5376, %v5389
    %5393 = vst.msk [vmem:[#allocation13 + $0x3] sm:$0x1] %vm1235, %v5383
    %5394 = vst.msk [vmem:[#allocation13 + $0xb] sm:$0x1] %vm1235, %v5390
    %v5395 = vmul.f32 %v2131, %v5366
    %v5398 = vunpack.c.l.s4 1966171168
    %v5399 = vunpack.c.0.s8 %v5398
    %v5400 = vlaneseq
    %v5401 = vshrl.u32 %v5400, 7
    %v5402 = vsub.s32 %v5399, %v5401
    %v5403 = vrot.slane %v5395, %v5402
    %v5404 = vcombine.high %v5403, %v5403
    %v5406 = vunpack.c.l.s4 1966171168
    %v5407 = vunpack.c.0.s8 %v5406
    %v5408 = vlaneseq
    %v5409 = vshrl.u32 %v5408, 7
    %v5410 = vsub.s32 %v5407, %v5409
    %v5411 = vrot.slane %v5403, %v5410
    %v5413 = vunpack.c.l.s4 1966171168
    %v5414 = vunpack.c.0.s8 %v5413
    %v5415 = vlaneseq
    %v5416 = vshrl.u32 %v5415, 7
    %v5417 = vsub.s32 %v5414, %v5416
    %v5418 = vrot.slane %v5404, %v5417
    %v5419 = vlaneseq
    %v5420 = vshrl.u32 %v5419, 7
    %v5421 = vsub.s32 0, %v5420
    %v5422 = vrot.slane %v5411, %v5421
    %v5423 = vlaneseq
    %v5424 = vshrl.u32 %v5423, 7
    %v5425 = vsub.s32 0, %v5424
    %v5426 = vrot.slane %v5418, %v5425
    %5427 = vrot.lane.b32.xlu0 %v5422, 16
    %v5428 = vpop.permute.xlu0 %5427
    %5429 = vrot.lane.b32.xlu0 %v5426, 16
    %v5430 = vpop.permute.xlu0 %5429
    %5433 = vst.msk [vmem:[#allocation13 + $0x4] sm:$0x1] %vm1276, %v5428
    %5434 = vst.msk [vmem:[#allocation13 + $0xc] sm:$0x1] %vm1276, %v5430
    %5436 = vrot.lane.b32.xlu0 %v5366, 16
    %v5437 = vpop.permute.xlu0 %5436
    %v5439 = vsel %vm1283, %v5352, %v5437
    %v5440 = vld [vmem:[#allocation2 + $0x4] sm:$0x1]
    %v5441 = vld [vmem:[#allocation2 + $0xc] sm:$0x1]
    %v5442 = vld [vmem:[#allocation2 + $0x3] sm:$0x1]
    %v5443 = vld [vmem:[#allocation2 + $0xb] sm:$0x1]
    %v5445 = vsel %vm131, %v5439, 0
    %5447 = vmatprep.subr.mxu0 0.0
    %5448 = vmatpush1.msra.mxu0 %v4258
    %5449 = vmatprep.subr.mxu0 0.0
    %5450 = vmatpush1.msra.mxu0 %v4259
    %5451 = vmatprep.subr.mxu0 0.0
    %5452 = vmatpush1.msra.mxu0 %v4260
    %5453 = vmatprep.subr.mxu0 0.0
    %5454 = vmatpush1.msra.mxu0 %v4261
    %5455 = vmatprep.subr.mxu0 0.0
    %5456 = vmatpush1.msra.mxu0 0.0
    %5457 = vmatprep.subr.mxu0 0.0
    %5458 = vmatpush1.msra.mxu0 0.0
    %5459 = vmatprep.subr.mxu0 0.0
    %5460 = vmatpush1.msra.mxu0 0.0
    %5461 = vmatprep.subr.mxu0 0.0
    %5462 = vmatpush1.msra.mxu0 0.0
    %5463 = vmatprep.subr.mxu0 0.0
    %5464 = vmatpush1.msra.mxu0 0.0
    %5465 = vmatprep.subr.mxu0 0.0
    %5466 = vmatpush1.msra.mxu0 0.0
    %5467 = vmatprep.subr.mxu0 0.0
    %5468 = vmatpush1.msra.mxu0 0.0
    %5469 = vmatprep.subr.mxu0 0.0
    %5470 = vmatpush1.msra.mxu0 0.0
    %5471 = vmatprep.subr.mxu0 0.0
    %5472 = vmatpush1.msra.mxu0 0.0
    %5473 = vmatprep.subr.mxu0 0.0
    %5474 = vmatpush1.msra.mxu0 0.0
    %5475 = vmatprep.subr.mxu0 0.0
    %5476 = vmatpush1.msra.mxu0 0.0
    %5477 = vmatprep.subr.mxu0 0.0
    %5478 = vmatpush1.msra.mxu0 0.0
    %5479 = vmatprep.subr.mxu0 0.0
    %5480 = vmatpush1.msra.mxu0 0.0
    %5481 = vmatprep.subr.mxu0 0.0
    %5482 = vmatpush1.msra.mxu0 0.0
    %5483 = vmatprep.subr.mxu0 0.0
    %5484 = vmatpush1.msra.mxu0 0.0
    %5485 = vmatprep.subr.mxu0 0.0
    %5486 = vmatpush1.msra.mxu0 0.0
    %5487 = vmatprep.subr.mxu0 0.0
    %5488 = vmatpush1.msra.mxu0 0.0
    %5489 = vmatprep.subr.mxu0 0.0
    %5490 = vmatpush1.msra.mxu0 0.0
    %5491 = vmatprep.subr.mxu0 0.0
    %5492 = vmatpush1.msra.mxu0 0.0
    %5493 = vmatprep.subr.mxu0 0.0
    %5494 = vmatpush1.msra.mxu0 0.0
    %5495 = vmatprep.subr.mxu0 0.0
    %5496 = vmatpush1.msra.mxu0 0.0
    %5497 = vmatprep.subr.mxu0 0.0
    %5498 = vmatpush1.msra.mxu0 0.0
    %5499 = vmatprep.subr.mxu0 0.0
    %5500 = vmatpush1.msra.mxu0 0.0
    %5501 = vmatprep.subr.mxu0 0.0
    %5502 = vmatpush1.msra.mxu0 0.0
    %5503 = vmatprep.subr.mxu0 0.0
    %5504 = vmatpush1.msra.mxu0 0.0
    %5505 = vmatprep.subr.mxu0 0.0
    %5506 = vmatpush1.msra.mxu0 0.0
    %5507 = vmatprep.subr.mxu0 0.0
    %5508 = vmatpush1.msra.mxu0 0.0
    %5509 = vmatprep.subr.mxu0 0.0
    %5510 = vmatpush1.msra.mxu0 0.0
    %5511 = vmatprep.mubr.f32.mxu0 0.0
    %5512 = vmatmul.mubr.f32.gmra.mrb[0].mxu0 %v5445
    %v5513 = vpop.f32.mrb[0].mxu0
    %v5514 = vadd.f32 0.0, %v5513
    %v5515 = vpop.f32.mrb[0].mxu0
    %5516 = vdwg.mxu0
    %v5518 = vrot.slane %v5514, 1
    %v5521 = vadd.f32 %v5440, %v5514
    %v5522 = vadd.f32 %v5441, %v5518
    %v5523 = vxor.u32 %v5521, 2147483648
    %v5524 = vxor.u32 %v5522, 2147483648
    %v5525 = vmul.f32 %v5523, 1.442695
    %v5526 = vpow.pop %v5525
    %v5527 = vmul.f32 %v5524, 1.442695
    %v5528 = vpow.pop %v5527
    %v5529 = vadd.f32 %v5526, 1.0
    %v5530 = vadd.f32 %v5528, 1.0
    %v5531 = vrcp.pop %v5529
    %v5532 = vmul.f32 1.0, %v5531
    %v5533 = vrcp.pop %v5530
    %v5534 = vmul.f32 1.0, %v5533
    %v5535 = vadd.f32 %v5514, %v4361
    %v5537 = vrot.slane %v5535, 1
    %5538 = vrot.lane.b32.xlu0 %v5535, 96
    %v5539 = vpop.permute.xlu0 %5538
    %5540 = vrot.lane.b32.xlu0 %v5537, 96
    %v5541 = vpop.permute.xlu0 %5540
    %v5544 = vmul.f32 %v5532, %v5539
    %v5545 = vmul.f32 %v5534, %v5541
    %5548 = vrot.lane.b32.xlu0 %v5544, 32
    %v5549 = vpop.permute.xlu0 %5548
    %5550 = vrot.lane.b32.xlu0 %v5545, 32
    %v5551 = vpop.permute.xlu0 %5550
    %v5554 = vadd.f32 %v5440, %v5549
    %v5555 = vadd.f32 %v5441, %v5551
    %v5556 = vtanh.pop %v5554
    %v5557 = vtanh.pop %v5555
    %v5558 = vsub.f32 1.0, %v5532
    %v5559 = vsub.f32 1.0, %v5534
    %5562 = vrot.lane.b32.xlu0 %v5556, 112
    %v5563 = vpop.permute.xlu0 %5562
    %5564 = vrot.lane.b32.xlu0 %v5557, 112
    %v5565 = vpop.permute.xlu0 %5564
    %v5568 = vmul.f32 %v5558, %v5563
    %v5569 = vmul.f32 %v5559, %v5565
    %v5570 = vrot.slane %v5439, 1
    %5571 = vrot.lane.b32.xlu0 %v5439, 16
    %v5572 = vpop.permute.xlu0 %5571
    %5573 = vrot.lane.b32.xlu0 %v5570, 16
    %v5574 = vpop.permute.xlu0 %5573
    %v5577 = vmul.f32 %v5532, %v5572
    %v5578 = vmul.f32 %v5534, %v5574
    %v5579 = vadd.f32 %v5568, %v5577
    %v5580 = vadd.f32 %v5569, %v5578
    %v5581 = vadd.f32 %v5442, %v5514
    %v5582 = vadd.f32 %v5443, %v5518
    %v5583 = vxor.u32 %v5581, 2147483648
    %v5584 = vxor.u32 %v5582, 2147483648
    %v5585 = vmul.f32 %v5583, 1.442695
    %v5586 = vpow.pop %v5585
    %v5587 = vmul.f32 %v5584, 1.442695
    %v5588 = vpow.pop %v5587
    %v5589 = vadd.f32 %v5586, 1.0
    %v5590 = vadd.f32 %v5588, 1.0
    %v5591 = vrcp.pop %v5589
    %v5592 = vmul.f32 1.0, %v5591
    %v5593 = vrcp.pop %v5590
    %v5594 = vmul.f32 1.0, %v5593
    %v5595 = vadd.f32 %v5514, %v4417
    %v5597 = vrot.slane %v5595, 1
    %5598 = vrot.lane.b32.xlu0 %v5595, 96
    %v5599 = vpop.permute.xlu0 %5598
    %5600 = vrot.lane.b32.xlu0 %v5597, 96
    %v5601 = vpop.permute.xlu0 %5600
    %v5604 = vmul.f32 %v5592, %v5599
    %v5605 = vmul.f32 %v5594, %v5601
    %5608 = vrot.lane.b32.xlu0 %v5604, 32
    %v5609 = vpop.permute.xlu0 %5608
    %5610 = vrot.lane.b32.xlu0 %v5605, 32
    %v5611 = vpop.permute.xlu0 %5610
    %v5614 = vadd.f32 %v5442, %v5609
    %v5615 = vadd.f32 %v5443, %v5611
    %v5616 = vtanh.pop %v5614
    %v5617 = vtanh.pop %v5615
    %v5618 = vsub.f32 1.0, %v5592
    %v5619 = vsub.f32 1.0, %v5594
    %5622 = vrot.lane.b32.xlu0 %v5616, 112
    %v5623 = vpop.permute.xlu0 %5622
    %5624 = vrot.lane.b32.xlu0 %v5617, 112
    %v5625 = vpop.permute.xlu0 %5624
    %v5628 = vmul.f32 %v5618, %v5623
    %v5629 = vmul.f32 %v5619, %v5625
    %5630 = vrot.lane.b32.xlu0 %v5439, 48
    %v5631 = vpop.permute.xlu0 %5630
    %5632 = vrot.lane.b32.xlu0 %v5570, 48
    %v5633 = vpop.permute.xlu0 %5632
    %v5636 = vmul.f32 %v5592, %v5631
    %v5637 = vmul.f32 %v5594, %v5633
    %v5638 = vadd.f32 %v5628, %v5636
    %v5639 = vadd.f32 %v5629, %v5637
    %v5642 = vrot.slane %v5580, 7
    %v5643 = vsel %vm129, %v5642, %v5579
    %5644 = vrot.lane.b32.xlu0 %v5643, 112
    %v5645 = vpop.permute.xlu0 %5644
    %v5647 = vmul.f32 %v2131, %v5645
    %v5648 = vmul.f32 %v2143, %v5439
    %v5649 = vadd.f32 %v5647, %v5648
    %v5652 = vrot.slane %v5639, 7
    %v5653 = vsel %vm129, %v5652, %v5638
    %5654 = vrot.lane.b32.xlu0 %v5653, 64
    %v5655 = vpop.permute.xlu0 %5654
    %v5657 = vmul.f32 %v2113, %v5655
    %v5658 = vmul.f32 %v2125, %v5439
    %5660 = vrot.lane.b32.xlu0 %v5658, 112
    %v5661 = vpop.permute.xlu0 %5660
    %v5663 = vadd.f32 %v5657, %v5661
    %v5664 = vmul.f32 %v2131, %v5649
    %v5667 = vunpack.c.l.s4 1966171168
    %v5668 = vunpack.c.0.s8 %v5667
    %v5669 = vlaneseq
    %v5670 = vshrl.u32 %v5669, 7
    %v5671 = vsub.s32 %v5668, %v5670
    %v5672 = vrot.slane %v5664, %v5671
    %v5673 = vcombine.high %v5672, %v5672
    %v5675 = vunpack.c.l.s4 1966171168
    %v5676 = vunpack.c.0.s8 %v5675
    %v5677 = vlaneseq
    %v5678 = vshrl.u32 %v5677, 7
    %v5679 = vsub.s32 %v5676, %v5678
    %v5680 = vrot.slane %v5672, %v5679
    %v5682 = vunpack.c.l.s4 1966171168
    %v5683 = vunpack.c.0.s8 %v5682
    %v5684 = vlaneseq
    %v5685 = vshrl.u32 %v5684, 7
    %v5686 = vsub.s32 %v5683, %v5685
    %v5687 = vrot.slane %v5673, %v5686
    %5690 = vst.msk [vmem:[#allocation13 + $0x4] sm:$0x1] %vm1235, %v5680
    %5691 = vst.msk [vmem:[#allocation13 + $0xc] sm:$0x1] %vm1235, %v5687
    %v5692 = vmul.f32 %v2113, %v5663
    %v5695 = vunpack.c.l.s4 1966171168
    %v5696 = vunpack.c.0.s8 %v5695
    %v5697 = vlaneseq
    %v5698 = vshrl.u32 %v5697, 7
    %v5699 = vsub.s32 %v5696, %v5698
    %v5700 = vrot.slane %v5692, %v5699
    %v5701 = vcombine.high %v5700, %v5700
    %v5703 = vunpack.c.l.s4 1966171168
    %v5704 = vunpack.c.0.s8 %v5703
    %v5705 = vlaneseq
    %v5706 = vshrl.u32 %v5705, 7
    %v5707 = vsub.s32 %v5704, %v5706
    %v5708 = vrot.slane %v5700, %v5707
    %v5710 = vunpack.c.l.s4 1966171168
    %v5711 = vunpack.c.0.s8 %v5710
    %v5712 = vlaneseq
    %v5713 = vshrl.u32 %v5712, 7
    %v5714 = vsub.s32 %v5711, %v5713
    %v5715 = vrot.slane %v5701, %v5714
    %v5716 = vlaneseq
    %v5717 = vshrl.u32 %v5716, 7
    %v5718 = vsub.s32 0, %v5717
    %v5719 = vrot.slane %v5708, %v5718
    %v5720 = vlaneseq
    %v5721 = vshrl.u32 %v5720, 7
    %v5722 = vsub.s32 0, %v5721
    %v5723 = vrot.slane %v5715, %v5722
    %5724 = vrot.lane.b32.xlu0 %v5719, 16
    %v5725 = vpop.permute.xlu0 %5724
    %5726 = vrot.lane.b32.xlu0 %v5723, 16
    %v5727 = vpop.permute.xlu0 %5726
    %5730 = vst.msk [vmem:[#allocation13 + $0x3] sm:$0x1] %vm1276, %v5725
    %5731 = vst.msk [vmem:[#allocation13 + $0xb] sm:$0x1] %vm1276, %v5727
    %5733 = vrot.lane.b32.xlu0 %v5663, 16
    %v5734 = vpop.permute.xlu0 %5733
    %v5736 = vsel %vm1283, %v5649, %v5734
    %v5737 = vld [vmem:[#allocation2 + $0x5] sm:$0x1]
    %v5738 = vld [vmem:[#allocation2 + $0xd] sm:$0x1]
    %v5739 = vld [vmem:[#allocation2 + $0x2] sm:$0x1]
    %v5740 = vld [vmem:[#allocation2 + $0xa] sm:$0x1]
    %v5742 = vsel %vm131, %v5736, 0
    %5744 = vmatprep.subr.mxu0 0.0
    %5745 = vmatpush1.msra.mxu0 %v4258
    %5746 = vmatprep.subr.mxu0 0.0
    %5747 = vmatpush1.msra.mxu0 %v4259
    %5748 = vmatprep.subr.mxu0 0.0
    %5749 = vmatpush1.msra.mxu0 %v4260
    %5750 = vmatprep.subr.mxu0 0.0
    %5751 = vmatpush1.msra.mxu0 %v4261
    %5752 = vmatprep.subr.mxu0 0.0
    %5753 = vmatpush1.msra.mxu0 0.0
    %5754 = vmatprep.subr.mxu0 0.0
    %5755 = vmatpush1.msra.mxu0 0.0
    %5756 = vmatprep.subr.mxu0 0.0
    %5757 = vmatpush1.msra.mxu0 0.0
    %5758 = vmatprep.subr.mxu0 0.0
    %5759 = vmatpush1.msra.mxu0 0.0
    %5760 = vmatprep.subr.mxu0 0.0
    %5761 = vmatpush1.msra.mxu0 0.0
    %5762 = vmatprep.subr.mxu0 0.0
    %5763 = vmatpush1.msra.mxu0 0.0
    %5764 = vmatprep.subr.mxu0 0.0
    %5765 = vmatpush1.msra.mxu0 0.0
    %5766 = vmatprep.subr.mxu0 0.0
    %5767 = vmatpush1.msra.mxu0 0.0
    %5768 = vmatprep.subr.mxu0 0.0
    %5769 = vmatpush1.msra.mxu0 0.0
    %5770 = vmatprep.subr.mxu0 0.0
    %5771 = vmatpush1.msra.mxu0 0.0
    %5772 = vmatprep.subr.mxu0 0.0
    %5773 = vmatpush1.msra.mxu0 0.0
    %5774 = vmatprep.subr.mxu0 0.0
    %5775 = vmatpush1.msra.mxu0 0.0
    %5776 = vmatprep.subr.mxu0 0.0
    %5777 = vmatpush1.msra.mxu0 0.0
    %5778 = vmatprep.subr.mxu0 0.0
    %5779 = vmatpush1.msra.mxu0 0.0
    %5780 = vmatprep.subr.mxu0 0.0
    %5781 = vmatpush1.msra.mxu0 0.0
    %5782 = vmatprep.subr.mxu0 0.0
    %5783 = vmatpush1.msra.mxu0 0.0
    %5784 = vmatprep.subr.mxu0 0.0
    %5785 = vmatpush1.msra.mxu0 0.0
    %5786 = vmatprep.subr.mxu0 0.0
    %5787 = vmatpush1.msra.mxu0 0.0
    %5788 = vmatprep.subr.mxu0 0.0
    %5789 = vmatpush1.msra.mxu0 0.0
    %5790 = vmatprep.subr.mxu0 0.0
    %5791 = vmatpush1.msra.mxu0 0.0
    %5792 = vmatprep.subr.mxu0 0.0
    %5793 = vmatpush1.msra.mxu0 0.0
    %5794 = vmatprep.subr.mxu0 0.0
    %5795 = vmatpush1.msra.mxu0 0.0
    %5796 = vmatprep.subr.mxu0 0.0
    %5797 = vmatpush1.msra.mxu0 0.0
    %5798 = vmatprep.subr.mxu0 0.0
    %5799 = vmatpush1.msra.mxu0 0.0
    %5800 = vmatprep.subr.mxu0 0.0
    %5801 = vmatpush1.msra.mxu0 0.0
    %5802 = vmatprep.subr.mxu0 0.0
    %5803 = vmatpush1.msra.mxu0 0.0
    %5804 = vmatprep.subr.mxu0 0.0
    %5805 = vmatpush1.msra.mxu0 0.0
    %5806 = vmatprep.subr.mxu0 0.0
    %5807 = vmatpush1.msra.mxu0 0.0
    %5808 = vmatprep.mubr.f32.mxu0 0.0
    %5809 = vmatmul.mubr.f32.gmra.mrb[0].mxu0 %v5742
    %v5810 = vpop.f32.mrb[0].mxu0
    %v5811 = vadd.f32 0.0, %v5810
    %v5812 = vpop.f32.mrb[0].mxu0
    %5813 = vdwg.mxu0
    %v5815 = vrot.slane %v5811, 1
    %v5818 = vadd.f32 %v5737, %v5811
    %v5819 = vadd.f32 %v5738, %v5815
    %v5820 = vxor.u32 %v5818, 2147483648
    %v5821 = vxor.u32 %v5819, 2147483648
    %v5822 = vmul.f32 %v5820, 1.442695
    %v5823 = vpow.pop %v5822
    %v5824 = vmul.f32 %v5821, 1.442695
    %v5825 = vpow.pop %v5824
    %v5826 = vadd.f32 %v5823, 1.0
    %v5827 = vadd.f32 %v5825, 1.0
    %v5828 = vrcp.pop %v5826
    %v5829 = vmul.f32 1.0, %v5828
    %v5830 = vrcp.pop %v5827
    %v5831 = vmul.f32 1.0, %v5830
    %v5832 = vadd.f32 %v5811, %v4361
    %v5834 = vrot.slane %v5832, 1
    %5835 = vrot.lane.b32.xlu0 %v5832, 96
    %v5836 = vpop.permute.xlu0 %5835
    %5837 = vrot.lane.b32.xlu0 %v5834, 96
    %v5838 = vpop.permute.xlu0 %5837
    %v5841 = vmul.f32 %v5829, %v5836
    %v5842 = vmul.f32 %v5831, %v5838
    %5845 = vrot.lane.b32.xlu0 %v5841, 32
    %v5846 = vpop.permute.xlu0 %5845
    %5847 = vrot.lane.b32.xlu0 %v5842, 32
    %v5848 = vpop.permute.xlu0 %5847
    %v5851 = vadd.f32 %v5737, %v5846
    %v5852 = vadd.f32 %v5738, %v5848
    %v5853 = vtanh.pop %v5851
    %v5854 = vtanh.pop %v5852
    %v5855 = vsub.f32 1.0, %v5829
    %v5856 = vsub.f32 1.0, %v5831
    %5859 = vrot.lane.b32.xlu0 %v5853, 112
    %v5860 = vpop.permute.xlu0 %5859
    %5861 = vrot.lane.b32.xlu0 %v5854, 112
    %v5862 = vpop.permute.xlu0 %5861
    %v5865 = vmul.f32 %v5855, %v5860
    %v5866 = vmul.f32 %v5856, %v5862
    %v5867 = vrot.slane %v5736, 1
    %5868 = vrot.lane.b32.xlu0 %v5736, 16
    %v5869 = vpop.permute.xlu0 %5868
    %5870 = vrot.lane.b32.xlu0 %v5867, 16
    %v5871 = vpop.permute.xlu0 %5870
    %v5874 = vmul.f32 %v5829, %v5869
    %v5875 = vmul.f32 %v5831, %v5871
    %v5876 = vadd.f32 %v5865, %v5874
    %v5877 = vadd.f32 %v5866, %v5875
    %v5878 = vadd.f32 %v5739, %v5811
    %v5879 = vadd.f32 %v5740, %v5815
    %v5880 = vxor.u32 %v5878, 2147483648
    %v5881 = vxor.u32 %v5879, 2147483648
    %v5882 = vmul.f32 %v5880, 1.442695
    %v5883 = vpow.pop %v5882
    %v5884 = vmul.f32 %v5881, 1.442695
    %v5885 = vpow.pop %v5884
    %v5886 = vadd.f32 %v5883, 1.0
    %v5887 = vadd.f32 %v5885, 1.0
    %v5888 = vrcp.pop %v5886
    %v5889 = vmul.f32 1.0, %v5888
    %v5890 = vrcp.pop %v5887
    %v5891 = vmul.f32 1.0, %v5890
    %v5892 = vadd.f32 %v5811, %v4417
    %v5894 = vrot.slane %v5892, 1
    %5895 = vrot.lane.b32.xlu0 %v5892, 96
    %v5896 = vpop.permute.xlu0 %5895
    %5897 = vrot.lane.b32.xlu0 %v5894, 96
    %v5898 = vpop.permute.xlu0 %5897
    %v5901 = vmul.f32 %v5889, %v5896
    %v5902 = vmul.f32 %v5891, %v5898
    %5905 = vrot.lane.b32.xlu0 %v5901, 32
    %v5906 = vpop.permute.xlu0 %5905
    %5907 = vrot.lane.b32.xlu0 %v5902, 32
    %v5908 = vpop.permute.xlu0 %5907
    %v5911 = vadd.f32 %v5739, %v5906
    %v5912 = vadd.f32 %v5740, %v5908
    %v5913 = vtanh.pop %v5911
    %v5914 = vtanh.pop %v5912
    %v5915 = vsub.f32 1.0, %v5889
    %v5916 = vsub.f32 1.0, %v5891
    %5919 = vrot.lane.b32.xlu0 %v5913, 112
    %v5920 = vpop.permute.xlu0 %5919
    %5921 = vrot.lane.b32.xlu0 %v5914, 112
    %v5922 = vpop.permute.xlu0 %5921
    %v5925 = vmul.f32 %v5915, %v5920
    %v5926 = vmul.f32 %v5916, %v5922
    %5927 = vrot.lane.b32.xlu0 %v5736, 48
    %v5928 = vpop.permute.xlu0 %5927
    %5929 = vrot.lane.b32.xlu0 %v5867, 48
    %v5930 = vpop.permute.xlu0 %5929
    %v5933 = vmul.f32 %v5889, %v5928
    %v5934 = vmul.f32 %v5891, %v5930
    %v5935 = vadd.f32 %v5925, %v5933
    %v5936 = vadd.f32 %v5926, %v5934
    %v5939 = vrot.slane %v5877, 7
    %v5940 = vsel %vm129, %v5939, %v5876
    %5941 = vrot.lane.b32.xlu0 %v5940, 112
    %v5942 = vpop.permute.xlu0 %5941
    %v5944 = vmul.f32 %v1818, %v5942
    %v5945 = vmul.f32 %v1830, %v5736
    %v5946 = vadd.f32 %v5944, %v5945
    %v5949 = vrot.slane %v5936, 7
    %v5950 = vsel %vm129, %v5949, %v5935
    %5951 = vrot.lane.b32.xlu0 %v5950, 64
    %v5952 = vpop.permute.xlu0 %5951
    %v5954 = vmul.f32 %v1800, %v5952
    %v5955 = vmul.f32 %v1812, %v5736
    %5957 = vrot.lane.b32.xlu0 %v5955, 112
    %v5958 = vpop.permute.xlu0 %5957
    %v5960 = vadd.f32 %v5954, %v5958
    %v5961 = vmul.f32 %v1818, %v5946
    %v5964 = vunpack.c.l.s4 1966171168
    %v5965 = vunpack.c.0.s8 %v5964
    %v5966 = vlaneseq
    %v5967 = vshrl.u32 %v5966, 7
    %v5968 = vsub.s32 %v5965, %v5967
    %v5969 = vrot.slane %v5961, %v5968
    %v5970 = vcombine.high %v5969, %v5969
    %v5972 = vunpack.c.l.s4 1966171168
    %v5973 = vunpack.c.0.s8 %v5972
    %v5974 = vlaneseq
    %v5975 = vshrl.u32 %v5974, 7
    %v5976 = vsub.s32 %v5973, %v5975
    %v5977 = vrot.slane %v5969, %v5976
    %v5979 = vunpack.c.l.s4 1966171168
    %v5980 = vunpack.c.0.s8 %v5979
    %v5981 = vlaneseq
    %v5982 = vshrl.u32 %v5981, 7
    %v5983 = vsub.s32 %v5980, %v5982
    %v5984 = vrot.slane %v5970, %v5983
    %5987 = vst.msk [vmem:[#allocation13 + $0x5] sm:$0x1] %vm1235, %v5977
    %5988 = vst.msk [vmem:[#allocation13 + $0xd] sm:$0x1] %vm1235, %v5984
    %v5989 = vmul.f32 %v1800, %v5960
    %v5992 = vunpack.c.l.s4 1966171168
    %v5993 = vunpack.c.0.s8 %v5992
    %v5994 = vlaneseq
    %v5995 = vshrl.u32 %v5994, 7
    %v5996 = vsub.s32 %v5993, %v5995
    %v5997 = vrot.slane %v5989, %v5996
    %v5998 = vcombine.high %v5997, %v5997
    %v6000 = vunpack.c.l.s4 1966171168
    %v6001 = vunpack.c.0.s8 %v6000
    %v6002 = vlaneseq
    %v6003 = vshrl.u32 %v6002, 7
    %v6004 = vsub.s32 %v6001, %v6003
    %v6005 = vrot.slane %v5997, %v6004
    %v6007 = vunpack.c.l.s4 1966171168
    %v6008 = vunpack.c.0.s8 %v6007
    %v6009 = vlaneseq
    %v6010 = vshrl.u32 %v6009, 7
    %v6011 = vsub.s32 %v6008, %v6010
    %v6012 = vrot.slane %v5998, %v6011
    %v6013 = vlaneseq
    %v6014 = vshrl.u32 %v6013, 7
    %v6015 = vsub.s32 0, %v6014
    %v6016 = vrot.slane %v6005, %v6015
    %v6017 = vlaneseq
    %v6018 = vshrl.u32 %v6017, 7
    %v6019 = vsub.s32 0, %v6018
    %v6020 = vrot.slane %v6012, %v6019
    %6021 = vrot.lane.b32.xlu0 %v6016, 16
    %v6022 = vpop.permute.xlu0 %6021
    %6023 = vrot.lane.b32.xlu0 %v6020, 16
    %v6024 = vpop.permute.xlu0 %6023
    %6027 = vst.msk [vmem:[#allocation13 + $0x2] sm:$0x1] %vm1276, %v6022
    %6028 = vst.msk [vmem:[#allocation13 + $0xa] sm:$0x1] %vm1276, %v6024
    %6030 = vrot.lane.b32.xlu0 %v5960, 16
    %v6031 = vpop.permute.xlu0 %6030
    %v6033 = vsel %vm1283, %v5946, %v6031
    %v6034 = vld [vmem:[#allocation2 + $0x6] sm:$0x1]
    %v6035 = vld [vmem:[#allocation2 + $0xe] sm:$0x1]
    %v6036 = vld [vmem:[#allocation2 + $0x1] sm:$0x1]
    %v6037 = vld [vmem:[#allocation2 + $0x9] sm:$0x1]
    %v6039 = vsel %vm131, %v6033, 0
    %6041 = vmatprep.subr.mxu0 0.0
    %6042 = vmatpush1.msra.mxu0 %v4258
    %6043 = vmatprep.subr.mxu0 0.0
    %6044 = vmatpush1.msra.mxu0 %v4259
    %6045 = vmatprep.subr.mxu0 0.0
    %6046 = vmatpush1.msra.mxu0 %v4260
    %6047 = vmatprep.subr.mxu0 0.0
    %6048 = vmatpush1.msra.mxu0 %v4261
    %6049 = vmatprep.subr.mxu0 0.0
    %6050 = vmatpush1.msra.mxu0 0.0
    %6051 = vmatprep.subr.mxu0 0.0
    %6052 = vmatpush1.msra.mxu0 0.0
    %6053 = vmatprep.subr.mxu0 0.0
    %6054 = vmatpush1.msra.mxu0 0.0
    %6055 = vmatprep.subr.mxu0 0.0
    %6056 = vmatpush1.msra.mxu0 0.0
    %6057 = vmatprep.subr.mxu0 0.0
    %6058 = vmatpush1.msra.mxu0 0.0
    %6059 = vmatprep.subr.mxu0 0.0
    %6060 = vmatpush1.msra.mxu0 0.0
    %6061 = vmatprep.subr.mxu0 0.0
    %6062 = vmatpush1.msra.mxu0 0.0
    %6063 = vmatprep.subr.mxu0 0.0
    %6064 = vmatpush1.msra.mxu0 0.0
    %6065 = vmatprep.subr.mxu0 0.0
    %6066 = vmatpush1.msra.mxu0 0.0
    %6067 = vmatprep.subr.mxu0 0.0
    %6068 = vmatpush1.msra.mxu0 0.0
    %6069 = vmatprep.subr.mxu0 0.0
    %6070 = vmatpush1.msra.mxu0 0.0
    %6071 = vmatprep.subr.mxu0 0.0
    %6072 = vmatpush1.msra.mxu0 0.0
    %6073 = vmatprep.subr.mxu0 0.0
    %6074 = vmatpush1.msra.mxu0 0.0
    %6075 = vmatprep.subr.mxu0 0.0
    %6076 = vmatpush1.msra.mxu0 0.0
    %6077 = vmatprep.subr.mxu0 0.0
    %6078 = vmatpush1.msra.mxu0 0.0
    %6079 = vmatprep.subr.mxu0 0.0
    %6080 = vmatpush1.msra.mxu0 0.0
    %6081 = vmatprep.subr.mxu0 0.0
    %6082 = vmatpush1.msra.mxu0 0.0
    %6083 = vmatprep.subr.mxu0 0.0
    %6084 = vmatpush1.msra.mxu0 0.0
    %6085 = vmatprep.subr.mxu0 0.0
    %6086 = vmatpush1.msra.mxu0 0.0
    %6087 = vmatprep.subr.mxu0 0.0
    %6088 = vmatpush1.msra.mxu0 0.0
    %6089 = vmatprep.subr.mxu0 0.0
    %6090 = vmatpush1.msra.mxu0 0.0
    %6091 = vmatprep.subr.mxu0 0.0
    %6092 = vmatpush1.msra.mxu0 0.0
    %6093 = vmatprep.subr.mxu0 0.0
    %6094 = vmatpush1.msra.mxu0 0.0
    %6095 = vmatprep.subr.mxu0 0.0
    %6096 = vmatpush1.msra.mxu0 0.0
    %6097 = vmatprep.subr.mxu0 0.0
    %6098 = vmatpush1.msra.mxu0 0.0
    %6099 = vmatprep.subr.mxu0 0.0
    %6100 = vmatpush1.msra.mxu0 0.0
    %6101 = vmatprep.subr.mxu0 0.0
    %6102 = vmatpush1.msra.mxu0 0.0
    %6103 = vmatprep.subr.mxu0 0.0
    %6104 = vmatpush1.msra.mxu0 0.0
    %6105 = vmatprep.mubr.f32.mxu0 0.0
    %6106 = vmatmul.mubr.f32.gmra.mrb[0].mxu0 %v6039
    %v6107 = vpop.f32.mrb[0].mxu0
    %v6108 = vadd.f32 0.0, %v6107
    %v6109 = vpop.f32.mrb[0].mxu0
    %6110 = vdwg.mxu0
    %v6112 = vrot.slane %v6108, 1
    %v6115 = vadd.f32 %v6034, %v6108
    %v6116 = vadd.f32 %v6035, %v6112
    %v6117 = vxor.u32 %v6115, 2147483648
    %v6118 = vxor.u32 %v6116, 2147483648
    %v6119 = vmul.f32 %v6117, 1.442695
    %v6120 = vpow.pop %v6119
    %v6121 = vmul.f32 %v6118, 1.442695
    %v6122 = vpow.pop %v6121
    %v6123 = vadd.f32 %v6120, 1.0
    %v6124 = vadd.f32 %v6122, 1.0
    %v6125 = vrcp.pop %v6123
    %v6126 = vmul.f32 1.0, %v6125
    %v6127 = vrcp.pop %v6124
    %v6128 = vmul.f32 1.0, %v6127
    %v6129 = vadd.f32 %v6108, %v4361
    %v6131 = vrot.slane %v6129, 1
    %6132 = vrot.lane.b32.xlu0 %v6129, 96
    %v6133 = vpop.permute.xlu0 %6132
    %6134 = vrot.lane.b32.xlu0 %v6131, 96
    %v6135 = vpop.permute.xlu0 %6134
    %v6138 = vmul.f32 %v6126, %v6133
    %v6139 = vmul.f32 %v6128, %v6135
    %6142 = vrot.lane.b32.xlu0 %v6138, 32
    %v6143 = vpop.permute.xlu0 %6142
    %6144 = vrot.lane.b32.xlu0 %v6139, 32
    %v6145 = vpop.permute.xlu0 %6144
    %v6148 = vadd.f32 %v6034, %v6143
    %v6149 = vadd.f32 %v6035, %v6145
    %v6150 = vtanh.pop %v6148
    %v6151 = vtanh.pop %v6149
    %v6152 = vsub.f32 1.0, %v6126
    %v6153 = vsub.f32 1.0, %v6128
    %6156 = vrot.lane.b32.xlu0 %v6150, 112
    %v6157 = vpop.permute.xlu0 %6156
    %6158 = vrot.lane.b32.xlu0 %v6151, 112
    %v6159 = vpop.permute.xlu0 %6158
    %v6162 = vmul.f32 %v6152, %v6157
    %v6163 = vmul.f32 %v6153, %v6159
    %v6164 = vrot.slane %v6033, 1
    %6165 = vrot.lane.b32.xlu0 %v6033, 16
    %v6166 = vpop.permute.xlu0 %6165
    %6167 = vrot.lane.b32.xlu0 %v6164, 16
    %v6168 = vpop.permute.xlu0 %6167
    %v6171 = vmul.f32 %v6126, %v6166
    %v6172 = vmul.f32 %v6128, %v6168
    %v6173 = vadd.f32 %v6162, %v6171
    %v6174 = vadd.f32 %v6163, %v6172
    %v6175 = vadd.f32 %v6036, %v6108
    %v6176 = vadd.f32 %v6037, %v6112
    %v6177 = vxor.u32 %v6175, 2147483648
    %v6178 = vxor.u32 %v6176, 2147483648
    %v6179 = vmul.f32 %v6177, 1.442695
    %v6180 = vpow.pop %v6179
    %v6181 = vmul.f32 %v6178, 1.442695
    %v6182 = vpow.pop %v6181
    %v6183 = vadd.f32 %v6180, 1.0
    %v6184 = vadd.f32 %v6182, 1.0
    %v6185 = vrcp.pop %v6183
    %v6186 = vmul.f32 1.0, %v6185
    %v6187 = vrcp.pop %v6184
    %v6188 = vmul.f32 1.0, %v6187
    %v6189 = vadd.f32 %v6108, %v4417
    %v6191 = vrot.slane %v6189, 1
    %6192 = vrot.lane.b32.xlu0 %v6189, 96
    %v6193 = vpop.permute.xlu0 %6192
    %6194 = vrot.lane.b32.xlu0 %v6191, 96
    %v6195 = vpop.permute.xlu0 %6194
    %v6198 = vmul.f32 %v6186, %v6193
    %v6199 = vmul.f32 %v6188, %v6195
    %6202 = vrot.lane.b32.xlu0 %v6198, 32
    %v6203 = vpop.permute.xlu0 %6202
    %6204 = vrot.lane.b32.xlu0 %v6199, 32
    %v6205 = vpop.permute.xlu0 %6204
    %v6208 = vadd.f32 %v6036, %v6203
    %v6209 = vadd.f32 %v6037, %v6205
    %v6210 = vtanh.pop %v6208
    %v6211 = vtanh.pop %v6209
    %v6212 = vsub.f32 1.0, %v6186
    %v6213 = vsub.f32 1.0, %v6188
    %6216 = vrot.lane.b32.xlu0 %v6210, 112
    %v6217 = vpop.permute.xlu0 %6216
    %6218 = vrot.lane.b32.xlu0 %v6211, 112
    %v6219 = vpop.permute.xlu0 %6218
    %v6222 = vmul.f32 %v6212, %v6217
    %v6223 = vmul.f32 %v6213, %v6219
    %6224 = vrot.lane.b32.xlu0 %v6033, 48
    %v6225 = vpop.permute.xlu0 %6224
    %6226 = vrot.lane.b32.xlu0 %v6164, 48
    %v6227 = vpop.permute.xlu0 %6226
    %v6230 = vmul.f32 %v6186, %v6225
    %v6231 = vmul.f32 %v6188, %v6227
    %v6232 = vadd.f32 %v6222, %v6230
    %v6233 = vadd.f32 %v6223, %v6231
    %v6236 = vrot.slane %v6174, 7
    %v6237 = vsel %vm129, %v6236, %v6173
    %6238 = vrot.lane.b32.xlu0 %v6237, 112
    %v6239 = vpop.permute.xlu0 %6238
    %v6241 = vmul.f32 %v1505, %v6239
    %v6242 = vmul.f32 %v1517, %v6033
    %v6243 = vadd.f32 %v6241, %v6242
    %v6246 = vrot.slane %v6233, 7
    %v6247 = vsel %vm129, %v6246, %v6232
    %6248 = vrot.lane.b32.xlu0 %v6247, 64
    %v6249 = vpop.permute.xlu0 %6248
    %v6251 = vmul.f32 %v1487, %v6249
    %v6252 = vmul.f32 %v1499, %v6033
    %6254 = vrot.lane.b32.xlu0 %v6252, 112
    %v6255 = vpop.permute.xlu0 %6254
    %v6257 = vadd.f32 %v6251, %v6255
    %v6258 = vmul.f32 %v1505, %v6243
    %v6261 = vunpack.c.l.s4 1966171168
    %v6262 = vunpack.c.0.s8 %v6261
    %v6263 = vlaneseq
    %v6264 = vshrl.u32 %v6263, 7
    %v6265 = vsub.s32 %v6262, %v6264
    %v6266 = vrot.slane %v6258, %v6265
    %v6267 = vcombine.high %v6266, %v6266
    %v6269 = vunpack.c.l.s4 1966171168
    %v6270 = vunpack.c.0.s8 %v6269
    %v6271 = vlaneseq
    %v6272 = vshrl.u32 %v6271, 7
    %v6273 = vsub.s32 %v6270, %v6272
    %v6274 = vrot.slane %v6266, %v6273
    %v6276 = vunpack.c.l.s4 1966171168
    %v6277 = vunpack.c.0.s8 %v6276
    %v6278 = vlaneseq
    %v6279 = vshrl.u32 %v6278, 7
    %v6280 = vsub.s32 %v6277, %v6279
    %v6281 = vrot.slane %v6267, %v6280
    %6284 = vst.msk [vmem:[#allocation13 + $0x6] sm:$0x1] %vm1235, %v6274
    %6285 = vst.msk [vmem:[#allocation13 + $0xe] sm:$0x1] %vm1235, %v6281
    %v6286 = vmul.f32 %v1487, %v6257
    %v6289 = vunpack.c.l.s4 1966171168
    %v6290 = vunpack.c.0.s8 %v6289
    %v6291 = vlaneseq
    %v6292 = vshrl.u32 %v6291, 7
    %v6293 = vsub.s32 %v6290, %v6292
    %v6294 = vrot.slane %v6286, %v6293
    %v6295 = vcombine.high %v6294, %v6294
    %v6297 = vunpack.c.l.s4 1966171168
    %v6298 = vunpack.c.0.s8 %v6297
    %v6299 = vlaneseq
    %v6300 = vshrl.u32 %v6299, 7
    %v6301 = vsub.s32 %v6298, %v6300
    %v6302 = vrot.slane %v6294, %v6301
    %v6304 = vunpack.c.l.s4 1966171168
    %v6305 = vunpack.c.0.s8 %v6304
    %v6306 = vlaneseq
    %v6307 = vshrl.u32 %v6306, 7
    %v6308 = vsub.s32 %v6305, %v6307
    %v6309 = vrot.slane %v6295, %v6308
    %v6310 = vlaneseq
    %v6311 = vshrl.u32 %v6310, 7
    %v6312 = vsub.s32 0, %v6311
    %v6313 = vrot.slane %v6302, %v6312
    %v6314 = vlaneseq
    %v6315 = vshrl.u32 %v6314, 7
    %v6316 = vsub.s32 0, %v6315
    %v6317 = vrot.slane %v6309, %v6316
    %6318 = vrot.lane.b32.xlu0 %v6313, 16
    %v6319 = vpop.permute.xlu0 %6318
    %6320 = vrot.lane.b32.xlu0 %v6317, 16
    %v6321 = vpop.permute.xlu0 %6320
    %6324 = vst.msk [vmem:[#allocation13 + $0x1] sm:$0x1] %vm1276, %v6319
    %6325 = vst.msk [vmem:[#allocation13 + $0x9] sm:$0x1] %vm1276, %v6321
    %6327 = vrot.lane.b32.xlu0 %v6257, 16
    %v6328 = vpop.permute.xlu0 %6327
    %v6330 = vsel %vm1283, %v6243, %v6328
    %v6331 = vld [vmem:[#allocation2 + $0x7] sm:$0x1]
    %v6332 = vld [vmem:[#allocation2 + $0xf] sm:$0x1]
    %v6333 = vld [vmem:[#allocation2] sm:$0x1]
    %v6334 = vld [vmem:[#allocation2 + $0x8] sm:$0x1]
    %v6336 = vsel %vm131, %v6330, 0
    %6338 = vmatprep.subr.mxu0 0.0
    %6339 = vmatpush1.msra.mxu0 %v4258
    %6340 = vmatprep.subr.mxu0 0.0
    %6341 = vmatpush1.msra.mxu0 %v4259
    %6342 = vmatprep.subr.mxu0 0.0
    %6343 = vmatpush1.msra.mxu0 %v4260
    %6344 = vmatprep.subr.mxu0 0.0
    %6345 = vmatpush1.msra.mxu0 %v4261
    %6346 = vmatprep.subr.mxu0 0.0
    %6347 = vmatpush1.msra.mxu0 0.0
    %6348 = vmatprep.subr.mxu0 0.0
    %6349 = vmatpush1.msra.mxu0 0.0
    %6350 = vmatprep.subr.mxu0 0.0
    %6351 = vmatpush1.msra.mxu0 0.0
    %6352 = vmatprep.subr.mxu0 0.0
    %6353 = vmatpush1.msra.mxu0 0.0
    %6354 = vmatprep.subr.mxu0 0.0
    %6355 = vmatpush1.msra.mxu0 0.0
    %6356 = vmatprep.subr.mxu0 0.0
    %6357 = vmatpush1.msra.mxu0 0.0
    %6358 = vmatprep.subr.mxu0 0.0
    %6359 = vmatpush1.msra.mxu0 0.0
    %6360 = vmatprep.subr.mxu0 0.0
    %6361 = vmatpush1.msra.mxu0 0.0
    %6362 = vmatprep.subr.mxu0 0.0
    %6363 = vmatpush1.msra.mxu0 0.0
    %6364 = vmatprep.subr.mxu0 0.0
    %6365 = vmatpush1.msra.mxu0 0.0
    %6366 = vmatprep.subr.mxu0 0.0
    %6367 = vmatpush1.msra.mxu0 0.0
    %6368 = vmatprep.subr.mxu0 0.0
    %6369 = vmatpush1.msra.mxu0 0.0
    %6370 = vmatprep.subr.mxu0 0.0
    %6371 = vmatpush1.msra.mxu0 0.0
    %6372 = vmatprep.subr.mxu0 0.0
    %6373 = vmatpush1.msra.mxu0 0.0
    %6374 = vmatprep.subr.mxu0 0.0
    %6375 = vmatpush1.msra.mxu0 0.0
    %6376 = vmatprep.subr.mxu0 0.0
    %6377 = vmatpush1.msra.mxu0 0.0
    %6378 = vmatprep.subr.mxu0 0.0
    %6379 = vmatpush1.msra.mxu0 0.0
    %6380 = vmatprep.subr.mxu0 0.0
    %6381 = vmatpush1.msra.mxu0 0.0
    %6382 = vmatprep.subr.mxu0 0.0
    %6383 = vmatpush1.msra.mxu0 0.0
    %6384 = vmatprep.subr.mxu0 0.0
    %6385 = vmatpush1.msra.mxu0 0.0
    %6386 = vmatprep.subr.mxu0 0.0
    %6387 = vmatpush1.msra.mxu0 0.0
    %6388 = vmatprep.subr.mxu0 0.0
    %6389 = vmatpush1.msra.mxu0 0.0
    %6390 = vmatprep.subr.mxu0 0.0
    %6391 = vmatpush1.msra.mxu0 0.0
    %6392 = vmatprep.subr.mxu0 0.0
    %6393 = vmatpush1.msra.mxu0 0.0
    %6394 = vmatprep.subr.mxu0 0.0
    %6395 = vmatpush1.msra.mxu0 0.0
    %6396 = vmatprep.subr.mxu0 0.0
    %6397 = vmatpush1.msra.mxu0 0.0
    %6398 = vmatprep.subr.mxu0 0.0
    %6399 = vmatpush1.msra.mxu0 0.0
    %6400 = vmatprep.subr.mxu0 0.0
    %6401 = vmatpush1.msra.mxu0 0.0
    %6402 = vmatprep.mubr.f32.mxu0 0.0
    %6403 = vmatmul.mubr.f32.gmra.mrb[0].mxu0 %v6336
    %v6404 = vpop.f32.mrb[0].mxu0
    %v6405 = vadd.f32 0.0, %v6404
    %v6406 = vpop.f32.mrb[0].mxu0
    %6407 = vdwg.mxu0
    %v6409 = vrot.slane %v6405, 1
    %v6412 = vadd.f32 %v6331, %v6405
    %v6413 = vadd.f32 %v6332, %v6409
    %v6414 = vxor.u32 %v6412, 2147483648
    %v6415 = vxor.u32 %v6413, 2147483648
    %v6416 = vmul.f32 %v6414, 1.442695
    %v6417 = vpow.pop %v6416
    %v6418 = vmul.f32 %v6415, 1.442695
    %v6419 = vpow.pop %v6418
    %v6420 = vadd.f32 %v6417, 1.0
    %v6421 = vadd.f32 %v6419, 1.0
    %v6422 = vrcp.pop %v6420
    %v6423 = vmul.f32 1.0, %v6422
    %v6424 = vrcp.pop %v6421
    %v6425 = vmul.f32 1.0, %v6424
    %v6426 = vadd.f32 %v6405, %v4361
    %v6428 = vrot.slane %v6426, 1
    %6429 = vrot.lane.b32.xlu0 %v6426, 96
    %v6430 = vpop.permute.xlu0 %6429
    %6431 = vrot.lane.b32.xlu0 %v6428, 96
    %v6432 = vpop.permute.xlu0 %6431
    %v6435 = vmul.f32 %v6423, %v6430
    %v6436 = vmul.f32 %v6425, %v6432
    %6439 = vrot.lane.b32.xlu0 %v6435, 32
    %v6440 = vpop.permute.xlu0 %6439
    %6441 = vrot.lane.b32.xlu0 %v6436, 32
    %v6442 = vpop.permute.xlu0 %6441
    %v6445 = vadd.f32 %v6331, %v6440
    %v6446 = vadd.f32 %v6332, %v6442
    %v6447 = vtanh.pop %v6445
    %v6448 = vtanh.pop %v6446
    %v6449 = vsub.f32 1.0, %v6423
    %v6450 = vsub.f32 1.0, %v6425
    %6453 = vrot.lane.b32.xlu0 %v6447, 112
    %v6454 = vpop.permute.xlu0 %6453
    %6455 = vrot.lane.b32.xlu0 %v6448, 112
    %v6456 = vpop.permute.xlu0 %6455
    %v6459 = vmul.f32 %v6449, %v6454
    %v6460 = vmul.f32 %v6450, %v6456
    %v6461 = vrot.slane %v6330, 1
    %6462 = vrot.lane.b32.xlu0 %v6330, 16
    %v6463 = vpop.permute.xlu0 %6462
    %6464 = vrot.lane.b32.xlu0 %v6461, 16
    %v6465 = vpop.permute.xlu0 %6464
    %v6468 = vmul.f32 %v6423, %v6463
    %v6469 = vmul.f32 %v6425, %v6465
    %v6470 = vadd.f32 %v6459, %v6468
    %v6471 = vadd.f32 %v6460, %v6469
    %v6472 = vadd.f32 %v6333, %v6405
    %v6473 = vadd.f32 %v6334, %v6409
    %v6474 = vxor.u32 %v6472, 2147483648
    %v6475 = vxor.u32 %v6473, 2147483648
    %v6476 = vmul.f32 %v6474, 1.442695
    %v6477 = vpow.pop %v6476
    %v6478 = vmul.f32 %v6475, 1.442695
    %v6479 = vpow.pop %v6478
    %v6480 = vadd.f32 %v6477, 1.0
    %v6481 = vadd.f32 %v6479, 1.0
    %v6482 = vrcp.pop %v6480
    %v6483 = vmul.f32 1.0, %v6482
    %v6484 = vrcp.pop %v6481
    %v6485 = vmul.f32 1.0, %v6484
    %v6486 = vadd.f32 %v6405, %v4417
    %v6488 = vrot.slane %v6486, 1
    %6489 = vrot.lane.b32.xlu0 %v6486, 96
    %v6490 = vpop.permute.xlu0 %6489
    %6491 = vrot.lane.b32.xlu0 %v6488, 96
    %v6492 = vpop.permute.xlu0 %6491
    %v6495 = vmul.f32 %v6483, %v6490
    %v6496 = vmul.f32 %v6485, %v6492
    %6499 = vrot.lane.b32.xlu0 %v6495, 32
    %v6500 = vpop.permute.xlu0 %6499
    %6501 = vrot.lane.b32.xlu0 %v6496, 32
    %v6502 = vpop.permute.xlu0 %6501
    %v6505 = vadd.f32 %v6333, %v6500
    %v6506 = vadd.f32 %v6334, %v6502
    %v6507 = vtanh.pop %v6505
    %v6508 = vtanh.pop %v6506
    %v6509 = vsub.f32 1.0, %v6483
    %v6510 = vsub.f32 1.0, %v6485
    %6513 = vrot.lane.b32.xlu0 %v6507, 112
    %v6514 = vpop.permute.xlu0 %6513
    %6515 = vrot.lane.b32.xlu0 %v6508, 112
    %v6516 = vpop.permute.xlu0 %6515
    %v6519 = vmul.f32 %v6509, %v6514
    %v6520 = vmul.f32 %v6510, %v6516
    %6521 = vrot.lane.b32.xlu0 %v6330, 48
    %v6522 = vpop.permute.xlu0 %6521
    %6523 = vrot.lane.b32.xlu0 %v6461, 48
    %v6524 = vpop.permute.xlu0 %6523
    %v6527 = vmul.f32 %v6483, %v6522
    %v6528 = vmul.f32 %v6485, %v6524
    %v6529 = vadd.f32 %v6519, %v6527
    %v6530 = vadd.f32 %v6520, %v6528
    %v6533 = vrot.slane %v6471, 7
    %v6534 = vsel %vm129, %v6533, %v6470
    %6535 = vrot.lane.b32.xlu0 %v6534, 112
    %v6536 = vpop.permute.xlu0 %6535
    %v6538 = vmul.f32 %v1193, %v6536
    %v6539 = vmul.f32 %v1205, %v6330
    %v6540 = vadd.f32 %v6538, %v6539
    %v6543 = vrot.slane %v6530, 7
    %v6544 = vsel %vm129, %v6543, %v6529
    %6545 = vrot.lane.b32.xlu0 %v6544, 64
    %v6546 = vpop.permute.xlu0 %6545
    %v6548 = vmul.f32 %v1173, %v6546
    %v6549 = vmul.f32 %v1187, %v6330
    %6551 = vrot.lane.b32.xlu0 %v6549, 112
    %v6552 = vpop.permute.xlu0 %6551
    %v6554 = vadd.f32 %v6548, %v6552
    %v6555 = vmul.f32 %v1193, %v6540
    %v6558 = vunpack.c.l.s4 1966171168
    %v6559 = vunpack.c.0.s8 %v6558
    %v6560 = vlaneseq
    %v6561 = vshrl.u32 %v6560, 7
    %v6562 = vsub.s32 %v6559, %v6561
    %v6563 = vrot.slane %v6555, %v6562
    %v6564 = vcombine.high %v6563, %v6563
    %v6566 = vunpack.c.l.s4 1966171168
    %v6567 = vunpack.c.0.s8 %v6566
    %v6568 = vlaneseq
    %v6569 = vshrl.u32 %v6568, 7
    %v6570 = vsub.s32 %v6567, %v6569
    %v6571 = vrot.slane %v6563, %v6570
    %v6573 = vunpack.c.l.s4 1966171168
    %v6574 = vunpack.c.0.s8 %v6573
    %v6575 = vlaneseq
    %v6576 = vshrl.u32 %v6575, 7
    %v6577 = vsub.s32 %v6574, %v6576
    %v6578 = vrot.slane %v6564, %v6577
    %6581 = vst.msk [vmem:[#allocation13 + $0x7] sm:$0x1] %vm1235, %v6571
    %6582 = vst.msk [vmem:[#allocation13 + $0xf] sm:$0x1] %vm1235, %v6578
    %v6583 = vmul.f32 %v1173, %v6554
    %v6586 = vunpack.c.l.s4 1966171168
    %v6587 = vunpack.c.0.s8 %v6586
    %v6588 = vlaneseq
    %v6589 = vshrl.u32 %v6588, 7
    %v6590 = vsub.s32 %v6587, %v6589
    %v6591 = vrot.slane %v6583, %v6590
    %v6592 = vcombine.high %v6591, %v6591
    %v6594 = vunpack.c.l.s4 1966171168
    %v6595 = vunpack.c.0.s8 %v6594
    %v6596 = vlaneseq
    %v6597 = vshrl.u32 %v6596, 7
    %v6598 = vsub.s32 %v6595, %v6597
    %v6599 = vrot.slane %v6591, %v6598
    %v6601 = vunpack.c.l.s4 1966171168
    %v6602 = vunpack.c.0.s8 %v6601
    %v6603 = vlaneseq
    %v6604 = vshrl.u32 %v6603, 7
    %v6605 = vsub.s32 %v6602, %v6604
    %v6606 = vrot.slane %v6592, %v6605
    %v6607 = vlaneseq
    %v6608 = vshrl.u32 %v6607, 7
    %v6609 = vsub.s32 0, %v6608
    %v6610 = vrot.slane %v6599, %v6609
    %v6611 = vlaneseq
    %v6612 = vshrl.u32 %v6611, 7
    %v6613 = vsub.s32 0, %v6612
    %v6614 = vrot.slane %v6606, %v6613
    %6615 = vrot.lane.b32.xlu0 %v6610, 16
    %v6616 = vpop.permute.xlu0 %6615
    %6617 = vrot.lane.b32.xlu0 %v6614, 16
    %v6618 = vpop.permute.xlu0 %6617
    %6621 = vst.msk [vmem:[#allocation13] sm:$0x1] %vm1276, %v6616
    %6622 = vst.msk [vmem:[#allocation13 + $0x8] sm:$0x1] %vm1276, %v6618
    // Predicated region
    $region62: #{tpu_custom_call.1} parent=1 // pred_check
      _
    $region63: #{tpu_custom_call.1} parent=1 // pred_check_branch
      %6624 = sbr.rel (0) target = $region65
    $region64: #{tpu_custom_call.1} parent=1 // pred_region
      %s6626 = ssub.s32 256, 256
      %6627 = vsyncadd [#allocation6], %s6626
      %s6628 = sshll.u32 [#allocation13], 4
      %s6629 = int_to_ptr.vmem [resolvable:$true] %s6628
      %6634 = dma.vmem_to_hbm [thread:$0]  %s6629, 256, %s10, [#allocation6], 128, 128, 8
    $region65: #{tpu_custom_call.1} parent=1 // pred_fallthru
      _
    // Predicated region
    $region66: #{tpu_custom_call.1} parent=1 // pred_check
      _
    $region67: #{tpu_custom_call.1} parent=1 // pred_check_branch
      %6636 = sbr.rel (0) target = $region69
    $region68: #{tpu_custom_call.1} parent=1 // pred_region
      %6637 = dma.done [#allocation6], 256
    $region69: #{tpu_custom_call.1} parent=1 // pred_fallthru
      _
    %6638 = vsyncpa [#allocation5], 1
    %6639 = vsyncpa [#allocation8], 1
    %6640 = vsyncpa [#allocation11], 1
    %6641 = vsyncpa [#allocation6], 1

</llo_original>
